<compile_context>
chip_gen: v6e
topology: v6e:2x2x1
jax: 0.10.0
libtpu: 0.0.40
codegen_flags: <defaults>
</compile_context>

<pallas_src>
import jax
import jax.numpy as jnp
from jax.experimental import pallas as pl
from jax.experimental.pallas import tpu as pltpu

INPUT_DIM = 1024
HIDDEN1 = 768
HIDDEN2 = 512
HIDDEN3 = 256
OUTPUT_DIM = 6
OUT_PAD = 128                     # lane-aligned padded output width
MAX_TM = 512                      # max batch tile (rows per grid step)
VMEM_LIMIT_BYTES = 32 * 1024 * 1024


def _round_up(x, m):
    return ((x + m - 1) // m) * m


def _select_tile(B):
    """Pick the largest batch tile in {512,...,8} with bounded padding waste,
    then make sure the grid has >= 2 steps (when B allows) so both of v7x's
    TensorCores get tiles."""
    max_waste = max(B // 4, 7)
    tm = 8
    for t in (MAX_TM, 256, 128, 64, 32, 16, 8):
        if (-B) % t <= max_waste:
            tm = t
            break
    b_pad = _round_up(B, tm)
    if b_pad // tm == 1 and B > 8:
        tm = max(tm // 2, 8)
        b_pad = _round_up(B, tm)
    return tm, b_pad


def mlp_kernel(x_ref, w1_ref, b1_ref, w2_ref, b2_ref, w3_ref, b3_ref,
               w4_ref, b4_ref, o_ref):
    # Layer 1: Linear(1024, 768) + ReLU   (Dropout = identity in eval mode)
    # astype is a no-op when the caller already supplies bf16 activations.
    h = jnp.dot(x_ref[...].astype(jnp.bfloat16), w1_ref[...],
                preferred_element_type=jnp.float32)
    h = jnp.maximum(h + b1_ref[...], 0.0)

    # Layer 2: Linear(768, 512) + ReLU
    h = jnp.dot(h.astype(jnp.bfloat16), w2_ref[...],
                preferred_element_type=jnp.float32)
    h = jnp.maximum(h + b2_ref[...], 0.0)

    # Layer 3: Linear(512, 256) + ReLU
    h = jnp.dot(h.astype(jnp.bfloat16), w3_ref[...],
                preferred_element_type=jnp.float32)
    h = jnp.maximum(h + b3_ref[...], 0.0)

    # Layer 4: Linear(256, 6)  (padded to 128 lanes; sliced in wrapper)
    out = jnp.dot(h.astype(jnp.bfloat16), w4_ref[...],
                  preferred_element_type=jnp.float32)
    o_ref[...] = (out + b4_ref[...]).astype(o_ref.dtype)


def _pallas_forward(x_padded, params, tm, b_pad, *, single_buffer_weights):
    w1, b1, w2, b2, w3, b3, w4, b4 = (
        params["w1"], params["b1"], params["w2"], params["b2"],
        params["w3"], params["b3"], params["w4"], params["b4"],
    )
    grid = (b_pad // tm,)
    const = lambda i: (0, 0)

    # Weights/biases: constant block index -> DMA'd once, resident in VMEM.
    # Buffered(1) reclaims the default double-buffer for these never-changing
    # blocks (~2.5 MB of VMEM headroom).
    wb_kwargs = {"pipeline_mode": pl.Buffered(1)} if single_buffer_weights else {}

    def wspec(shape):
        return pl.BlockSpec(shape, const, **wb_kwargs)

    in_specs = [
        pl.BlockSpec((tm, INPUT_DIM), lambda i: (i, 0)),   # x tile (pipelined)
        wspec((INPUT_DIM, HIDDEN1)),                       # w1
        wspec((1, HIDDEN1)),                               # b1
        wspec((HIDDEN1, HIDDEN2)),                         # w2
        wspec((1, HIDDEN2)),                               # b2
        wspec((HIDDEN2, HIDDEN3)),                         # w3
        wspec((1, HIDDEN3)),                               # b3
        wspec((HIDDEN3, OUT_PAD)),                         # w4 (padded)
        wspec((1, OUT_PAD)),                               # b4 (padded)
    ]
    out_spec = pl.BlockSpec((tm, OUT_PAD), lambda i: (i, 0))

    flops = 2 * b_pad * (INPUT_DIM * HIDDEN1 + HIDDEN1 * HIDDEN2
                         + HIDDEN2 * HIDDEN3 + HIDDEN3 * OUT_PAD)
    weight_bytes = (2 * (INPUT_DIM * HIDDEN1 + HIDDEN1 * HIDDEN2
                         + HIDDEN2 * HIDDEN3 + HIDDEN3 * OUT_PAD)
                    + 4 * (HIDDEN1 + HIDDEN2 + HIDDEN3 + OUT_PAD))
    bytes_accessed = (weight_bytes
                      + x_padded.dtype.itemsize * b_pad * INPUT_DIM
                      + 4 * b_pad * OUT_PAD)

    return pl.pallas_call(
        mlp_kernel,
        out_shape=jax.ShapeDtypeStruct((b_pad, OUT_PAD), jnp.float32),
        grid=grid,
        in_specs=in_specs,
        out_specs=out_spec,
        compiler_params=pltpu.CompilerParams(
            dimension_semantics=("parallel",),
            vmem_limit_bytes=VMEM_LIMIT_BYTES),
        cost_estimate=pl.CostEstimate(
            flops=flops, transcendentals=0, bytes_accessed=bytes_accessed),
    )(x_padded, w1, b1, w2, b2, w3, b3, w4, b4)


def mlp_forward(x, params):
    """x: (B, 1024) float32 or bfloat16. params: dict from init_params.
    Returns (B, 6) float32 logits."""
    B = x.shape[0]
    tm, b_pad = _select_tile(B)
    if b_pad != B:
        x = jnp.pad(x, ((0, b_pad - B), (0, 0)))

    try:
        out_padded = _pallas_forward(x, params, tm, b_pad,
                                     single_buffer_weights=True)
    except Exception:
        # Fallback for JAX versions without BlockSpec pipeline_mode support.
        out_padded = _pallas_forward(x, params, tm, b_pad,
                                     single_buffer_weights=False)

    return out_padded[:B, :OUTPUT_DIM]


def init_params(key):
    """Deterministic parameter init (shapes match the nn.Linear layers).

    Weights stored (in, out) in bfloat16; biases (1, out) float32.  The final
    layer is zero-padded to 128 output lanes once here, so the forward path
    does no per-call padding work."""
    ks = jax.random.split(key, 8)

    def linear(kw, kb, fan_in, fan_out):
        bound = 1.0 / jnp.sqrt(fan_in)
        w = jax.random.uniform(kw, (fan_in, fan_out), jnp.float32, -bound, bound)
        b = jax.random.uniform(kb, (1, fan_out), jnp.float32, -bound, bound)
        return w.astype(jnp.bfloat16), b

    w1, b1 = linear(ks[0], ks[1], INPUT_DIM, HIDDEN1)
    w2, b2 = linear(ks[2], ks[3], HIDDEN1, HIDDEN2)
    w3, b3 = linear(ks[4], ks[5], HIDDEN2, HIDDEN3)
    w4, b4 = linear(ks[6], ks[7], HIDDEN3, OUTPUT_DIM)

    w4p = jnp.zeros((HIDDEN3, OUT_PAD), jnp.bfloat16).at[:, :OUTPUT_DIM].set(w4)
    b4p = jnp.zeros((1, OUT_PAD), jnp.float32).at[:, :OUTPUT_DIM].set(b4)

    return {"w1": w1, "b1": b1, "w2": w2, "b2": b2,
            "w3": w3, "b3": b3, "w4": w4p, "b4": b4p}


def reference_forward(x, params):
    """Pure-JAX reference matching the kernel's bf16-weight / f32-accum math."""
    def dense(h, w, b):
        return jnp.dot(h.astype(jnp.bfloat16), w,
                       preferred_element_type=jnp.float32) + b
    h = jnp.maximum(dense(x, params["w1"], params["b1"]), 0.0)
    h = jnp.maximum(dense(h, params["w2"], params["b2"]), 0.0)
    h = jnp.maximum(dense(h, params["w3"], params["b3"]), 0.0)
    return dense(h, params["w4"], params["b4"])[:, :OUTPUT_DIM]


if __name__ == "__main__":
    key = jax.random.PRNGKey(0)
    k_param, k_x = jax.random.split(key)
    params = init_params(k_param)

    # Small deterministic checks: batch=8 (single tile) and batch=20
    # (exercises batch padding + a multi-step grid).
    for batch in (8, 20):
        xk = jax.random.fold_in(k_x, batch)
        x = jax.random.normal(xk, (batch, INPUT_DIM), dtype=jnp.float32)

        out = jax.block_until_ready(mlp_forward(x, params))
        ref = reference_forward(x, params)

        assert out.shape == (batch, OUTPUT_DIM), out.shape
        max_err = jnp.max(jnp.abs(out - ref))
        assert jnp.allclose(out, ref, atol=2e-2, rtol=2e-2), \
            f"batch={batch} max abs err {max_err}"

    print("KERNEL_OK")
</pallas_src>

<mosaic_0001>
module attributes {stable_mosaic.version = 11 : i64} {
  func.func @mlp_kernel(%arg0: i32, %arg1: memref<8x1024xf32, #tpu.memory_space<vmem>>, %arg2: memref<1024x768xbf16, #tpu.memory_space<vmem>>, %arg3: memref<1x768xf32, #tpu.memory_space<vmem>>, %arg4: memref<768x512xbf16, #tpu.memory_space<vmem>>, %arg5: memref<1x512xf32, #tpu.memory_space<vmem>>, %arg6: memref<512x256xbf16, #tpu.memory_space<vmem>>, %arg7: memref<1x256xf32, #tpu.memory_space<vmem>>, %arg8: memref<256x128xbf16, #tpu.memory_space<vmem>>, %arg9: memref<1x128xf32, #tpu.memory_space<vmem>>, %arg10: memref<8x128xf32, #tpu.memory_space<vmem>>) attributes {dimension_semantics = [#tpu.dimension_semantics<parallel>], iteration_bounds = array<i64: 1>, scalar_prefetch = 0 : i64, scratch_operands = 0 : i64, tpu.core_type = #tpu.core_type<tc>, window_params = [{transform_indices = @transform_0, window_bounds = array<i64: 8, 1024>}, {pipeline_mode = #tpu.pipeline_mode<synchronous>, transform_indices = @transform_1, window_bounds = array<i64: 1024, 768>}, {pipeline_mode = #tpu.pipeline_mode<synchronous>, transform_indices = @transform_2, window_bounds = array<i64: 1, 768>}, {pipeline_mode = #tpu.pipeline_mode<synchronous>, transform_indices = @transform_3, window_bounds = array<i64: 768, 512>}, {pipeline_mode = #tpu.pipeline_mode<synchronous>, transform_indices = @transform_4, window_bounds = array<i64: 1, 512>}, {pipeline_mode = #tpu.pipeline_mode<synchronous>, transform_indices = @transform_5, window_bounds = array<i64: 512, 256>}, {pipeline_mode = #tpu.pipeline_mode<synchronous>, transform_indices = @transform_6, window_bounds = array<i64: 1, 256>}, {pipeline_mode = #tpu.pipeline_mode<synchronous>, transform_indices = @transform_7, window_bounds = array<i64: 256, 128>}, {pipeline_mode = #tpu.pipeline_mode<synchronous>, transform_indices = @transform_8, window_bounds = array<i64: 1, 128>}, {transform_indices = @transform_9, window_bounds = array<i64: 8, 128>}]} {
    %c0 = arith.constant 0 : index
    %c0_0 = arith.constant 0 : index
    %0 = vector.load %arg1[%c0, %c0_0] : memref<8x1024xf32, #tpu.memory_space<vmem>>, vector<8x1024xf32>
    %1 = arith.truncf %0 : vector<8x1024xf32> to vector<8x1024xbf16>
    %c0_1 = arith.constant 0 : index
    %c0_2 = arith.constant 0 : index
    %2 = vector.load %arg2[%c0_1, %c0_2] : memref<1024x768xbf16, #tpu.memory_space<vmem>>, vector<1024x768xbf16>
    %cst = arith.constant dense<0.000000e+00> : vector<8x768xf32>
    %3 = tpu.matmul %1, %2, %cst {dimension_numbers = #tpu.dot_dimension_numbers<[1], [0], [0], [1], [0, 0, 1, 1], [], []>} : vector<8x1024xbf16>, vector<1024x768xbf16>, vector<8x768xf32> -> vector<8x768xf32>
    %c0_3 = arith.constant 0 : index
    %c0_4 = arith.constant 0 : index
    %4 = vector.load %arg3[%c0_3, %c0_4] : memref<1x768xf32, #tpu.memory_space<vmem>>, vector<1x768xf32>
    %5 = vector.broadcast %4 : vector<1x768xf32> to vector<8x768xf32>
    %6 = arith.addf %3, %5 : vector<8x768xf32>
    %cst_5 = arith.constant 0.000000e+00 : f32
    %7 = vector.broadcast %cst_5 : f32 to vector<8x768xf32>
    %8 = arith.maximumf %6, %7 : vector<8x768xf32>
    %9 = arith.truncf %8 : vector<8x768xf32> to vector<8x768xbf16>
    %c0_6 = arith.constant 0 : index
    %c0_7 = arith.constant 0 : index
    %10 = vector.load %arg4[%c0_6, %c0_7] : memref<768x512xbf16, #tpu.memory_space<vmem>>, vector<768x512xbf16>
    %cst_8 = arith.constant dense<0.000000e+00> : vector<8x512xf32>
    %11 = tpu.matmul %9, %10, %cst_8 {dimension_numbers = #tpu.dot_dimension_numbers<[1], [0], [0], [1], [0, 0, 1, 1], [], []>} : vector<8x768xbf16>, vector<768x512xbf16>, vector<8x512xf32> -> vector<8x512xf32>
    %c0_9 = arith.constant 0 : index
    %c0_10 = arith.constant 0 : index
    %12 = vector.load %arg5[%c0_9, %c0_10] : memref<1x512xf32, #tpu.memory_space<vmem>>, vector<1x512xf32>
    %13 = vector.broadcast %12 : vector<1x512xf32> to vector<8x512xf32>
    %14 = arith.addf %11, %13 : vector<8x512xf32>
    %cst_11 = arith.constant 0.000000e+00 : f32
    %15 = vector.broadcast %cst_11 : f32 to vector<8x512xf32>
    %16 = arith.maximumf %14, %15 : vector<8x512xf32>
    %17 = arith.truncf %16 : vector<8x512xf32> to vector<8x512xbf16>
    %c0_12 = arith.constant 0 : index
    %c0_13 = arith.constant 0 : index
    %18 = vector.load %arg6[%c0_12, %c0_13] : memref<512x256xbf16, #tpu.memory_space<vmem>>, vector<512x256xbf16>
    %cst_14 = arith.constant dense<0.000000e+00> : vector<8x256xf32>
    %19 = tpu.matmul %17, %18, %cst_14 {dimension_numbers = #tpu.dot_dimension_numbers<[1], [0], [0], [1], [0, 0, 1, 1], [], []>} : vector<8x512xbf16>, vector<512x256xbf16>, vector<8x256xf32> -> vector<8x256xf32>
    %c0_15 = arith.constant 0 : index
    %c0_16 = arith.constant 0 : index
    %20 = vector.load %arg7[%c0_15, %c0_16] : memref<1x256xf32, #tpu.memory_space<vmem>>, vector<1x256xf32>
    %21 = vector.broadcast %20 : vector<1x256xf32> to vector<8x256xf32>
    %22 = arith.addf %19, %21 : vector<8x256xf32>
    %cst_17 = arith.constant 0.000000e+00 : f32
    %23 = vector.broadcast %cst_17 : f32 to vector<8x256xf32>
    %24 = arith.maximumf %22, %23 : vector<8x256xf32>
    %25 = arith.truncf %24 : vector<8x256xf32> to vector<8x256xbf16>
    %c0_18 = arith.constant 0 : index
    %c0_19 = arith.constant 0 : index
    %26 = vector.load %arg8[%c0_18, %c0_19] : memref<256x128xbf16, #tpu.memory_space<vmem>>, vector<256x128xbf16>
    %cst_20 = arith.constant dense<0.000000e+00> : vector<8x128xf32>
    %27 = tpu.matmul %25, %26, %cst_20 {dimension_numbers = #tpu.dot_dimension_numbers<[1], [0], [0], [1], [0, 0, 1, 1], [], []>} : vector<8x256xbf16>, vector<256x128xbf16>, vector<8x128xf32> -> vector<8x128xf32>
    %c0_21 = arith.constant 0 : index
    %c0_22 = arith.constant 0 : index
    %28 = vector.load %arg9[%c0_21, %c0_22] : memref<1x128xf32, #tpu.memory_space<vmem>>, vector<1x128xf32>
    %29 = vector.broadcast %28 : vector<1x128xf32> to vector<8x128xf32>
    %30 = arith.addf %27, %29 : vector<8x128xf32>
    %c0_23 = arith.constant 0 : index
    %c0_24 = arith.constant 0 : index
    %31 = vector.load %arg10[%c0_23, %c0_24] : memref<8x128xf32, #tpu.memory_space<vmem>>, vector<8x128xf32>
    tpu.vector_store %arg10[%c0_23, %c0_24], %30 {strides = array<i32>} : memref<8x128xf32, #tpu.memory_space<vmem>>, vector<8x128xf32>,
    return
  }
  func.func @transform_0(%arg0: i32) -> (i32, i32) {
    %c0_i32 = arith.constant 0 : i32
    %c0_i32_0 = arith.constant 0 : i32
    return %arg0, %c0_i32 : i32, i32
  }
  func.func @transform_1(%arg0: i32) -> (i32, i32) {
    %c0_i32 = arith.constant 0 : i32
    %c0_i32_0 = arith.constant 0 : i32
    %c0_i32_1 = arith.constant 0 : i32
    return %c0_i32, %c0_i32_0 : i32, i32
  }
  func.func @transform_2(%arg0: i32) -> (i32, i32) {
    %c0_i32 = arith.constant 0 : i32
    %c0_i32_0 = arith.constant 0 : i32
    %c0_i32_1 = arith.constant 0 : i32
    return %c0_i32, %c0_i32_0 : i32, i32
  }
  func.func @transform_3(%arg0: i32) -> (i32, i32) {
    %c0_i32 = arith.constant 0 : i32
    %c0_i32_0 = arith.constant 0 : i32
    %c0_i32_1 = arith.constant 0 : i32
    return %c0_i32, %c0_i32_0 : i32, i32
  }
  func.func @transform_4(%arg0: i32) -> (i32, i32) {
    %c0_i32 = arith.constant 0 : i32
    %c0_i32_0 = arith.constant 0 : i32
    %c0_i32_1 = arith.constant 0 : i32
    return %c0_i32, %c0_i32_0 : i32, i32
  }
  func.func @transform_5(%arg0: i32) -> (i32, i32) {
    %c0_i32 = arith.constant 0 : i32
    %c0_i32_0 = arith.constant 0 : i32
    %c0_i32_1 = arith.constant 0 : i32
    return %c0_i32, %c0_i32_0 : i32, i32
  }
  func.func @transform_6(%arg0: i32) -> (i32, i32) {
    %c0_i32 = arith.constant 0 : i32
    %c0_i32_0 = arith.constant 0 : i32
    %c0_i32_1 = arith.constant 0 : i32
    return %c0_i32, %c0_i32_0 : i32, i32
  }
  func.func @transform_7(%arg0: i32) -> (i32, i32) {
    %c0_i32 = arith.constant 0 : i32
    %c0_i32_0 = arith.constant 0 : i32
    %c0_i32_1 = arith.constant 0 : i32
    return %c0_i32, %c0_i32_0 : i32, i32
  }
  func.func @transform_8(%arg0: i32) -> (i32, i32) {
    %c0_i32 = arith.constant 0 : i32
    %c0_i32_0 = arith.constant 0 : i32
    %c0_i32_1 = arith.constant 0 : i32
    return %c0_i32, %c0_i32_0 : i32, i32
  }
  func.func @transform_9(%arg0: i32) -> (i32, i32) {
    %c0_i32 = arith.constant 0 : i32
    %c0_i32_0 = arith.constant 0 : i32
    return %arg0, %c0_i32 : i32, i32
  }
}

module attributes {stable_mosaic.version = 11 : i64} {
  func.func @mlp_kernel(%arg0: i32, %arg1: memref<8x1024xf32, #tpu.memory_space<vmem>>, %arg2: memref<1024x768xbf16, #tpu.memory_space<vmem>>, %arg3: memref<1x768xf32, #tpu.memory_space<vmem>>, %arg4: memref<768x512xbf16, #tpu.memory_space<vmem>>, %arg5: memref<1x512xf32, #tpu.memory_space<vmem>>, %arg6: memref<512x256xbf16, #tpu.memory_space<vmem>>, %arg7: memref<1x256xf32, #tpu.memory_space<vmem>>, %arg8: memref<256x128xbf16, #tpu.memory_space<vmem>>, %arg9: memref<1x128xf32, #tpu.memory_space<vmem>>, %arg10: memref<8x128xf32, #tpu.memory_space<vmem>>) attributes {dimension_semantics = [#tpu.dimension_semantics<parallel>], iteration_bounds = array<i64: 1>, scalar_prefetch = 0 : i64, scratch_operands = 0 : i64, tpu.core_type = #tpu.core_type<tc>, window_params = [{transform_indices = @transform_0, window_bounds = array<i64: 8, 1024>}, {pipeline_mode = #tpu.pipeline_mode<synchronous>, transform_indices = @transform_1, window_bounds = array<i64: 1024, 768>}, {pipeline_mode = #tpu.pipeline_mode<synchronous>, transform_indices = @transform_2, window_bounds = array<i64: 1, 768>}, {pipeline_mode = #tpu.pipeline_mode<synchronous>, transform_indices = @transform_3, window_bounds = array<i64: 768, 512>}, {pipeline_mode = #tpu.pipeline_mode<synchronous>, transform_indices = @transform_4, window_bounds = array<i64: 1, 512>}, {pipeline_mode = #tpu.pipeline_mode<synchronous>, transform_indices = @transform_5, window_bounds = array<i64: 512, 256>}, {pipeline_mode = #tpu.pipeline_mode<synchronous>, transform_indices = @transform_6, window_bounds = array<i64: 1, 256>}, {pipeline_mode = #tpu.pipeline_mode<synchronous>, transform_indices = @transform_7, window_bounds = array<i64: 256, 128>}, {pipeline_mode = #tpu.pipeline_mode<synchronous>, transform_indices = @transform_8, window_bounds = array<i64: 1, 128>}, {transform_indices = @transform_9, window_bounds = array<i64: 8, 128>}]} {
    %c0 = arith.constant 0 : index
    %c0_0 = arith.constant 0 : index
    %0 = vector.load %arg1[%c0, %c0_0] : memref<8x1024xf32, #tpu.memory_space<vmem>>, vector<8x1024xf32>
    %1 = arith.truncf %0 : vector<8x1024xf32> to vector<8x1024xbf16>
    %c0_1 = arith.constant 0 : index
    %c0_2 = arith.constant 0 : index
    %2 = vector.load %arg2[%c0_1, %c0_2] : memref<1024x768xbf16, #tpu.memory_space<vmem>>, vector<1024x768xbf16>
    %cst = arith.constant dense<0.000000e+00> : vector<8x768xf32>
    %3 = tpu.matmul %1, %2, %cst {dimension_numbers = #tpu.dot_dimension_numbers<[1], [0], [0], [1], [0, 0, 1, 1], [], []>} : vector<8x1024xbf16>, vector<1024x768xbf16>, vector<8x768xf32> -> vector<8x768xf32>
    %c0_3 = arith.constant 0 : index
    %c0_4 = arith.constant 0 : index
    %4 = vector.load %arg3[%c0_3, %c0_4] : memref<1x768xf32, #tpu.memory_space<vmem>>, vector<1x768xf32>
    %5 = vector.broadcast %4 : vector<1x768xf32> to vector<8x768xf32>
    %6 = arith.addf %3, %5 : vector<8x768xf32>
    %cst_5 = arith.constant 0.000000e+00 : f32
    %7 = vector.broadcast %cst_5 : f32 to vector<8x768xf32>
    %8 = arith.maximumf %6, %7 : vector<8x768xf32>
    %9 = arith.truncf %8 : vector<8x768xf32> to vector<8x768xbf16>
    %c0_6 = arith.constant 0 : index
    %c0_7 = arith.constant 0 : index
    %10 = vector.load %arg4[%c0_6, %c0_7] : memref<768x512xbf16, #tpu.memory_space<vmem>>, vector<768x512xbf16>
    %cst_8 = arith.constant dense<0.000000e+00> : vector<8x512xf32>
    %11 = tpu.matmul %9, %10, %cst_8 {dimension_numbers = #tpu.dot_dimension_numbers<[1], [0], [0], [1], [0, 0, 1, 1], [], []>} : vector<8x768xbf16>, vector<768x512xbf16>, vector<8x512xf32> -> vector<8x512xf32>
    %c0_9 = arith.constant 0 : index
    %c0_10 = arith.constant 0 : index
    %12 = vector.load %arg5[%c0_9, %c0_10] : memref<1x512xf32, #tpu.memory_space<vmem>>, vector<1x512xf32>
    %13 = vector.broadcast %12 : vector<1x512xf32> to vector<8x512xf32>
    %14 = arith.addf %11, %13 : vector<8x512xf32>
    %cst_11 = arith.constant 0.000000e+00 : f32
    %15 = vector.broadcast %cst_11 : f32 to vector<8x512xf32>
    %16 = arith.maximumf %14, %15 : vector<8x512xf32>
    %17 = arith.truncf %16 : vector<8x512xf32> to vector<8x512xbf16>
    %c0_12 = arith.constant 0 : index
    %c0_13 = arith.constant 0 : index
    %18 = vector.load %arg6[%c0_12, %c0_13] : memref<512x256xbf16, #tpu.memory_space<vmem>>, vector<512x256xbf16>
    %cst_14 = arith.constant dense<0.000000e+00> : vector<8x256xf32>
    %19 = tpu.matmul %17, %18, %cst_14 {dimension_numbers = #tpu.dot_dimension_numbers<[1], [0], [0], [1], [0, 0, 1, 1], [], []>} : vector<8x512xbf16>, vector<512x256xbf16>, vector<8x256xf32> -> vector<8x256xf32>
    %c0_15 = arith.constant 0 : index
    %c0_16 = arith.constant 0 : index
    %20 = vector.load %arg7[%c0_15, %c0_16] : memref<1x256xf32, #tpu.memory_space<vmem>>, vector<1x256xf32>
    %21 = vector.broadcast %20 : vector<1x256xf32> to vector<8x256xf32>
    %22 = arith.addf %19, %21 : vector<8x256xf32>
    %cst_17 = arith.constant 0.000000e+00 : f32
    %23 = vector.broadcast %cst_17 : f32 to vector<8x256xf32>
    %24 = arith.maximumf %22, %23 : vector<8x256xf32>
    %25 = arith.truncf %24 : vector<8x256xf32> to vector<8x256xbf16>
    %c0_18 = arith.constant 0 : index
    %c0_19 = arith.constant 0 : index
    %26 = vector.load %arg8[%c0_18, %c0_19] : memref<256x128xbf16, #tpu.memory_space<vmem>>, vector<256x128xbf16>
    %cst_20 = arith.constant dense<0.000000e+00> : vector<8x128xf32>
    %27 = tpu.matmul %25, %26, %cst_20 {dimension_numbers = #tpu.dot_dimension_numbers<[1], [0], [0], [1], [0, 0, 1, 1], [], []>} : vector<8x256xbf16>, vector<256x128xbf16>, vector<8x128xf32> -> vector<8x128xf32>
    %c0_21 = arith.constant 0 : index
    %c0_22 = arith.constant 0 : index
    %28 = vector.load %arg9[%c0_21, %c0_22] : memref<1x128xf32, #tpu.memory_space<vmem>>, vector<1x128xf32>
    %29 = vector.broadcast %28 : vector<1x128xf32> to vector<8x128xf32>
    %30 = arith.addf %27, %29 : vector<8x128xf32>
    %c0_23 = arith.constant 0 : index
    %c0_24 = arith.constant 0 : index
    %31 = vector.load %arg10[%c0_23, %c0_24] : memref<8x128xf32, #tpu.memory_space<vmem>>, vector<8x128xf32>
    tpu.vector_store %arg10[%c0_23, %c0_24], %30 {strides = array<i32>} : memref<8x128xf32, #tpu.memory_space<vmem>>, vector<8x128xf32>,
    return
  }
  func.func @transform_0(%arg0: i32) -> (i32, i32) {
    %c0_i32 = arith.constant 0 : i32
    %c0_i32_0 = arith.constant 0 : i32
    return %arg0, %c0_i32 : i32, i32
  }
  func.func @transform_1(%arg0: i32) -> (i32, i32) {
    %c0_i32 = arith.constant 0 : i32
    %c0_i32_0 = arith.constant 0 : i32
    %c0_i32_1 = arith.constant 0 : i32
    return %c0_i32, %c0_i32_0 : i32, i32
  }
  func.func @transform_2(%arg0: i32) -> (i32, i32) {
    %c0_i32 = arith.constant 0 : i32
    %c0_i32_0 = arith.constant 0 : i32
    %c0_i32_1 = arith.constant 0 : i32
    return %c0_i32, %c0_i32_0 : i32, i32
  }
  func.func @transform_3(%arg0: i32) -> (i32, i32) {
    %c0_i32 = arith.constant 0 : i32
    %c0_i32_0 = arith.constant 0 : i32
    %c0_i32_1 = arith.constant 0 : i32
    return %c0_i32, %c0_i32_0 : i32, i32
  }
  func.func @transform_4(%arg0: i32) -> (i32, i32) {
    %c0_i32 = arith.constant 0 : i32
    %c0_i32_0 = arith.constant 0 : i32
    %c0_i32_1 = arith.constant 0 : i32
    return %c0_i32, %c0_i32_0 : i32, i32
  }
  func.func @transform_5(%arg0: i32) -> (i32, i32) {
    %c0_i32 = arith.constant 0 : i32
    %c0_i32_0 = arith.constant 0 : i32
    %c0_i32_1 = arith.constant 0 : i32
    return %c0_i32, %c0_i32_0 : i32, i32
  }
  func.func @transform_6(%arg0: i32) -> (i32, i32) {
    %c0_i32 = arith.constant 0 : i32
    %c0_i32_0 = arith.constant 0 : i32
    %c0_i32_1 = arith.constant 0 : i32
    return %c0_i32, %c0_i32_0 : i32, i32
  }
  func.func @transform_7(%arg0: i32) -> (i32, i32) {
    %c0_i32 = arith.constant 0 : i32
    %c0_i32_0 = arith.constant 0 : i32
    %c0_i32_1 = arith.constant 0 : i32
    return %c0_i32, %c0_i32_0 : i32, i32
  }
  func.func @transform_8(%arg0: i32) -> (i32, i32) {
    %c0_i32 = arith.constant 0 : i32
    %c0_i32_0 = arith.constant 0 : i32
    %c0_i32_1 = arith.constant 0 : i32
    return %c0_i32, %c0_i32_0 : i32, i32
  }
  func.func @transform_9(%arg0: i32) -> (i32, i32) {
    %c0_i32 = arith.constant 0 : i32
    %c0_i32_0 = arith.constant 0 : i32
    return %arg0, %c0_i32 : i32, i32
  }
}

</mosaic_0001>

<llo_original>
// kernel: tpu_custom_call.1
$region0: #{tpu_custom_call.1}
  #allocation0 [shape = 'u32[]', space=smem, size = 0x4, offset = 0x4, fixed_abs, tag = 'smem constant byte address 0x4 - core index']
  #allocation1 [shape = 'u32[144,128]{1,0:T(1,128)}', space=vmem, size = 0x12000, scoped, tag = 'internal scratch']
  %s0 = inlined_call_operand.hbm [shape: f32[8,1024], index: 0, kind: input, shape index: {}]
  %s1 = inlined_call_operand.hbm [shape: bf16[1024,768], index: 1, kind: input, shape index: {}]
  %s2 = inlined_call_operand.hbm [shape: f32[1,768], index: 2, kind: input, shape index: {}]
  %s3 = inlined_call_operand.hbm [shape: bf16[768,512], index: 3, kind: input, shape index: {}]
  %s4 = inlined_call_operand.hbm [shape: f32[1,512], index: 4, kind: input, shape index: {}]
  %s5 = inlined_call_operand.hbm [shape: bf16[512,256], index: 5, kind: input, shape index: {}]
  %s6 = inlined_call_operand.hbm [shape: f32[1,256], index: 6, kind: input, shape index: {}]
  %s7 = inlined_call_operand.hbm [shape: bf16[256,128], index: 7, kind: input, shape index: {}]
  %s8 = inlined_call_operand.hbm [shape: f32[1,128], index: 8, kind: input, shape index: {}]
  %s9 = inlined_call_operand.hbm [shape: f32[8,128], index: 9, kind: output, shape index: {}]
  %s10 = sld [smem:[#allocation0]]
  $region82: #{tpu_custom_call.1} parent=0
    _
  %s12 = ssub.s32 1, %s10
  %s13 = scalar_select 0, %s12, %s10
  $region1: #{tpu_custom_call.1} parent=0
    #allocation2 [shape = 'u8[32768]{0}', space=vmem, size = 0x8000, scoped, tag = 'input window, operand 0, single buffered']
    #allocation3 [shape = 's32[1]{0}', space=sflag, size = 0x4, scoped, tag = 'scoped memory for tpu_custom_call.1']
    #allocation4 [shape = 's32[1]{0}', space=sflag, size = 0x4, scoped, tag = 'scoped memory for tpu_custom_call.1']
    #allocation5 [shape = 'u8[1572864]{0}', space=vmem, size = 0x180000, scoped, tag = 'input window, operand 1, single buffered']
    #allocation6 [shape = 's32[1]{0}', space=sflag, size = 0x4, scoped, tag = 'scoped memory for tpu_custom_call.1']
    #allocation7 [shape = 'u8[3072]{0}', space=vmem, size = 0xc00, scoped, tag = 'input window, operand 2, single buffered']
    #allocation8 [shape = 'u8[786432]{0}', space=vmem, size = 0xc0000, scoped, tag = 'input window, operand 3, single buffered']
    #allocation9 [shape = 's32[1]{0}', space=sflag, size = 0x4, scoped, tag = 'scoped memory for tpu_custom_call.1']
    #allocation10 [shape = 'u8[2048]{0}', space=vmem, size = 0x800, scoped, tag = 'input window, operand 4, single buffered']
    #allocation11 [shape = 'u8[262144]{0}', space=vmem, size = 0x40000, scoped, tag = 'input window, operand 5, single buffered']
    #allocation12 [shape = 's32[1]{0}', space=sflag, size = 0x4, scoped, tag = 'scoped memory for tpu_custom_call.1']
    #allocation13 [shape = 'u8[1024]{0}', space=vmem, size = 0x400, scoped, tag = 'input window, operand 6, single buffered']
    #allocation14 [shape = 'u8[65536]{0}', space=vmem, size = 0x10000, scoped, tag = 'input window, operand 7, single buffered']
    #allocation15 [shape = 's32[1]{0}', space=sflag, size = 0x4, scoped, tag = 'scoped memory for tpu_custom_call.1']
    #allocation16 [shape = 'u8[512]{0}', space=vmem, size = 0x400, scoped, tag = 'input window, operand 8, single buffered']
    #allocation17 [shape = 'u8[4096]{0}', space=vmem, size = 0x1000, scoped, tag = 'output window, operand 0, single buffered']
    %14 = vsyncpa [#allocation3], 0
    %15 = vsyncpa [#allocation6], 0
    %16 = vsyncpa [#allocation9], 0
    %17 = vsyncpa [#allocation12], 0
    %18 = vsyncpa [#allocation15], 0
    %19 = vsyncpa [#allocation4], 0
    // Predicated region
    $region2: #{tpu_custom_call.1} parent=1 // pred_check
      _
    $region3: #{tpu_custom_call.1} parent=1 // pred_check_branch
      %21 = sbr.rel (0) target = $region5
    $region4: #{tpu_custom_call.1} parent=1 // pred_region
      %s23 = ssub.s32 1024, 1024
      %24 = vsyncadd [#allocation3], %s23
      %s26 = sshll.u32 [#allocation2], 4
      %s27 = int_to_ptr.vmem [resolvable:$true] %s26
      %29 = dma.hbm_to_vmem [thread:$0]  %s0, 1024, %s27, [#allocation3]
    $region5: #{tpu_custom_call.1} parent=1 // pred_fallthru
      _
    // Predicated region
    $region6: #{tpu_custom_call.1} parent=1 // pred_check
      _
    $region7: #{tpu_custom_call.1} parent=1 // pred_check_branch
      %31 = sbr.rel (0) target = $region9
    $region8: #{tpu_custom_call.1} parent=1 // pred_region
      %s33 = ssub.s32 49152, 49152
      %34 = vsyncadd [#allocation6], %s33
      %s35 = sshll.u32 [#allocation5], 4
      %s36 = int_to_ptr.vmem [resolvable:$true] %s35
      %41 = dma.hbm_to_vmem [thread:$0]  %s1, 49152, %s36, [#allocation6], 384, 384, 24
    $region9: #{tpu_custom_call.1} parent=1 // pred_fallthru
      _
    // Predicated region
    $region10: #{tpu_custom_call.1} parent=1 // pred_check
      _
    $region11: #{tpu_custom_call.1} parent=1 // pred_check_branch
      %43 = sbr.rel (0) target = $region13
    $region12: #{tpu_custom_call.1} parent=1 // pred_region
      %s45 = ssub.s32 96, 96
      %46 = vsyncadd [#allocation6], %s45
      %s48 = sshll.u32 [#allocation7], 4
      %s49 = int_to_ptr.vmem [resolvable:$true] %s48
      %51 = dma.hbm_to_vmem [thread:$0]  %s2, 96, %s49, [#allocation6]
    $region13: #{tpu_custom_call.1} parent=1 // pred_fallthru
      _
    // Predicated region
    $region14: #{tpu_custom_call.1} parent=1 // pred_check
      _
    $region15: #{tpu_custom_call.1} parent=1 // pred_check_branch
      %53 = sbr.rel (0) target = $region17
    $region16: #{tpu_custom_call.1} parent=1 // pred_region
      %s55 = ssub.s32 24576, 24576
      %56 = vsyncadd [#allocation9], %s55
      %s57 = sshll.u32 [#allocation8], 4
      %s58 = int_to_ptr.vmem [resolvable:$true] %s57
      %63 = dma.hbm_to_vmem [thread:$0]  %s3, 24576, %s58, [#allocation9], 256, 256, 16
    $region17: #{tpu_custom_call.1} parent=1 // pred_fallthru
      _
    // Predicated region
    $region18: #{tpu_custom_call.1} parent=1 // pred_check
      _
    $region19: #{tpu_custom_call.1} parent=1 // pred_check_branch
      %65 = sbr.rel (0) target = $region21
    $region20: #{tpu_custom_call.1} parent=1 // pred_region
      %s67 = ssub.s32 64, 64
      %68 = vsyncadd [#allocation9], %s67
      %s70 = sshll.u32 [#allocation10], 4
      %s71 = int_to_ptr.vmem [resolvable:$true] %s70
      %73 = dma.hbm_to_vmem [thread:$0]  %s4, 64, %s71, [#allocation9]
    $region21: #{tpu_custom_call.1} parent=1 // pred_fallthru
      _
    // Predicated region
    $region22: #{tpu_custom_call.1} parent=1 // pred_check
      _
    $region23: #{tpu_custom_call.1} parent=1 // pred_check_branch
      %75 = sbr.rel (0) target = $region25
    $region24: #{tpu_custom_call.1} parent=1 // pred_region
      %s77 = ssub.s32 8192, 8192
      %78 = vsyncadd [#allocation12], %s77
      %s79 = sshll.u32 [#allocation11], 4
      %s80 = int_to_ptr.vmem [resolvable:$true] %s79
      %85 = dma.hbm_to_vmem [thread:$0]  %s5, 8192, %s80, [#allocation12], 128, 128, 8
    $region25: #{tpu_custom_call.1} parent=1 // pred_fallthru
      _
    // Predicated region
    $region26: #{tpu_custom_call.1} parent=1 // pred_check
      _
    $region27: #{tpu_custom_call.1} parent=1 // pred_check_branch
      %87 = sbr.rel (0) target = $region29
    $region28: #{tpu_custom_call.1} parent=1 // pred_region
      %s89 = ssub.s32 32, 32
      %90 = vsyncadd [#allocation12], %s89
      %s92 = sshll.u32 [#allocation13], 4
      %s93 = int_to_ptr.vmem [resolvable:$true] %s92
      %95 = dma.hbm_to_vmem [thread:$0]  %s6, 32, %s93, [#allocation12]
    $region29: #{tpu_custom_call.1} parent=1 // pred_fallthru
      _
    // Predicated region
    $region30: #{tpu_custom_call.1} parent=1 // pred_check
      _
    $region31: #{tpu_custom_call.1} parent=1 // pred_check_branch
      %97 = sbr.rel (0) target = $region33
    $region32: #{tpu_custom_call.1} parent=1 // pred_region
      %s99 = ssub.s32 2048, 2048
      %100 = vsyncadd [#allocation15], %s99
      %s101 = sshll.u32 [#allocation14], 4
      %s102 = int_to_ptr.vmem [resolvable:$true] %s101
      %107 = dma.hbm_to_vmem [thread:$0]  %s7, 2048, %s102, [#allocation15], 64, 64, 4
    $region33: #{tpu_custom_call.1} parent=1 // pred_fallthru
      _
    // Predicated region
    $region34: #{tpu_custom_call.1} parent=1 // pred_check
      _
    $region35: #{tpu_custom_call.1} parent=1 // pred_check_branch
      %109 = sbr.rel (0) target = $region37
    $region36: #{tpu_custom_call.1} parent=1 // pred_region
      %s111 = ssub.s32 16, 16
      %112 = vsyncadd [#allocation15], %s111
      %s114 = sshll.u32 [#allocation16], 4
      %s115 = int_to_ptr.vmem [resolvable:$true] %s114
      %117 = dma.hbm_to_vmem [thread:$0]  %s8, 16, %s115, [#allocation15]
    $region37: #{tpu_custom_call.1} parent=1 // pred_fallthru
      _
    // Predicated region
    $region38: #{tpu_custom_call.1} parent=1 // pred_check
      _
    $region39: #{tpu_custom_call.1} parent=1 // pred_check_branch
      %119 = sbr.rel (0) target = $region41
    $region40: #{tpu_custom_call.1} parent=1 // pred_region
      %120 = dma.done [#allocation3], 1024
    $region41: #{tpu_custom_call.1} parent=1 // pred_fallthru
      _
    // Predicated region
    $region42: #{tpu_custom_call.1} parent=1 // pred_check
      _
    $region43: #{tpu_custom_call.1} parent=1 // pred_check_branch
      %122 = sbr.rel (0) target = $region45
    $region44: #{tpu_custom_call.1} parent=1 // pred_region
      %123 = dma.done [#allocation6], 49152
    $region45: #{tpu_custom_call.1} parent=1 // pred_fallthru
      _
    // Predicated region
    $region46: #{tpu_custom_call.1} parent=1 // pred_check
      _
    $region47: #{tpu_custom_call.1} parent=1 // pred_check_branch
      %125 = sbr.rel (0) target = $region49
    $region48: #{tpu_custom_call.1} parent=1 // pred_region
      %126 = dma.done [#allocation6], 96
    $region49: #{tpu_custom_call.1} parent=1 // pred_fallthru
      _
    // Predicated region
    $region50: #{tpu_custom_call.1} parent=1 // pred_check
      _
    $region51: #{tpu_custom_call.1} parent=1 // pred_check_branch
      %128 = sbr.rel (0) target = $region53
    $region52: #{tpu_custom_call.1} parent=1 // pred_region
      %129 = dma.done [#allocation9], 24576
    $region53: #{tpu_custom_call.1} parent=1 // pred_fallthru
      _
    // Predicated region
    $region54: #{tpu_custom_call.1} parent=1 // pred_check
      _
    $region55: #{tpu_custom_call.1} parent=1 // pred_check_branch
      %131 = sbr.rel (0) target = $region57
    $region56: #{tpu_custom_call.1} parent=1 // pred_region
      %132 = dma.done [#allocation9], 64
    $region57: #{tpu_custom_call.1} parent=1 // pred_fallthru
      _
    // Predicated region
    $region58: #{tpu_custom_call.1} parent=1 // pred_check
      _
    $region59: #{tpu_custom_call.1} parent=1 // pred_check_branch
      %134 = sbr.rel (0) target = $region61
    $region60: #{tpu_custom_call.1} parent=1 // pred_region
      %135 = dma.done [#allocation12], 8192
    $region61: #{tpu_custom_call.1} parent=1 // pred_fallthru
      _
    // Predicated region
    $region62: #{tpu_custom_call.1} parent=1 // pred_check
      _
    $region63: #{tpu_custom_call.1} parent=1 // pred_check_branch
      %137 = sbr.rel (0) target = $region65
    $region64: #{tpu_custom_call.1} parent=1 // pred_region
      %138 = dma.done [#allocation12], 32
    $region65: #{tpu_custom_call.1} parent=1 // pred_fallthru
      _
    // Predicated region
    $region66: #{tpu_custom_call.1} parent=1 // pred_check
      _
    $region67: #{tpu_custom_call.1} parent=1 // pred_check_branch
      %140 = sbr.rel (0) target = $region69
    $region68: #{tpu_custom_call.1} parent=1 // pred_region
      %141 = dma.done [#allocation15], 2048
    $region69: #{tpu_custom_call.1} parent=1 // pred_fallthru
      _
    // Predicated region
    $region70: #{tpu_custom_call.1} parent=1 // pred_check
      _
    $region71: #{tpu_custom_call.1} parent=1 // pred_check_branch
      %143 = sbr.rel (0) target = $region73
    $region72: #{tpu_custom_call.1} parent=1 // pred_region
      %144 = dma.done [#allocation15], 16
    $region73: #{tpu_custom_call.1} parent=1 // pred_fallthru
      _
    %v146 = vld [vmem:[#allocation2] sm:$0xff]
    %v147 = vld [vmem:[#allocation2 + $0x8] sm:$0xff]
    %v148 = vld [vmem:[#allocation2 + $0x10] sm:$0xff]
    %v149 = vld [vmem:[#allocation2 + $0x18] sm:$0xff]
    %v150 = vld [vmem:[#allocation2 + $0x20] sm:$0xff]
    %v151 = vld [vmem:[#allocation2 + $0x28] sm:$0xff]
    %v152 = vld [vmem:[#allocation2 + $0x30] sm:$0xff]
    %v153 = vld [vmem:[#allocation2 + $0x38] sm:$0xff]
    %v154 = vpack.c.bf16 %v146, %v146
    %v155 = vpack.c.bf16 %v147, %v147
    %v156 = vpack.c.bf16 %v148, %v148
    %v157 = vpack.c.bf16 %v149, %v149
    %v158 = vpack.c.bf16 %v150, %v150
    %v159 = vpack.c.bf16 %v151, %v151
    %v160 = vpack.c.bf16 %v152, %v152
    %v161 = vpack.c.bf16 %v153, %v153
    %v162 = vld [vmem:[#allocation5] sm:$0xff]
    %v163 = vld [vmem:[#allocation5 + $0x8] sm:$0xff]
    %v164 = vld [vmem:[#allocation5 + $0x10] sm:$0xff]
    %v165 = vld [vmem:[#allocation5 + $0x18] sm:$0xff]
    %v166 = vld [vmem:[#allocation5 + $0x20] sm:$0xff]
    %v167 = vld [vmem:[#allocation5 + $0x28] sm:$0xff]
    %v168 = vld [vmem:[#allocation5 + $0x30] sm:$0xff]
    %v169 = vld [vmem:[#allocation5 + $0x38] sm:$0xff]
    %v170 = vld [vmem:[#allocation5 + $0x40] sm:$0xff]
    %v171 = vld [vmem:[#allocation5 + $0x48] sm:$0xff]
    %v172 = vld [vmem:[#allocation5 + $0x50] sm:$0xff]
    %v173 = vld [vmem:[#allocation5 + $0x58] sm:$0xff]
    %v174 = vld [vmem:[#allocation5 + $0x60] sm:$0xff]
    %v175 = vld [vmem:[#allocation5 + $0x68] sm:$0xff]
    %v176 = vld [vmem:[#allocation5 + $0x70] sm:$0xff]
    %v177 = vld [vmem:[#allocation5 + $0x78] sm:$0xff]
    %v178 = vld [vmem:[#allocation5 + $0x80] sm:$0xff]
    %v179 = vld [vmem:[#allocation5 + $0x88] sm:$0xff]
    %v180 = vld [vmem:[#allocation5 + $0x90] sm:$0xff]
    %v181 = vld [vmem:[#allocation5 + $0x98] sm:$0xff]
    %v182 = vld [vmem:[#allocation5 + $0xa0] sm:$0xff]
    %v183 = vld [vmem:[#allocation5 + $0xa8] sm:$0xff]
    %v184 = vld [vmem:[#allocation5 + $0xb0] sm:$0xff]
    %v185 = vld [vmem:[#allocation5 + $0xb8] sm:$0xff]
    %v186 = vld [vmem:[#allocation5 + $0xc0] sm:$0xff]
    %v187 = vld [vmem:[#allocation5 + $0xc8] sm:$0xff]
    %v188 = vld [vmem:[#allocation5 + $0xd0] sm:$0xff]
    %v189 = vld [vmem:[#allocation5 + $0xd8] sm:$0xff]
    %v190 = vld [vmem:[#allocation5 + $0xe0] sm:$0xff]
    %v191 = vld [vmem:[#allocation5 + $0xe8] sm:$0xff]
    %v192 = vld [vmem:[#allocation5 + $0xf0] sm:$0xff]
    %v193 = vld [vmem:[#allocation5 + $0xf8] sm:$0xff]
    %v194 = vld [vmem:[#allocation5 + $0x100] sm:$0xff]
    %v195 = vld [vmem:[#allocation5 + $0x108] sm:$0xff]
    %v196 = vld [vmem:[#allocation5 + $0x110] sm:$0xff]
    %v197 = vld [vmem:[#allocation5 + $0x118] sm:$0xff]
    %v198 = vld [vmem:[#allocation5 + $0x120] sm:$0xff]
    %v199 = vld [vmem:[#allocation5 + $0x128] sm:$0xff]
    %v200 = vld [vmem:[#allocation5 + $0x130] sm:$0xff]
    %v201 = vld [vmem:[#allocation5 + $0x138] sm:$0xff]
    %v202 = vld [vmem:[#allocation5 + $0x140] sm:$0xff]
    %v203 = vld [vmem:[#allocation5 + $0x148] sm:$0xff]
    %v204 = vld [vmem:[#allocation5 + $0x150] sm:$0xff]
    %v205 = vld [vmem:[#allocation5 + $0x158] sm:$0xff]
    %v206 = vld [vmem:[#allocation5 + $0x160] sm:$0xff]
    %v207 = vld [vmem:[#allocation5 + $0x168] sm:$0xff]
    %v208 = vld [vmem:[#allocation5 + $0x170] sm:$0xff]
    %v209 = vld [vmem:[#allocation5 + $0x178] sm:$0xff]
    %v210 = vld [vmem:[#allocation5 + $0x180] sm:$0xff]
    %v211 = vld [vmem:[#allocation5 + $0x188] sm:$0xff]
    %v212 = vld [vmem:[#allocation5 + $0x190] sm:$0xff]
    %v213 = vld [vmem:[#allocation5 + $0x198] sm:$0xff]
    %v214 = vld [vmem:[#allocation5 + $0x1a0] sm:$0xff]
    %v215 = vld [vmem:[#allocation5 + $0x1a8] sm:$0xff]
    %v216 = vld [vmem:[#allocation5 + $0x1b0] sm:$0xff]
    %v217 = vld [vmem:[#allocation5 + $0x1b8] sm:$0xff]
    %v218 = vld [vmem:[#allocation5 + $0x1c0] sm:$0xff]
    %v219 = vld [vmem:[#allocation5 + $0x1c8] sm:$0xff]
    %v220 = vld [vmem:[#allocation5 + $0x1d0] sm:$0xff]
    %v221 = vld [vmem:[#allocation5 + $0x1d8] sm:$0xff]
    %v222 = vld [vmem:[#allocation5 + $0x1e0] sm:$0xff]
    %v223 = vld [vmem:[#allocation5 + $0x1e8] sm:$0xff]
    %v224 = vld [vmem:[#allocation5 + $0x1f0] sm:$0xff]
    %v225 = vld [vmem:[#allocation5 + $0x1f8] sm:$0xff]
    %v226 = vld [vmem:[#allocation5 + $0x200] sm:$0xff]
    %v227 = vld [vmem:[#allocation5 + $0x208] sm:$0xff]
    %v228 = vld [vmem:[#allocation5 + $0x210] sm:$0xff]
    %v229 = vld [vmem:[#allocation5 + $0x218] sm:$0xff]
    %v230 = vld [vmem:[#allocation5 + $0x220] sm:$0xff]
    %v231 = vld [vmem:[#allocation5 + $0x228] sm:$0xff]
    %v232 = vld [vmem:[#allocation5 + $0x230] sm:$0xff]
    %v233 = vld [vmem:[#allocation5 + $0x238] sm:$0xff]
    %v234 = vld [vmem:[#allocation5 + $0x240] sm:$0xff]
    %v235 = vld [vmem:[#allocation5 + $0x248] sm:$0xff]
    %v236 = vld [vmem:[#allocation5 + $0x250] sm:$0xff]
    %v237 = vld [vmem:[#allocation5 + $0x258] sm:$0xff]
    %v238 = vld [vmem:[#allocation5 + $0x260] sm:$0xff]
    %v239 = vld [vmem:[#allocation5 + $0x268] sm:$0xff]
    %v240 = vld [vmem:[#allocation5 + $0x270] sm:$0xff]
    %v241 = vld [vmem:[#allocation5 + $0x278] sm:$0xff]
    %v242 = vld [vmem:[#allocation5 + $0x280] sm:$0xff]
    %v243 = vld [vmem:[#allocation5 + $0x288] sm:$0xff]
    %v244 = vld [vmem:[#allocation5 + $0x290] sm:$0xff]
    %v245 = vld [vmem:[#allocation5 + $0x298] sm:$0xff]
    %v246 = vld [vmem:[#allocation5 + $0x2a0] sm:$0xff]
    %v247 = vld [vmem:[#allocation5 + $0x2a8] sm:$0xff]
    %v248 = vld [vmem:[#allocation5 + $0x2b0] sm:$0xff]
    %v249 = vld [vmem:[#allocation5 + $0x2b8] sm:$0xff]
    %v250 = vld [vmem:[#allocation5 + $0x2c0] sm:$0xff]
    %v251 = vld [vmem:[#allocation5 + $0x2c8] sm:$0xff]
    %v252 = vld [vmem:[#allocation5 + $0x2d0] sm:$0xff]
    %v253 = vld [vmem:[#allocation5 + $0x2d8] sm:$0xff]
    %v254 = vld [vmem:[#allocation5 + $0x2e0] sm:$0xff]
    %v255 = vld [vmem:[#allocation5 + $0x2e8] sm:$0xff]
    %v256 = vld [vmem:[#allocation5 + $0x2f0] sm:$0xff]
    %v257 = vld [vmem:[#allocation5 + $0x2f8] sm:$0xff]
    %v258 = vld [vmem:[#allocation5 + $0x300] sm:$0xff]
    %v259 = vld [vmem:[#allocation5 + $0x308] sm:$0xff]
    %v260 = vld [vmem:[#allocation5 + $0x310] sm:$0xff]
    %v261 = vld [vmem:[#allocation5 + $0x318] sm:$0xff]
    %v262 = vld [vmem:[#allocation5 + $0x320] sm:$0xff]
    %v263 = vld [vmem:[#allocation5 + $0x328] sm:$0xff]
    %v264 = vld [vmem:[#allocation5 + $0x330] sm:$0xff]
    %v265 = vld [vmem:[#allocation5 + $0x338] sm:$0xff]
    %v266 = vld [vmem:[#allocation5 + $0x340] sm:$0xff]
    %v267 = vld [vmem:[#allocation5 + $0x348] sm:$0xff]
    %v268 = vld [vmem:[#allocation5 + $0x350] sm:$0xff]
    %v269 = vld [vmem:[#allocation5 + $0x358] sm:$0xff]
    %v270 = vld [vmem:[#allocation5 + $0x360] sm:$0xff]
    %v271 = vld [vmem:[#allocation5 + $0x368] sm:$0xff]
    %v272 = vld [vmem:[#allocation5 + $0x370] sm:$0xff]
    %v273 = vld [vmem:[#allocation5 + $0x378] sm:$0xff]
    %v274 = vld [vmem:[#allocation5 + $0x380] sm:$0xff]
    %v275 = vld [vmem:[#allocation5 + $0x388] sm:$0xff]
    %v276 = vld [vmem:[#allocation5 + $0x390] sm:$0xff]
    %v277 = vld [vmem:[#allocation5 + $0x398] sm:$0xff]
    %v278 = vld [vmem:[#allocation5 + $0x3a0] sm:$0xff]
    %v279 = vld [vmem:[#allocation5 + $0x3a8] sm:$0xff]
    %v280 = vld [vmem:[#allocation5 + $0x3b0] sm:$0xff]
    %v281 = vld [vmem:[#allocation5 + $0x3b8] sm:$0xff]
    %v282 = vld [vmem:[#allocation5 + $0x3c0] sm:$0xff]
    %v283 = vld [vmem:[#allocation5 + $0x3c8] sm:$0xff]
    %v284 = vld [vmem:[#allocation5 + $0x3d0] sm:$0xff]
    %v285 = vld [vmem:[#allocation5 + $0x3d8] sm:$0xff]
    %v286 = vld [vmem:[#allocation5 + $0x3e0] sm:$0xff]
    %v287 = vld [vmem:[#allocation5 + $0x3e8] sm:$0xff]
    %v288 = vld [vmem:[#allocation5 + $0x3f0] sm:$0xff]
    %v289 = vld [vmem:[#allocation5 + $0x3f8] sm:$0xff]
    %v290 = vld [vmem:[#allocation5 + $0x400] sm:$0xff]
    %v291 = vld [vmem:[#allocation5 + $0x408] sm:$0xff]
    %v292 = vld [vmem:[#allocation5 + $0x410] sm:$0xff]
    %v293 = vld [vmem:[#allocation5 + $0x418] sm:$0xff]
    %v294 = vld [vmem:[#allocation5 + $0x420] sm:$0xff]
    %v295 = vld [vmem:[#allocation5 + $0x428] sm:$0xff]
    %v296 = vld [vmem:[#allocation5 + $0x430] sm:$0xff]
    %v297 = vld [vmem:[#allocation5 + $0x438] sm:$0xff]
    %v298 = vld [vmem:[#allocation5 + $0x440] sm:$0xff]
    %v299 = vld [vmem:[#allocation5 + $0x448] sm:$0xff]
    %v300 = vld [vmem:[#allocation5 + $0x450] sm:$0xff]
    %v301 = vld [vmem:[#allocation5 + $0x458] sm:$0xff]
    %v302 = vld [vmem:[#allocation5 + $0x460] sm:$0xff]
    %v303 = vld [vmem:[#allocation5 + $0x468] sm:$0xff]
    %v304 = vld [vmem:[#allocation5 + $0x470] sm:$0xff]
    %v305 = vld [vmem:[#allocation5 + $0x478] sm:$0xff]
    %v306 = vld [vmem:[#allocation5 + $0x480] sm:$0xff]
    %v307 = vld [vmem:[#allocation5 + $0x488] sm:$0xff]
    %v308 = vld [vmem:[#allocation5 + $0x490] sm:$0xff]
    %v309 = vld [vmem:[#allocation5 + $0x498] sm:$0xff]
    %v310 = vld [vmem:[#allocation5 + $0x4a0] sm:$0xff]
    %v311 = vld [vmem:[#allocation5 + $0x4a8] sm:$0xff]
    %v312 = vld [vmem:[#allocation5 + $0x4b0] sm:$0xff]
    %v313 = vld [vmem:[#allocation5 + $0x4b8] sm:$0xff]
    %v314 = vld [vmem:[#allocation5 + $0x4c0] sm:$0xff]
    %v315 = vld [vmem:[#allocation5 + $0x4c8] sm:$0xff]
    %v316 = vld [vmem:[#allocation5 + $0x4d0] sm:$0xff]
    %v317 = vld [vmem:[#allocation5 + $0x4d8] sm:$0xff]
    %v318 = vld [vmem:[#allocation5 + $0x4e0] sm:$0xff]
    %v319 = vld [vmem:[#allocation5 + $0x4e8] sm:$0xff]
    %v320 = vld [vmem:[#allocation5 + $0x4f0] sm:$0xff]
    %v321 = vld [vmem:[#allocation5 + $0x4f8] sm:$0xff]
    %v322 = vld [vmem:[#allocation5 + $0x500] sm:$0xff]
    %v323 = vld [vmem:[#allocation5 + $0x508] sm:$0xff]
    %v324 = vld [vmem:[#allocation5 + $0x510] sm:$0xff]
    %v325 = vld [vmem:[#allocation5 + $0x518] sm:$0xff]
    %v326 = vld [vmem:[#allocation5 + $0x520] sm:$0xff]
    %v327 = vld [vmem:[#allocation5 + $0x528] sm:$0xff]
    %v328 = vld [vmem:[#allocation5 + $0x530] sm:$0xff]
    %v329 = vld [vmem:[#allocation5 + $0x538] sm:$0xff]
    %v330 = vld [vmem:[#allocation5 + $0x540] sm:$0xff]
    %v331 = vld [vmem:[#allocation5 + $0x548] sm:$0xff]
    %v332 = vld [vmem:[#allocation5 + $0x550] sm:$0xff]
    %v333 = vld [vmem:[#allocation5 + $0x558] sm:$0xff]
    %v334 = vld [vmem:[#allocation5 + $0x560] sm:$0xff]
    %v335 = vld [vmem:[#allocation5 + $0x568] sm:$0xff]
    %v336 = vld [vmem:[#allocation5 + $0x570] sm:$0xff]
    %v337 = vld [vmem:[#allocation5 + $0x578] sm:$0xff]
    %v338 = vld [vmem:[#allocation5 + $0x580] sm:$0xff]
    %v339 = vld [vmem:[#allocation5 + $0x588] sm:$0xff]
    %v340 = vld [vmem:[#allocation5 + $0x590] sm:$0xff]
    %v341 = vld [vmem:[#allocation5 + $0x598] sm:$0xff]
    %v342 = vld [vmem:[#allocation5 + $0x5a0] sm:$0xff]
    %v343 = vld [vmem:[#allocation5 + $0x5a8] sm:$0xff]
    %v344 = vld [vmem:[#allocation5 + $0x5b0] sm:$0xff]
    %v345 = vld [vmem:[#allocation5 + $0x5b8] sm:$0xff]
    %v346 = vld [vmem:[#allocation5 + $0x5c0] sm:$0xff]
    %v347 = vld [vmem:[#allocation5 + $0x5c8] sm:$0xff]
    %v348 = vld [vmem:[#allocation5 + $0x5d0] sm:$0xff]
    %v349 = vld [vmem:[#allocation5 + $0x5d8] sm:$0xff]
    %v350 = vld [vmem:[#allocation5 + $0x5e0] sm:$0xff]
    %v351 = vld [vmem:[#allocation5 + $0x5e8] sm:$0xff]
    %v352 = vld [vmem:[#allocation5 + $0x5f0] sm:$0xff]
    %v353 = vld [vmem:[#allocation5 + $0x5f8] sm:$0xff]
    %v354 = vld [vmem:[#allocation5 + $0x600] sm:$0xff]
    %v355 = vld [vmem:[#allocation5 + $0x608] sm:$0xff]
    %v356 = vld [vmem:[#allocation5 + $0x610] sm:$0xff]
    %v357 = vld [vmem:[#allocation5 + $0x618] sm:$0xff]
    %v358 = vld [vmem:[#allocation5 + $0x620] sm:$0xff]
    %v359 = vld [vmem:[#allocation5 + $0x628] sm:$0xff]
    %v360 = vld [vmem:[#allocation5 + $0x630] sm:$0xff]
    %v361 = vld [vmem:[#allocation5 + $0x638] sm:$0xff]
    %v362 = vld [vmem:[#allocation5 + $0x640] sm:$0xff]
    %v363 = vld [vmem:[#allocation5 + $0x648] sm:$0xff]
    %v364 = vld [vmem:[#allocation5 + $0x650] sm:$0xff]
    %v365 = vld [vmem:[#allocation5 + $0x658] sm:$0xff]
    %v366 = vld [vmem:[#allocation5 + $0x660] sm:$0xff]
    %v367 = vld [vmem:[#allocation5 + $0x668] sm:$0xff]
    %v368 = vld [vmem:[#allocation5 + $0x670] sm:$0xff]
    %v369 = vld [vmem:[#allocation5 + $0x678] sm:$0xff]
    %v370 = vld [vmem:[#allocation5 + $0x680] sm:$0xff]
    %v371 = vld [vmem:[#allocation5 + $0x688] sm:$0xff]
    %v372 = vld [vmem:[#allocation5 + $0x690] sm:$0xff]
    %v373 = vld [vmem:[#allocation5 + $0x698] sm:$0xff]
    %v374 = vld [vmem:[#allocation5 + $0x6a0] sm:$0xff]
    %v375 = vld [vmem:[#allocation5 + $0x6a8] sm:$0xff]
    %v376 = vld [vmem:[#allocation5 + $0x6b0] sm:$0xff]
    %v377 = vld [vmem:[#allocation5 + $0x6b8] sm:$0xff]
    %v378 = vld [vmem:[#allocation5 + $0x6c0] sm:$0xff]
    %v379 = vld [vmem:[#allocation5 + $0x6c8] sm:$0xff]
    %v380 = vld [vmem:[#allocation5 + $0x6d0] sm:$0xff]
    %v381 = vld [vmem:[#allocation5 + $0x6d8] sm:$0xff]
    %v382 = vld [vmem:[#allocation5 + $0x6e0] sm:$0xff]
    %v383 = vld [vmem:[#allocation5 + $0x6e8] sm:$0xff]
    %v384 = vld [vmem:[#allocation5 + $0x6f0] sm:$0xff]
    %v385 = vld [vmem:[#allocation5 + $0x6f8] sm:$0xff]
    %v386 = vld [vmem:[#allocation5 + $0x700] sm:$0xff]
    %v387 = vld [vmem:[#allocation5 + $0x708] sm:$0xff]
    %v388 = vld [vmem:[#allocation5 + $0x710] sm:$0xff]
    %v389 = vld [vmem:[#allocation5 + $0x718] sm:$0xff]
    %v390 = vld [vmem:[#allocation5 + $0x720] sm:$0xff]
    %v391 = vld [vmem:[#allocation5 + $0x728] sm:$0xff]
    %v392 = vld [vmem:[#allocation5 + $0x730] sm:$0xff]
    %v393 = vld [vmem:[#allocation5 + $0x738] sm:$0xff]
    %v394 = vld [vmem:[#allocation5 + $0x740] sm:$0xff]
    %v395 = vld [vmem:[#allocation5 + $0x748] sm:$0xff]
    %v396 = vld [vmem:[#allocation5 + $0x750] sm:$0xff]
    %v397 = vld [vmem:[#allocation5 + $0x758] sm:$0xff]
    %v398 = vld [vmem:[#allocation5 + $0x760] sm:$0xff]
    %v399 = vld [vmem:[#allocation5 + $0x768] sm:$0xff]
    %v400 = vld [vmem:[#allocation5 + $0x770] sm:$0xff]
    %v401 = vld [vmem:[#allocation5 + $0x778] sm:$0xff]
    %v402 = vld [vmem:[#allocation5 + $0x780] sm:$0xff]
    %v403 = vld [vmem:[#allocation5 + $0x788] sm:$0xff]
    %v404 = vld [vmem:[#allocation5 + $0x790] sm:$0xff]
    %v405 = vld [vmem:[#allocation5 + $0x798] sm:$0xff]
    %v406 = vld [vmem:[#allocation5 + $0x7a0] sm:$0xff]
    %v407 = vld [vmem:[#allocation5 + $0x7a8] sm:$0xff]
    %v408 = vld [vmem:[#allocation5 + $0x7b0] sm:$0xff]
    %v409 = vld [vmem:[#allocation5 + $0x7b8] sm:$0xff]
    %v410 = vld [vmem:[#allocation5 + $0x7c0] sm:$0xff]
    %v411 = vld [vmem:[#allocation5 + $0x7c8] sm:$0xff]
    %v412 = vld [vmem:[#allocation5 + $0x7d0] sm:$0xff]
    %v413 = vld [vmem:[#allocation5 + $0x7d8] sm:$0xff]
    %v414 = vld [vmem:[#allocation5 + $0x7e0] sm:$0xff]
    %v415 = vld [vmem:[#allocation5 + $0x7e8] sm:$0xff]
    %v416 = vld [vmem:[#allocation5 + $0x7f0] sm:$0xff]
    %v417 = vld [vmem:[#allocation5 + $0x7f8] sm:$0xff]
    %v418 = vld [vmem:[#allocation5 + $0x800] sm:$0xff]
    %v419 = vld [vmem:[#allocation5 + $0x808] sm:$0xff]
    %v420 = vld [vmem:[#allocation5 + $0x810] sm:$0xff]
    %v421 = vld [vmem:[#allocation5 + $0x818] sm:$0xff]
    %v422 = vld [vmem:[#allocation5 + $0x820] sm:$0xff]
    %v423 = vld [vmem:[#allocation5 + $0x828] sm:$0xff]
    %v424 = vld [vmem:[#allocation5 + $0x830] sm:$0xff]
    %v425 = vld [vmem:[#allocation5 + $0x838] sm:$0xff]
    %v426 = vld [vmem:[#allocation5 + $0x840] sm:$0xff]
    %v427 = vld [vmem:[#allocation5 + $0x848] sm:$0xff]
    %v428 = vld [vmem:[#allocation5 + $0x850] sm:$0xff]
    %v429 = vld [vmem:[#allocation5 + $0x858] sm:$0xff]
    %v430 = vld [vmem:[#allocation5 + $0x860] sm:$0xff]
    %v431 = vld [vmem:[#allocation5 + $0x868] sm:$0xff]
    %v432 = vld [vmem:[#allocation5 + $0x870] sm:$0xff]
    %v433 = vld [vmem:[#allocation5 + $0x878] sm:$0xff]
    %v434 = vld [vmem:[#allocation5 + $0x880] sm:$0xff]
    %v435 = vld [vmem:[#allocation5 + $0x888] sm:$0xff]
    %v436 = vld [vmem:[#allocation5 + $0x890] sm:$0xff]
    %v437 = vld [vmem:[#allocation5 + $0x898] sm:$0xff]
    %v438 = vld [vmem:[#allocation5 + $0x8a0] sm:$0xff]
    %v439 = vld [vmem:[#allocation5 + $0x8a8] sm:$0xff]
    %v440 = vld [vmem:[#allocation5 + $0x8b0] sm:$0xff]
    %v441 = vld [vmem:[#allocation5 + $0x8b8] sm:$0xff]
    %v442 = vld [vmem:[#allocation5 + $0x8c0] sm:$0xff]
    %v443 = vld [vmem:[#allocation5 + $0x8c8] sm:$0xff]
    %v444 = vld [vmem:[#allocation5 + $0x8d0] sm:$0xff]
    %v445 = vld [vmem:[#allocation5 + $0x8d8] sm:$0xff]
    %v446 = vld [vmem:[#allocation5 + $0x8e0] sm:$0xff]
    %v447 = vld [vmem:[#allocation5 + $0x8e8] sm:$0xff]
    %v448 = vld [vmem:[#allocation5 + $0x8f0] sm:$0xff]
    %v449 = vld [vmem:[#allocation5 + $0x8f8] sm:$0xff]
    %v450 = vld [vmem:[#allocation5 + $0x900] sm:$0xff]
    %v451 = vld [vmem:[#allocation5 + $0x908] sm:$0xff]
    %v452 = vld [vmem:[#allocation5 + $0x910] sm:$0xff]
    %v453 = vld [vmem:[#allocation5 + $0x918] sm:$0xff]
    %v454 = vld [vmem:[#allocation5 + $0x920] sm:$0xff]
    %v455 = vld [vmem:[#allocation5 + $0x928] sm:$0xff]
    %v456 = vld [vmem:[#allocation5 + $0x930] sm:$0xff]
    %v457 = vld [vmem:[#allocation5 + $0x938] sm:$0xff]
    %v458 = vld [vmem:[#allocation5 + $0x940] sm:$0xff]
    %v459 = vld [vmem:[#allocation5 + $0x948] sm:$0xff]
    %v460 = vld [vmem:[#allocation5 + $0x950] sm:$0xff]
    %v461 = vld [vmem:[#allocation5 + $0x958] sm:$0xff]
    %v462 = vld [vmem:[#allocation5 + $0x960] sm:$0xff]
    %v463 = vld [vmem:[#allocation5 + $0x968] sm:$0xff]
    %v464 = vld [vmem:[#allocation5 + $0x970] sm:$0xff]
    %v465 = vld [vmem:[#allocation5 + $0x978] sm:$0xff]
    %v466 = vld [vmem:[#allocation5 + $0x980] sm:$0xff]
    %v467 = vld [vmem:[#allocation5 + $0x988] sm:$0xff]
    %v468 = vld [vmem:[#allocation5 + $0x990] sm:$0xff]
    %v469 = vld [vmem:[#allocation5 + $0x998] sm:$0xff]
    %v470 = vld [vmem:[#allocation5 + $0x9a0] sm:$0xff]
    %v471 = vld [vmem:[#allocation5 + $0x9a8] sm:$0xff]
    %v472 = vld [vmem:[#allocation5 + $0x9b0] sm:$0xff]
    %v473 = vld [vmem:[#allocation5 + $0x9b8] sm:$0xff]
    %v474 = vld [vmem:[#allocation5 + $0x9c0] sm:$0xff]
    %v475 = vld [vmem:[#allocation5 + $0x9c8] sm:$0xff]
    %v476 = vld [vmem:[#allocation5 + $0x9d0] sm:$0xff]
    %v477 = vld [vmem:[#allocation5 + $0x9d8] sm:$0xff]
    %v478 = vld [vmem:[#allocation5 + $0x9e0] sm:$0xff]
    %v479 = vld [vmem:[#allocation5 + $0x9e8] sm:$0xff]
    %v480 = vld [vmem:[#allocation5 + $0x9f0] sm:$0xff]
    %v481 = vld [vmem:[#allocation5 + $0x9f8] sm:$0xff]
    %v482 = vld [vmem:[#allocation5 + $0xa00] sm:$0xff]
    %v483 = vld [vmem:[#allocation5 + $0xa08] sm:$0xff]
    %v484 = vld [vmem:[#allocation5 + $0xa10] sm:$0xff]
    %v485 = vld [vmem:[#allocation5 + $0xa18] sm:$0xff]
    %v486 = vld [vmem:[#allocation5 + $0xa20] sm:$0xff]
    %v487 = vld [vmem:[#allocation5 + $0xa28] sm:$0xff]
    %v488 = vld [vmem:[#allocation5 + $0xa30] sm:$0xff]
    %v489 = vld [vmem:[#allocation5 + $0xa38] sm:$0xff]
    %v490 = vld [vmem:[#allocation5 + $0xa40] sm:$0xff]
    %v491 = vld [vmem:[#allocation5 + $0xa48] sm:$0xff]
    %v492 = vld [vmem:[#allocation5 + $0xa50] sm:$0xff]
    %v493 = vld [vmem:[#allocation5 + $0xa58] sm:$0xff]
    %v494 = vld [vmem:[#allocation5 + $0xa60] sm:$0xff]
    %v495 = vld [vmem:[#allocation5 + $0xa68] sm:$0xff]
    %v496 = vld [vmem:[#allocation5 + $0xa70] sm:$0xff]
    %v497 = vld [vmem:[#allocation5 + $0xa78] sm:$0xff]
    %v498 = vld [vmem:[#allocation5 + $0xa80] sm:$0xff]
    %v499 = vld [vmem:[#allocation5 + $0xa88] sm:$0xff]
    %v500 = vld [vmem:[#allocation5 + $0xa90] sm:$0xff]
    %v501 = vld [vmem:[#allocation5 + $0xa98] sm:$0xff]
    %v502 = vld [vmem:[#allocation5 + $0xaa0] sm:$0xff]
    %v503 = vld [vmem:[#allocation5 + $0xaa8] sm:$0xff]
    %v504 = vld [vmem:[#allocation5 + $0xab0] sm:$0xff]
    %v505 = vld [vmem:[#allocation5 + $0xab8] sm:$0xff]
    %v506 = vld [vmem:[#allocation5 + $0xac0] sm:$0xff]
    %v507 = vld [vmem:[#allocation5 + $0xac8] sm:$0xff]
    %v508 = vld [vmem:[#allocation5 + $0xad0] sm:$0xff]
    %v509 = vld [vmem:[#allocation5 + $0xad8] sm:$0xff]
    %v510 = vld [vmem:[#allocation5 + $0xae0] sm:$0xff]
    %v511 = vld [vmem:[#allocation5 + $0xae8] sm:$0xff]
    %v512 = vld [vmem:[#allocation5 + $0xaf0] sm:$0xff]
    %v513 = vld [vmem:[#allocation5 + $0xaf8] sm:$0xff]
    %v514 = vld [vmem:[#allocation5 + $0xb00] sm:$0xff]
    %v515 = vld [vmem:[#allocation5 + $0xb08] sm:$0xff]
    %v516 = vld [vmem:[#allocation5 + $0xb10] sm:$0xff]
    %v517 = vld [vmem:[#allocation5 + $0xb18] sm:$0xff]
    %v518 = vld [vmem:[#allocation5 + $0xb20] sm:$0xff]
    %v519 = vld [vmem:[#allocation5 + $0xb28] sm:$0xff]
    %v520 = vld [vmem:[#allocation5 + $0xb30] sm:$0xff]
    %v521 = vld [vmem:[#allocation5 + $0xb38] sm:$0xff]
    %v522 = vld [vmem:[#allocation5 + $0xb40] sm:$0xff]
    %v523 = vld [vmem:[#allocation5 + $0xb48] sm:$0xff]
    %v524 = vld [vmem:[#allocation5 + $0xb50] sm:$0xff]
    %v525 = vld [vmem:[#allocation5 + $0xb58] sm:$0xff]
    %v526 = vld [vmem:[#allocation5 + $0xb60] sm:$0xff]
    %v527 = vld [vmem:[#allocation5 + $0xb68] sm:$0xff]
    %v528 = vld [vmem:[#allocation5 + $0xb70] sm:$0xff]
    %v529 = vld [vmem:[#allocation5 + $0xb78] sm:$0xff]
    %v530 = vld [vmem:[#allocation5 + $0xb80] sm:$0xff]
    %v531 = vld [vmem:[#allocation5 + $0xb88] sm:$0xff]
    %v532 = vld [vmem:[#allocation5 + $0xb90] sm:$0xff]
    %v533 = vld [vmem:[#allocation5 + $0xb98] sm:$0xff]
    %v534 = vld [vmem:[#allocation5 + $0xba0] sm:$0xff]
    %v535 = vld [vmem:[#allocation5 + $0xba8] sm:$0xff]
    %v536 = vld [vmem:[#allocation5 + $0xbb0] sm:$0xff]
    %v537 = vld [vmem:[#allocation5 + $0xbb8] sm:$0xff]
    %v538 = vld [vmem:[#allocation5 + $0xbc0] sm:$0xff]
    %v539 = vld [vmem:[#allocation5 + $0xbc8] sm:$0xff]
    %v540 = vld [vmem:[#allocation5 + $0xbd0] sm:$0xff]
    %v541 = vld [vmem:[#allocation5 + $0xbd8] sm:$0xff]
    %v542 = vld [vmem:[#allocation5 + $0xbe0] sm:$0xff]
    %v543 = vld [vmem:[#allocation5 + $0xbe8] sm:$0xff]
    %v544 = vld [vmem:[#allocation5 + $0xbf0] sm:$0xff]
    %v545 = vld [vmem:[#allocation5 + $0xbf8] sm:$0xff]
    %v546 = vld [vmem:[#allocation7] sm:$0x3f]
    %v548 = vlaneseq
    %v549 = vshrl.u32 %v548, 7
    %v550 = vsub.s32 0, %v549
    %v551 = vrot.slane %v546, %v550
    %v552 = vlaneseq
    %v553 = vshrl.u32 %v552, 7
    %v554 = vsub.s32 1, %v553
    %v555 = vrot.slane %v546, %v554
    %v556 = vlaneseq
    %v557 = vshrl.u32 %v556, 7
    %v558 = vsub.s32 2, %v557
    %v559 = vrot.slane %v546, %v558
    %v560 = vlaneseq
    %v561 = vshrl.u32 %v560, 7
    %v562 = vsub.s32 3, %v561
    %v563 = vrot.slane %v546, %v562
    %v564 = vlaneseq
    %v565 = vshrl.u32 %v564, 7
    %v566 = vsub.s32 4, %v565
    %v567 = vrot.slane %v546, %v566
    %v568 = vlaneseq
    %v569 = vshrl.u32 %v568, 7
    %v570 = vsub.s32 5, %v569
    %v571 = vrot.slane %v546, %v570
    %v962 = vunpack.c.l.b16 %v162
    %v963 = vunpack.c.h.b16 %v162
    %v964 = vunpack.c.l.b16 %v163
    %v965 = vunpack.c.h.b16 %v163
    %v966 = vunpack.c.l.b16 %v164
    %v967 = vunpack.c.h.b16 %v164
    %v968 = vunpack.c.l.b16 %v165
    %v969 = vunpack.c.h.b16 %v165
    %v970 = vunpack.c.l.b16 %v166
    %v971 = vunpack.c.h.b16 %v166
    %v972 = vunpack.c.l.b16 %v167
    %v973 = vunpack.c.h.b16 %v167
    %v974 = vunpack.c.l.b16 %v168
    %v975 = vunpack.c.h.b16 %v168
    %v976 = vunpack.c.l.b16 %v169
    %v977 = vunpack.c.h.b16 %v169
    %v978 = vunpack.c.l.b16 %v170
    %v979 = vunpack.c.h.b16 %v170
    %v980 = vunpack.c.l.b16 %v171
    %v981 = vunpack.c.h.b16 %v171
    %v982 = vunpack.c.l.b16 %v172
    %v983 = vunpack.c.h.b16 %v172
    %v984 = vunpack.c.l.b16 %v173
    %v985 = vunpack.c.h.b16 %v173
    %v986 = vunpack.c.l.b16 %v174
    %v987 = vunpack.c.h.b16 %v174
    %v988 = vunpack.c.l.b16 %v175
    %v989 = vunpack.c.h.b16 %v175
    %v990 = vunpack.c.l.b16 %v176
    %v991 = vunpack.c.h.b16 %v176
    %v992 = vunpack.c.l.b16 %v177
    %v993 = vunpack.c.h.b16 %v177
    %v994 = vunpack.c.l.b16 %v178
    %v995 = vunpack.c.h.b16 %v178
    %v996 = vunpack.c.l.b16 %v179
    %v997 = vunpack.c.h.b16 %v179
    %v998 = vunpack.c.l.b16 %v180
    %v999 = vunpack.c.h.b16 %v180
    %v1000 = vunpack.c.l.b16 %v181
    %v1001 = vunpack.c.h.b16 %v181
    %v1002 = vunpack.c.l.b16 %v182
    %v1003 = vunpack.c.h.b16 %v182
    %v1004 = vunpack.c.l.b16 %v183
    %v1005 = vunpack.c.h.b16 %v183
    %v1006 = vunpack.c.l.b16 %v184
    %v1007 = vunpack.c.h.b16 %v184
    %v1008 = vunpack.c.l.b16 %v185
    %v1009 = vunpack.c.h.b16 %v185
    %v1010 = vunpack.c.l.b16 %v186
    %v1011 = vunpack.c.h.b16 %v186
    %v1012 = vunpack.c.l.b16 %v187
    %v1013 = vunpack.c.h.b16 %v187
    %v1014 = vunpack.c.l.b16 %v188
    %v1015 = vunpack.c.h.b16 %v188
    %v1016 = vunpack.c.l.b16 %v189
    %v1017 = vunpack.c.h.b16 %v189
    %v1018 = vunpack.c.l.b16 %v190
    %v1019 = vunpack.c.h.b16 %v190
    %v1020 = vunpack.c.l.b16 %v191
    %v1021 = vunpack.c.h.b16 %v191
    %v1022 = vunpack.c.l.b16 %v192
    %v1023 = vunpack.c.h.b16 %v192
    %v1024 = vunpack.c.l.b16 %v193
    %v1025 = vunpack.c.h.b16 %v193
    %v1026 = vunpack.c.l.b16 %v194
    %v1027 = vunpack.c.h.b16 %v194
    %v1028 = vunpack.c.l.b16 %v195
    %v1029 = vunpack.c.h.b16 %v195
    %v1030 = vunpack.c.l.b16 %v196
    %v1031 = vunpack.c.h.b16 %v196
    %v1032 = vunpack.c.l.b16 %v197
    %v1033 = vunpack.c.h.b16 %v197
    %v1034 = vunpack.c.l.b16 %v198
    %v1035 = vunpack.c.h.b16 %v198
    %v1036 = vunpack.c.l.b16 %v199
    %v1037 = vunpack.c.h.b16 %v199
    %v1038 = vunpack.c.l.b16 %v200
    %v1039 = vunpack.c.h.b16 %v200
    %v1040 = vunpack.c.l.b16 %v201
    %v1041 = vunpack.c.h.b16 %v201
    %v1042 = vunpack.c.l.b16 %v202
    %v1043 = vunpack.c.h.b16 %v202
    %v1044 = vunpack.c.l.b16 %v203
    %v1045 = vunpack.c.h.b16 %v203
    %v1046 = vunpack.c.l.b16 %v204
    %v1047 = vunpack.c.h.b16 %v204
    %v1048 = vunpack.c.l.b16 %v205
    %v1049 = vunpack.c.h.b16 %v205
    %v1050 = vunpack.c.l.b16 %v206
    %v1051 = vunpack.c.h.b16 %v206
    %v1052 = vunpack.c.l.b16 %v207
    %v1053 = vunpack.c.h.b16 %v207
    %v1054 = vunpack.c.l.b16 %v208
    %v1055 = vunpack.c.h.b16 %v208
    %v1056 = vunpack.c.l.b16 %v209
    %v1057 = vunpack.c.h.b16 %v209
    %v1058 = vunpack.c.l.b16 %v210
    %v1059 = vunpack.c.h.b16 %v210
    %v1060 = vunpack.c.l.b16 %v211
    %v1061 = vunpack.c.h.b16 %v211
    %v1062 = vunpack.c.l.b16 %v212
    %v1063 = vunpack.c.h.b16 %v212
    %v1064 = vunpack.c.l.b16 %v213
    %v1065 = vunpack.c.h.b16 %v213
    %v1066 = vunpack.c.l.b16 %v214
    %v1067 = vunpack.c.h.b16 %v214
    %v1068 = vunpack.c.l.b16 %v215
    %v1069 = vunpack.c.h.b16 %v215
    %v1070 = vunpack.c.l.b16 %v216
    %v1071 = vunpack.c.h.b16 %v216
    %v1072 = vunpack.c.l.b16 %v217
    %v1073 = vunpack.c.h.b16 %v217
    %v1074 = vunpack.c.l.b16 %v218
    %v1075 = vunpack.c.h.b16 %v218
    %v1076 = vunpack.c.l.b16 %v219
    %v1077 = vunpack.c.h.b16 %v219
    %v1078 = vunpack.c.l.b16 %v220
    %v1079 = vunpack.c.h.b16 %v220
    %v1080 = vunpack.c.l.b16 %v221
    %v1081 = vunpack.c.h.b16 %v221
    %v1082 = vunpack.c.l.b16 %v222
    %v1083 = vunpack.c.h.b16 %v222
    %v1084 = vunpack.c.l.b16 %v223
    %v1085 = vunpack.c.h.b16 %v223
    %v1086 = vunpack.c.l.b16 %v224
    %v1087 = vunpack.c.h.b16 %v224
    %v1088 = vunpack.c.l.b16 %v225
    %v1089 = vunpack.c.h.b16 %v225
    %v1090 = vunpack.c.l.b16 %v226
    %v1091 = vunpack.c.h.b16 %v226
    %v1092 = vunpack.c.l.b16 %v227
    %v1093 = vunpack.c.h.b16 %v227
    %v1094 = vunpack.c.l.b16 %v228
    %v1095 = vunpack.c.h.b16 %v228
    %v1096 = vunpack.c.l.b16 %v229
    %v1097 = vunpack.c.h.b16 %v229
    %v1098 = vunpack.c.l.b16 %v230
    %v1099 = vunpack.c.h.b16 %v230
    %v1100 = vunpack.c.l.b16 %v231
    %v1101 = vunpack.c.h.b16 %v231
    %v1102 = vunpack.c.l.b16 %v232
    %v1103 = vunpack.c.h.b16 %v232
    %v1104 = vunpack.c.l.b16 %v233
    %v1105 = vunpack.c.h.b16 %v233
    %v1106 = vunpack.c.l.b16 %v234
    %v1107 = vunpack.c.h.b16 %v234
    %v1108 = vunpack.c.l.b16 %v235
    %v1109 = vunpack.c.h.b16 %v235
    %v1110 = vunpack.c.l.b16 %v236
    %v1111 = vunpack.c.h.b16 %v236
    %v1112 = vunpack.c.l.b16 %v237
    %v1113 = vunpack.c.h.b16 %v237
    %v1114 = vunpack.c.l.b16 %v238
    %v1115 = vunpack.c.h.b16 %v238
    %v1116 = vunpack.c.l.b16 %v239
    %v1117 = vunpack.c.h.b16 %v239
    %v1118 = vunpack.c.l.b16 %v240
    %v1119 = vunpack.c.h.b16 %v240
    %v1120 = vunpack.c.l.b16 %v241
    %v1121 = vunpack.c.h.b16 %v241
    %v1122 = vunpack.c.l.b16 %v242
    %v1123 = vunpack.c.h.b16 %v242
    %v1124 = vunpack.c.l.b16 %v243
    %v1125 = vunpack.c.h.b16 %v243
    %v1126 = vunpack.c.l.b16 %v244
    %v1127 = vunpack.c.h.b16 %v244
    %v1128 = vunpack.c.l.b16 %v245
    %v1129 = vunpack.c.h.b16 %v245
    %v1130 = vunpack.c.l.b16 %v246
    %v1131 = vunpack.c.h.b16 %v246
    %v1132 = vunpack.c.l.b16 %v247
    %v1133 = vunpack.c.h.b16 %v247
    %v1134 = vunpack.c.l.b16 %v248
    %v1135 = vunpack.c.h.b16 %v248
    %v1136 = vunpack.c.l.b16 %v249
    %v1137 = vunpack.c.h.b16 %v249
    %v1138 = vunpack.c.l.b16 %v250
    %v1139 = vunpack.c.h.b16 %v250
    %v1140 = vunpack.c.l.b16 %v251
    %v1141 = vunpack.c.h.b16 %v251
    %v1142 = vunpack.c.l.b16 %v252
    %v1143 = vunpack.c.h.b16 %v252
    %v1144 = vunpack.c.l.b16 %v253
    %v1145 = vunpack.c.h.b16 %v253
    %v1146 = vunpack.c.l.b16 %v254
    %v1147 = vunpack.c.h.b16 %v254
    %v1148 = vunpack.c.l.b16 %v255
    %v1149 = vunpack.c.h.b16 %v255
    %v1150 = vunpack.c.l.b16 %v256
    %v1151 = vunpack.c.h.b16 %v256
    %v1152 = vunpack.c.l.b16 %v257
    %v1153 = vunpack.c.h.b16 %v257
    %v1154 = vunpack.c.l.b16 %v258
    %v1155 = vunpack.c.h.b16 %v258
    %v1156 = vunpack.c.l.b16 %v259
    %v1157 = vunpack.c.h.b16 %v259
    %v1158 = vunpack.c.l.b16 %v260
    %v1159 = vunpack.c.h.b16 %v260
    %v1160 = vunpack.c.l.b16 %v261
    %v1161 = vunpack.c.h.b16 %v261
    %v1162 = vunpack.c.l.b16 %v262
    %v1163 = vunpack.c.h.b16 %v262
    %v1164 = vunpack.c.l.b16 %v263
    %v1165 = vunpack.c.h.b16 %v263
    %v1166 = vunpack.c.l.b16 %v264
    %v1167 = vunpack.c.h.b16 %v264
    %v1168 = vunpack.c.l.b16 %v265
    %v1169 = vunpack.c.h.b16 %v265
    %v1170 = vunpack.c.l.b16 %v266
    %v1171 = vunpack.c.h.b16 %v266
    %v1172 = vunpack.c.l.b16 %v267
    %v1173 = vunpack.c.h.b16 %v267
    %v1174 = vunpack.c.l.b16 %v268
    %v1175 = vunpack.c.h.b16 %v268
    %v1176 = vunpack.c.l.b16 %v269
    %v1177 = vunpack.c.h.b16 %v269
    %v1178 = vunpack.c.l.b16 %v270
    %v1179 = vunpack.c.h.b16 %v270
    %v1180 = vunpack.c.l.b16 %v271
    %v1181 = vunpack.c.h.b16 %v271
    %v1182 = vunpack.c.l.b16 %v272
    %v1183 = vunpack.c.h.b16 %v272
    %v1184 = vunpack.c.l.b16 %v273
    %v1185 = vunpack.c.h.b16 %v273
    %v1186 = vunpack.c.l.b16 %v274
    %v1187 = vunpack.c.h.b16 %v274
    %v1188 = vunpack.c.l.b16 %v275
    %v1189 = vunpack.c.h.b16 %v275
    %v1190 = vunpack.c.l.b16 %v276
    %v1191 = vunpack.c.h.b16 %v276
    %v1192 = vunpack.c.l.b16 %v277
    %v1193 = vunpack.c.h.b16 %v277
    %v1194 = vunpack.c.l.b16 %v278
    %v1195 = vunpack.c.h.b16 %v278
    %v1196 = vunpack.c.l.b16 %v279
    %v1197 = vunpack.c.h.b16 %v279
    %v1198 = vunpack.c.l.b16 %v280
    %v1199 = vunpack.c.h.b16 %v280
    %v1200 = vunpack.c.l.b16 %v281
    %v1201 = vunpack.c.h.b16 %v281
    %v1202 = vunpack.c.l.b16 %v282
    %v1203 = vunpack.c.h.b16 %v282
    %v1204 = vunpack.c.l.b16 %v283
    %v1205 = vunpack.c.h.b16 %v283
    %v1206 = vunpack.c.l.b16 %v284
    %v1207 = vunpack.c.h.b16 %v284
    %v1208 = vunpack.c.l.b16 %v285
    %v1209 = vunpack.c.h.b16 %v285
    %v1210 = vunpack.c.l.b16 %v286
    %v1211 = vunpack.c.h.b16 %v286
    %v1212 = vunpack.c.l.b16 %v287
    %v1213 = vunpack.c.h.b16 %v287
    %v1214 = vunpack.c.l.b16 %v288
    %v1215 = vunpack.c.h.b16 %v288
    %v1216 = vunpack.c.l.b16 %v289
    %v1217 = vunpack.c.h.b16 %v289
    %v1218 = vunpack.c.l.b16 %v290
    %v1219 = vunpack.c.h.b16 %v290
    %v1220 = vunpack.c.l.b16 %v291
    %v1221 = vunpack.c.h.b16 %v291
    %v1222 = vunpack.c.l.b16 %v292
    %v1223 = vunpack.c.h.b16 %v292
    %v1224 = vunpack.c.l.b16 %v293
    %v1225 = vunpack.c.h.b16 %v293
    %v1226 = vunpack.c.l.b16 %v294
    %v1227 = vunpack.c.h.b16 %v294
    %v1228 = vunpack.c.l.b16 %v295
    %v1229 = vunpack.c.h.b16 %v295
    %v1230 = vunpack.c.l.b16 %v296
    %v1231 = vunpack.c.h.b16 %v296
    %v1232 = vunpack.c.l.b16 %v297
    %v1233 = vunpack.c.h.b16 %v297
    %v1234 = vunpack.c.l.b16 %v298
    %v1235 = vunpack.c.h.b16 %v298
    %v1236 = vunpack.c.l.b16 %v299
    %v1237 = vunpack.c.h.b16 %v299
    %v1238 = vunpack.c.l.b16 %v300
    %v1239 = vunpack.c.h.b16 %v300
    %v1240 = vunpack.c.l.b16 %v301
    %v1241 = vunpack.c.h.b16 %v301
    %v1242 = vunpack.c.l.b16 %v302
    %v1243 = vunpack.c.h.b16 %v302
    %v1244 = vunpack.c.l.b16 %v303
    %v1245 = vunpack.c.h.b16 %v303
    %v1246 = vunpack.c.l.b16 %v304
    %v1247 = vunpack.c.h.b16 %v304
    %v1248 = vunpack.c.l.b16 %v305
    %v1249 = vunpack.c.h.b16 %v305
    %v1250 = vunpack.c.l.b16 %v306
    %v1251 = vunpack.c.h.b16 %v306
    %v1252 = vunpack.c.l.b16 %v307
    %v1253 = vunpack.c.h.b16 %v307
    %v1254 = vunpack.c.l.b16 %v308
    %v1255 = vunpack.c.h.b16 %v308
    %v1256 = vunpack.c.l.b16 %v309
    %v1257 = vunpack.c.h.b16 %v309
    %v1258 = vunpack.c.l.b16 %v310
    %v1259 = vunpack.c.h.b16 %v310
    %v1260 = vunpack.c.l.b16 %v311
    %v1261 = vunpack.c.h.b16 %v311
    %v1262 = vunpack.c.l.b16 %v312
    %v1263 = vunpack.c.h.b16 %v312
    %v1264 = vunpack.c.l.b16 %v313
    %v1265 = vunpack.c.h.b16 %v313
    %v1266 = vunpack.c.l.b16 %v314
    %v1267 = vunpack.c.h.b16 %v314
    %v1268 = vunpack.c.l.b16 %v315
    %v1269 = vunpack.c.h.b16 %v315
    %v1270 = vunpack.c.l.b16 %v316
    %v1271 = vunpack.c.h.b16 %v316
    %v1272 = vunpack.c.l.b16 %v317
    %v1273 = vunpack.c.h.b16 %v317
    %v1274 = vunpack.c.l.b16 %v318
    %v1275 = vunpack.c.h.b16 %v318
    %v1276 = vunpack.c.l.b16 %v319
    %v1277 = vunpack.c.h.b16 %v319
    %v1278 = vunpack.c.l.b16 %v320
    %v1279 = vunpack.c.h.b16 %v320
    %v1280 = vunpack.c.l.b16 %v321
    %v1281 = vunpack.c.h.b16 %v321
    %v1282 = vunpack.c.l.b16 %v322
    %v1283 = vunpack.c.h.b16 %v322
    %v1284 = vunpack.c.l.b16 %v323
    %v1285 = vunpack.c.h.b16 %v323
    %v1286 = vunpack.c.l.b16 %v324
    %v1287 = vunpack.c.h.b16 %v324
    %v1288 = vunpack.c.l.b16 %v325
    %v1289 = vunpack.c.h.b16 %v325
    %v1290 = vunpack.c.l.b16 %v326
    %v1291 = vunpack.c.h.b16 %v326
    %v1292 = vunpack.c.l.b16 %v327
    %v1293 = vunpack.c.h.b16 %v327
    %v1294 = vunpack.c.l.b16 %v328
    %v1295 = vunpack.c.h.b16 %v328
    %v1296 = vunpack.c.l.b16 %v329
    %v1297 = vunpack.c.h.b16 %v329
    %v1298 = vunpack.c.l.b16 %v330
    %v1299 = vunpack.c.h.b16 %v330
    %v1300 = vunpack.c.l.b16 %v331
    %v1301 = vunpack.c.h.b16 %v331
    %v1302 = vunpack.c.l.b16 %v332
    %v1303 = vunpack.c.h.b16 %v332
    %v1304 = vunpack.c.l.b16 %v333
    %v1305 = vunpack.c.h.b16 %v333
    %v1306 = vunpack.c.l.b16 %v334
    %v1307 = vunpack.c.h.b16 %v334
    %v1308 = vunpack.c.l.b16 %v335
    %v1309 = vunpack.c.h.b16 %v335
    %v1310 = vunpack.c.l.b16 %v336
    %v1311 = vunpack.c.h.b16 %v336
    %v1312 = vunpack.c.l.b16 %v337
    %v1313 = vunpack.c.h.b16 %v337
    %v1314 = vunpack.c.l.b16 %v338
    %v1315 = vunpack.c.h.b16 %v338
    %v1316 = vunpack.c.l.b16 %v339
    %v1317 = vunpack.c.h.b16 %v339
    %v1318 = vunpack.c.l.b16 %v340
    %v1319 = vunpack.c.h.b16 %v340
    %v1320 = vunpack.c.l.b16 %v341
    %v1321 = vunpack.c.h.b16 %v341
    %v1322 = vunpack.c.l.b16 %v342
    %v1323 = vunpack.c.h.b16 %v342
    %v1324 = vunpack.c.l.b16 %v343
    %v1325 = vunpack.c.h.b16 %v343
    %v1326 = vunpack.c.l.b16 %v344
    %v1327 = vunpack.c.h.b16 %v344
    %v1328 = vunpack.c.l.b16 %v345
    %v1329 = vunpack.c.h.b16 %v345
    %v1330 = vunpack.c.l.b16 %v346
    %v1331 = vunpack.c.h.b16 %v346
    %v1332 = vunpack.c.l.b16 %v347
    %v1333 = vunpack.c.h.b16 %v347
    %v1334 = vunpack.c.l.b16 %v348
    %v1335 = vunpack.c.h.b16 %v348
    %v1336 = vunpack.c.l.b16 %v349
    %v1337 = vunpack.c.h.b16 %v349
    %v1338 = vunpack.c.l.b16 %v350
    %v1339 = vunpack.c.h.b16 %v350
    %v1340 = vunpack.c.l.b16 %v351
    %v1341 = vunpack.c.h.b16 %v351
    %v1342 = vunpack.c.l.b16 %v352
    %v1343 = vunpack.c.h.b16 %v352
    %v1344 = vunpack.c.l.b16 %v353
    %v1345 = vunpack.c.h.b16 %v353
    %v1346 = vunpack.c.l.b16 %v354
    %v1347 = vunpack.c.h.b16 %v354
    %v1348 = vunpack.c.l.b16 %v355
    %v1349 = vunpack.c.h.b16 %v355
    %v1350 = vunpack.c.l.b16 %v356
    %v1351 = vunpack.c.h.b16 %v356
    %v1352 = vunpack.c.l.b16 %v357
    %v1353 = vunpack.c.h.b16 %v357
    %v1354 = vunpack.c.l.b16 %v358
    %v1355 = vunpack.c.h.b16 %v358
    %v1356 = vunpack.c.l.b16 %v359
    %v1357 = vunpack.c.h.b16 %v359
    %v1358 = vunpack.c.l.b16 %v360
    %v1359 = vunpack.c.h.b16 %v360
    %v1360 = vunpack.c.l.b16 %v361
    %v1361 = vunpack.c.h.b16 %v361
    %v1362 = vunpack.c.l.b16 %v362
    %v1363 = vunpack.c.h.b16 %v362
    %v1364 = vunpack.c.l.b16 %v363
    %v1365 = vunpack.c.h.b16 %v363
    %v1366 = vunpack.c.l.b16 %v364
    %v1367 = vunpack.c.h.b16 %v364
    %v1368 = vunpack.c.l.b16 %v365
    %v1369 = vunpack.c.h.b16 %v365
    %v1370 = vunpack.c.l.b16 %v366
    %v1371 = vunpack.c.h.b16 %v366
    %v1372 = vunpack.c.l.b16 %v367
    %v1373 = vunpack.c.h.b16 %v367
    %v1374 = vunpack.c.l.b16 %v368
    %v1375 = vunpack.c.h.b16 %v368
    %v1376 = vunpack.c.l.b16 %v369
    %v1377 = vunpack.c.h.b16 %v369
    %v1378 = vunpack.c.l.b16 %v370
    %v1379 = vunpack.c.h.b16 %v370
    %v1380 = vunpack.c.l.b16 %v371
    %v1381 = vunpack.c.h.b16 %v371
    %v1382 = vunpack.c.l.b16 %v372
    %v1383 = vunpack.c.h.b16 %v372
    %v1384 = vunpack.c.l.b16 %v373
    %v1385 = vunpack.c.h.b16 %v373
    %v1386 = vunpack.c.l.b16 %v374
    %v1387 = vunpack.c.h.b16 %v374
    %v1388 = vunpack.c.l.b16 %v375
    %v1389 = vunpack.c.h.b16 %v375
    %v1390 = vunpack.c.l.b16 %v376
    %v1391 = vunpack.c.h.b16 %v376
    %v1392 = vunpack.c.l.b16 %v377
    %v1393 = vunpack.c.h.b16 %v377
    %v1394 = vunpack.c.l.b16 %v378
    %v1395 = vunpack.c.h.b16 %v378
    %v1396 = vunpack.c.l.b16 %v379
    %v1397 = vunpack.c.h.b16 %v379
    %v1398 = vunpack.c.l.b16 %v380
    %v1399 = vunpack.c.h.b16 %v380
    %v1400 = vunpack.c.l.b16 %v381
    %v1401 = vunpack.c.h.b16 %v381
    %v1402 = vunpack.c.l.b16 %v382
    %v1403 = vunpack.c.h.b16 %v382
    %v1404 = vunpack.c.l.b16 %v383
    %v1405 = vunpack.c.h.b16 %v383
    %v1406 = vunpack.c.l.b16 %v384
    %v1407 = vunpack.c.h.b16 %v384
    %v1408 = vunpack.c.l.b16 %v385
    %v1409 = vunpack.c.h.b16 %v385
    %v1410 = vunpack.c.l.b16 %v386
    %v1411 = vunpack.c.h.b16 %v386
    %v1412 = vunpack.c.l.b16 %v387
    %v1413 = vunpack.c.h.b16 %v387
    %v1414 = vunpack.c.l.b16 %v388
    %v1415 = vunpack.c.h.b16 %v388
    %v1416 = vunpack.c.l.b16 %v389
    %v1417 = vunpack.c.h.b16 %v389
    %v1418 = vunpack.c.l.b16 %v390
    %v1419 = vunpack.c.h.b16 %v390
    %v1420 = vunpack.c.l.b16 %v391
    %v1421 = vunpack.c.h.b16 %v391
    %v1422 = vunpack.c.l.b16 %v392
    %v1423 = vunpack.c.h.b16 %v392
    %v1424 = vunpack.c.l.b16 %v393
    %v1425 = vunpack.c.h.b16 %v393
    %v1426 = vunpack.c.l.b16 %v394
    %v1427 = vunpack.c.h.b16 %v394
    %v1428 = vunpack.c.l.b16 %v395
    %v1429 = vunpack.c.h.b16 %v395
    %v1430 = vunpack.c.l.b16 %v396
    %v1431 = vunpack.c.h.b16 %v396
    %v1432 = vunpack.c.l.b16 %v397
    %v1433 = vunpack.c.h.b16 %v397
    %v1434 = vunpack.c.l.b16 %v398
    %v1435 = vunpack.c.h.b16 %v398
    %v1436 = vunpack.c.l.b16 %v399
    %v1437 = vunpack.c.h.b16 %v399
    %v1438 = vunpack.c.l.b16 %v400
    %v1439 = vunpack.c.h.b16 %v400
    %v1440 = vunpack.c.l.b16 %v401
    %v1441 = vunpack.c.h.b16 %v401
    %v1442 = vunpack.c.l.b16 %v402
    %v1443 = vunpack.c.h.b16 %v402
    %v1444 = vunpack.c.l.b16 %v403
    %v1445 = vunpack.c.h.b16 %v403
    %v1446 = vunpack.c.l.b16 %v404
    %v1447 = vunpack.c.h.b16 %v404
    %v1448 = vunpack.c.l.b16 %v405
    %v1449 = vunpack.c.h.b16 %v405
    %v1450 = vunpack.c.l.b16 %v406
    %v1451 = vunpack.c.h.b16 %v406
    %v1452 = vunpack.c.l.b16 %v407
    %v1453 = vunpack.c.h.b16 %v407
    %v1454 = vunpack.c.l.b16 %v408
    %v1455 = vunpack.c.h.b16 %v408
    %v1456 = vunpack.c.l.b16 %v409
    %v1457 = vunpack.c.h.b16 %v409
    %v1458 = vunpack.c.l.b16 %v410
    %v1459 = vunpack.c.h.b16 %v410
    %v1460 = vunpack.c.l.b16 %v411
    %v1461 = vunpack.c.h.b16 %v411
    %v1462 = vunpack.c.l.b16 %v412
    %v1463 = vunpack.c.h.b16 %v412
    %v1464 = vunpack.c.l.b16 %v413
    %v1465 = vunpack.c.h.b16 %v413
    %v1466 = vunpack.c.l.b16 %v414
    %v1467 = vunpack.c.h.b16 %v414
    %v1468 = vunpack.c.l.b16 %v415
    %v1469 = vunpack.c.h.b16 %v415
    %v1470 = vunpack.c.l.b16 %v416
    %v1471 = vunpack.c.h.b16 %v416
    %v1472 = vunpack.c.l.b16 %v417
    %v1473 = vunpack.c.h.b16 %v417
    %v1474 = vunpack.c.l.b16 %v418
    %v1475 = vunpack.c.h.b16 %v418
    %v1476 = vunpack.c.l.b16 %v419
    %v1477 = vunpack.c.h.b16 %v419
    %v1478 = vunpack.c.l.b16 %v420
    %v1479 = vunpack.c.h.b16 %v420
    %v1480 = vunpack.c.l.b16 %v421
    %v1481 = vunpack.c.h.b16 %v421
    %v1482 = vunpack.c.l.b16 %v422
    %v1483 = vunpack.c.h.b16 %v422
    %v1484 = vunpack.c.l.b16 %v423
    %v1485 = vunpack.c.h.b16 %v423
    %v1486 = vunpack.c.l.b16 %v424
    %v1487 = vunpack.c.h.b16 %v424
    %v1488 = vunpack.c.l.b16 %v425
    %v1489 = vunpack.c.h.b16 %v425
    %v1490 = vunpack.c.l.b16 %v426
    %v1491 = vunpack.c.h.b16 %v426
    %v1492 = vunpack.c.l.b16 %v427
    %v1493 = vunpack.c.h.b16 %v427
    %v1494 = vunpack.c.l.b16 %v428
    %v1495 = vunpack.c.h.b16 %v428
    %v1496 = vunpack.c.l.b16 %v429
    %v1497 = vunpack.c.h.b16 %v429
    %v1498 = vunpack.c.l.b16 %v430
    %v1499 = vunpack.c.h.b16 %v430
    %v1500 = vunpack.c.l.b16 %v431
    %v1501 = vunpack.c.h.b16 %v431
    %v1502 = vunpack.c.l.b16 %v432
    %v1503 = vunpack.c.h.b16 %v432
    %v1504 = vunpack.c.l.b16 %v433
    %v1505 = vunpack.c.h.b16 %v433
    %v1506 = vunpack.c.l.b16 %v434
    %v1507 = vunpack.c.h.b16 %v434
    %v1508 = vunpack.c.l.b16 %v435
    %v1509 = vunpack.c.h.b16 %v435
    %v1510 = vunpack.c.l.b16 %v436
    %v1511 = vunpack.c.h.b16 %v436
    %v1512 = vunpack.c.l.b16 %v437
    %v1513 = vunpack.c.h.b16 %v437
    %v1514 = vunpack.c.l.b16 %v438
    %v1515 = vunpack.c.h.b16 %v438
    %v1516 = vunpack.c.l.b16 %v439
    %v1517 = vunpack.c.h.b16 %v439
    %v1518 = vunpack.c.l.b16 %v440
    %v1519 = vunpack.c.h.b16 %v440
    %v1520 = vunpack.c.l.b16 %v441
    %v1521 = vunpack.c.h.b16 %v441
    %v1522 = vunpack.c.l.b16 %v442
    %v1523 = vunpack.c.h.b16 %v442
    %v1524 = vunpack.c.l.b16 %v443
    %v1525 = vunpack.c.h.b16 %v443
    %v1526 = vunpack.c.l.b16 %v444
    %v1527 = vunpack.c.h.b16 %v444
    %v1528 = vunpack.c.l.b16 %v445
    %v1529 = vunpack.c.h.b16 %v445
    %v1530 = vunpack.c.l.b16 %v446
    %v1531 = vunpack.c.h.b16 %v446
    %v1532 = vunpack.c.l.b16 %v447
    %v1533 = vunpack.c.h.b16 %v447
    %v1534 = vunpack.c.l.b16 %v448
    %v1535 = vunpack.c.h.b16 %v448
    %v1536 = vunpack.c.l.b16 %v449
    %v1537 = vunpack.c.h.b16 %v449
    %v1538 = vunpack.c.l.b16 %v450
    %v1539 = vunpack.c.h.b16 %v450
    %v1540 = vunpack.c.l.b16 %v451
    %v1541 = vunpack.c.h.b16 %v451
    %v1542 = vunpack.c.l.b16 %v452
    %v1543 = vunpack.c.h.b16 %v452
    %v1544 = vunpack.c.l.b16 %v453
    %v1545 = vunpack.c.h.b16 %v453
    %v1546 = vunpack.c.l.b16 %v454
    %v1547 = vunpack.c.h.b16 %v454
    %v1548 = vunpack.c.l.b16 %v455
    %v1549 = vunpack.c.h.b16 %v455
    %v1550 = vunpack.c.l.b16 %v456
    %v1551 = vunpack.c.h.b16 %v456
    %v1552 = vunpack.c.l.b16 %v457
    %v1553 = vunpack.c.h.b16 %v457
    %v1554 = vunpack.c.l.b16 %v458
    %v1555 = vunpack.c.h.b16 %v458
    %v1556 = vunpack.c.l.b16 %v459
    %v1557 = vunpack.c.h.b16 %v459
    %v1558 = vunpack.c.l.b16 %v460
    %v1559 = vunpack.c.h.b16 %v460
    %v1560 = vunpack.c.l.b16 %v461
    %v1561 = vunpack.c.h.b16 %v461
    %v1562 = vunpack.c.l.b16 %v462
    %v1563 = vunpack.c.h.b16 %v462
    %v1564 = vunpack.c.l.b16 %v463
    %v1565 = vunpack.c.h.b16 %v463
    %v1566 = vunpack.c.l.b16 %v464
    %v1567 = vunpack.c.h.b16 %v464
    %v1568 = vunpack.c.l.b16 %v465
    %v1569 = vunpack.c.h.b16 %v465
    %v1570 = vunpack.c.l.b16 %v466
    %v1571 = vunpack.c.h.b16 %v466
    %v1572 = vunpack.c.l.b16 %v467
    %v1573 = vunpack.c.h.b16 %v467
    %v1574 = vunpack.c.l.b16 %v468
    %v1575 = vunpack.c.h.b16 %v468
    %v1576 = vunpack.c.l.b16 %v469
    %v1577 = vunpack.c.h.b16 %v469
    %v1578 = vunpack.c.l.b16 %v470
    %v1579 = vunpack.c.h.b16 %v470
    %v1580 = vunpack.c.l.b16 %v471
    %v1581 = vunpack.c.h.b16 %v471
    %v1582 = vunpack.c.l.b16 %v472
    %v1583 = vunpack.c.h.b16 %v472
    %v1584 = vunpack.c.l.b16 %v473
    %v1585 = vunpack.c.h.b16 %v473
    %v1586 = vunpack.c.l.b16 %v474
    %v1587 = vunpack.c.h.b16 %v474
    %v1588 = vunpack.c.l.b16 %v475
    %v1589 = vunpack.c.h.b16 %v475
    %v1590 = vunpack.c.l.b16 %v476
    %v1591 = vunpack.c.h.b16 %v476
    %v1592 = vunpack.c.l.b16 %v477
    %v1593 = vunpack.c.h.b16 %v477
    %v1594 = vunpack.c.l.b16 %v478
    %v1595 = vunpack.c.h.b16 %v478
    %v1596 = vunpack.c.l.b16 %v479
    %v1597 = vunpack.c.h.b16 %v479
    %v1598 = vunpack.c.l.b16 %v480
    %v1599 = vunpack.c.h.b16 %v480
    %v1600 = vunpack.c.l.b16 %v481
    %v1601 = vunpack.c.h.b16 %v481
    %v1602 = vunpack.c.l.b16 %v482
    %v1603 = vunpack.c.h.b16 %v482
    %v1604 = vunpack.c.l.b16 %v483
    %v1605 = vunpack.c.h.b16 %v483
    %v1606 = vunpack.c.l.b16 %v484
    %v1607 = vunpack.c.h.b16 %v484
    %v1608 = vunpack.c.l.b16 %v485
    %v1609 = vunpack.c.h.b16 %v485
    %v1610 = vunpack.c.l.b16 %v486
    %v1611 = vunpack.c.h.b16 %v486
    %v1612 = vunpack.c.l.b16 %v487
    %v1613 = vunpack.c.h.b16 %v487
    %v1614 = vunpack.c.l.b16 %v488
    %v1615 = vunpack.c.h.b16 %v488
    %v1616 = vunpack.c.l.b16 %v489
    %v1617 = vunpack.c.h.b16 %v489
    %v1618 = vunpack.c.l.b16 %v490
    %v1619 = vunpack.c.h.b16 %v490
    %v1620 = vunpack.c.l.b16 %v491
    %v1621 = vunpack.c.h.b16 %v491
    %v1622 = vunpack.c.l.b16 %v492
    %v1623 = vunpack.c.h.b16 %v492
    %v1624 = vunpack.c.l.b16 %v493
    %v1625 = vunpack.c.h.b16 %v493
    %v1626 = vunpack.c.l.b16 %v494
    %v1627 = vunpack.c.h.b16 %v494
    %v1628 = vunpack.c.l.b16 %v495
    %v1629 = vunpack.c.h.b16 %v495
    %v1630 = vunpack.c.l.b16 %v496
    %v1631 = vunpack.c.h.b16 %v496
    %v1632 = vunpack.c.l.b16 %v497
    %v1633 = vunpack.c.h.b16 %v497
    %v1634 = vunpack.c.l.b16 %v498
    %v1635 = vunpack.c.h.b16 %v498
    %v1636 = vunpack.c.l.b16 %v499
    %v1637 = vunpack.c.h.b16 %v499
    %v1638 = vunpack.c.l.b16 %v500
    %v1639 = vunpack.c.h.b16 %v500
    %v1640 = vunpack.c.l.b16 %v501
    %v1641 = vunpack.c.h.b16 %v501
    %v1642 = vunpack.c.l.b16 %v502
    %v1643 = vunpack.c.h.b16 %v502
    %v1644 = vunpack.c.l.b16 %v503
    %v1645 = vunpack.c.h.b16 %v503
    %v1646 = vunpack.c.l.b16 %v504
    %v1647 = vunpack.c.h.b16 %v504
    %v1648 = vunpack.c.l.b16 %v505
    %v1649 = vunpack.c.h.b16 %v505
    %v1650 = vunpack.c.l.b16 %v506
    %v1651 = vunpack.c.h.b16 %v506
    %v1652 = vunpack.c.l.b16 %v507
    %v1653 = vunpack.c.h.b16 %v507
    %v1654 = vunpack.c.l.b16 %v508
    %v1655 = vunpack.c.h.b16 %v508
    %v1656 = vunpack.c.l.b16 %v509
    %v1657 = vunpack.c.h.b16 %v509
    %v1658 = vunpack.c.l.b16 %v510
    %v1659 = vunpack.c.h.b16 %v510
    %v1660 = vunpack.c.l.b16 %v511
    %v1661 = vunpack.c.h.b16 %v511
    %v1662 = vunpack.c.l.b16 %v512
    %v1663 = vunpack.c.h.b16 %v512
    %v1664 = vunpack.c.l.b16 %v513
    %v1665 = vunpack.c.h.b16 %v513
    %v1666 = vunpack.c.l.b16 %v514
    %v1667 = vunpack.c.h.b16 %v514
    %v1668 = vunpack.c.l.b16 %v515
    %v1669 = vunpack.c.h.b16 %v515
    %v1670 = vunpack.c.l.b16 %v516
    %v1671 = vunpack.c.h.b16 %v516
    %v1672 = vunpack.c.l.b16 %v517
    %v1673 = vunpack.c.h.b16 %v517
    %v1674 = vunpack.c.l.b16 %v518
    %v1675 = vunpack.c.h.b16 %v518
    %v1676 = vunpack.c.l.b16 %v519
    %v1677 = vunpack.c.h.b16 %v519
    %v1678 = vunpack.c.l.b16 %v520
    %v1679 = vunpack.c.h.b16 %v520
    %v1680 = vunpack.c.l.b16 %v521
    %v1681 = vunpack.c.h.b16 %v521
    %v1682 = vunpack.c.l.b16 %v522
    %v1683 = vunpack.c.h.b16 %v522
    %v1684 = vunpack.c.l.b16 %v523
    %v1685 = vunpack.c.h.b16 %v523
    %v1686 = vunpack.c.l.b16 %v524
    %v1687 = vunpack.c.h.b16 %v524
    %v1688 = vunpack.c.l.b16 %v525
    %v1689 = vunpack.c.h.b16 %v525
    %v1690 = vunpack.c.l.b16 %v526
    %v1691 = vunpack.c.h.b16 %v526
    %v1692 = vunpack.c.l.b16 %v527
    %v1693 = vunpack.c.h.b16 %v527
    %v1694 = vunpack.c.l.b16 %v528
    %v1695 = vunpack.c.h.b16 %v528
    %v1696 = vunpack.c.l.b16 %v529
    %v1697 = vunpack.c.h.b16 %v529
    %v1698 = vunpack.c.l.b16 %v530
    %v1699 = vunpack.c.h.b16 %v530
    %v1700 = vunpack.c.l.b16 %v531
    %v1701 = vunpack.c.h.b16 %v531
    %v1702 = vunpack.c.l.b16 %v532
    %v1703 = vunpack.c.h.b16 %v532
    %v1704 = vunpack.c.l.b16 %v533
    %v1705 = vunpack.c.h.b16 %v533
    %v1706 = vunpack.c.l.b16 %v534
    %v1707 = vunpack.c.h.b16 %v534
    %v1708 = vunpack.c.l.b16 %v535
    %v1709 = vunpack.c.h.b16 %v535
    %v1710 = vunpack.c.l.b16 %v536
    %v1711 = vunpack.c.h.b16 %v536
    %v1712 = vunpack.c.l.b16 %v537
    %v1713 = vunpack.c.h.b16 %v537
    %v1714 = vunpack.c.l.b16 %v538
    %v1715 = vunpack.c.h.b16 %v538
    %v1716 = vunpack.c.l.b16 %v539
    %v1717 = vunpack.c.h.b16 %v539
    %v1718 = vunpack.c.l.b16 %v540
    %v1719 = vunpack.c.h.b16 %v540
    %v1720 = vunpack.c.l.b16 %v541
    %v1721 = vunpack.c.h.b16 %v541
    %v1722 = vunpack.c.l.b16 %v542
    %v1723 = vunpack.c.h.b16 %v542
    %v1724 = vunpack.c.l.b16 %v543
    %v1725 = vunpack.c.h.b16 %v543
    %v1726 = vunpack.c.l.b16 %v544
    %v1727 = vunpack.c.h.b16 %v544
    %v1728 = vunpack.c.l.b16 %v545
    %v1729 = vunpack.c.h.b16 %v545
    %v1730 = vpack.c.b16 %v968, %v962
    %v1731 = vpack.c.b16 %v969, %v963
    %v1732 = vpack.c.b16 %v970, %v964
    %v1733 = vpack.c.b16 %v971, %v965
    %v1734 = vpack.c.b16 %v972, %v966
    %v1735 = vpack.c.b16 %v973, %v967
    %v1736 = vpack.c.b16 %v980, %v974
    %v1737 = vpack.c.b16 %v981, %v975
    %v1738 = vpack.c.b16 %v982, %v976
    %v1739 = vpack.c.b16 %v983, %v977
    %v1740 = vpack.c.b16 %v984, %v978
    %v1741 = vpack.c.b16 %v985, %v979
    %v1742 = vpack.c.b16 %v992, %v986
    %v1743 = vpack.c.b16 %v993, %v987
    %v1744 = vpack.c.b16 %v994, %v988
    %v1745 = vpack.c.b16 %v995, %v989
    %v1746 = vpack.c.b16 %v996, %v990
    %v1747 = vpack.c.b16 %v997, %v991
    %v1748 = vpack.c.b16 %v1004, %v998
    %v1749 = vpack.c.b16 %v1005, %v999
    %v1750 = vpack.c.b16 %v1006, %v1000
    %v1751 = vpack.c.b16 %v1007, %v1001
    %v1752 = vpack.c.b16 %v1008, %v1002
    %v1753 = vpack.c.b16 %v1009, %v1003
    %v1754 = vpack.c.b16 %v1016, %v1010
    %v1755 = vpack.c.b16 %v1017, %v1011
    %v1756 = vpack.c.b16 %v1018, %v1012
    %v1757 = vpack.c.b16 %v1019, %v1013
    %v1758 = vpack.c.b16 %v1020, %v1014
    %v1759 = vpack.c.b16 %v1021, %v1015
    %v1760 = vpack.c.b16 %v1028, %v1022
    %v1761 = vpack.c.b16 %v1029, %v1023
    %v1762 = vpack.c.b16 %v1030, %v1024
    %v1763 = vpack.c.b16 %v1031, %v1025
    %v1764 = vpack.c.b16 %v1032, %v1026
    %v1765 = vpack.c.b16 %v1033, %v1027
    %v1766 = vpack.c.b16 %v1040, %v1034
    %v1767 = vpack.c.b16 %v1041, %v1035
    %v1768 = vpack.c.b16 %v1042, %v1036
    %v1769 = vpack.c.b16 %v1043, %v1037
    %v1770 = vpack.c.b16 %v1044, %v1038
    %v1771 = vpack.c.b16 %v1045, %v1039
    %v1772 = vpack.c.b16 %v1052, %v1046
    %v1773 = vpack.c.b16 %v1053, %v1047
    %v1774 = vpack.c.b16 %v1054, %v1048
    %v1775 = vpack.c.b16 %v1055, %v1049
    %v1776 = vpack.c.b16 %v1056, %v1050
    %v1777 = vpack.c.b16 %v1057, %v1051
    %v1778 = vpack.c.b16 %v1064, %v1058
    %v1779 = vpack.c.b16 %v1065, %v1059
    %v1780 = vpack.c.b16 %v1066, %v1060
    %v1781 = vpack.c.b16 %v1067, %v1061
    %v1782 = vpack.c.b16 %v1068, %v1062
    %v1783 = vpack.c.b16 %v1069, %v1063
    %v1784 = vpack.c.b16 %v1076, %v1070
    %v1785 = vpack.c.b16 %v1077, %v1071
    %v1786 = vpack.c.b16 %v1078, %v1072
    %v1787 = vpack.c.b16 %v1079, %v1073
    %v1788 = vpack.c.b16 %v1080, %v1074
    %v1789 = vpack.c.b16 %v1081, %v1075
    %v1790 = vpack.c.b16 %v1088, %v1082
    %v1791 = vpack.c.b16 %v1089, %v1083
    %v1792 = vpack.c.b16 %v1090, %v1084
    %v1793 = vpack.c.b16 %v1091, %v1085
    %v1794 = vpack.c.b16 %v1092, %v1086
    %v1795 = vpack.c.b16 %v1093, %v1087
    %v1796 = vpack.c.b16 %v1100, %v1094
    %v1797 = vpack.c.b16 %v1101, %v1095
    %v1798 = vpack.c.b16 %v1102, %v1096
    %v1799 = vpack.c.b16 %v1103, %v1097
    %v1800 = vpack.c.b16 %v1104, %v1098
    %v1801 = vpack.c.b16 %v1105, %v1099
    %v1802 = vpack.c.b16 %v1112, %v1106
    %v1803 = vpack.c.b16 %v1113, %v1107
    %v1804 = vpack.c.b16 %v1114, %v1108
    %v1805 = vpack.c.b16 %v1115, %v1109
    %v1806 = vpack.c.b16 %v1116, %v1110
    %v1807 = vpack.c.b16 %v1117, %v1111
    %v1808 = vpack.c.b16 %v1124, %v1118
    %v1809 = vpack.c.b16 %v1125, %v1119
    %v1810 = vpack.c.b16 %v1126, %v1120
    %v1811 = vpack.c.b16 %v1127, %v1121
    %v1812 = vpack.c.b16 %v1128, %v1122
    %v1813 = vpack.c.b16 %v1129, %v1123
    %v1814 = vpack.c.b16 %v1136, %v1130
    %v1815 = vpack.c.b16 %v1137, %v1131
    %v1816 = vpack.c.b16 %v1138, %v1132
    %v1817 = vpack.c.b16 %v1139, %v1133
    %v1818 = vpack.c.b16 %v1140, %v1134
    %v1819 = vpack.c.b16 %v1141, %v1135
    %v1820 = vpack.c.b16 %v1148, %v1142
    %v1821 = vpack.c.b16 %v1149, %v1143
    %v1822 = vpack.c.b16 %v1150, %v1144
    %v1823 = vpack.c.b16 %v1151, %v1145
    %v1824 = vpack.c.b16 %v1152, %v1146
    %v1825 = vpack.c.b16 %v1153, %v1147
    %v1826 = vpack.c.b16 %v1160, %v1154
    %v1827 = vpack.c.b16 %v1161, %v1155
    %v1828 = vpack.c.b16 %v1162, %v1156
    %v1829 = vpack.c.b16 %v1163, %v1157
    %v1830 = vpack.c.b16 %v1164, %v1158
    %v1831 = vpack.c.b16 %v1165, %v1159
    %v1832 = vpack.c.b16 %v1172, %v1166
    %v1833 = vpack.c.b16 %v1173, %v1167
    %v1834 = vpack.c.b16 %v1174, %v1168
    %v1835 = vpack.c.b16 %v1175, %v1169
    %v1836 = vpack.c.b16 %v1176, %v1170
    %v1837 = vpack.c.b16 %v1177, %v1171
    %v1838 = vpack.c.b16 %v1184, %v1178
    %v1839 = vpack.c.b16 %v1185, %v1179
    %v1840 = vpack.c.b16 %v1186, %v1180
    %v1841 = vpack.c.b16 %v1187, %v1181
    %v1842 = vpack.c.b16 %v1188, %v1182
    %v1843 = vpack.c.b16 %v1189, %v1183
    %v1844 = vpack.c.b16 %v1196, %v1190
    %v1845 = vpack.c.b16 %v1197, %v1191
    %v1846 = vpack.c.b16 %v1198, %v1192
    %v1847 = vpack.c.b16 %v1199, %v1193
    %v1848 = vpack.c.b16 %v1200, %v1194
    %v1849 = vpack.c.b16 %v1201, %v1195
    %v1850 = vpack.c.b16 %v1208, %v1202
    %v1851 = vpack.c.b16 %v1209, %v1203
    %v1852 = vpack.c.b16 %v1210, %v1204
    %v1853 = vpack.c.b16 %v1211, %v1205
    %v1854 = vpack.c.b16 %v1212, %v1206
    %v1855 = vpack.c.b16 %v1213, %v1207
    %v1856 = vpack.c.b16 %v1220, %v1214
    %v1857 = vpack.c.b16 %v1221, %v1215
    %v1858 = vpack.c.b16 %v1222, %v1216
    %v1859 = vpack.c.b16 %v1223, %v1217
    %v1860 = vpack.c.b16 %v1224, %v1218
    %v1861 = vpack.c.b16 %v1225, %v1219
    %v1862 = vpack.c.b16 %v1232, %v1226
    %v1863 = vpack.c.b16 %v1233, %v1227
    %v1864 = vpack.c.b16 %v1234, %v1228
    %v1865 = vpack.c.b16 %v1235, %v1229
    %v1866 = vpack.c.b16 %v1236, %v1230
    %v1867 = vpack.c.b16 %v1237, %v1231
    %v1868 = vpack.c.b16 %v1244, %v1238
    %v1869 = vpack.c.b16 %v1245, %v1239
    %v1870 = vpack.c.b16 %v1246, %v1240
    %v1871 = vpack.c.b16 %v1247, %v1241
    %v1872 = vpack.c.b16 %v1248, %v1242
    %v1873 = vpack.c.b16 %v1249, %v1243
    %v1874 = vpack.c.b16 %v1256, %v1250
    %v1875 = vpack.c.b16 %v1257, %v1251
    %v1876 = vpack.c.b16 %v1258, %v1252
    %v1877 = vpack.c.b16 %v1259, %v1253
    %v1878 = vpack.c.b16 %v1260, %v1254
    %v1879 = vpack.c.b16 %v1261, %v1255
    %v1880 = vpack.c.b16 %v1268, %v1262
    %v1881 = vpack.c.b16 %v1269, %v1263
    %v1882 = vpack.c.b16 %v1270, %v1264
    %v1883 = vpack.c.b16 %v1271, %v1265
    %v1884 = vpack.c.b16 %v1272, %v1266
    %v1885 = vpack.c.b16 %v1273, %v1267
    %v1886 = vpack.c.b16 %v1280, %v1274
    %v1887 = vpack.c.b16 %v1281, %v1275
    %v1888 = vpack.c.b16 %v1282, %v1276
    %v1889 = vpack.c.b16 %v1283, %v1277
    %v1890 = vpack.c.b16 %v1284, %v1278
    %v1891 = vpack.c.b16 %v1285, %v1279
    %v1892 = vpack.c.b16 %v1292, %v1286
    %v1893 = vpack.c.b16 %v1293, %v1287
    %v1894 = vpack.c.b16 %v1294, %v1288
    %v1895 = vpack.c.b16 %v1295, %v1289
    %v1896 = vpack.c.b16 %v1296, %v1290
    %v1897 = vpack.c.b16 %v1297, %v1291
    %v1898 = vpack.c.b16 %v1304, %v1298
    %v1899 = vpack.c.b16 %v1305, %v1299
    %v1900 = vpack.c.b16 %v1306, %v1300
    %v1901 = vpack.c.b16 %v1307, %v1301
    %v1902 = vpack.c.b16 %v1308, %v1302
    %v1903 = vpack.c.b16 %v1309, %v1303
    %v1904 = vpack.c.b16 %v1316, %v1310
    %v1905 = vpack.c.b16 %v1317, %v1311
    %v1906 = vpack.c.b16 %v1318, %v1312
    %v1907 = vpack.c.b16 %v1319, %v1313
    %v1908 = vpack.c.b16 %v1320, %v1314
    %v1909 = vpack.c.b16 %v1321, %v1315
    %v1910 = vpack.c.b16 %v1328, %v1322
    %v1911 = vpack.c.b16 %v1329, %v1323
    %v1912 = vpack.c.b16 %v1330, %v1324
    %v1913 = vpack.c.b16 %v1331, %v1325
    %v1914 = vpack.c.b16 %v1332, %v1326
    %v1915 = vpack.c.b16 %v1333, %v1327
    %v1916 = vpack.c.b16 %v1340, %v1334
    %v1917 = vpack.c.b16 %v1341, %v1335
    %v1918 = vpack.c.b16 %v1342, %v1336
    %v1919 = vpack.c.b16 %v1343, %v1337
    %v1920 = vpack.c.b16 %v1344, %v1338
    %v1921 = vpack.c.b16 %v1345, %v1339
    %v1922 = vpack.c.b16 %v1352, %v1346
    %v1923 = vpack.c.b16 %v1353, %v1347
    %v1924 = vpack.c.b16 %v1354, %v1348
    %v1925 = vpack.c.b16 %v1355, %v1349
    %v1926 = vpack.c.b16 %v1356, %v1350
    %v1927 = vpack.c.b16 %v1357, %v1351
    %v1928 = vpack.c.b16 %v1364, %v1358
    %v1929 = vpack.c.b16 %v1365, %v1359
    %v1930 = vpack.c.b16 %v1366, %v1360
    %v1931 = vpack.c.b16 %v1367, %v1361
    %v1932 = vpack.c.b16 %v1368, %v1362
    %v1933 = vpack.c.b16 %v1369, %v1363
    %v1934 = vpack.c.b16 %v1376, %v1370
    %v1935 = vpack.c.b16 %v1377, %v1371
    %v1936 = vpack.c.b16 %v1378, %v1372
    %v1937 = vpack.c.b16 %v1379, %v1373
    %v1938 = vpack.c.b16 %v1380, %v1374
    %v1939 = vpack.c.b16 %v1381, %v1375
    %v1940 = vpack.c.b16 %v1388, %v1382
    %v1941 = vpack.c.b16 %v1389, %v1383
    %v1942 = vpack.c.b16 %v1390, %v1384
    %v1943 = vpack.c.b16 %v1391, %v1385
    %v1944 = vpack.c.b16 %v1392, %v1386
    %v1945 = vpack.c.b16 %v1393, %v1387
    %v1946 = vpack.c.b16 %v1400, %v1394
    %v1947 = vpack.c.b16 %v1401, %v1395
    %v1948 = vpack.c.b16 %v1402, %v1396
    %v1949 = vpack.c.b16 %v1403, %v1397
    %v1950 = vpack.c.b16 %v1404, %v1398
    %v1951 = vpack.c.b16 %v1405, %v1399
    %v1952 = vpack.c.b16 %v1412, %v1406
    %v1953 = vpack.c.b16 %v1413, %v1407
    %v1954 = vpack.c.b16 %v1414, %v1408
    %v1955 = vpack.c.b16 %v1415, %v1409
    %v1956 = vpack.c.b16 %v1416, %v1410
    %v1957 = vpack.c.b16 %v1417, %v1411
    %v1958 = vpack.c.b16 %v1424, %v1418
    %v1959 = vpack.c.b16 %v1425, %v1419
    %v1960 = vpack.c.b16 %v1426, %v1420
    %v1961 = vpack.c.b16 %v1427, %v1421
    %v1962 = vpack.c.b16 %v1428, %v1422
    %v1963 = vpack.c.b16 %v1429, %v1423
    %v1964 = vpack.c.b16 %v1436, %v1430
    %v1965 = vpack.c.b16 %v1437, %v1431
    %v1966 = vpack.c.b16 %v1438, %v1432
    %v1967 = vpack.c.b16 %v1439, %v1433
    %v1968 = vpack.c.b16 %v1440, %v1434
    %v1969 = vpack.c.b16 %v1441, %v1435
    %v1970 = vpack.c.b16 %v1448, %v1442
    %v1971 = vpack.c.b16 %v1449, %v1443
    %v1972 = vpack.c.b16 %v1450, %v1444
    %v1973 = vpack.c.b16 %v1451, %v1445
    %v1974 = vpack.c.b16 %v1452, %v1446
    %v1975 = vpack.c.b16 %v1453, %v1447
    %v1976 = vpack.c.b16 %v1460, %v1454
    %v1977 = vpack.c.b16 %v1461, %v1455
    %v1978 = vpack.c.b16 %v1462, %v1456
    %v1979 = vpack.c.b16 %v1463, %v1457
    %v1980 = vpack.c.b16 %v1464, %v1458
    %v1981 = vpack.c.b16 %v1465, %v1459
    %v1982 = vpack.c.b16 %v1472, %v1466
    %v1983 = vpack.c.b16 %v1473, %v1467
    %v1984 = vpack.c.b16 %v1474, %v1468
    %v1985 = vpack.c.b16 %v1475, %v1469
    %v1986 = vpack.c.b16 %v1476, %v1470
    %v1987 = vpack.c.b16 %v1477, %v1471
    %v1988 = vpack.c.b16 %v1484, %v1478
    %v1989 = vpack.c.b16 %v1485, %v1479
    %v1990 = vpack.c.b16 %v1486, %v1480
    %v1991 = vpack.c.b16 %v1487, %v1481
    %v1992 = vpack.c.b16 %v1488, %v1482
    %v1993 = vpack.c.b16 %v1489, %v1483
    %v1994 = vpack.c.b16 %v1496, %v1490
    %v1995 = vpack.c.b16 %v1497, %v1491
    %v1996 = vpack.c.b16 %v1498, %v1492
    %v1997 = vpack.c.b16 %v1499, %v1493
    %v1998 = vpack.c.b16 %v1500, %v1494
    %v1999 = vpack.c.b16 %v1501, %v1495
    %v2000 = vpack.c.b16 %v1508, %v1502
    %v2001 = vpack.c.b16 %v1509, %v1503
    %v2002 = vpack.c.b16 %v1510, %v1504
    %v2003 = vpack.c.b16 %v1511, %v1505
    %v2004 = vpack.c.b16 %v1512, %v1506
    %v2005 = vpack.c.b16 %v1513, %v1507
    %v2006 = vpack.c.b16 %v1520, %v1514
    %v2007 = vpack.c.b16 %v1521, %v1515
    %v2008 = vpack.c.b16 %v1522, %v1516
    %v2009 = vpack.c.b16 %v1523, %v1517
    %v2010 = vpack.c.b16 %v1524, %v1518
    %v2011 = vpack.c.b16 %v1525, %v1519
    %v2012 = vpack.c.b16 %v1532, %v1526
    %v2013 = vpack.c.b16 %v1533, %v1527
    %v2014 = vpack.c.b16 %v1534, %v1528
    %v2015 = vpack.c.b16 %v1535, %v1529
    %v2016 = vpack.c.b16 %v1536, %v1530
    %v2017 = vpack.c.b16 %v1537, %v1531
    %v2018 = vpack.c.b16 %v1544, %v1538
    %v2019 = vpack.c.b16 %v1545, %v1539
    %v2020 = vpack.c.b16 %v1546, %v1540
    %v2021 = vpack.c.b16 %v1547, %v1541
    %v2022 = vpack.c.b16 %v1548, %v1542
    %v2023 = vpack.c.b16 %v1549, %v1543
    %v2024 = vpack.c.b16 %v1556, %v1550
    %v2025 = vpack.c.b16 %v1557, %v1551
    %v2026 = vpack.c.b16 %v1558, %v1552
    %v2027 = vpack.c.b16 %v1559, %v1553
    %v2028 = vpack.c.b16 %v1560, %v1554
    %v2029 = vpack.c.b16 %v1561, %v1555
    %v2030 = vpack.c.b16 %v1568, %v1562
    %v2031 = vpack.c.b16 %v1569, %v1563
    %v2032 = vpack.c.b16 %v1570, %v1564
    %v2033 = vpack.c.b16 %v1571, %v1565
    %v2034 = vpack.c.b16 %v1572, %v1566
    %v2035 = vpack.c.b16 %v1573, %v1567
    %v2036 = vpack.c.b16 %v1580, %v1574
    %v2037 = vpack.c.b16 %v1581, %v1575
    %v2038 = vpack.c.b16 %v1582, %v1576
    %v2039 = vpack.c.b16 %v1583, %v1577
    %v2040 = vpack.c.b16 %v1584, %v1578
    %v2041 = vpack.c.b16 %v1585, %v1579
    %v2042 = vpack.c.b16 %v1592, %v1586
    %v2043 = vpack.c.b16 %v1593, %v1587
    %v2044 = vpack.c.b16 %v1594, %v1588
    %v2045 = vpack.c.b16 %v1595, %v1589
    %v2046 = vpack.c.b16 %v1596, %v1590
    %v2047 = vpack.c.b16 %v1597, %v1591
    %v2048 = vpack.c.b16 %v1604, %v1598
    %v2049 = vpack.c.b16 %v1605, %v1599
    %v2050 = vpack.c.b16 %v1606, %v1600
    %v2051 = vpack.c.b16 %v1607, %v1601
    %v2052 = vpack.c.b16 %v1608, %v1602
    %v2053 = vpack.c.b16 %v1609, %v1603
    %v2054 = vpack.c.b16 %v1616, %v1610
    %v2055 = vpack.c.b16 %v1617, %v1611
    %v2056 = vpack.c.b16 %v1618, %v1612
    %v2057 = vpack.c.b16 %v1619, %v1613
    %v2058 = vpack.c.b16 %v1620, %v1614
    %v2059 = vpack.c.b16 %v1621, %v1615
    %v2060 = vpack.c.b16 %v1628, %v1622
    %v2061 = vpack.c.b16 %v1629, %v1623
    %v2062 = vpack.c.b16 %v1630, %v1624
    %v2063 = vpack.c.b16 %v1631, %v1625
    %v2064 = vpack.c.b16 %v1632, %v1626
    %v2065 = vpack.c.b16 %v1633, %v1627
    %v2066 = vpack.c.b16 %v1640, %v1634
    %v2067 = vpack.c.b16 %v1641, %v1635
    %v2068 = vpack.c.b16 %v1642, %v1636
    %v2069 = vpack.c.b16 %v1643, %v1637
    %v2070 = vpack.c.b16 %v1644, %v1638
    %v2071 = vpack.c.b16 %v1645, %v1639
    %v2072 = vpack.c.b16 %v1652, %v1646
    %v2073 = vpack.c.b16 %v1653, %v1647
    %v2074 = vpack.c.b16 %v1654, %v1648
    %v2075 = vpack.c.b16 %v1655, %v1649
    %v2076 = vpack.c.b16 %v1656, %v1650
    %v2077 = vpack.c.b16 %v1657, %v1651
    %v2078 = vpack.c.b16 %v1664, %v1658
    %v2079 = vpack.c.b16 %v1665, %v1659
    %v2080 = vpack.c.b16 %v1666, %v1660
    %v2081 = vpack.c.b16 %v1667, %v1661
    %v2082 = vpack.c.b16 %v1668, %v1662
    %v2083 = vpack.c.b16 %v1669, %v1663
    %v2084 = vpack.c.b16 %v1676, %v1670
    %v2085 = vpack.c.b16 %v1677, %v1671
    %v2086 = vpack.c.b16 %v1678, %v1672
    %v2087 = vpack.c.b16 %v1679, %v1673
    %v2088 = vpack.c.b16 %v1680, %v1674
    %v2089 = vpack.c.b16 %v1681, %v1675
    %v2090 = vpack.c.b16 %v1688, %v1682
    %v2091 = vpack.c.b16 %v1689, %v1683
    %v2092 = vpack.c.b16 %v1690, %v1684
    %v2093 = vpack.c.b16 %v1691, %v1685
    %v2094 = vpack.c.b16 %v1692, %v1686
    %v2095 = vpack.c.b16 %v1693, %v1687
    %v2096 = vpack.c.b16 %v1700, %v1694
    %v2097 = vpack.c.b16 %v1701, %v1695
    %v2098 = vpack.c.b16 %v1702, %v1696
    %v2099 = vpack.c.b16 %v1703, %v1697
    %v2100 = vpack.c.b16 %v1704, %v1698
    %v2101 = vpack.c.b16 %v1705, %v1699
    %v2102 = vpack.c.b16 %v1712, %v1706
    %v2103 = vpack.c.b16 %v1713, %v1707
    %v2104 = vpack.c.b16 %v1714, %v1708
    %v2105 = vpack.c.b16 %v1715, %v1709
    %v2106 = vpack.c.b16 %v1716, %v1710
    %v2107 = vpack.c.b16 %v1717, %v1711
    %v2108 = vpack.c.b16 %v1724, %v1718
    %v2109 = vpack.c.b16 %v1725, %v1719
    %v2110 = vpack.c.b16 %v1726, %v1720
    %v2111 = vpack.c.b16 %v1727, %v1721
    %v2112 = vpack.c.b16 %v1728, %v1722
    %v2113 = vpack.c.b16 %v1729, %v1723
    %2498 = vmatprep.subr.bf16.mxu0 %v1773
    %2499 = vmatpush1.bf16.msra.mxu0 %v1772
    %2500 = vmatprep.subr.bf16.mxu0 %v1767
    %2501 = vmatpush1.bf16.msra.mxu0 %v1766
    %2502 = vmatprep.subr.bf16.mxu0 %v1761
    %2503 = vmatpush1.bf16.msra.mxu0 %v1760
    %2504 = vmatprep.subr.bf16.mxu0 %v1755
    %2505 = vmatpush1.bf16.msra.mxu0 %v1754
    %2506 = vmatprep.subr.bf16.mxu0 %v1749
    %2507 = vmatpush1.bf16.msra.mxu0 %v1748
    %2508 = vmatprep.subr.bf16.mxu0 %v1743
    %2509 = vmatpush1.bf16.msra.mxu0 %v1742
    %2510 = vmatprep.subr.bf16.mxu0 %v1737
    %2511 = vmatpush1.bf16.msra.mxu0 %v1736
    %2512 = vmatprep.subr.bf16.mxu0 %v1731
    %2513 = vmatpush1.bf16.msra.mxu0 %v1730
    %2514 = vmatprep.subr.bf16.mxu0 %v1821
    %2515 = vmatpush2.bf16.msra.mxu0 %v1820
    %2516 = vmatprep.subr.bf16.mxu0 %v1815
    %2517 = vmatpush2.bf16.msra.mxu0 %v1814
    %2518 = vmatprep.subr.bf16.mxu0 %v1809
    %2519 = vmatpush2.bf16.msra.mxu0 %v1808
    %2520 = vmatprep.subr.bf16.mxu0 %v1803
    %2521 = vmatpush2.bf16.msra.mxu0 %v1802
    %2522 = vmatprep.subr.bf16.mxu0 %v1797
    %2523 = vmatpush2.bf16.msra.mxu0 %v1796
    %2524 = vmatprep.subr.bf16.mxu0 %v1791
    %2525 = vmatpush2.bf16.msra.mxu0 %v1790
    %2526 = vmatprep.subr.bf16.mxu0 %v1785
    %2527 = vmatpush2.bf16.msra.mxu0 %v1784
    %2528 = vmatprep.subr.bf16.mxu0 %v1779
    %2529 = vmatpush2.bf16.msra.mxu0 %v1778
    %2530 = vmatprep.mubr.bf16.mxu0 %v155
    %2531 = vmatmul.mubr.bf16.gmra.mxu0 %v154
    %v2532 = vpop.f32.mrf.mxu0
    %v2533 = vadd.f32 %v551, %v2532
    %v2534 = vpop.f32.mrf.mxu0
    %v2535 = vadd.f32 %v555, %v2534
    %v2536 = vpop.f32.mrf.mxu0
    %v2537 = vpop.f32.mrf.mxu0
    %2538 = vdwg.mxu0
    %2539 = vmatprep.subr.bf16.mxu0 %v1869
    %2540 = vmatpush1.bf16.msra.mxu0 %v1868
    %2541 = vmatprep.subr.bf16.mxu0 %v1863
    %2542 = vmatpush1.bf16.msra.mxu0 %v1862
    %2543 = vmatprep.subr.bf16.mxu0 %v1857
    %2544 = vmatpush1.bf16.msra.mxu0 %v1856
    %2545 = vmatprep.subr.bf16.mxu0 %v1851
    %2546 = vmatpush1.bf16.msra.mxu0 %v1850
    %2547 = vmatprep.subr.bf16.mxu0 %v1845
    %2548 = vmatpush1.bf16.msra.mxu0 %v1844
    %2549 = vmatprep.subr.bf16.mxu0 %v1839
    %2550 = vmatpush1.bf16.msra.mxu0 %v1838
    %2551 = vmatprep.subr.bf16.mxu0 %v1833
    %2552 = vmatpush1.bf16.msra.mxu0 %v1832
    %2553 = vmatprep.subr.bf16.mxu0 %v1827
    %2554 = vmatpush1.bf16.msra.mxu0 %v1826
    %2555 = vmatprep.subr.bf16.mxu0 %v1917
    %2556 = vmatpush2.bf16.msra.mxu0 %v1916
    %2557 = vmatprep.subr.bf16.mxu0 %v1911
    %2558 = vmatpush2.bf16.msra.mxu0 %v1910
    %2559 = vmatprep.subr.bf16.mxu0 %v1905
    %2560 = vmatpush2.bf16.msra.mxu0 %v1904
    %2561 = vmatprep.subr.bf16.mxu0 %v1899
    %2562 = vmatpush2.bf16.msra.mxu0 %v1898
    %2563 = vmatprep.subr.bf16.mxu0 %v1893
    %2564 = vmatpush2.bf16.msra.mxu0 %v1892
    %2565 = vmatprep.subr.bf16.mxu0 %v1887
    %2566 = vmatpush2.bf16.msra.mxu0 %v1886
    %2567 = vmatprep.subr.bf16.mxu0 %v1881
    %2568 = vmatpush2.bf16.msra.mxu0 %v1880
    %2569 = vmatprep.subr.bf16.mxu0 %v1875
    %2570 = vmatpush2.bf16.msra.mxu0 %v1874
    %2571 = vmatprep.mubr.bf16.mxu0 %v157
    %2572 = vmatmul.mubr.bf16.gmra.mxu0 %v156
    %v2573 = vpop.f32.mrf.mxu0
    %v2574 = vadd.f32 %v2533, %v2573
    %v2575 = vpop.f32.mrf.mxu0
    %v2576 = vadd.f32 %v2535, %v2575
    %v2577 = vpop.f32.mrf.mxu0
    %v2578 = vpop.f32.mrf.mxu0
    %2579 = vdwg.mxu0
    %2580 = vmatprep.subr.bf16.mxu0 %v1965
    %2581 = vmatpush1.bf16.msra.mxu0 %v1964
    %2582 = vmatprep.subr.bf16.mxu0 %v1959
    %2583 = vmatpush1.bf16.msra.mxu0 %v1958
    %2584 = vmatprep.subr.bf16.mxu0 %v1953
    %2585 = vmatpush1.bf16.msra.mxu0 %v1952
    %2586 = vmatprep.subr.bf16.mxu0 %v1947
    %2587 = vmatpush1.bf16.msra.mxu0 %v1946
    %2588 = vmatprep.subr.bf16.mxu0 %v1941
    %2589 = vmatpush1.bf16.msra.mxu0 %v1940
    %2590 = vmatprep.subr.bf16.mxu0 %v1935
    %2591 = vmatpush1.bf16.msra.mxu0 %v1934
    %2592 = vmatprep.subr.bf16.mxu0 %v1929
    %2593 = vmatpush1.bf16.msra.mxu0 %v1928
    %2594 = vmatprep.subr.bf16.mxu0 %v1923
    %2595 = vmatpush1.bf16.msra.mxu0 %v1922
    %2596 = vmatprep.subr.bf16.mxu0 %v2013
    %2597 = vmatpush2.bf16.msra.mxu0 %v2012
    %2598 = vmatprep.subr.bf16.mxu0 %v2007
    %2599 = vmatpush2.bf16.msra.mxu0 %v2006
    %2600 = vmatprep.subr.bf16.mxu0 %v2001
    %2601 = vmatpush2.bf16.msra.mxu0 %v2000
    %2602 = vmatprep.subr.bf16.mxu0 %v1995
    %2603 = vmatpush2.bf16.msra.mxu0 %v1994
    %2604 = vmatprep.subr.bf16.mxu0 %v1989
    %2605 = vmatpush2.bf16.msra.mxu0 %v1988
    %2606 = vmatprep.subr.bf16.mxu0 %v1983
    %2607 = vmatpush2.bf16.msra.mxu0 %v1982
    %2608 = vmatprep.subr.bf16.mxu0 %v1977
    %2609 = vmatpush2.bf16.msra.mxu0 %v1976
    %2610 = vmatprep.subr.bf16.mxu0 %v1971
    %2611 = vmatpush2.bf16.msra.mxu0 %v1970
    %2612 = vmatprep.mubr.bf16.mxu0 %v159
    %2613 = vmatmul.mubr.bf16.gmra.mxu0 %v158
    %v2614 = vpop.f32.mrf.mxu0
    %v2615 = vadd.f32 %v2574, %v2614
    %v2616 = vpop.f32.mrf.mxu0
    %v2617 = vadd.f32 %v2576, %v2616
    %v2618 = vpop.f32.mrf.mxu0
    %v2619 = vpop.f32.mrf.mxu0
    %2620 = vdwg.mxu0
    %2621 = vmatprep.subr.bf16.mxu0 %v2061
    %2622 = vmatpush1.bf16.msra.mxu0 %v2060
    %2623 = vmatprep.subr.bf16.mxu0 %v2055
    %2624 = vmatpush1.bf16.msra.mxu0 %v2054
    %2625 = vmatprep.subr.bf16.mxu0 %v2049
    %2626 = vmatpush1.bf16.msra.mxu0 %v2048
    %2627 = vmatprep.subr.bf16.mxu0 %v2043
    %2628 = vmatpush1.bf16.msra.mxu0 %v2042
    %2629 = vmatprep.subr.bf16.mxu0 %v2037
    %2630 = vmatpush1.bf16.msra.mxu0 %v2036
    %2631 = vmatprep.subr.bf16.mxu0 %v2031
    %2632 = vmatpush1.bf16.msra.mxu0 %v2030
    %2633 = vmatprep.subr.bf16.mxu0 %v2025
    %2634 = vmatpush1.bf16.msra.mxu0 %v2024
    %2635 = vmatprep.subr.bf16.mxu0 %v2019
    %2636 = vmatpush1.bf16.msra.mxu0 %v2018
    %2637 = vmatprep.subr.bf16.mxu0 %v2109
    %2638 = vmatpush2.bf16.msra.mxu0 %v2108
    %2639 = vmatprep.subr.bf16.mxu0 %v2103
    %2640 = vmatpush2.bf16.msra.mxu0 %v2102
    %2641 = vmatprep.subr.bf16.mxu0 %v2097
    %2642 = vmatpush2.bf16.msra.mxu0 %v2096
    %2643 = vmatprep.subr.bf16.mxu0 %v2091
    %2644 = vmatpush2.bf16.msra.mxu0 %v2090
    %2645 = vmatprep.subr.bf16.mxu0 %v2085
    %2646 = vmatpush2.bf16.msra.mxu0 %v2084
    %2647 = vmatprep.subr.bf16.mxu0 %v2079
    %2648 = vmatpush2.bf16.msra.mxu0 %v2078
    %2649 = vmatprep.subr.bf16.mxu0 %v2073
    %2650 = vmatpush2.bf16.msra.mxu0 %v2072
    %2651 = vmatprep.subr.bf16.mxu0 %v2067
    %2652 = vmatpush2.bf16.msra.mxu0 %v2066
    %2653 = vmatprep.mubr.bf16.mxu0 %v161
    %2654 = vmatmul.mubr.bf16.gmra.mxu0 %v160
    %v2655 = vpop.f32.mrf.mxu0
    %v2656 = vadd.f32 %v2615, %v2655
    %v2657 = vpop.f32.mrf.mxu0
    %v2658 = vadd.f32 %v2617, %v2657
    %v2659 = vpop.f32.mrf.mxu0
    %v2660 = vpop.f32.mrf.mxu0
    %2661 = vdwg.mxu0
    %2662 = vmatprep.subr.bf16.mxu0 %v1775
    %2663 = vmatpush1.bf16.msra.mxu0 %v1774
    %2664 = vmatprep.subr.bf16.mxu0 %v1769
    %2665 = vmatpush1.bf16.msra.mxu0 %v1768
    %2666 = vmatprep.subr.bf16.mxu0 %v1763
    %2667 = vmatpush1.bf16.msra.mxu0 %v1762
    %2668 = vmatprep.subr.bf16.mxu0 %v1757
    %2669 = vmatpush1.bf16.msra.mxu0 %v1756
    %2670 = vmatprep.subr.bf16.mxu0 %v1751
    %2671 = vmatpush1.bf16.msra.mxu0 %v1750
    %2672 = vmatprep.subr.bf16.mxu0 %v1745
    %2673 = vmatpush1.bf16.msra.mxu0 %v1744
    %2674 = vmatprep.subr.bf16.mxu0 %v1739
    %2675 = vmatpush1.bf16.msra.mxu0 %v1738
    %2676 = vmatprep.subr.bf16.mxu0 %v1733
    %2677 = vmatpush1.bf16.msra.mxu0 %v1732
    %2678 = vmatprep.subr.bf16.mxu0 %v1823
    %2679 = vmatpush2.bf16.msra.mxu0 %v1822
    %2680 = vmatprep.subr.bf16.mxu0 %v1817
    %2681 = vmatpush2.bf16.msra.mxu0 %v1816
    %2682 = vmatprep.subr.bf16.mxu0 %v1811
    %2683 = vmatpush2.bf16.msra.mxu0 %v1810
    %2684 = vmatprep.subr.bf16.mxu0 %v1805
    %2685 = vmatpush2.bf16.msra.mxu0 %v1804
    %2686 = vmatprep.subr.bf16.mxu0 %v1799
    %2687 = vmatpush2.bf16.msra.mxu0 %v1798
    %2688 = vmatprep.subr.bf16.mxu0 %v1793
    %2689 = vmatpush2.bf16.msra.mxu0 %v1792
    %2690 = vmatprep.subr.bf16.mxu0 %v1787
    %2691 = vmatpush2.bf16.msra.mxu0 %v1786
    %2692 = vmatprep.subr.bf16.mxu0 %v1781
    %2693 = vmatpush2.bf16.msra.mxu0 %v1780
    %2694 = vmatprep.mubr.bf16.mxu0 %v155
    %2695 = vmatmul.mubr.bf16.gmra.mxu0 %v154
    %v2696 = vpop.f32.mrf.mxu0
    %v2697 = vadd.f32 %v559, %v2696
    %v2698 = vpop.f32.mrf.mxu0
    %v2699 = vadd.f32 %v563, %v2698
    %v2700 = vpop.f32.mrf.mxu0
    %v2701 = vpop.f32.mrf.mxu0
    %2702 = vdwg.mxu0
    %2703 = vmatprep.subr.bf16.mxu0 %v1871
    %2704 = vmatpush1.bf16.msra.mxu0 %v1870
    %2705 = vmatprep.subr.bf16.mxu0 %v1865
    %2706 = vmatpush1.bf16.msra.mxu0 %v1864
    %2707 = vmatprep.subr.bf16.mxu0 %v1859
    %2708 = vmatpush1.bf16.msra.mxu0 %v1858
    %2709 = vmatprep.subr.bf16.mxu0 %v1853
    %2710 = vmatpush1.bf16.msra.mxu0 %v1852
    %2711 = vmatprep.subr.bf16.mxu0 %v1847
    %2712 = vmatpush1.bf16.msra.mxu0 %v1846
    %2713 = vmatprep.subr.bf16.mxu0 %v1841
    %2714 = vmatpush1.bf16.msra.mxu0 %v1840
    %2715 = vmatprep.subr.bf16.mxu0 %v1835
    %2716 = vmatpush1.bf16.msra.mxu0 %v1834
    %2717 = vmatprep.subr.bf16.mxu0 %v1829
    %2718 = vmatpush1.bf16.msra.mxu0 %v1828
    %2719 = vmatprep.subr.bf16.mxu0 %v1919
    %2720 = vmatpush2.bf16.msra.mxu0 %v1918
    %2721 = vmatprep.subr.bf16.mxu0 %v1913
    %2722 = vmatpush2.bf16.msra.mxu0 %v1912
    %2723 = vmatprep.subr.bf16.mxu0 %v1907
    %2724 = vmatpush2.bf16.msra.mxu0 %v1906
    %2725 = vmatprep.subr.bf16.mxu0 %v1901
    %2726 = vmatpush2.bf16.msra.mxu0 %v1900
    %2727 = vmatprep.subr.bf16.mxu0 %v1895
    %2728 = vmatpush2.bf16.msra.mxu0 %v1894
    %2729 = vmatprep.subr.bf16.mxu0 %v1889
    %2730 = vmatpush2.bf16.msra.mxu0 %v1888
    %2731 = vmatprep.subr.bf16.mxu0 %v1883
    %2732 = vmatpush2.bf16.msra.mxu0 %v1882
    %2733 = vmatprep.subr.bf16.mxu0 %v1877
    %2734 = vmatpush2.bf16.msra.mxu0 %v1876
    %2735 = vmatprep.mubr.bf16.mxu0 %v157
    %2736 = vmatmul.mubr.bf16.gmra.mxu0 %v156
    %v2737 = vpop.f32.mrf.mxu0
    %v2738 = vadd.f32 %v2697, %v2737
    %v2739 = vpop.f32.mrf.mxu0
    %v2740 = vadd.f32 %v2699, %v2739
    %v2741 = vpop.f32.mrf.mxu0
    %v2742 = vpop.f32.mrf.mxu0
    %2743 = vdwg.mxu0
    %2744 = vmatprep.subr.bf16.mxu0 %v1967
    %2745 = vmatpush1.bf16.msra.mxu0 %v1966
    %2746 = vmatprep.subr.bf16.mxu0 %v1961
    %2747 = vmatpush1.bf16.msra.mxu0 %v1960
    %2748 = vmatprep.subr.bf16.mxu0 %v1955
    %2749 = vmatpush1.bf16.msra.mxu0 %v1954
    %2750 = vmatprep.subr.bf16.mxu0 %v1949
    %2751 = vmatpush1.bf16.msra.mxu0 %v1948
    %2752 = vmatprep.subr.bf16.mxu0 %v1943
    %2753 = vmatpush1.bf16.msra.mxu0 %v1942
    %2754 = vmatprep.subr.bf16.mxu0 %v1937
    %2755 = vmatpush1.bf16.msra.mxu0 %v1936
    %2756 = vmatprep.subr.bf16.mxu0 %v1931
    %2757 = vmatpush1.bf16.msra.mxu0 %v1930
    %2758 = vmatprep.subr.bf16.mxu0 %v1925
    %2759 = vmatpush1.bf16.msra.mxu0 %v1924
    %2760 = vmatprep.subr.bf16.mxu0 %v2015
    %2761 = vmatpush2.bf16.msra.mxu0 %v2014
    %2762 = vmatprep.subr.bf16.mxu0 %v2009
    %2763 = vmatpush2.bf16.msra.mxu0 %v2008
    %2764 = vmatprep.subr.bf16.mxu0 %v2003
    %2765 = vmatpush2.bf16.msra.mxu0 %v2002
    %2766 = vmatprep.subr.bf16.mxu0 %v1997
    %2767 = vmatpush2.bf16.msra.mxu0 %v1996
    %2768 = vmatprep.subr.bf16.mxu0 %v1991
    %2769 = vmatpush2.bf16.msra.mxu0 %v1990
    %2770 = vmatprep.subr.bf16.mxu0 %v1985
    %2771 = vmatpush2.bf16.msra.mxu0 %v1984
    %2772 = vmatprep.subr.bf16.mxu0 %v1979
    %2773 = vmatpush2.bf16.msra.mxu0 %v1978
    %2774 = vmatprep.subr.bf16.mxu0 %v1973
    %2775 = vmatpush2.bf16.msra.mxu0 %v1972
    %2776 = vmatprep.mubr.bf16.mxu0 %v159
    %2777 = vmatmul.mubr.bf16.gmra.mxu0 %v158
    %v2778 = vpop.f32.mrf.mxu0
    %v2779 = vadd.f32 %v2738, %v2778
    %v2780 = vpop.f32.mrf.mxu0
    %v2781 = vadd.f32 %v2740, %v2780
    %v2782 = vpop.f32.mrf.mxu0
    %v2783 = vpop.f32.mrf.mxu0
    %2784 = vdwg.mxu0
    %2785 = vmatprep.subr.bf16.mxu0 %v2063
    %2786 = vmatpush1.bf16.msra.mxu0 %v2062
    %2787 = vmatprep.subr.bf16.mxu0 %v2057
    %2788 = vmatpush1.bf16.msra.mxu0 %v2056
    %2789 = vmatprep.subr.bf16.mxu0 %v2051
    %2790 = vmatpush1.bf16.msra.mxu0 %v2050
    %2791 = vmatprep.subr.bf16.mxu0 %v2045
    %2792 = vmatpush1.bf16.msra.mxu0 %v2044
    %2793 = vmatprep.subr.bf16.mxu0 %v2039
    %2794 = vmatpush1.bf16.msra.mxu0 %v2038
    %2795 = vmatprep.subr.bf16.mxu0 %v2033
    %2796 = vmatpush1.bf16.msra.mxu0 %v2032
    %2797 = vmatprep.subr.bf16.mxu0 %v2027
    %2798 = vmatpush1.bf16.msra.mxu0 %v2026
    %2799 = vmatprep.subr.bf16.mxu0 %v2021
    %2800 = vmatpush1.bf16.msra.mxu0 %v2020
    %2801 = vmatprep.subr.bf16.mxu0 %v2111
    %2802 = vmatpush2.bf16.msra.mxu0 %v2110
    %2803 = vmatprep.subr.bf16.mxu0 %v2105
    %2804 = vmatpush2.bf16.msra.mxu0 %v2104
    %2805 = vmatprep.subr.bf16.mxu0 %v2099
    %2806 = vmatpush2.bf16.msra.mxu0 %v2098
    %2807 = vmatprep.subr.bf16.mxu0 %v2093
    %2808 = vmatpush2.bf16.msra.mxu0 %v2092
    %2809 = vmatprep.subr.bf16.mxu0 %v2087
    %2810 = vmatpush2.bf16.msra.mxu0 %v2086
    %2811 = vmatprep.subr.bf16.mxu0 %v2081
    %2812 = vmatpush2.bf16.msra.mxu0 %v2080
    %2813 = vmatprep.subr.bf16.mxu0 %v2075
    %2814 = vmatpush2.bf16.msra.mxu0 %v2074
    %2815 = vmatprep.subr.bf16.mxu0 %v2069
    %2816 = vmatpush2.bf16.msra.mxu0 %v2068
    %2817 = vmatprep.mubr.bf16.mxu0 %v161
    %2818 = vmatmul.mubr.bf16.gmra.mxu0 %v160
    %v2819 = vpop.f32.mrf.mxu0
    %v2820 = vadd.f32 %v2779, %v2819
    %v2821 = vpop.f32.mrf.mxu0
    %v2822 = vadd.f32 %v2781, %v2821
    %v2823 = vpop.f32.mrf.mxu0
    %v2824 = vpop.f32.mrf.mxu0
    %2825 = vdwg.mxu0
    %2826 = vmatprep.subr.bf16.mxu0 %v1777
    %2827 = vmatpush1.bf16.msra.mxu0 %v1776
    %2828 = vmatprep.subr.bf16.mxu0 %v1771
    %2829 = vmatpush1.bf16.msra.mxu0 %v1770
    %2830 = vmatprep.subr.bf16.mxu0 %v1765
    %2831 = vmatpush1.bf16.msra.mxu0 %v1764
    %2832 = vmatprep.subr.bf16.mxu0 %v1759
    %2833 = vmatpush1.bf16.msra.mxu0 %v1758
    %2834 = vmatprep.subr.bf16.mxu0 %v1753
    %2835 = vmatpush1.bf16.msra.mxu0 %v1752
    %2836 = vmatprep.subr.bf16.mxu0 %v1747
    %2837 = vmatpush1.bf16.msra.mxu0 %v1746
    %2838 = vmatprep.subr.bf16.mxu0 %v1741
    %2839 = vmatpush1.bf16.msra.mxu0 %v1740
    %2840 = vmatprep.subr.bf16.mxu0 %v1735
    %2841 = vmatpush1.bf16.msra.mxu0 %v1734
    %2842 = vmatprep.subr.bf16.mxu0 %v1825
    %2843 = vmatpush2.bf16.msra.mxu0 %v1824
    %2844 = vmatprep.subr.bf16.mxu0 %v1819
    %2845 = vmatpush2.bf16.msra.mxu0 %v1818
    %2846 = vmatprep.subr.bf16.mxu0 %v1813
    %2847 = vmatpush2.bf16.msra.mxu0 %v1812
    %2848 = vmatprep.subr.bf16.mxu0 %v1807
    %2849 = vmatpush2.bf16.msra.mxu0 %v1806
    %2850 = vmatprep.subr.bf16.mxu0 %v1801
    %2851 = vmatpush2.bf16.msra.mxu0 %v1800
    %2852 = vmatprep.subr.bf16.mxu0 %v1795
    %2853 = vmatpush2.bf16.msra.mxu0 %v1794
    %2854 = vmatprep.subr.bf16.mxu0 %v1789
    %2855 = vmatpush2.bf16.msra.mxu0 %v1788
    %2856 = vmatprep.subr.bf16.mxu0 %v1783
    %2857 = vmatpush2.bf16.msra.mxu0 %v1782
    %2858 = vmatprep.mubr.bf16.mxu0 %v155
    %2859 = vmatmul.mubr.bf16.gmra.mxu0 %v154
    %v2860 = vpop.f32.mrf.mxu0
    %v2861 = vadd.f32 %v567, %v2860
    %v2862 = vpop.f32.mrf.mxu0
    %v2863 = vadd.f32 %v571, %v2862
    %v2864 = vpop.f32.mrf.mxu0
    %v2865 = vpop.f32.mrf.mxu0
    %2866 = vdwg.mxu0
    %2867 = vmatprep.subr.bf16.mxu0 %v1873
    %2868 = vmatpush1.bf16.msra.mxu0 %v1872
    %2869 = vmatprep.subr.bf16.mxu0 %v1867
    %2870 = vmatpush1.bf16.msra.mxu0 %v1866
    %2871 = vmatprep.subr.bf16.mxu0 %v1861
    %2872 = vmatpush1.bf16.msra.mxu0 %v1860
    %2873 = vmatprep.subr.bf16.mxu0 %v1855
    %2874 = vmatpush1.bf16.msra.mxu0 %v1854
    %2875 = vmatprep.subr.bf16.mxu0 %v1849
    %2876 = vmatpush1.bf16.msra.mxu0 %v1848
    %2877 = vmatprep.subr.bf16.mxu0 %v1843
    %2878 = vmatpush1.bf16.msra.mxu0 %v1842
    %2879 = vmatprep.subr.bf16.mxu0 %v1837
    %2880 = vmatpush1.bf16.msra.mxu0 %v1836
    %2881 = vmatprep.subr.bf16.mxu0 %v1831
    %2882 = vmatpush1.bf16.msra.mxu0 %v1830
    %2883 = vmatprep.subr.bf16.mxu0 %v1921
    %2884 = vmatpush2.bf16.msra.mxu0 %v1920
    %2885 = vmatprep.subr.bf16.mxu0 %v1915
    %2886 = vmatpush2.bf16.msra.mxu0 %v1914
    %2887 = vmatprep.subr.bf16.mxu0 %v1909
    %2888 = vmatpush2.bf16.msra.mxu0 %v1908
    %2889 = vmatprep.subr.bf16.mxu0 %v1903
    %2890 = vmatpush2.bf16.msra.mxu0 %v1902
    %2891 = vmatprep.subr.bf16.mxu0 %v1897
    %2892 = vmatpush2.bf16.msra.mxu0 %v1896
    %2893 = vmatprep.subr.bf16.mxu0 %v1891
    %2894 = vmatpush2.bf16.msra.mxu0 %v1890
    %2895 = vmatprep.subr.bf16.mxu0 %v1885
    %2896 = vmatpush2.bf16.msra.mxu0 %v1884
    %2897 = vmatprep.subr.bf16.mxu0 %v1879
    %2898 = vmatpush2.bf16.msra.mxu0 %v1878
    %2899 = vmatprep.mubr.bf16.mxu0 %v157
    %2900 = vmatmul.mubr.bf16.gmra.mxu0 %v156
    %v2901 = vpop.f32.mrf.mxu0
    %v2902 = vadd.f32 %v2861, %v2901
    %v2903 = vpop.f32.mrf.mxu0
    %v2904 = vadd.f32 %v2863, %v2903
    %v2905 = vpop.f32.mrf.mxu0
    %v2906 = vpop.f32.mrf.mxu0
    %2907 = vdwg.mxu0
    %2908 = vmatprep.subr.bf16.mxu0 %v1969
    %2909 = vmatpush1.bf16.msra.mxu0 %v1968
    %2910 = vmatprep.subr.bf16.mxu0 %v1963
    %2911 = vmatpush1.bf16.msra.mxu0 %v1962
    %2912 = vmatprep.subr.bf16.mxu0 %v1957
    %2913 = vmatpush1.bf16.msra.mxu0 %v1956
    %2914 = vmatprep.subr.bf16.mxu0 %v1951
    %2915 = vmatpush1.bf16.msra.mxu0 %v1950
    %2916 = vmatprep.subr.bf16.mxu0 %v1945
    %2917 = vmatpush1.bf16.msra.mxu0 %v1944
    %2918 = vmatprep.subr.bf16.mxu0 %v1939
    %2919 = vmatpush1.bf16.msra.mxu0 %v1938
    %2920 = vmatprep.subr.bf16.mxu0 %v1933
    %2921 = vmatpush1.bf16.msra.mxu0 %v1932
    %2922 = vmatprep.subr.bf16.mxu0 %v1927
    %2923 = vmatpush1.bf16.msra.mxu0 %v1926
    %2924 = vmatprep.subr.bf16.mxu0 %v2017
    %2925 = vmatpush2.bf16.msra.mxu0 %v2016
    %2926 = vmatprep.subr.bf16.mxu0 %v2011
    %2927 = vmatpush2.bf16.msra.mxu0 %v2010
    %2928 = vmatprep.subr.bf16.mxu0 %v2005
    %2929 = vmatpush2.bf16.msra.mxu0 %v2004
    %2930 = vmatprep.subr.bf16.mxu0 %v1999
    %2931 = vmatpush2.bf16.msra.mxu0 %v1998
    %2932 = vmatprep.subr.bf16.mxu0 %v1993
    %2933 = vmatpush2.bf16.msra.mxu0 %v1992
    %2934 = vmatprep.subr.bf16.mxu0 %v1987
    %2935 = vmatpush2.bf16.msra.mxu0 %v1986
    %2936 = vmatprep.subr.bf16.mxu0 %v1981
    %2937 = vmatpush2.bf16.msra.mxu0 %v1980
    %2938 = vmatprep.subr.bf16.mxu0 %v1975
    %2939 = vmatpush2.bf16.msra.mxu0 %v1974
    %2940 = vmatprep.mubr.bf16.mxu0 %v159
    %2941 = vmatmul.mubr.bf16.gmra.mxu0 %v158
    %v2942 = vpop.f32.mrf.mxu0
    %v2943 = vadd.f32 %v2902, %v2942
    %v2944 = vpop.f32.mrf.mxu0
    %v2945 = vadd.f32 %v2904, %v2944
    %v2946 = vpop.f32.mrf.mxu0
    %v2947 = vpop.f32.mrf.mxu0
    %2948 = vdwg.mxu0
    %2949 = vmatprep.subr.bf16.mxu0 %v2065
    %2950 = vmatpush1.bf16.msra.mxu0 %v2064
    %2951 = vmatprep.subr.bf16.mxu0 %v2059
    %2952 = vmatpush1.bf16.msra.mxu0 %v2058
    %2953 = vmatprep.subr.bf16.mxu0 %v2053
    %2954 = vmatpush1.bf16.msra.mxu0 %v2052
    %2955 = vmatprep.subr.bf16.mxu0 %v2047
    %2956 = vmatpush1.bf16.msra.mxu0 %v2046
    %2957 = vmatprep.subr.bf16.mxu0 %v2041
    %2958 = vmatpush1.bf16.msra.mxu0 %v2040
    %2959 = vmatprep.subr.bf16.mxu0 %v2035
    %2960 = vmatpush1.bf16.msra.mxu0 %v2034
    %2961 = vmatprep.subr.bf16.mxu0 %v2029
    %2962 = vmatpush1.bf16.msra.mxu0 %v2028
    %2963 = vmatprep.subr.bf16.mxu0 %v2023
    %2964 = vmatpush1.bf16.msra.mxu0 %v2022
    %2965 = vmatprep.subr.bf16.mxu0 %v2113
    %2966 = vmatpush2.bf16.msra.mxu0 %v2112
    %2967 = vmatprep.subr.bf16.mxu0 %v2107
    %2968 = vmatpush2.bf16.msra.mxu0 %v2106
    %2969 = vmatprep.subr.bf16.mxu0 %v2101
    %2970 = vmatpush2.bf16.msra.mxu0 %v2100
    %2971 = vmatprep.subr.bf16.mxu0 %v2095
    %2972 = vmatpush2.bf16.msra.mxu0 %v2094
    %2973 = vmatprep.subr.bf16.mxu0 %v2089
    %2974 = vmatpush2.bf16.msra.mxu0 %v2088
    %2975 = vmatprep.subr.bf16.mxu0 %v2083
    %2976 = vmatpush2.bf16.msra.mxu0 %v2082
    %2977 = vmatprep.subr.bf16.mxu0 %v2077
    %2978 = vmatpush2.bf16.msra.mxu0 %v2076
    %2979 = vmatprep.subr.bf16.mxu0 %v2071
    %2980 = vmatpush2.bf16.msra.mxu0 %v2070
    %2981 = vmatprep.mubr.bf16.mxu0 %v161
    %2982 = vmatmul.mubr.bf16.gmra.mxu0 %v160
    %v2983 = vpop.f32.mrf.mxu0
    %v2984 = vadd.f32 %v2943, %v2983
    %v2985 = vpop.f32.mrf.mxu0
    %v2986 = vadd.f32 %v2945, %v2985
    %v2987 = vpop.f32.mrf.mxu0
    %v2988 = vpop.f32.mrf.mxu0
    %2989 = vdwg.mxu0
    %v2990 = vmax.f32 %v2656, 0.0
    %v2991 = vmax.f32 %v2658, 0.0
    %v2992 = vmax.f32 %v2820, 0.0
    %v2993 = vmax.f32 %v2822, 0.0
    %v2994 = vmax.f32 %v2984, 0.0
    %v2995 = vmax.f32 %v2986, 0.0
    %v2996 = vpack.c.bf16 %v2990, %v2990
    %v2997 = vpack.c.bf16 %v2991, %v2991
    %v2998 = vpack.c.bf16 %v2992, %v2992
    %v2999 = vpack.c.bf16 %v2993, %v2993
    %v3000 = vpack.c.bf16 %v2994, %v2994
    %v3001 = vpack.c.bf16 %v2995, %v2995
    %v3002 = vld [vmem:[#allocation8] sm:$0xff]
    %v3003 = vld [vmem:[#allocation8 + $0x8] sm:$0xff]
    %v3004 = vld [vmem:[#allocation8 + $0x10] sm:$0xff]
    %v3005 = vld [vmem:[#allocation8 + $0x18] sm:$0xff]
    %v3006 = vld [vmem:[#allocation8 + $0x20] sm:$0xff]
    %v3007 = vld [vmem:[#allocation8 + $0x28] sm:$0xff]
    %v3008 = vld [vmem:[#allocation8 + $0x30] sm:$0xff]
    %v3009 = vld [vmem:[#allocation8 + $0x38] sm:$0xff]
    %v3010 = vld [vmem:[#allocation8 + $0x40] sm:$0xff]
    %v3011 = vld [vmem:[#allocation8 + $0x48] sm:$0xff]
    %v3012 = vld [vmem:[#allocation8 + $0x50] sm:$0xff]
    %v3013 = vld [vmem:[#allocation8 + $0x58] sm:$0xff]
    %v3014 = vld [vmem:[#allocation8 + $0x60] sm:$0xff]
    %v3015 = vld [vmem:[#allocation8 + $0x68] sm:$0xff]
    %v3016 = vld [vmem:[#allocation8 + $0x70] sm:$0xff]
    %v3017 = vld [vmem:[#allocation8 + $0x78] sm:$0xff]
    %v3018 = vld [vmem:[#allocation8 + $0x80] sm:$0xff]
    %v3019 = vld [vmem:[#allocation8 + $0x88] sm:$0xff]
    %v3020 = vld [vmem:[#allocation8 + $0x90] sm:$0xff]
    %v3021 = vld [vmem:[#allocation8 + $0x98] sm:$0xff]
    %v3022 = vld [vmem:[#allocation8 + $0xa0] sm:$0xff]
    %v3023 = vld [vmem:[#allocation8 + $0xa8] sm:$0xff]
    %v3024 = vld [vmem:[#allocation8 + $0xb0] sm:$0xff]
    %v3025 = vld [vmem:[#allocation8 + $0xb8] sm:$0xff]
    %v3026 = vld [vmem:[#allocation8 + $0xc0] sm:$0xff]
    %v3027 = vld [vmem:[#allocation8 + $0xc8] sm:$0xff]
    %v3028 = vld [vmem:[#allocation8 + $0xd0] sm:$0xff]
    %v3029 = vld [vmem:[#allocation8 + $0xd8] sm:$0xff]
    %v3030 = vld [vmem:[#allocation8 + $0xe0] sm:$0xff]
    %v3031 = vld [vmem:[#allocation8 + $0xe8] sm:$0xff]
    %v3032 = vld [vmem:[#allocation8 + $0xf0] sm:$0xff]
    %v3033 = vld [vmem:[#allocation8 + $0xf8] sm:$0xff]
    %v3034 = vld [vmem:[#allocation8 + $0x100] sm:$0xff]
    %v3035 = vld [vmem:[#allocation8 + $0x108] sm:$0xff]
    %v3036 = vld [vmem:[#allocation8 + $0x110] sm:$0xff]
    %v3037 = vld [vmem:[#allocation8 + $0x118] sm:$0xff]
    %v3038 = vld [vmem:[#allocation8 + $0x120] sm:$0xff]
    %v3039 = vld [vmem:[#allocation8 + $0x128] sm:$0xff]
    %v3040 = vld [vmem:[#allocation8 + $0x130] sm:$0xff]
    %v3041 = vld [vmem:[#allocation8 + $0x138] sm:$0xff]
    %v3042 = vld [vmem:[#allocation8 + $0x140] sm:$0xff]
    %v3043 = vld [vmem:[#allocation8 + $0x148] sm:$0xff]
    %v3044 = vld [vmem:[#allocation8 + $0x150] sm:$0xff]
    %v3045 = vld [vmem:[#allocation8 + $0x158] sm:$0xff]
    %v3046 = vld [vmem:[#allocation8 + $0x160] sm:$0xff]
    %v3047 = vld [vmem:[#allocation8 + $0x168] sm:$0xff]
    %v3048 = vld [vmem:[#allocation8 + $0x170] sm:$0xff]
    %v3049 = vld [vmem:[#allocation8 + $0x178] sm:$0xff]
    %v3050 = vld [vmem:[#allocation8 + $0x180] sm:$0xff]
    %v3051 = vld [vmem:[#allocation8 + $0x188] sm:$0xff]
    %v3052 = vld [vmem:[#allocation8 + $0x190] sm:$0xff]
    %v3053 = vld [vmem:[#allocation8 + $0x198] sm:$0xff]
    %v3054 = vld [vmem:[#allocation8 + $0x1a0] sm:$0xff]
    %v3055 = vld [vmem:[#allocation8 + $0x1a8] sm:$0xff]
    %v3056 = vld [vmem:[#allocation8 + $0x1b0] sm:$0xff]
    %v3057 = vld [vmem:[#allocation8 + $0x1b8] sm:$0xff]
    %v3058 = vld [vmem:[#allocation8 + $0x1c0] sm:$0xff]
    %v3059 = vld [vmem:[#allocation8 + $0x1c8] sm:$0xff]
    %v3060 = vld [vmem:[#allocation8 + $0x1d0] sm:$0xff]
    %v3061 = vld [vmem:[#allocation8 + $0x1d8] sm:$0xff]
    %v3062 = vld [vmem:[#allocation8 + $0x1e0] sm:$0xff]
    %v3063 = vld [vmem:[#allocation8 + $0x1e8] sm:$0xff]
    %v3064 = vld [vmem:[#allocation8 + $0x1f0] sm:$0xff]
    %v3065 = vld [vmem:[#allocation8 + $0x1f8] sm:$0xff]
    %v3066 = vld [vmem:[#allocation8 + $0x200] sm:$0xff]
    %v3067 = vld [vmem:[#allocation8 + $0x208] sm:$0xff]
    %v3068 = vld [vmem:[#allocation8 + $0x210] sm:$0xff]
    %v3069 = vld [vmem:[#allocation8 + $0x218] sm:$0xff]
    %v3070 = vld [vmem:[#allocation8 + $0x220] sm:$0xff]
    %v3071 = vld [vmem:[#allocation8 + $0x228] sm:$0xff]
    %v3072 = vld [vmem:[#allocation8 + $0x230] sm:$0xff]
    %v3073 = vld [vmem:[#allocation8 + $0x238] sm:$0xff]
    %v3074 = vld [vmem:[#allocation8 + $0x240] sm:$0xff]
    %v3075 = vld [vmem:[#allocation8 + $0x248] sm:$0xff]
    %v3076 = vld [vmem:[#allocation8 + $0x250] sm:$0xff]
    %v3077 = vld [vmem:[#allocation8 + $0x258] sm:$0xff]
    %v3078 = vld [vmem:[#allocation8 + $0x260] sm:$0xff]
    %v3079 = vld [vmem:[#allocation8 + $0x268] sm:$0xff]
    %v3080 = vld [vmem:[#allocation8 + $0x270] sm:$0xff]
    %v3081 = vld [vmem:[#allocation8 + $0x278] sm:$0xff]
    %v3082 = vld [vmem:[#allocation8 + $0x280] sm:$0xff]
    %v3083 = vld [vmem:[#allocation8 + $0x288] sm:$0xff]
    %v3084 = vld [vmem:[#allocation8 + $0x290] sm:$0xff]
    %v3085 = vld [vmem:[#allocation8 + $0x298] sm:$0xff]
    %v3086 = vld [vmem:[#allocation8 + $0x2a0] sm:$0xff]
    %v3087 = vld [vmem:[#allocation8 + $0x2a8] sm:$0xff]
    %v3088 = vld [vmem:[#allocation8 + $0x2b0] sm:$0xff]
    %v3089 = vld [vmem:[#allocation8 + $0x2b8] sm:$0xff]
    %v3090 = vld [vmem:[#allocation8 + $0x2c0] sm:$0xff]
    %v3091 = vld [vmem:[#allocation8 + $0x2c8] sm:$0xff]
    %v3092 = vld [vmem:[#allocation8 + $0x2d0] sm:$0xff]
    %v3093 = vld [vmem:[#allocation8 + $0x2d8] sm:$0xff]
    %v3094 = vld [vmem:[#allocation8 + $0x2e0] sm:$0xff]
    %v3095 = vld [vmem:[#allocation8 + $0x2e8] sm:$0xff]
    %v3096 = vld [vmem:[#allocation8 + $0x2f0] sm:$0xff]
    %v3097 = vld [vmem:[#allocation8 + $0x2f8] sm:$0xff]
    %v3098 = vld [vmem:[#allocation8 + $0x300] sm:$0xff]
    %v3099 = vld [vmem:[#allocation8 + $0x308] sm:$0xff]
    %v3100 = vld [vmem:[#allocation8 + $0x310] sm:$0xff]
    %v3101 = vld [vmem:[#allocation8 + $0x318] sm:$0xff]
    %v3102 = vld [vmem:[#allocation8 + $0x320] sm:$0xff]
    %v3103 = vld [vmem:[#allocation8 + $0x328] sm:$0xff]
    %v3104 = vld [vmem:[#allocation8 + $0x330] sm:$0xff]
    %v3105 = vld [vmem:[#allocation8 + $0x338] sm:$0xff]
    %v3106 = vld [vmem:[#allocation8 + $0x340] sm:$0xff]
    %v3107 = vld [vmem:[#allocation8 + $0x348] sm:$0xff]
    %v3108 = vld [vmem:[#allocation8 + $0x350] sm:$0xff]
    %v3109 = vld [vmem:[#allocation8 + $0x358] sm:$0xff]
    %v3110 = vld [vmem:[#allocation8 + $0x360] sm:$0xff]
    %v3111 = vld [vmem:[#allocation8 + $0x368] sm:$0xff]
    %v3112 = vld [vmem:[#allocation8 + $0x370] sm:$0xff]
    %v3113 = vld [vmem:[#allocation8 + $0x378] sm:$0xff]
    %v3114 = vld [vmem:[#allocation8 + $0x380] sm:$0xff]
    %v3115 = vld [vmem:[#allocation8 + $0x388] sm:$0xff]
    %v3116 = vld [vmem:[#allocation8 + $0x390] sm:$0xff]
    %v3117 = vld [vmem:[#allocation8 + $0x398] sm:$0xff]
    %v3118 = vld [vmem:[#allocation8 + $0x3a0] sm:$0xff]
    %v3119 = vld [vmem:[#allocation8 + $0x3a8] sm:$0xff]
    %v3120 = vld [vmem:[#allocation8 + $0x3b0] sm:$0xff]
    %v3121 = vld [vmem:[#allocation8 + $0x3b8] sm:$0xff]
    %v3122 = vld [vmem:[#allocation8 + $0x3c0] sm:$0xff]
    %v3123 = vld [vmem:[#allocation8 + $0x3c8] sm:$0xff]
    %v3124 = vld [vmem:[#allocation8 + $0x3d0] sm:$0xff]
    %v3125 = vld [vmem:[#allocation8 + $0x3d8] sm:$0xff]
    %v3126 = vld [vmem:[#allocation8 + $0x3e0] sm:$0xff]
    %v3127 = vld [vmem:[#allocation8 + $0x3e8] sm:$0xff]
    %v3128 = vld [vmem:[#allocation8 + $0x3f0] sm:$0xff]
    %v3129 = vld [vmem:[#allocation8 + $0x3f8] sm:$0xff]
    %v3130 = vld [vmem:[#allocation8 + $0x400] sm:$0xff]
    %v3131 = vld [vmem:[#allocation8 + $0x408] sm:$0xff]
    %v3132 = vld [vmem:[#allocation8 + $0x410] sm:$0xff]
    %v3133 = vld [vmem:[#allocation8 + $0x418] sm:$0xff]
    %v3134 = vld [vmem:[#allocation8 + $0x420] sm:$0xff]
    %v3135 = vld [vmem:[#allocation8 + $0x428] sm:$0xff]
    %v3136 = vld [vmem:[#allocation8 + $0x430] sm:$0xff]
    %v3137 = vld [vmem:[#allocation8 + $0x438] sm:$0xff]
    %v3138 = vld [vmem:[#allocation8 + $0x440] sm:$0xff]
    %v3139 = vld [vmem:[#allocation8 + $0x448] sm:$0xff]
    %v3140 = vld [vmem:[#allocation8 + $0x450] sm:$0xff]
    %v3141 = vld [vmem:[#allocation8 + $0x458] sm:$0xff]
    %v3142 = vld [vmem:[#allocation8 + $0x460] sm:$0xff]
    %v3143 = vld [vmem:[#allocation8 + $0x468] sm:$0xff]
    %v3144 = vld [vmem:[#allocation8 + $0x470] sm:$0xff]
    %v3145 = vld [vmem:[#allocation8 + $0x478] sm:$0xff]
    %v3146 = vld [vmem:[#allocation8 + $0x480] sm:$0xff]
    %v3147 = vld [vmem:[#allocation8 + $0x488] sm:$0xff]
    %v3148 = vld [vmem:[#allocation8 + $0x490] sm:$0xff]
    %v3149 = vld [vmem:[#allocation8 + $0x498] sm:$0xff]
    %v3150 = vld [vmem:[#allocation8 + $0x4a0] sm:$0xff]
    %v3151 = vld [vmem:[#allocation8 + $0x4a8] sm:$0xff]
    %v3152 = vld [vmem:[#allocation8 + $0x4b0] sm:$0xff]
    %v3153 = vld [vmem:[#allocation8 + $0x4b8] sm:$0xff]
    %v3154 = vld [vmem:[#allocation8 + $0x4c0] sm:$0xff]
    %v3155 = vld [vmem:[#allocation8 + $0x4c8] sm:$0xff]
    %v3156 = vld [vmem:[#allocation8 + $0x4d0] sm:$0xff]
    %v3157 = vld [vmem:[#allocation8 + $0x4d8] sm:$0xff]
    %v3158 = vld [vmem:[#allocation8 + $0x4e0] sm:$0xff]
    %v3159 = vld [vmem:[#allocation8 + $0x4e8] sm:$0xff]
    %v3160 = vld [vmem:[#allocation8 + $0x4f0] sm:$0xff]
    %v3161 = vld [vmem:[#allocation8 + $0x4f8] sm:$0xff]
    %v3162 = vld [vmem:[#allocation8 + $0x500] sm:$0xff]
    %v3163 = vld [vmem:[#allocation8 + $0x508] sm:$0xff]
    %v3164 = vld [vmem:[#allocation8 + $0x510] sm:$0xff]
    %v3165 = vld [vmem:[#allocation8 + $0x518] sm:$0xff]
    %v3166 = vld [vmem:[#allocation8 + $0x520] sm:$0xff]
    %v3167 = vld [vmem:[#allocation8 + $0x528] sm:$0xff]
    %v3168 = vld [vmem:[#allocation8 + $0x530] sm:$0xff]
    %v3169 = vld [vmem:[#allocation8 + $0x538] sm:$0xff]
    %v3170 = vld [vmem:[#allocation8 + $0x540] sm:$0xff]
    %v3171 = vld [vmem:[#allocation8 + $0x548] sm:$0xff]
    %v3172 = vld [vmem:[#allocation8 + $0x550] sm:$0xff]
    %v3173 = vld [vmem:[#allocation8 + $0x558] sm:$0xff]
    %v3174 = vld [vmem:[#allocation8 + $0x560] sm:$0xff]
    %v3175 = vld [vmem:[#allocation8 + $0x568] sm:$0xff]
    %v3176 = vld [vmem:[#allocation8 + $0x570] sm:$0xff]
    %v3177 = vld [vmem:[#allocation8 + $0x578] sm:$0xff]
    %v3178 = vld [vmem:[#allocation8 + $0x580] sm:$0xff]
    %v3179 = vld [vmem:[#allocation8 + $0x588] sm:$0xff]
    %v3180 = vld [vmem:[#allocation8 + $0x590] sm:$0xff]
    %v3181 = vld [vmem:[#allocation8 + $0x598] sm:$0xff]
    %v3182 = vld [vmem:[#allocation8 + $0x5a0] sm:$0xff]
    %v3183 = vld [vmem:[#allocation8 + $0x5a8] sm:$0xff]
    %v3184 = vld [vmem:[#allocation8 + $0x5b0] sm:$0xff]
    %v3185 = vld [vmem:[#allocation8 + $0x5b8] sm:$0xff]
    %v3186 = vld [vmem:[#allocation8 + $0x5c0] sm:$0xff]
    %v3187 = vld [vmem:[#allocation8 + $0x5c8] sm:$0xff]
    %v3188 = vld [vmem:[#allocation8 + $0x5d0] sm:$0xff]
    %v3189 = vld [vmem:[#allocation8 + $0x5d8] sm:$0xff]
    %v3190 = vld [vmem:[#allocation8 + $0x5e0] sm:$0xff]
    %v3191 = vld [vmem:[#allocation8 + $0x5e8] sm:$0xff]
    %v3192 = vld [vmem:[#allocation8 + $0x5f0] sm:$0xff]
    %v3193 = vld [vmem:[#allocation8 + $0x5f8] sm:$0xff]
    %v3194 = vld [vmem:[#allocation10] sm:$0xf]
    %v3196 = vlaneseq
    %v3197 = vshrl.u32 %v3196, 7
    %v3198 = vsub.s32 0, %v3197
    %v3199 = vrot.slane %v3194, %v3198
    %v3200 = vlaneseq
    %v3201 = vshrl.u32 %v3200, 7
    %v3202 = vsub.s32 1, %v3201
    %v3203 = vrot.slane %v3194, %v3202
    %v3204 = vlaneseq
    %v3205 = vshrl.u32 %v3204, 7
    %v3206 = vsub.s32 2, %v3205
    %v3207 = vrot.slane %v3194, %v3206
    %v3208 = vlaneseq
    %v3209 = vshrl.u32 %v3208, 7
    %v3210 = vsub.s32 3, %v3209
    %v3211 = vrot.slane %v3194, %v3210
    %v3408 = vunpack.c.l.b16 %v3002
    %v3409 = vunpack.c.h.b16 %v3002
    %v3410 = vunpack.c.l.b16 %v3003
    %v3411 = vunpack.c.h.b16 %v3003
    %v3412 = vunpack.c.l.b16 %v3004
    %v3413 = vunpack.c.h.b16 %v3004
    %v3414 = vunpack.c.l.b16 %v3005
    %v3415 = vunpack.c.h.b16 %v3005
    %v3416 = vunpack.c.l.b16 %v3006
    %v3417 = vunpack.c.h.b16 %v3006
    %v3418 = vunpack.c.l.b16 %v3007
    %v3419 = vunpack.c.h.b16 %v3007
    %v3420 = vunpack.c.l.b16 %v3008
    %v3421 = vunpack.c.h.b16 %v3008
    %v3422 = vunpack.c.l.b16 %v3009
    %v3423 = vunpack.c.h.b16 %v3009
    %v3424 = vunpack.c.l.b16 %v3010
    %v3425 = vunpack.c.h.b16 %v3010
    %v3426 = vunpack.c.l.b16 %v3011
    %v3427 = vunpack.c.h.b16 %v3011
    %v3428 = vunpack.c.l.b16 %v3012
    %v3429 = vunpack.c.h.b16 %v3012
    %v3430 = vunpack.c.l.b16 %v3013
    %v3431 = vunpack.c.h.b16 %v3013
    %v3432 = vunpack.c.l.b16 %v3014
    %v3433 = vunpack.c.h.b16 %v3014
    %v3434 = vunpack.c.l.b16 %v3015
    %v3435 = vunpack.c.h.b16 %v3015
    %v3436 = vunpack.c.l.b16 %v3016
    %v3437 = vunpack.c.h.b16 %v3016
    %v3438 = vunpack.c.l.b16 %v3017
    %v3439 = vunpack.c.h.b16 %v3017
    %v3440 = vunpack.c.l.b16 %v3018
    %v3441 = vunpack.c.h.b16 %v3018
    %v3442 = vunpack.c.l.b16 %v3019
    %v3443 = vunpack.c.h.b16 %v3019
    %v3444 = vunpack.c.l.b16 %v3020
    %v3445 = vunpack.c.h.b16 %v3020
    %v3446 = vunpack.c.l.b16 %v3021
    %v3447 = vunpack.c.h.b16 %v3021
    %v3448 = vunpack.c.l.b16 %v3022
    %v3449 = vunpack.c.h.b16 %v3022
    %v3450 = vunpack.c.l.b16 %v3023
    %v3451 = vunpack.c.h.b16 %v3023
    %v3452 = vunpack.c.l.b16 %v3024
    %v3453 = vunpack.c.h.b16 %v3024
    %v3454 = vunpack.c.l.b16 %v3025
    %v3455 = vunpack.c.h.b16 %v3025
    %v3456 = vunpack.c.l.b16 %v3026
    %v3457 = vunpack.c.h.b16 %v3026
    %v3458 = vunpack.c.l.b16 %v3027
    %v3459 = vunpack.c.h.b16 %v3027
    %v3460 = vunpack.c.l.b16 %v3028
    %v3461 = vunpack.c.h.b16 %v3028
    %v3462 = vunpack.c.l.b16 %v3029
    %v3463 = vunpack.c.h.b16 %v3029
    %v3464 = vunpack.c.l.b16 %v3030
    %v3465 = vunpack.c.h.b16 %v3030
    %v3466 = vunpack.c.l.b16 %v3031
    %v3467 = vunpack.c.h.b16 %v3031
    %v3468 = vunpack.c.l.b16 %v3032
    %v3469 = vunpack.c.h.b16 %v3032
    %v3470 = vunpack.c.l.b16 %v3033
    %v3471 = vunpack.c.h.b16 %v3033
    %v3472 = vunpack.c.l.b16 %v3034
    %v3473 = vunpack.c.h.b16 %v3034
    %v3474 = vunpack.c.l.b16 %v3035
    %v3475 = vunpack.c.h.b16 %v3035
    %v3476 = vunpack.c.l.b16 %v3036
    %v3477 = vunpack.c.h.b16 %v3036
    %v3478 = vunpack.c.l.b16 %v3037
    %v3479 = vunpack.c.h.b16 %v3037
    %v3480 = vunpack.c.l.b16 %v3038
    %v3481 = vunpack.c.h.b16 %v3038
    %v3482 = vunpack.c.l.b16 %v3039
    %v3483 = vunpack.c.h.b16 %v3039
    %v3484 = vunpack.c.l.b16 %v3040
    %v3485 = vunpack.c.h.b16 %v3040
    %v3486 = vunpack.c.l.b16 %v3041
    %v3487 = vunpack.c.h.b16 %v3041
    %v3488 = vunpack.c.l.b16 %v3042
    %v3489 = vunpack.c.h.b16 %v3042
    %v3490 = vunpack.c.l.b16 %v3043
    %v3491 = vunpack.c.h.b16 %v3043
    %v3492 = vunpack.c.l.b16 %v3044
    %v3493 = vunpack.c.h.b16 %v3044
    %v3494 = vunpack.c.l.b16 %v3045
    %v3495 = vunpack.c.h.b16 %v3045
    %v3496 = vunpack.c.l.b16 %v3046
    %v3497 = vunpack.c.h.b16 %v3046
    %v3498 = vunpack.c.l.b16 %v3047
    %v3499 = vunpack.c.h.b16 %v3047
    %v3500 = vunpack.c.l.b16 %v3048
    %v3501 = vunpack.c.h.b16 %v3048
    %v3502 = vunpack.c.l.b16 %v3049
    %v3503 = vunpack.c.h.b16 %v3049
    %v3504 = vunpack.c.l.b16 %v3050
    %v3505 = vunpack.c.h.b16 %v3050
    %v3506 = vunpack.c.l.b16 %v3051
    %v3507 = vunpack.c.h.b16 %v3051
    %v3508 = vunpack.c.l.b16 %v3052
    %v3509 = vunpack.c.h.b16 %v3052
    %v3510 = vunpack.c.l.b16 %v3053
    %v3511 = vunpack.c.h.b16 %v3053
    %v3512 = vunpack.c.l.b16 %v3054
    %v3513 = vunpack.c.h.b16 %v3054
    %v3514 = vunpack.c.l.b16 %v3055
    %v3515 = vunpack.c.h.b16 %v3055
    %v3516 = vunpack.c.l.b16 %v3056
    %v3517 = vunpack.c.h.b16 %v3056
    %v3518 = vunpack.c.l.b16 %v3057
    %v3519 = vunpack.c.h.b16 %v3057
    %v3520 = vunpack.c.l.b16 %v3058
    %v3521 = vunpack.c.h.b16 %v3058
    %v3522 = vunpack.c.l.b16 %v3059
    %v3523 = vunpack.c.h.b16 %v3059
    %v3524 = vunpack.c.l.b16 %v3060
    %v3525 = vunpack.c.h.b16 %v3060
    %v3526 = vunpack.c.l.b16 %v3061
    %v3527 = vunpack.c.h.b16 %v3061
    %v3528 = vunpack.c.l.b16 %v3062
    %v3529 = vunpack.c.h.b16 %v3062
    %v3530 = vunpack.c.l.b16 %v3063
    %v3531 = vunpack.c.h.b16 %v3063
    %v3532 = vunpack.c.l.b16 %v3064
    %v3533 = vunpack.c.h.b16 %v3064
    %v3534 = vunpack.c.l.b16 %v3065
    %v3535 = vunpack.c.h.b16 %v3065
    %v3536 = vunpack.c.l.b16 %v3066
    %v3537 = vunpack.c.h.b16 %v3066
    %v3538 = vunpack.c.l.b16 %v3067
    %v3539 = vunpack.c.h.b16 %v3067
    %v3540 = vunpack.c.l.b16 %v3068
    %v3541 = vunpack.c.h.b16 %v3068
    %v3542 = vunpack.c.l.b16 %v3069
    %v3543 = vunpack.c.h.b16 %v3069
    %v3544 = vunpack.c.l.b16 %v3070
    %v3545 = vunpack.c.h.b16 %v3070
    %v3546 = vunpack.c.l.b16 %v3071
    %v3547 = vunpack.c.h.b16 %v3071
    %v3548 = vunpack.c.l.b16 %v3072
    %v3549 = vunpack.c.h.b16 %v3072
    %v3550 = vunpack.c.l.b16 %v3073
    %v3551 = vunpack.c.h.b16 %v3073
    %v3552 = vunpack.c.l.b16 %v3074
    %v3553 = vunpack.c.h.b16 %v3074
    %v3554 = vunpack.c.l.b16 %v3075
    %v3555 = vunpack.c.h.b16 %v3075
    %v3556 = vunpack.c.l.b16 %v3076
    %v3557 = vunpack.c.h.b16 %v3076
    %v3558 = vunpack.c.l.b16 %v3077
    %v3559 = vunpack.c.h.b16 %v3077
    %v3560 = vunpack.c.l.b16 %v3078
    %v3561 = vunpack.c.h.b16 %v3078
    %v3562 = vunpack.c.l.b16 %v3079
    %v3563 = vunpack.c.h.b16 %v3079
    %v3564 = vunpack.c.l.b16 %v3080
    %v3565 = vunpack.c.h.b16 %v3080
    %v3566 = vunpack.c.l.b16 %v3081
    %v3567 = vunpack.c.h.b16 %v3081
    %v3568 = vunpack.c.l.b16 %v3082
    %v3569 = vunpack.c.h.b16 %v3082
    %v3570 = vunpack.c.l.b16 %v3083
    %v3571 = vunpack.c.h.b16 %v3083
    %v3572 = vunpack.c.l.b16 %v3084
    %v3573 = vunpack.c.h.b16 %v3084
    %v3574 = vunpack.c.l.b16 %v3085
    %v3575 = vunpack.c.h.b16 %v3085
    %v3576 = vunpack.c.l.b16 %v3086
    %v3577 = vunpack.c.h.b16 %v3086
    %v3578 = vunpack.c.l.b16 %v3087
    %v3579 = vunpack.c.h.b16 %v3087
    %v3580 = vunpack.c.l.b16 %v3088
    %v3581 = vunpack.c.h.b16 %v3088
    %v3582 = vunpack.c.l.b16 %v3089
    %v3583 = vunpack.c.h.b16 %v3089
    %v3584 = vunpack.c.l.b16 %v3090
    %v3585 = vunpack.c.h.b16 %v3090
    %v3586 = vunpack.c.l.b16 %v3091
    %v3587 = vunpack.c.h.b16 %v3091
    %v3588 = vunpack.c.l.b16 %v3092
    %v3589 = vunpack.c.h.b16 %v3092
    %v3590 = vunpack.c.l.b16 %v3093
    %v3591 = vunpack.c.h.b16 %v3093
    %v3592 = vunpack.c.l.b16 %v3094
    %v3593 = vunpack.c.h.b16 %v3094
    %v3594 = vunpack.c.l.b16 %v3095
    %v3595 = vunpack.c.h.b16 %v3095
    %v3596 = vunpack.c.l.b16 %v3096
    %v3597 = vunpack.c.h.b16 %v3096
    %v3598 = vunpack.c.l.b16 %v3097
    %v3599 = vunpack.c.h.b16 %v3097
    %v3600 = vunpack.c.l.b16 %v3098
    %v3601 = vunpack.c.h.b16 %v3098
    %v3602 = vunpack.c.l.b16 %v3099
    %v3603 = vunpack.c.h.b16 %v3099
    %v3604 = vunpack.c.l.b16 %v3100
    %v3605 = vunpack.c.h.b16 %v3100
    %v3606 = vunpack.c.l.b16 %v3101
    %v3607 = vunpack.c.h.b16 %v3101
    %v3608 = vunpack.c.l.b16 %v3102
    %v3609 = vunpack.c.h.b16 %v3102
    %v3610 = vunpack.c.l.b16 %v3103
    %v3611 = vunpack.c.h.b16 %v3103
    %v3612 = vunpack.c.l.b16 %v3104
    %v3613 = vunpack.c.h.b16 %v3104
    %v3614 = vunpack.c.l.b16 %v3105
    %v3615 = vunpack.c.h.b16 %v3105
    %v3616 = vunpack.c.l.b16 %v3106
    %v3617 = vunpack.c.h.b16 %v3106
    %v3618 = vunpack.c.l.b16 %v3107
    %v3619 = vunpack.c.h.b16 %v3107
    %v3620 = vunpack.c.l.b16 %v3108
    %v3621 = vunpack.c.h.b16 %v3108
    %v3622 = vunpack.c.l.b16 %v3109
    %v3623 = vunpack.c.h.b16 %v3109
    %v3624 = vunpack.c.l.b16 %v3110
    %v3625 = vunpack.c.h.b16 %v3110
    %v3626 = vunpack.c.l.b16 %v3111
    %v3627 = vunpack.c.h.b16 %v3111
    %v3628 = vunpack.c.l.b16 %v3112
    %v3629 = vunpack.c.h.b16 %v3112
    %v3630 = vunpack.c.l.b16 %v3113
    %v3631 = vunpack.c.h.b16 %v3113
    %v3632 = vunpack.c.l.b16 %v3114
    %v3633 = vunpack.c.h.b16 %v3114
    %v3634 = vunpack.c.l.b16 %v3115
    %v3635 = vunpack.c.h.b16 %v3115
    %v3636 = vunpack.c.l.b16 %v3116
    %v3637 = vunpack.c.h.b16 %v3116
    %v3638 = vunpack.c.l.b16 %v3117
    %v3639 = vunpack.c.h.b16 %v3117
    %v3640 = vunpack.c.l.b16 %v3118
    %v3641 = vunpack.c.h.b16 %v3118
    %v3642 = vunpack.c.l.b16 %v3119
    %v3643 = vunpack.c.h.b16 %v3119
    %v3644 = vunpack.c.l.b16 %v3120
    %v3645 = vunpack.c.h.b16 %v3120
    %v3646 = vunpack.c.l.b16 %v3121
    %v3647 = vunpack.c.h.b16 %v3121
    %v3648 = vunpack.c.l.b16 %v3122
    %v3649 = vunpack.c.h.b16 %v3122
    %v3650 = vunpack.c.l.b16 %v3123
    %v3651 = vunpack.c.h.b16 %v3123
    %v3652 = vunpack.c.l.b16 %v3124
    %v3653 = vunpack.c.h.b16 %v3124
    %v3654 = vunpack.c.l.b16 %v3125
    %v3655 = vunpack.c.h.b16 %v3125
    %v3656 = vunpack.c.l.b16 %v3126
    %v3657 = vunpack.c.h.b16 %v3126
    %v3658 = vunpack.c.l.b16 %v3127
    %v3659 = vunpack.c.h.b16 %v3127
    %v3660 = vunpack.c.l.b16 %v3128
    %v3661 = vunpack.c.h.b16 %v3128
    %v3662 = vunpack.c.l.b16 %v3129
    %v3663 = vunpack.c.h.b16 %v3129
    %v3664 = vunpack.c.l.b16 %v3130
    %v3665 = vunpack.c.h.b16 %v3130
    %v3666 = vunpack.c.l.b16 %v3131
    %v3667 = vunpack.c.h.b16 %v3131
    %v3668 = vunpack.c.l.b16 %v3132
    %v3669 = vunpack.c.h.b16 %v3132
    %v3670 = vunpack.c.l.b16 %v3133
    %v3671 = vunpack.c.h.b16 %v3133
    %v3672 = vunpack.c.l.b16 %v3134
    %v3673 = vunpack.c.h.b16 %v3134
    %v3674 = vunpack.c.l.b16 %v3135
    %v3675 = vunpack.c.h.b16 %v3135
    %v3676 = vunpack.c.l.b16 %v3136
    %v3677 = vunpack.c.h.b16 %v3136
    %v3678 = vunpack.c.l.b16 %v3137
    %v3679 = vunpack.c.h.b16 %v3137
    %v3680 = vunpack.c.l.b16 %v3138
    %v3681 = vunpack.c.h.b16 %v3138
    %v3682 = vunpack.c.l.b16 %v3139
    %v3683 = vunpack.c.h.b16 %v3139
    %v3684 = vunpack.c.l.b16 %v3140
    %v3685 = vunpack.c.h.b16 %v3140
    %v3686 = vunpack.c.l.b16 %v3141
    %v3687 = vunpack.c.h.b16 %v3141
    %v3688 = vunpack.c.l.b16 %v3142
    %v3689 = vunpack.c.h.b16 %v3142
    %v3690 = vunpack.c.l.b16 %v3143
    %v3691 = vunpack.c.h.b16 %v3143
    %v3692 = vunpack.c.l.b16 %v3144
    %v3693 = vunpack.c.h.b16 %v3144
    %v3694 = vunpack.c.l.b16 %v3145
    %v3695 = vunpack.c.h.b16 %v3145
    %v3696 = vunpack.c.l.b16 %v3146
    %v3697 = vunpack.c.h.b16 %v3146
    %v3698 = vunpack.c.l.b16 %v3147
    %v3699 = vunpack.c.h.b16 %v3147
    %v3700 = vunpack.c.l.b16 %v3148
    %v3701 = vunpack.c.h.b16 %v3148
    %v3702 = vunpack.c.l.b16 %v3149
    %v3703 = vunpack.c.h.b16 %v3149
    %v3704 = vunpack.c.l.b16 %v3150
    %v3705 = vunpack.c.h.b16 %v3150
    %v3706 = vunpack.c.l.b16 %v3151
    %v3707 = vunpack.c.h.b16 %v3151
    %v3708 = vunpack.c.l.b16 %v3152
    %v3709 = vunpack.c.h.b16 %v3152
    %v3710 = vunpack.c.l.b16 %v3153
    %v3711 = vunpack.c.h.b16 %v3153
    %v3712 = vunpack.c.l.b16 %v3154
    %v3713 = vunpack.c.h.b16 %v3154
    %v3714 = vunpack.c.l.b16 %v3155
    %v3715 = vunpack.c.h.b16 %v3155
    %v3716 = vunpack.c.l.b16 %v3156
    %v3717 = vunpack.c.h.b16 %v3156
    %v3718 = vunpack.c.l.b16 %v3157
    %v3719 = vunpack.c.h.b16 %v3157
    %v3720 = vunpack.c.l.b16 %v3158
    %v3721 = vunpack.c.h.b16 %v3158
    %v3722 = vunpack.c.l.b16 %v3159
    %v3723 = vunpack.c.h.b16 %v3159
    %v3724 = vunpack.c.l.b16 %v3160
    %v3725 = vunpack.c.h.b16 %v3160
    %v3726 = vunpack.c.l.b16 %v3161
    %v3727 = vunpack.c.h.b16 %v3161
    %v3728 = vunpack.c.l.b16 %v3162
    %v3729 = vunpack.c.h.b16 %v3162
    %v3730 = vunpack.c.l.b16 %v3163
    %v3731 = vunpack.c.h.b16 %v3163
    %v3732 = vunpack.c.l.b16 %v3164
    %v3733 = vunpack.c.h.b16 %v3164
    %v3734 = vunpack.c.l.b16 %v3165
    %v3735 = vunpack.c.h.b16 %v3165
    %v3736 = vunpack.c.l.b16 %v3166
    %v3737 = vunpack.c.h.b16 %v3166
    %v3738 = vunpack.c.l.b16 %v3167
    %v3739 = vunpack.c.h.b16 %v3167
    %v3740 = vunpack.c.l.b16 %v3168
    %v3741 = vunpack.c.h.b16 %v3168
    %v3742 = vunpack.c.l.b16 %v3169
    %v3743 = vunpack.c.h.b16 %v3169
    %v3744 = vunpack.c.l.b16 %v3170
    %v3745 = vunpack.c.h.b16 %v3170
    %v3746 = vunpack.c.l.b16 %v3171
    %v3747 = vunpack.c.h.b16 %v3171
    %v3748 = vunpack.c.l.b16 %v3172
    %v3749 = vunpack.c.h.b16 %v3172
    %v3750 = vunpack.c.l.b16 %v3173
    %v3751 = vunpack.c.h.b16 %v3173
    %v3752 = vunpack.c.l.b16 %v3174
    %v3753 = vunpack.c.h.b16 %v3174
    %v3754 = vunpack.c.l.b16 %v3175
    %v3755 = vunpack.c.h.b16 %v3175
    %v3756 = vunpack.c.l.b16 %v3176
    %v3757 = vunpack.c.h.b16 %v3176
    %v3758 = vunpack.c.l.b16 %v3177
    %v3759 = vunpack.c.h.b16 %v3177
    %v3760 = vunpack.c.l.b16 %v3178
    %v3761 = vunpack.c.h.b16 %v3178
    %v3762 = vunpack.c.l.b16 %v3179
    %v3763 = vunpack.c.h.b16 %v3179
    %v3764 = vunpack.c.l.b16 %v3180
    %v3765 = vunpack.c.h.b16 %v3180
    %v3766 = vunpack.c.l.b16 %v3181
    %v3767 = vunpack.c.h.b16 %v3181
    %v3768 = vunpack.c.l.b16 %v3182
    %v3769 = vunpack.c.h.b16 %v3182
    %v3770 = vunpack.c.l.b16 %v3183
    %v3771 = vunpack.c.h.b16 %v3183
    %v3772 = vunpack.c.l.b16 %v3184
    %v3773 = vunpack.c.h.b16 %v3184
    %v3774 = vunpack.c.l.b16 %v3185
    %v3775 = vunpack.c.h.b16 %v3185
    %v3776 = vunpack.c.l.b16 %v3186
    %v3777 = vunpack.c.h.b16 %v3186
    %v3778 = vunpack.c.l.b16 %v3187
    %v3779 = vunpack.c.h.b16 %v3187
    %v3780 = vunpack.c.l.b16 %v3188
    %v3781 = vunpack.c.h.b16 %v3188
    %v3782 = vunpack.c.l.b16 %v3189
    %v3783 = vunpack.c.h.b16 %v3189
    %v3784 = vunpack.c.l.b16 %v3190
    %v3785 = vunpack.c.h.b16 %v3190
    %v3786 = vunpack.c.l.b16 %v3191
    %v3787 = vunpack.c.h.b16 %v3191
    %v3788 = vunpack.c.l.b16 %v3192
    %v3789 = vunpack.c.h.b16 %v3192
    %v3790 = vunpack.c.l.b16 %v3193
    %v3791 = vunpack.c.h.b16 %v3193
    %v3792 = vpack.c.b16 %v3412, %v3408
    %v3793 = vpack.c.b16 %v3413, %v3409
    %v3794 = vpack.c.b16 %v3414, %v3410
    %v3795 = vpack.c.b16 %v3415, %v3411
    %v3796 = vpack.c.b16 %v3420, %v3416
    %v3797 = vpack.c.b16 %v3421, %v3417
    %v3798 = vpack.c.b16 %v3422, %v3418
    %v3799 = vpack.c.b16 %v3423, %v3419
    %v3800 = vpack.c.b16 %v3428, %v3424
    %v3801 = vpack.c.b16 %v3429, %v3425
    %v3802 = vpack.c.b16 %v3430, %v3426
    %v3803 = vpack.c.b16 %v3431, %v3427
    %v3804 = vpack.c.b16 %v3436, %v3432
    %v3805 = vpack.c.b16 %v3437, %v3433
    %v3806 = vpack.c.b16 %v3438, %v3434
    %v3807 = vpack.c.b16 %v3439, %v3435
    %v3808 = vpack.c.b16 %v3444, %v3440
    %v3809 = vpack.c.b16 %v3445, %v3441
    %v3810 = vpack.c.b16 %v3446, %v3442
    %v3811 = vpack.c.b16 %v3447, %v3443
    %v3812 = vpack.c.b16 %v3452, %v3448
    %v3813 = vpack.c.b16 %v3453, %v3449
    %v3814 = vpack.c.b16 %v3454, %v3450
    %v3815 = vpack.c.b16 %v3455, %v3451
    %v3816 = vpack.c.b16 %v3460, %v3456
    %v3817 = vpack.c.b16 %v3461, %v3457
    %v3818 = vpack.c.b16 %v3462, %v3458
    %v3819 = vpack.c.b16 %v3463, %v3459
    %v3820 = vpack.c.b16 %v3468, %v3464
    %v3821 = vpack.c.b16 %v3469, %v3465
    %v3822 = vpack.c.b16 %v3470, %v3466
    %v3823 = vpack.c.b16 %v3471, %v3467
    %v3824 = vpack.c.b16 %v3476, %v3472
    %v3825 = vpack.c.b16 %v3477, %v3473
    %v3826 = vpack.c.b16 %v3478, %v3474
    %v3827 = vpack.c.b16 %v3479, %v3475
    %v3828 = vpack.c.b16 %v3484, %v3480
    %v3829 = vpack.c.b16 %v3485, %v3481
    %v3830 = vpack.c.b16 %v3486, %v3482
    %v3831 = vpack.c.b16 %v3487, %v3483
    %v3832 = vpack.c.b16 %v3492, %v3488
    %v3833 = vpack.c.b16 %v3493, %v3489
    %v3834 = vpack.c.b16 %v3494, %v3490
    %v3835 = vpack.c.b16 %v3495, %v3491
    %v3836 = vpack.c.b16 %v3500, %v3496
    %v3837 = vpack.c.b16 %v3501, %v3497
    %v3838 = vpack.c.b16 %v3502, %v3498
    %v3839 = vpack.c.b16 %v3503, %v3499
    %v3840 = vpack.c.b16 %v3508, %v3504
    %v3841 = vpack.c.b16 %v3509, %v3505
    %v3842 = vpack.c.b16 %v3510, %v3506
    %v3843 = vpack.c.b16 %v3511, %v3507
    %v3844 = vpack.c.b16 %v3516, %v3512
    %v3845 = vpack.c.b16 %v3517, %v3513
    %v3846 = vpack.c.b16 %v3518, %v3514
    %v3847 = vpack.c.b16 %v3519, %v3515
    %v3848 = vpack.c.b16 %v3524, %v3520
    %v3849 = vpack.c.b16 %v3525, %v3521
    %v3850 = vpack.c.b16 %v3526, %v3522
    %v3851 = vpack.c.b16 %v3527, %v3523
    %v3852 = vpack.c.b16 %v3532, %v3528
    %v3853 = vpack.c.b16 %v3533, %v3529
    %v3854 = vpack.c.b16 %v3534, %v3530
    %v3855 = vpack.c.b16 %v3535, %v3531
    %v3856 = vpack.c.b16 %v3540, %v3536
    %v3857 = vpack.c.b16 %v3541, %v3537
    %v3858 = vpack.c.b16 %v3542, %v3538
    %v3859 = vpack.c.b16 %v3543, %v3539
    %v3860 = vpack.c.b16 %v3548, %v3544
    %v3861 = vpack.c.b16 %v3549, %v3545
    %v3862 = vpack.c.b16 %v3550, %v3546
    %v3863 = vpack.c.b16 %v3551, %v3547
    %v3864 = vpack.c.b16 %v3556, %v3552
    %v3865 = vpack.c.b16 %v3557, %v3553
    %v3866 = vpack.c.b16 %v3558, %v3554
    %v3867 = vpack.c.b16 %v3559, %v3555
    %v3868 = vpack.c.b16 %v3564, %v3560
    %v3869 = vpack.c.b16 %v3565, %v3561
    %v3870 = vpack.c.b16 %v3566, %v3562
    %v3871 = vpack.c.b16 %v3567, %v3563
    %v3872 = vpack.c.b16 %v3572, %v3568
    %v3873 = vpack.c.b16 %v3573, %v3569
    %v3874 = vpack.c.b16 %v3574, %v3570
    %v3875 = vpack.c.b16 %v3575, %v3571
    %v3876 = vpack.c.b16 %v3580, %v3576
    %v3877 = vpack.c.b16 %v3581, %v3577
    %v3878 = vpack.c.b16 %v3582, %v3578
    %v3879 = vpack.c.b16 %v3583, %v3579
    %v3880 = vpack.c.b16 %v3588, %v3584
    %v3881 = vpack.c.b16 %v3589, %v3585
    %v3882 = vpack.c.b16 %v3590, %v3586
    %v3883 = vpack.c.b16 %v3591, %v3587
    %v3884 = vpack.c.b16 %v3596, %v3592
    %v3885 = vpack.c.b16 %v3597, %v3593
    %v3886 = vpack.c.b16 %v3598, %v3594
    %v3887 = vpack.c.b16 %v3599, %v3595
    %v3888 = vpack.c.b16 %v3604, %v3600
    %v3889 = vpack.c.b16 %v3605, %v3601
    %v3890 = vpack.c.b16 %v3606, %v3602
    %v3891 = vpack.c.b16 %v3607, %v3603
    %v3892 = vpack.c.b16 %v3612, %v3608
    %v3893 = vpack.c.b16 %v3613, %v3609
    %v3894 = vpack.c.b16 %v3614, %v3610
    %v3895 = vpack.c.b16 %v3615, %v3611
    %v3896 = vpack.c.b16 %v3620, %v3616
    %v3897 = vpack.c.b16 %v3621, %v3617
    %v3898 = vpack.c.b16 %v3622, %v3618
    %v3899 = vpack.c.b16 %v3623, %v3619
    %v3900 = vpack.c.b16 %v3628, %v3624
    %v3901 = vpack.c.b16 %v3629, %v3625
    %v3902 = vpack.c.b16 %v3630, %v3626
    %v3903 = vpack.c.b16 %v3631, %v3627
    %v3904 = vpack.c.b16 %v3636, %v3632
    %v3905 = vpack.c.b16 %v3637, %v3633
    %v3906 = vpack.c.b16 %v3638, %v3634
    %v3907 = vpack.c.b16 %v3639, %v3635
    %v3908 = vpack.c.b16 %v3644, %v3640
    %v3909 = vpack.c.b16 %v3645, %v3641
    %v3910 = vpack.c.b16 %v3646, %v3642
    %v3911 = vpack.c.b16 %v3647, %v3643
    %v3912 = vpack.c.b16 %v3652, %v3648
    %v3913 = vpack.c.b16 %v3653, %v3649
    %v3914 = vpack.c.b16 %v3654, %v3650
    %v3915 = vpack.c.b16 %v3655, %v3651
    %v3916 = vpack.c.b16 %v3660, %v3656
    %v3917 = vpack.c.b16 %v3661, %v3657
    %v3918 = vpack.c.b16 %v3662, %v3658
    %v3919 = vpack.c.b16 %v3663, %v3659
    %v3920 = vpack.c.b16 %v3668, %v3664
    %v3921 = vpack.c.b16 %v3669, %v3665
    %v3922 = vpack.c.b16 %v3670, %v3666
    %v3923 = vpack.c.b16 %v3671, %v3667
    %v3924 = vpack.c.b16 %v3676, %v3672
    %v3925 = vpack.c.b16 %v3677, %v3673
    %v3926 = vpack.c.b16 %v3678, %v3674
    %v3927 = vpack.c.b16 %v3679, %v3675
    %v3928 = vpack.c.b16 %v3684, %v3680
    %v3929 = vpack.c.b16 %v3685, %v3681
    %v3930 = vpack.c.b16 %v3686, %v3682
    %v3931 = vpack.c.b16 %v3687, %v3683
    %v3932 = vpack.c.b16 %v3692, %v3688
    %v3933 = vpack.c.b16 %v3693, %v3689
    %v3934 = vpack.c.b16 %v3694, %v3690
    %v3935 = vpack.c.b16 %v3695, %v3691
    %v3936 = vpack.c.b16 %v3700, %v3696
    %v3937 = vpack.c.b16 %v3701, %v3697
    %v3938 = vpack.c.b16 %v3702, %v3698
    %v3939 = vpack.c.b16 %v3703, %v3699
    %v3940 = vpack.c.b16 %v3708, %v3704
    %v3941 = vpack.c.b16 %v3709, %v3705
    %v3942 = vpack.c.b16 %v3710, %v3706
    %v3943 = vpack.c.b16 %v3711, %v3707
    %v3944 = vpack.c.b16 %v3716, %v3712
    %v3945 = vpack.c.b16 %v3717, %v3713
    %v3946 = vpack.c.b16 %v3718, %v3714
    %v3947 = vpack.c.b16 %v3719, %v3715
    %v3948 = vpack.c.b16 %v3724, %v3720
    %v3949 = vpack.c.b16 %v3725, %v3721
    %v3950 = vpack.c.b16 %v3726, %v3722
    %v3951 = vpack.c.b16 %v3727, %v3723
    %v3952 = vpack.c.b16 %v3732, %v3728
    %v3953 = vpack.c.b16 %v3733, %v3729
    %v3954 = vpack.c.b16 %v3734, %v3730
    %v3955 = vpack.c.b16 %v3735, %v3731
    %v3956 = vpack.c.b16 %v3740, %v3736
    %v3957 = vpack.c.b16 %v3741, %v3737
    %v3958 = vpack.c.b16 %v3742, %v3738
    %v3959 = vpack.c.b16 %v3743, %v3739
    %v3960 = vpack.c.b16 %v3748, %v3744
    %v3961 = vpack.c.b16 %v3749, %v3745
    %v3962 = vpack.c.b16 %v3750, %v3746
    %v3963 = vpack.c.b16 %v3751, %v3747
    %v3964 = vpack.c.b16 %v3756, %v3752
    %v3965 = vpack.c.b16 %v3757, %v3753
    %v3966 = vpack.c.b16 %v3758, %v3754
    %v3967 = vpack.c.b16 %v3759, %v3755
    %v3968 = vpack.c.b16 %v3764, %v3760
    %v3969 = vpack.c.b16 %v3765, %v3761
    %v3970 = vpack.c.b16 %v3766, %v3762
    %v3971 = vpack.c.b16 %v3767, %v3763
    %v3972 = vpack.c.b16 %v3772, %v3768
    %v3973 = vpack.c.b16 %v3773, %v3769
    %v3974 = vpack.c.b16 %v3774, %v3770
    %v3975 = vpack.c.b16 %v3775, %v3771
    %v3976 = vpack.c.b16 %v3780, %v3776
    %v3977 = vpack.c.b16 %v3781, %v3777
    %v3978 = vpack.c.b16 %v3782, %v3778
    %v3979 = vpack.c.b16 %v3783, %v3779
    %v3980 = vpack.c.b16 %v3788, %v3784
    %v3981 = vpack.c.b16 %v3789, %v3785
    %v3982 = vpack.c.b16 %v3790, %v3786
    %v3983 = vpack.c.b16 %v3791, %v3787
    %4176 = vmatprep.subr.bf16.mxu0 %v3821
    %4177 = vmatpush1.bf16.msra.mxu0 %v3820
    %4178 = vmatprep.subr.bf16.mxu0 %v3817
    %4179 = vmatpush1.bf16.msra.mxu0 %v3816
    %4180 = vmatprep.subr.bf16.mxu0 %v3813
    %4181 = vmatpush1.bf16.msra.mxu0 %v3812
    %4182 = vmatprep.subr.bf16.mxu0 %v3809
    %4183 = vmatpush1.bf16.msra.mxu0 %v3808
    %4184 = vmatprep.subr.bf16.mxu0 %v3805
    %4185 = vmatpush1.bf16.msra.mxu0 %v3804
    %4186 = vmatprep.subr.bf16.mxu0 %v3801
    %4187 = vmatpush1.bf16.msra.mxu0 %v3800
    %4188 = vmatprep.subr.bf16.mxu0 %v3797
    %4189 = vmatpush1.bf16.msra.mxu0 %v3796
    %4190 = vmatprep.subr.bf16.mxu0 %v3793
    %4191 = vmatpush1.bf16.msra.mxu0 %v3792
    %4192 = vmatprep.subr.bf16.mxu0 %v3853
    %4193 = vmatpush2.bf16.msra.mxu0 %v3852
    %4194 = vmatprep.subr.bf16.mxu0 %v3849
    %4195 = vmatpush2.bf16.msra.mxu0 %v3848
    %4196 = vmatprep.subr.bf16.mxu0 %v3845
    %4197 = vmatpush2.bf16.msra.mxu0 %v3844
    %4198 = vmatprep.subr.bf16.mxu0 %v3841
    %4199 = vmatpush2.bf16.msra.mxu0 %v3840
    %4200 = vmatprep.subr.bf16.mxu0 %v3837
    %4201 = vmatpush2.bf16.msra.mxu0 %v3836
    %4202 = vmatprep.subr.bf16.mxu0 %v3833
    %4203 = vmatpush2.bf16.msra.mxu0 %v3832
    %4204 = vmatprep.subr.bf16.mxu0 %v3829
    %4205 = vmatpush2.bf16.msra.mxu0 %v3828
    %4206 = vmatprep.subr.bf16.mxu0 %v3825
    %4207 = vmatpush2.bf16.msra.mxu0 %v3824
    %4208 = vmatprep.mubr.bf16.mxu0 %v2997
    %4209 = vmatmul.mubr.bf16.gmra.mxu0 %v2996
    %v4210 = vpop.f32.mrf.mxu0
    %v4211 = vadd.f32 %v3199, %v4210
    %v4212 = vpop.f32.mrf.mxu0
    %v4213 = vadd.f32 %v3203, %v4212
    %v4214 = vpop.f32.mrf.mxu0
    %v4215 = vpop.f32.mrf.mxu0
    %4216 = vdwg.mxu0
    %4217 = vmatprep.subr.bf16.mxu0 %v3885
    %4218 = vmatpush1.bf16.msra.mxu0 %v3884
    %4219 = vmatprep.subr.bf16.mxu0 %v3881
    %4220 = vmatpush1.bf16.msra.mxu0 %v3880
    %4221 = vmatprep.subr.bf16.mxu0 %v3877
    %4222 = vmatpush1.bf16.msra.mxu0 %v3876
    %4223 = vmatprep.subr.bf16.mxu0 %v3873
    %4224 = vmatpush1.bf16.msra.mxu0 %v3872
    %4225 = vmatprep.subr.bf16.mxu0 %v3869
    %4226 = vmatpush1.bf16.msra.mxu0 %v3868
    %4227 = vmatprep.subr.bf16.mxu0 %v3865
    %4228 = vmatpush1.bf16.msra.mxu0 %v3864
    %4229 = vmatprep.subr.bf16.mxu0 %v3861
    %4230 = vmatpush1.bf16.msra.mxu0 %v3860
    %4231 = vmatprep.subr.bf16.mxu0 %v3857
    %4232 = vmatpush1.bf16.msra.mxu0 %v3856
    %4233 = vmatprep.subr.bf16.mxu0 %v3917
    %4234 = vmatpush2.bf16.msra.mxu0 %v3916
    %4235 = vmatprep.subr.bf16.mxu0 %v3913
    %4236 = vmatpush2.bf16.msra.mxu0 %v3912
    %4237 = vmatprep.subr.bf16.mxu0 %v3909
    %4238 = vmatpush2.bf16.msra.mxu0 %v3908
    %4239 = vmatprep.subr.bf16.mxu0 %v3905
    %4240 = vmatpush2.bf16.msra.mxu0 %v3904
    %4241 = vmatprep.subr.bf16.mxu0 %v3901
    %4242 = vmatpush2.bf16.msra.mxu0 %v3900
    %4243 = vmatprep.subr.bf16.mxu0 %v3897
    %4244 = vmatpush2.bf16.msra.mxu0 %v3896
    %4245 = vmatprep.subr.bf16.mxu0 %v3893
    %4246 = vmatpush2.bf16.msra.mxu0 %v3892
    %4247 = vmatprep.subr.bf16.mxu0 %v3889
    %4248 = vmatpush2.bf16.msra.mxu0 %v3888
    %4249 = vmatprep.mubr.bf16.mxu0 %v2999
    %4250 = vmatmul.mubr.bf16.gmra.mxu0 %v2998
    %v4251 = vpop.f32.mrf.mxu0
    %v4252 = vadd.f32 %v4211, %v4251
    %v4253 = vpop.f32.mrf.mxu0
    %v4254 = vadd.f32 %v4213, %v4253
    %v4255 = vpop.f32.mrf.mxu0
    %v4256 = vpop.f32.mrf.mxu0
    %4257 = vdwg.mxu0
    %4258 = vmatprep.subr.bf16.mxu0 %v3949
    %4259 = vmatpush1.bf16.msra.mxu0 %v3948
    %4260 = vmatprep.subr.bf16.mxu0 %v3945
    %4261 = vmatpush1.bf16.msra.mxu0 %v3944
    %4262 = vmatprep.subr.bf16.mxu0 %v3941
    %4263 = vmatpush1.bf16.msra.mxu0 %v3940
    %4264 = vmatprep.subr.bf16.mxu0 %v3937
    %4265 = vmatpush1.bf16.msra.mxu0 %v3936
    %4266 = vmatprep.subr.bf16.mxu0 %v3933
    %4267 = vmatpush1.bf16.msra.mxu0 %v3932
    %4268 = vmatprep.subr.bf16.mxu0 %v3929
    %4269 = vmatpush1.bf16.msra.mxu0 %v3928
    %4270 = vmatprep.subr.bf16.mxu0 %v3925
    %4271 = vmatpush1.bf16.msra.mxu0 %v3924
    %4272 = vmatprep.subr.bf16.mxu0 %v3921
    %4273 = vmatpush1.bf16.msra.mxu0 %v3920
    %4274 = vmatprep.subr.bf16.mxu0 %v3981
    %4275 = vmatpush2.bf16.msra.mxu0 %v3980
    %4276 = vmatprep.subr.bf16.mxu0 %v3977
    %4277 = vmatpush2.bf16.msra.mxu0 %v3976
    %4278 = vmatprep.subr.bf16.mxu0 %v3973
    %4279 = vmatpush2.bf16.msra.mxu0 %v3972
    %4280 = vmatprep.subr.bf16.mxu0 %v3969
    %4281 = vmatpush2.bf16.msra.mxu0 %v3968
    %4282 = vmatprep.subr.bf16.mxu0 %v3965
    %4283 = vmatpush2.bf16.msra.mxu0 %v3964
    %4284 = vmatprep.subr.bf16.mxu0 %v3961
    %4285 = vmatpush2.bf16.msra.mxu0 %v3960
    %4286 = vmatprep.subr.bf16.mxu0 %v3957
    %4287 = vmatpush2.bf16.msra.mxu0 %v3956
    %4288 = vmatprep.subr.bf16.mxu0 %v3953
    %4289 = vmatpush2.bf16.msra.mxu0 %v3952
    %4290 = vmatprep.mubr.bf16.mxu0 %v3001
    %4291 = vmatmul.mubr.bf16.gmra.mxu0 %v3000
    %v4292 = vpop.f32.mrf.mxu0
    %v4293 = vadd.f32 %v4252, %v4292
    %v4294 = vpop.f32.mrf.mxu0
    %v4295 = vadd.f32 %v4254, %v4294
    %v4296 = vpop.f32.mrf.mxu0
    %v4297 = vpop.f32.mrf.mxu0
    %4298 = vdwg.mxu0
    %4299 = vmatprep.subr.bf16.mxu0 %v3823
    %4300 = vmatpush1.bf16.msra.mxu0 %v3822
    %4301 = vmatprep.subr.bf16.mxu0 %v3819
    %4302 = vmatpush1.bf16.msra.mxu0 %v3818
    %4303 = vmatprep.subr.bf16.mxu0 %v3815
    %4304 = vmatpush1.bf16.msra.mxu0 %v3814
    %4305 = vmatprep.subr.bf16.mxu0 %v3811
    %4306 = vmatpush1.bf16.msra.mxu0 %v3810
    %4307 = vmatprep.subr.bf16.mxu0 %v3807
    %4308 = vmatpush1.bf16.msra.mxu0 %v3806
    %4309 = vmatprep.subr.bf16.mxu0 %v3803
    %4310 = vmatpush1.bf16.msra.mxu0 %v3802
    %4311 = vmatprep.subr.bf16.mxu0 %v3799
    %4312 = vmatpush1.bf16.msra.mxu0 %v3798
    %4313 = vmatprep.subr.bf16.mxu0 %v3795
    %4314 = vmatpush1.bf16.msra.mxu0 %v3794
    %4315 = vmatprep.subr.bf16.mxu0 %v3855
    %4316 = vmatpush2.bf16.msra.mxu0 %v3854
    %4317 = vmatprep.subr.bf16.mxu0 %v3851
    %4318 = vmatpush2.bf16.msra.mxu0 %v3850
    %4319 = vmatprep.subr.bf16.mxu0 %v3847
    %4320 = vmatpush2.bf16.msra.mxu0 %v3846
    %4321 = vmatprep.subr.bf16.mxu0 %v3843
    %4322 = vmatpush2.bf16.msra.mxu0 %v3842
    %4323 = vmatprep.subr.bf16.mxu0 %v3839
    %4324 = vmatpush2.bf16.msra.mxu0 %v3838
    %4325 = vmatprep.subr.bf16.mxu0 %v3835
    %4326 = vmatpush2.bf16.msra.mxu0 %v3834
    %4327 = vmatprep.subr.bf16.mxu0 %v3831
    %4328 = vmatpush2.bf16.msra.mxu0 %v3830
    %4329 = vmatprep.subr.bf16.mxu0 %v3827
    %4330 = vmatpush2.bf16.msra.mxu0 %v3826
    %4331 = vmatprep.mubr.bf16.mxu0 %v2997
    %4332 = vmatmul.mubr.bf16.gmra.mxu0 %v2996
    %v4333 = vpop.f32.mrf.mxu0
    %v4334 = vadd.f32 %v3207, %v4333
    %v4335 = vpop.f32.mrf.mxu0
    %v4336 = vadd.f32 %v3211, %v4335
    %v4337 = vpop.f32.mrf.mxu0
    %v4338 = vpop.f32.mrf.mxu0
    %4339 = vdwg.mxu0
    %4340 = vmatprep.subr.bf16.mxu0 %v3887
    %4341 = vmatpush1.bf16.msra.mxu0 %v3886
    %4342 = vmatprep.subr.bf16.mxu0 %v3883
    %4343 = vmatpush1.bf16.msra.mxu0 %v3882
    %4344 = vmatprep.subr.bf16.mxu0 %v3879
    %4345 = vmatpush1.bf16.msra.mxu0 %v3878
    %4346 = vmatprep.subr.bf16.mxu0 %v3875
    %4347 = vmatpush1.bf16.msra.mxu0 %v3874
    %4348 = vmatprep.subr.bf16.mxu0 %v3871
    %4349 = vmatpush1.bf16.msra.mxu0 %v3870
    %4350 = vmatprep.subr.bf16.mxu0 %v3867
    %4351 = vmatpush1.bf16.msra.mxu0 %v3866
    %4352 = vmatprep.subr.bf16.mxu0 %v3863
    %4353 = vmatpush1.bf16.msra.mxu0 %v3862
    %4354 = vmatprep.subr.bf16.mxu0 %v3859
    %4355 = vmatpush1.bf16.msra.mxu0 %v3858
    %4356 = vmatprep.subr.bf16.mxu0 %v3919
    %4357 = vmatpush2.bf16.msra.mxu0 %v3918
    %4358 = vmatprep.subr.bf16.mxu0 %v3915
    %4359 = vmatpush2.bf16.msra.mxu0 %v3914
    %4360 = vmatprep.subr.bf16.mxu0 %v3911
    %4361 = vmatpush2.bf16.msra.mxu0 %v3910
    %4362 = vmatprep.subr.bf16.mxu0 %v3907
    %4363 = vmatpush2.bf16.msra.mxu0 %v3906
    %4364 = vmatprep.subr.bf16.mxu0 %v3903
    %4365 = vmatpush2.bf16.msra.mxu0 %v3902
    %4366 = vmatprep.subr.bf16.mxu0 %v3899
    %4367 = vmatpush2.bf16.msra.mxu0 %v3898
    %4368 = vmatprep.subr.bf16.mxu0 %v3895
    %4369 = vmatpush2.bf16.msra.mxu0 %v3894
    %4370 = vmatprep.subr.bf16.mxu0 %v3891
    %4371 = vmatpush2.bf16.msra.mxu0 %v3890
    %4372 = vmatprep.mubr.bf16.mxu0 %v2999
    %4373 = vmatmul.mubr.bf16.gmra.mxu0 %v2998
    %v4374 = vpop.f32.mrf.mxu0
    %v4375 = vadd.f32 %v4334, %v4374
    %v4376 = vpop.f32.mrf.mxu0
    %v4377 = vadd.f32 %v4336, %v4376
    %v4378 = vpop.f32.mrf.mxu0
    %v4379 = vpop.f32.mrf.mxu0
    %4380 = vdwg.mxu0
    %4381 = vmatprep.subr.bf16.mxu0 %v3951
    %4382 = vmatpush1.bf16.msra.mxu0 %v3950
    %4383 = vmatprep.subr.bf16.mxu0 %v3947
    %4384 = vmatpush1.bf16.msra.mxu0 %v3946
    %4385 = vmatprep.subr.bf16.mxu0 %v3943
    %4386 = vmatpush1.bf16.msra.mxu0 %v3942
    %4387 = vmatprep.subr.bf16.mxu0 %v3939
    %4388 = vmatpush1.bf16.msra.mxu0 %v3938
    %4389 = vmatprep.subr.bf16.mxu0 %v3935
    %4390 = vmatpush1.bf16.msra.mxu0 %v3934
    %4391 = vmatprep.subr.bf16.mxu0 %v3931
    %4392 = vmatpush1.bf16.msra.mxu0 %v3930
    %4393 = vmatprep.subr.bf16.mxu0 %v3927
    %4394 = vmatpush1.bf16.msra.mxu0 %v3926
    %4395 = vmatprep.subr.bf16.mxu0 %v3923
    %4396 = vmatpush1.bf16.msra.mxu0 %v3922
    %4397 = vmatprep.subr.bf16.mxu0 %v3983
    %4398 = vmatpush2.bf16.msra.mxu0 %v3982
    %4399 = vmatprep.subr.bf16.mxu0 %v3979
    %4400 = vmatpush2.bf16.msra.mxu0 %v3978
    %4401 = vmatprep.subr.bf16.mxu0 %v3975
    %4402 = vmatpush2.bf16.msra.mxu0 %v3974
    %4403 = vmatprep.subr.bf16.mxu0 %v3971
    %4404 = vmatpush2.bf16.msra.mxu0 %v3970
    %4405 = vmatprep.subr.bf16.mxu0 %v3967
    %4406 = vmatpush2.bf16.msra.mxu0 %v3966
    %4407 = vmatprep.subr.bf16.mxu0 %v3963
    %4408 = vmatpush2.bf16.msra.mxu0 %v3962
    %4409 = vmatprep.subr.bf16.mxu0 %v3959
    %4410 = vmatpush2.bf16.msra.mxu0 %v3958
    %4411 = vmatprep.subr.bf16.mxu0 %v3955
    %4412 = vmatpush2.bf16.msra.mxu0 %v3954
    %4413 = vmatprep.mubr.bf16.mxu0 %v3001
    %4414 = vmatmul.mubr.bf16.gmra.mxu0 %v3000
    %v4415 = vpop.f32.mrf.mxu0
    %v4416 = vadd.f32 %v4375, %v4415
    %v4417 = vpop.f32.mrf.mxu0
    %v4418 = vadd.f32 %v4377, %v4417
    %v4419 = vpop.f32.mrf.mxu0
    %v4420 = vpop.f32.mrf.mxu0
    %4421 = vdwg.mxu0
    %v4422 = vmax.f32 %v4293, 0.0
    %v4423 = vmax.f32 %v4295, 0.0
    %v4424 = vmax.f32 %v4416, 0.0
    %v4425 = vmax.f32 %v4418, 0.0
    %v4426 = vpack.c.bf16 %v4422, %v4422
    %v4427 = vpack.c.bf16 %v4423, %v4423
    %v4428 = vpack.c.bf16 %v4424, %v4424
    %v4429 = vpack.c.bf16 %v4425, %v4425
    %v4430 = vld [vmem:[#allocation11] sm:$0xff]
    %v4431 = vld [vmem:[#allocation11 + $0x8] sm:$0xff]
    %v4432 = vld [vmem:[#allocation11 + $0x10] sm:$0xff]
    %v4433 = vld [vmem:[#allocation11 + $0x18] sm:$0xff]
    %v4434 = vld [vmem:[#allocation11 + $0x20] sm:$0xff]
    %v4435 = vld [vmem:[#allocation11 + $0x28] sm:$0xff]
    %v4436 = vld [vmem:[#allocation11 + $0x30] sm:$0xff]
    %v4437 = vld [vmem:[#allocation11 + $0x38] sm:$0xff]
    %v4438 = vld [vmem:[#allocation11 + $0x40] sm:$0xff]
    %v4439 = vld [vmem:[#allocation11 + $0x48] sm:$0xff]
    %v4440 = vld [vmem:[#allocation11 + $0x50] sm:$0xff]
    %v4441 = vld [vmem:[#allocation11 + $0x58] sm:$0xff]
    %v4442 = vld [vmem:[#allocation11 + $0x60] sm:$0xff]
    %v4443 = vld [vmem:[#allocation11 + $0x68] sm:$0xff]
    %v4444 = vld [vmem:[#allocation11 + $0x70] sm:$0xff]
    %v4445 = vld [vmem:[#allocation11 + $0x78] sm:$0xff]
    %v4446 = vld [vmem:[#allocation11 + $0x80] sm:$0xff]
    %v4447 = vld [vmem:[#allocation11 + $0x88] sm:$0xff]
    %v4448 = vld [vmem:[#allocation11 + $0x90] sm:$0xff]
    %v4449 = vld [vmem:[#allocation11 + $0x98] sm:$0xff]
    %v4450 = vld [vmem:[#allocation11 + $0xa0] sm:$0xff]
    %v4451 = vld [vmem:[#allocation11 + $0xa8] sm:$0xff]
    %v4452 = vld [vmem:[#allocation11 + $0xb0] sm:$0xff]
    %v4453 = vld [vmem:[#allocation11 + $0xb8] sm:$0xff]
    %v4454 = vld [vmem:[#allocation11 + $0xc0] sm:$0xff]
    %v4455 = vld [vmem:[#allocation11 + $0xc8] sm:$0xff]
    %v4456 = vld [vmem:[#allocation11 + $0xd0] sm:$0xff]
    %v4457 = vld [vmem:[#allocation11 + $0xd8] sm:$0xff]
    %v4458 = vld [vmem:[#allocation11 + $0xe0] sm:$0xff]
    %v4459 = vld [vmem:[#allocation11 + $0xe8] sm:$0xff]
    %v4460 = vld [vmem:[#allocation11 + $0xf0] sm:$0xff]
    %v4461 = vld [vmem:[#allocation11 + $0xf8] sm:$0xff]
    %v4462 = vld [vmem:[#allocation11 + $0x100] sm:$0xff]
    %v4463 = vld [vmem:[#allocation11 + $0x108] sm:$0xff]
    %v4464 = vld [vmem:[#allocation11 + $0x110] sm:$0xff]
    %v4465 = vld [vmem:[#allocation11 + $0x118] sm:$0xff]
    %v4466 = vld [vmem:[#allocation11 + $0x120] sm:$0xff]
    %v4467 = vld [vmem:[#allocation11 + $0x128] sm:$0xff]
    %v4468 = vld [vmem:[#allocation11 + $0x130] sm:$0xff]
    %v4469 = vld [vmem:[#allocation11 + $0x138] sm:$0xff]
    %v4470 = vld [vmem:[#allocation11 + $0x140] sm:$0xff]
    %v4471 = vld [vmem:[#allocation11 + $0x148] sm:$0xff]
    %v4472 = vld [vmem:[#allocation11 + $0x150] sm:$0xff]
    %v4473 = vld [vmem:[#allocation11 + $0x158] sm:$0xff]
    %v4474 = vld [vmem:[#allocation11 + $0x160] sm:$0xff]
    %v4475 = vld [vmem:[#allocation11 + $0x168] sm:$0xff]
    %v4476 = vld [vmem:[#allocation11 + $0x170] sm:$0xff]
    %v4477 = vld [vmem:[#allocation11 + $0x178] sm:$0xff]
    %v4478 = vld [vmem:[#allocation11 + $0x180] sm:$0xff]
    %v4479 = vld [vmem:[#allocation11 + $0x188] sm:$0xff]
    %v4480 = vld [vmem:[#allocation11 + $0x190] sm:$0xff]
    %v4481 = vld [vmem:[#allocation11 + $0x198] sm:$0xff]
    %v4482 = vld [vmem:[#allocation11 + $0x1a0] sm:$0xff]
    %v4483 = vld [vmem:[#allocation11 + $0x1a8] sm:$0xff]
    %v4484 = vld [vmem:[#allocation11 + $0x1b0] sm:$0xff]
    %v4485 = vld [vmem:[#allocation11 + $0x1b8] sm:$0xff]
    %v4486 = vld [vmem:[#allocation11 + $0x1c0] sm:$0xff]
    %v4487 = vld [vmem:[#allocation11 + $0x1c8] sm:$0xff]
    %v4488 = vld [vmem:[#allocation11 + $0x1d0] sm:$0xff]
    %v4489 = vld [vmem:[#allocation11 + $0x1d8] sm:$0xff]
    %v4490 = vld [vmem:[#allocation11 + $0x1e0] sm:$0xff]
    %v4491 = vld [vmem:[#allocation11 + $0x1e8] sm:$0xff]
    %v4492 = vld [vmem:[#allocation11 + $0x1f0] sm:$0xff]
    %v4493 = vld [vmem:[#allocation11 + $0x1f8] sm:$0xff]
    %v4494 = vld [vmem:[#allocation13] sm:$0x3]
    %v4496 = vlaneseq
    %v4497 = vshrl.u32 %v4496, 7
    %v4498 = vsub.s32 0, %v4497
    %v4499 = vrot.slane %v4494, %v4498
    %v4500 = vlaneseq
    %v4501 = vshrl.u32 %v4500, 7
    %v4502 = vsub.s32 1, %v4501
    %v4503 = vrot.slane %v4494, %v4502
    %v4570 = vunpack.c.l.b16 %v4430
    %v4571 = vunpack.c.h.b16 %v4430
    %v4572 = vunpack.c.l.b16 %v4431
    %v4573 = vunpack.c.h.b16 %v4431
    %v4574 = vunpack.c.l.b16 %v4432
    %v4575 = vunpack.c.h.b16 %v4432
    %v4576 = vunpack.c.l.b16 %v4433
    %v4577 = vunpack.c.h.b16 %v4433
    %v4578 = vunpack.c.l.b16 %v4434
    %v4579 = vunpack.c.h.b16 %v4434
    %v4580 = vunpack.c.l.b16 %v4435
    %v4581 = vunpack.c.h.b16 %v4435
    %v4582 = vunpack.c.l.b16 %v4436
    %v4583 = vunpack.c.h.b16 %v4436
    %v4584 = vunpack.c.l.b16 %v4437
    %v4585 = vunpack.c.h.b16 %v4437
    %v4586 = vunpack.c.l.b16 %v4438
    %v4587 = vunpack.c.h.b16 %v4438
    %v4588 = vunpack.c.l.b16 %v4439
    %v4589 = vunpack.c.h.b16 %v4439
    %v4590 = vunpack.c.l.b16 %v4440
    %v4591 = vunpack.c.h.b16 %v4440
    %v4592 = vunpack.c.l.b16 %v4441
    %v4593 = vunpack.c.h.b16 %v4441
    %v4594 = vunpack.c.l.b16 %v4442
    %v4595 = vunpack.c.h.b16 %v4442
    %v4596 = vunpack.c.l.b16 %v4443
    %v4597 = vunpack.c.h.b16 %v4443
    %v4598 = vunpack.c.l.b16 %v4444
    %v4599 = vunpack.c.h.b16 %v4444
    %v4600 = vunpack.c.l.b16 %v4445
    %v4601 = vunpack.c.h.b16 %v4445
    %v4602 = vunpack.c.l.b16 %v4446
    %v4603 = vunpack.c.h.b16 %v4446
    %v4604 = vunpack.c.l.b16 %v4447
    %v4605 = vunpack.c.h.b16 %v4447
    %v4606 = vunpack.c.l.b16 %v4448
    %v4607 = vunpack.c.h.b16 %v4448
    %v4608 = vunpack.c.l.b16 %v4449
    %v4609 = vunpack.c.h.b16 %v4449
    %v4610 = vunpack.c.l.b16 %v4450
    %v4611 = vunpack.c.h.b16 %v4450
    %v4612 = vunpack.c.l.b16 %v4451
    %v4613 = vunpack.c.h.b16 %v4451
    %v4614 = vunpack.c.l.b16 %v4452
    %v4615 = vunpack.c.h.b16 %v4452
    %v4616 = vunpack.c.l.b16 %v4453
    %v4617 = vunpack.c.h.b16 %v4453
    %v4618 = vunpack.c.l.b16 %v4454
    %v4619 = vunpack.c.h.b16 %v4454
    %v4620 = vunpack.c.l.b16 %v4455
    %v4621 = vunpack.c.h.b16 %v4455
    %v4622 = vunpack.c.l.b16 %v4456
    %v4623 = vunpack.c.h.b16 %v4456
    %v4624 = vunpack.c.l.b16 %v4457
    %v4625 = vunpack.c.h.b16 %v4457
    %v4626 = vunpack.c.l.b16 %v4458
    %v4627 = vunpack.c.h.b16 %v4458
    %v4628 = vunpack.c.l.b16 %v4459
    %v4629 = vunpack.c.h.b16 %v4459
    %v4630 = vunpack.c.l.b16 %v4460
    %v4631 = vunpack.c.h.b16 %v4460
    %v4632 = vunpack.c.l.b16 %v4461
    %v4633 = vunpack.c.h.b16 %v4461
    %v4634 = vunpack.c.l.b16 %v4462
    %v4635 = vunpack.c.h.b16 %v4462
    %v4636 = vunpack.c.l.b16 %v4463
    %v4637 = vunpack.c.h.b16 %v4463
    %v4638 = vunpack.c.l.b16 %v4464
    %v4639 = vunpack.c.h.b16 %v4464
    %v4640 = vunpack.c.l.b16 %v4465
    %v4641 = vunpack.c.h.b16 %v4465
    %v4642 = vunpack.c.l.b16 %v4466
    %v4643 = vunpack.c.h.b16 %v4466
    %v4644 = vunpack.c.l.b16 %v4467
    %v4645 = vunpack.c.h.b16 %v4467
    %v4646 = vunpack.c.l.b16 %v4468
    %v4647 = vunpack.c.h.b16 %v4468
    %v4648 = vunpack.c.l.b16 %v4469
    %v4649 = vunpack.c.h.b16 %v4469
    %v4650 = vunpack.c.l.b16 %v4470
    %v4651 = vunpack.c.h.b16 %v4470
    %v4652 = vunpack.c.l.b16 %v4471
    %v4653 = vunpack.c.h.b16 %v4471
    %v4654 = vunpack.c.l.b16 %v4472
    %v4655 = vunpack.c.h.b16 %v4472
    %v4656 = vunpack.c.l.b16 %v4473
    %v4657 = vunpack.c.h.b16 %v4473
    %v4658 = vunpack.c.l.b16 %v4474
    %v4659 = vunpack.c.h.b16 %v4474
    %v4660 = vunpack.c.l.b16 %v4475
    %v4661 = vunpack.c.h.b16 %v4475
    %v4662 = vunpack.c.l.b16 %v4476
    %v4663 = vunpack.c.h.b16 %v4476
    %v4664 = vunpack.c.l.b16 %v4477
    %v4665 = vunpack.c.h.b16 %v4477
    %v4666 = vunpack.c.l.b16 %v4478
    %v4667 = vunpack.c.h.b16 %v4478
    %v4668 = vunpack.c.l.b16 %v4479
    %v4669 = vunpack.c.h.b16 %v4479
    %v4670 = vunpack.c.l.b16 %v4480
    %v4671 = vunpack.c.h.b16 %v4480
    %v4672 = vunpack.c.l.b16 %v4481
    %v4673 = vunpack.c.h.b16 %v4481
    %v4674 = vunpack.c.l.b16 %v4482
    %v4675 = vunpack.c.h.b16 %v4482
    %v4676 = vunpack.c.l.b16 %v4483
    %v4677 = vunpack.c.h.b16 %v4483
    %v4678 = vunpack.c.l.b16 %v4484
    %v4679 = vunpack.c.h.b16 %v4484
    %v4680 = vunpack.c.l.b16 %v4485
    %v4681 = vunpack.c.h.b16 %v4485
    %v4682 = vunpack.c.l.b16 %v4486
    %v4683 = vunpack.c.h.b16 %v4486
    %v4684 = vunpack.c.l.b16 %v4487
    %v4685 = vunpack.c.h.b16 %v4487
    %v4686 = vunpack.c.l.b16 %v4488
    %v4687 = vunpack.c.h.b16 %v4488
    %v4688 = vunpack.c.l.b16 %v4489
    %v4689 = vunpack.c.h.b16 %v4489
    %v4690 = vunpack.c.l.b16 %v4490
    %v4691 = vunpack.c.h.b16 %v4490
    %v4692 = vunpack.c.l.b16 %v4491
    %v4693 = vunpack.c.h.b16 %v4491
    %v4694 = vunpack.c.l.b16 %v4492
    %v4695 = vunpack.c.h.b16 %v4492
    %v4696 = vunpack.c.l.b16 %v4493
    %v4697 = vunpack.c.h.b16 %v4493
    %v4698 = vpack.c.b16 %v4572, %v4570
    %v4699 = vpack.c.b16 %v4573, %v4571
    %v4700 = vpack.c.b16 %v4576, %v4574
    %v4701 = vpack.c.b16 %v4577, %v4575
    %v4702 = vpack.c.b16 %v4580, %v4578
    %v4703 = vpack.c.b16 %v4581, %v4579
    %v4704 = vpack.c.b16 %v4584, %v4582
    %v4705 = vpack.c.b16 %v4585, %v4583
    %v4706 = vpack.c.b16 %v4588, %v4586
    %v4707 = vpack.c.b16 %v4589, %v4587
    %v4708 = vpack.c.b16 %v4592, %v4590
    %v4709 = vpack.c.b16 %v4593, %v4591
    %v4710 = vpack.c.b16 %v4596, %v4594
    %v4711 = vpack.c.b16 %v4597, %v4595
    %v4712 = vpack.c.b16 %v4600, %v4598
    %v4713 = vpack.c.b16 %v4601, %v4599
    %v4714 = vpack.c.b16 %v4604, %v4602
    %v4715 = vpack.c.b16 %v4605, %v4603
    %v4716 = vpack.c.b16 %v4608, %v4606
    %v4717 = vpack.c.b16 %v4609, %v4607
    %v4718 = vpack.c.b16 %v4612, %v4610
    %v4719 = vpack.c.b16 %v4613, %v4611
    %v4720 = vpack.c.b16 %v4616, %v4614
    %v4721 = vpack.c.b16 %v4617, %v4615
    %v4722 = vpack.c.b16 %v4620, %v4618
    %v4723 = vpack.c.b16 %v4621, %v4619
    %v4724 = vpack.c.b16 %v4624, %v4622
    %v4725 = vpack.c.b16 %v4625, %v4623
    %v4726 = vpack.c.b16 %v4628, %v4626
    %v4727 = vpack.c.b16 %v4629, %v4627
    %v4728 = vpack.c.b16 %v4632, %v4630
    %v4729 = vpack.c.b16 %v4633, %v4631
    %v4730 = vpack.c.b16 %v4636, %v4634
    %v4731 = vpack.c.b16 %v4637, %v4635
    %v4732 = vpack.c.b16 %v4640, %v4638
    %v4733 = vpack.c.b16 %v4641, %v4639
    %v4734 = vpack.c.b16 %v4644, %v4642
    %v4735 = vpack.c.b16 %v4645, %v4643
    %v4736 = vpack.c.b16 %v4648, %v4646
    %v4737 = vpack.c.b16 %v4649, %v4647
    %v4738 = vpack.c.b16 %v4652, %v4650
    %v4739 = vpack.c.b16 %v4653, %v4651
    %v4740 = vpack.c.b16 %v4656, %v4654
    %v4741 = vpack.c.b16 %v4657, %v4655
    %v4742 = vpack.c.b16 %v4660, %v4658
    %v4743 = vpack.c.b16 %v4661, %v4659
    %v4744 = vpack.c.b16 %v4664, %v4662
    %v4745 = vpack.c.b16 %v4665, %v4663
    %v4746 = vpack.c.b16 %v4668, %v4666
    %v4747 = vpack.c.b16 %v4669, %v4667
    %v4748 = vpack.c.b16 %v4672, %v4670
    %v4749 = vpack.c.b16 %v4673, %v4671
    %v4750 = vpack.c.b16 %v4676, %v4674
    %v4751 = vpack.c.b16 %v4677, %v4675
    %v4752 = vpack.c.b16 %v4680, %v4678
    %v4753 = vpack.c.b16 %v4681, %v4679
    %v4754 = vpack.c.b16 %v4684, %v4682
    %v4755 = vpack.c.b16 %v4685, %v4683
    %v4756 = vpack.c.b16 %v4688, %v4686
    %v4757 = vpack.c.b16 %v4689, %v4687
    %v4758 = vpack.c.b16 %v4692, %v4690
    %v4759 = vpack.c.b16 %v4693, %v4691
    %v4760 = vpack.c.b16 %v4696, %v4694
    %v4761 = vpack.c.b16 %v4697, %v4695
    %4826 = vmatprep.subr.bf16.mxu0 %v4713
    %4827 = vmatpush1.bf16.msra.mxu0 %v4712
    %4828 = vmatprep.subr.bf16.mxu0 %v4711
    %4829 = vmatpush1.bf16.msra.mxu0 %v4710
    %4830 = vmatprep.subr.bf16.mxu0 %v4709
    %4831 = vmatpush1.bf16.msra.mxu0 %v4708
    %4832 = vmatprep.subr.bf16.mxu0 %v4707
    %4833 = vmatpush1.bf16.msra.mxu0 %v4706
    %4834 = vmatprep.subr.bf16.mxu0 %v4705
    %4835 = vmatpush1.bf16.msra.mxu0 %v4704
    %4836 = vmatprep.subr.bf16.mxu0 %v4703
    %4837 = vmatpush1.bf16.msra.mxu0 %v4702
    %4838 = vmatprep.subr.bf16.mxu0 %v4701
    %4839 = vmatpush1.bf16.msra.mxu0 %v4700
    %4840 = vmatprep.subr.bf16.mxu0 %v4699
    %4841 = vmatpush1.bf16.msra.mxu0 %v4698
    %4842 = vmatprep.subr.bf16.mxu0 %v4729
    %4843 = vmatpush2.bf16.msra.mxu0 %v4728
    %4844 = vmatprep.subr.bf16.mxu0 %v4727
    %4845 = vmatpush2.bf16.msra.mxu0 %v4726
    %4846 = vmatprep.subr.bf16.mxu0 %v4725
    %4847 = vmatpush2.bf16.msra.mxu0 %v4724
    %4848 = vmatprep.subr.bf16.mxu0 %v4723
    %4849 = vmatpush2.bf16.msra.mxu0 %v4722
    %4850 = vmatprep.subr.bf16.mxu0 %v4721
    %4851 = vmatpush2.bf16.msra.mxu0 %v4720
    %4852 = vmatprep.subr.bf16.mxu0 %v4719
    %4853 = vmatpush2.bf16.msra.mxu0 %v4718
    %4854 = vmatprep.subr.bf16.mxu0 %v4717
    %4855 = vmatpush2.bf16.msra.mxu0 %v4716
    %4856 = vmatprep.subr.bf16.mxu0 %v4715
    %4857 = vmatpush2.bf16.msra.mxu0 %v4714
    %4858 = vmatprep.mubr.bf16.mxu0 %v4427
    %4859 = vmatmul.mubr.bf16.gmra.mxu0 %v4426
    %v4860 = vpop.f32.mrf.mxu0
    %v4861 = vadd.f32 %v4499, %v4860
    %v4862 = vpop.f32.mrf.mxu0
    %v4863 = vadd.f32 %v4503, %v4862
    %v4864 = vpop.f32.mrf.mxu0
    %v4865 = vpop.f32.mrf.mxu0
    %4866 = vdwg.mxu0
    %4867 = vmatprep.subr.bf16.mxu0 %v4745
    %4868 = vmatpush1.bf16.msra.mxu0 %v4744
    %4869 = vmatprep.subr.bf16.mxu0 %v4743
    %4870 = vmatpush1.bf16.msra.mxu0 %v4742
    %4871 = vmatprep.subr.bf16.mxu0 %v4741
    %4872 = vmatpush1.bf16.msra.mxu0 %v4740
    %4873 = vmatprep.subr.bf16.mxu0 %v4739
    %4874 = vmatpush1.bf16.msra.mxu0 %v4738
    %4875 = vmatprep.subr.bf16.mxu0 %v4737
    %4876 = vmatpush1.bf16.msra.mxu0 %v4736
    %4877 = vmatprep.subr.bf16.mxu0 %v4735
    %4878 = vmatpush1.bf16.msra.mxu0 %v4734
    %4879 = vmatprep.subr.bf16.mxu0 %v4733
    %4880 = vmatpush1.bf16.msra.mxu0 %v4732
    %4881 = vmatprep.subr.bf16.mxu0 %v4731
    %4882 = vmatpush1.bf16.msra.mxu0 %v4730
    %4883 = vmatprep.subr.bf16.mxu0 %v4761
    %4884 = vmatpush2.bf16.msra.mxu0 %v4760
    %4885 = vmatprep.subr.bf16.mxu0 %v4759
    %4886 = vmatpush2.bf16.msra.mxu0 %v4758
    %4887 = vmatprep.subr.bf16.mxu0 %v4757
    %4888 = vmatpush2.bf16.msra.mxu0 %v4756
    %4889 = vmatprep.subr.bf16.mxu0 %v4755
    %4890 = vmatpush2.bf16.msra.mxu0 %v4754
    %4891 = vmatprep.subr.bf16.mxu0 %v4753
    %4892 = vmatpush2.bf16.msra.mxu0 %v4752
    %4893 = vmatprep.subr.bf16.mxu0 %v4751
    %4894 = vmatpush2.bf16.msra.mxu0 %v4750
    %4895 = vmatprep.subr.bf16.mxu0 %v4749
    %4896 = vmatpush2.bf16.msra.mxu0 %v4748
    %4897 = vmatprep.subr.bf16.mxu0 %v4747
    %4898 = vmatpush2.bf16.msra.mxu0 %v4746
    %4899 = vmatprep.mubr.bf16.mxu0 %v4429
    %4900 = vmatmul.mubr.bf16.gmra.mxu0 %v4428
    %v4901 = vpop.f32.mrf.mxu0
    %v4902 = vadd.f32 %v4861, %v4901
    %v4903 = vpop.f32.mrf.mxu0
    %v4904 = vadd.f32 %v4863, %v4903
    %v4905 = vpop.f32.mrf.mxu0
    %v4906 = vpop.f32.mrf.mxu0
    %4907 = vdwg.mxu0
    %v4908 = vmax.f32 %v4902, 0.0
    %v4909 = vmax.f32 %v4904, 0.0
    %v4910 = vpack.c.bf16 %v4908, %v4908
    %v4911 = vpack.c.bf16 %v4909, %v4909
    %v4912 = vld [vmem:[#allocation14] sm:$0xf]
    %v4913 = vld [vmem:[#allocation14 + $0x4] sm:$0xf]
    %v4914 = vld [vmem:[#allocation14 + $0x8] sm:$0xf]
    %v4915 = vld [vmem:[#allocation14 + $0xc] sm:$0xf]
    %v4916 = vld [vmem:[#allocation14 + $0x10] sm:$0xf]
    %v4917 = vld [vmem:[#allocation14 + $0x14] sm:$0xf]
    %v4918 = vld [vmem:[#allocation14 + $0x18] sm:$0xf]
    %v4919 = vld [vmem:[#allocation14 + $0x1c] sm:$0xf]
    %v4920 = vld [vmem:[#allocation14 + $0x20] sm:$0xf]
    %v4921 = vld [vmem:[#allocation14 + $0x24] sm:$0xf]
    %v4922 = vld [vmem:[#allocation14 + $0x28] sm:$0xf]
    %v4923 = vld [vmem:[#allocation14 + $0x2c] sm:$0xf]
    %v4924 = vld [vmem:[#allocation14 + $0x30] sm:$0xf]
    %v4925 = vld [vmem:[#allocation14 + $0x34] sm:$0xf]
    %v4926 = vld [vmem:[#allocation14 + $0x38] sm:$0xf]
    %v4927 = vld [vmem:[#allocation14 + $0x3c] sm:$0xf]
    %v4928 = vld [vmem:[#allocation14 + $0x40] sm:$0xf]
    %v4929 = vld [vmem:[#allocation14 + $0x44] sm:$0xf]
    %v4930 = vld [vmem:[#allocation14 + $0x48] sm:$0xf]
    %v4931 = vld [vmem:[#allocation14 + $0x4c] sm:$0xf]
    %v4932 = vld [vmem:[#allocation14 + $0x50] sm:$0xf]
    %v4933 = vld [vmem:[#allocation14 + $0x54] sm:$0xf]
    %v4934 = vld [vmem:[#allocation14 + $0x58] sm:$0xf]
    %v4935 = vld [vmem:[#allocation14 + $0x5c] sm:$0xf]
    %v4936 = vld [vmem:[#allocation14 + $0x60] sm:$0xf]
    %v4937 = vld [vmem:[#allocation14 + $0x64] sm:$0xf]
    %v4938 = vld [vmem:[#allocation14 + $0x68] sm:$0xf]
    %v4939 = vld [vmem:[#allocation14 + $0x6c] sm:$0xf]
    %v4940 = vld [vmem:[#allocation14 + $0x70] sm:$0xf]
    %v4941 = vld [vmem:[#allocation14 + $0x74] sm:$0xf]
    %v4942 = vld [vmem:[#allocation14 + $0x78] sm:$0xf]
    %v4943 = vld [vmem:[#allocation14 + $0x7c] sm:$0xf]
    %v4944 = vld [vmem:[#allocation16] sm:$0x1]
    %v4946 = vlaneseq
    %v4947 = vshrl.u32 %v4946, 7
    %v4948 = vsub.s32 0, %v4947
    %v4949 = vrot.slane %v4944, %v4948
    %v4983 = vunpack.c.l.b16 %v4912
    %v4984 = vunpack.c.l.b16 %v4913
    %v4985 = vunpack.c.l.b16 %v4914
    %v4986 = vunpack.c.l.b16 %v4915
    %v4987 = vunpack.c.l.b16 %v4916
    %v4988 = vunpack.c.l.b16 %v4917
    %v4989 = vunpack.c.l.b16 %v4918
    %v4990 = vunpack.c.l.b16 %v4919
    %v4991 = vunpack.c.l.b16 %v4920
    %v4992 = vunpack.c.l.b16 %v4921
    %v4993 = vunpack.c.l.b16 %v4922
    %v4994 = vunpack.c.l.b16 %v4923
    %v4995 = vunpack.c.l.b16 %v4924
    %v4996 = vunpack.c.l.b16 %v4925
    %v4997 = vunpack.c.l.b16 %v4926
    %v4998 = vunpack.c.l.b16 %v4927
    %v4999 = vunpack.c.l.b16 %v4928
    %v5000 = vunpack.c.l.b16 %v4929
    %v5001 = vunpack.c.l.b16 %v4930
    %v5002 = vunpack.c.l.b16 %v4931
    %v5003 = vunpack.c.l.b16 %v4932
    %v5004 = vunpack.c.l.b16 %v4933
    %v5005 = vunpack.c.l.b16 %v4934
    %v5006 = vunpack.c.l.b16 %v4935
    %v5007 = vunpack.c.l.b16 %v4936
    %v5008 = vunpack.c.l.b16 %v4937
    %v5009 = vunpack.c.l.b16 %v4938
    %v5010 = vunpack.c.l.b16 %v4939
    %v5011 = vunpack.c.l.b16 %v4940
    %v5012 = vunpack.c.l.b16 %v4941
    %v5013 = vunpack.c.l.b16 %v4942
    %v5014 = vunpack.c.l.b16 %v4943
    %v5015 = vpack.c.b16 %v4984, %v4983
    %v5016 = vpack.c.b16 %v4986, %v4985
    %v5017 = vpack.c.b16 %v4988, %v4987
    %v5018 = vpack.c.b16 %v4990, %v4989
    %v5019 = vpack.c.b16 %v4992, %v4991
    %v5020 = vpack.c.b16 %v4994, %v4993
    %v5021 = vpack.c.b16 %v4996, %v4995
    %v5022 = vpack.c.b16 %v4998, %v4997
    %v5023 = vpack.c.b16 %v5000, %v4999
    %v5024 = vpack.c.b16 %v5002, %v5001
    %v5025 = vpack.c.b16 %v5004, %v5003
    %v5026 = vpack.c.b16 %v5006, %v5005
    %v5027 = vpack.c.b16 %v5008, %v5007
    %v5028 = vpack.c.b16 %v5010, %v5009
    %v5029 = vpack.c.b16 %v5012, %v5011
    %v5030 = vpack.c.b16 %v5014, %v5013
    %5047 = vmatprep.subr.bf16.mxu0 0
    %5048 = vmatpush1.bf16.msra.mxu0 %v5022
    %5049 = vmatprep.subr.bf16.mxu0 0
    %5050 = vmatpush1.bf16.msra.mxu0 %v5021
    %5051 = vmatprep.subr.bf16.mxu0 0
    %5052 = vmatpush1.bf16.msra.mxu0 %v5020
    %5053 = vmatprep.subr.bf16.mxu0 0
    %5054 = vmatpush1.bf16.msra.mxu0 %v5019
    %5055 = vmatprep.subr.bf16.mxu0 0
    %5056 = vmatpush1.bf16.msra.mxu0 %v5018
    %5057 = vmatprep.subr.bf16.mxu0 0
    %5058 = vmatpush1.bf16.msra.mxu0 %v5017
    %5059 = vmatprep.subr.bf16.mxu0 0
    %5060 = vmatpush1.bf16.msra.mxu0 %v5016
    %5061 = vmatprep.subr.bf16.mxu0 0
    %5062 = vmatpush1.bf16.msra.mxu0 %v5015
    %5063 = vmatprep.subr.bf16.mxu0 0
    %5064 = vmatpush2.bf16.msra.mxu0 %v5030
    %5065 = vmatprep.subr.bf16.mxu0 0
    %5066 = vmatpush2.bf16.msra.mxu0 %v5029
    %5067 = vmatprep.subr.bf16.mxu0 0
    %5068 = vmatpush2.bf16.msra.mxu0 %v5028
    %5069 = vmatprep.subr.bf16.mxu0 0
    %5070 = vmatpush2.bf16.msra.mxu0 %v5027
    %5071 = vmatprep.subr.bf16.mxu0 0
    %5072 = vmatpush2.bf16.msra.mxu0 %v5026
    %5073 = vmatprep.subr.bf16.mxu0 0
    %5074 = vmatpush2.bf16.msra.mxu0 %v5025
    %5075 = vmatprep.subr.bf16.mxu0 0
    %5076 = vmatpush2.bf16.msra.mxu0 %v5024
    %5077 = vmatprep.subr.bf16.mxu0 0
    %5078 = vmatpush2.bf16.msra.mxu0 %v5023
    %5079 = vmatprep.mubr.bf16.mxu0 %v4911
    %5080 = vmatmul.mubr.bf16.gmra.mxu0 %v4910
    %v5081 = vpop.f32.mrf.mxu0
    %v5082 = vadd.f32 %v4949, %v5081
    %v5083 = vpop.f32.mrf.mxu0
    %v5084 = vpop.f32.mrf.mxu0
    %v5085 = vpop.f32.mrf.mxu0
    %5086 = vdwg.mxu0
    %5087 = vst [vmem:[#allocation17] sm:$0xff] %v5082
    // Predicated region
    $region74: #{tpu_custom_call.1} parent=1 // pred_check
      _
    $region75: #{tpu_custom_call.1} parent=1 // pred_check_branch
      %5089 = sbr.rel (0) target = $region77
    $region76: #{tpu_custom_call.1} parent=1 // pred_region
      %s5091 = ssub.s32 128, 128
      %5092 = vsyncadd [#allocation4], %s5091
      %s5094 = sshll.u32 [#allocation17], 4
      %s5095 = int_to_ptr.vmem [resolvable:$true] %s5094
      %5097 = dma.vmem_to_hbm [thread:$0]  %s5095, 128, %s9, [#allocation4]
    $region77: #{tpu_custom_call.1} parent=1 // pred_fallthru
      _
    // Predicated region
    $region78: #{tpu_custom_call.1} parent=1 // pred_check
      _
    $region79: #{tpu_custom_call.1} parent=1 // pred_check_branch
      %5099 = sbr.rel (0) target = $region81
    $region80: #{tpu_custom_call.1} parent=1 // pred_region
      %5100 = dma.done [#allocation4], 128
    $region81: #{tpu_custom_call.1} parent=1 // pred_fallthru
      _
    %5101 = vsyncpa [#allocation3], 1
    %5102 = vsyncpa [#allocation6], 1
    %5103 = vsyncpa [#allocation9], 1
    %5104 = vsyncpa [#allocation12], 1
    %5105 = vsyncpa [#allocation15], 1
    %5106 = vsyncpa [#allocation4], 1

// kernel: tpu_custom_call.1
$region0: #{tpu_custom_call.1}
  #allocation0 [shape = 'u32[]', space=smem, size = 0x4, offset = 0x4, fixed_abs, tag = 'smem constant byte address 0x4 - core index']
  #allocation1 [shape = 'u32[144,128]{1,0:T(1,128)}', space=vmem, size = 0x12000, scoped, tag = 'internal scratch']
  %s0 = inlined_call_operand.hbm [shape: f32[8,1024], index: 0, kind: input, shape index: {}]
  %s1 = inlined_call_operand.hbm [shape: bf16[1024,768], index: 1, kind: input, shape index: {}]
  %s2 = inlined_call_operand.hbm [shape: f32[1,768], index: 2, kind: input, shape index: {}]
  %s3 = inlined_call_operand.hbm [shape: bf16[768,512], index: 3, kind: input, shape index: {}]
  %s4 = inlined_call_operand.hbm [shape: f32[1,512], index: 4, kind: input, shape index: {}]
  %s5 = inlined_call_operand.hbm [shape: bf16[512,256], index: 5, kind: input, shape index: {}]
  %s6 = inlined_call_operand.hbm [shape: f32[1,256], index: 6, kind: input, shape index: {}]
  %s7 = inlined_call_operand.hbm [shape: bf16[256,128], index: 7, kind: input, shape index: {}]
  %s8 = inlined_call_operand.hbm [shape: f32[1,128], index: 8, kind: input, shape index: {}]
  %s9 = inlined_call_operand.hbm [shape: f32[8,128], index: 9, kind: output, shape index: {}]
  %s10 = sld [smem:[#allocation0]]
  $region82: #{tpu_custom_call.1} parent=0
    _
  %s12 = ssub.s32 1, %s10
  %s13 = scalar_select 0, %s12, %s10
  $region1: #{tpu_custom_call.1} parent=0
    #allocation2 [shape = 'u8[32768]{0}', space=vmem, size = 0x8000, scoped, tag = 'input window, operand 0, single buffered']
    #allocation3 [shape = 's32[1]{0}', space=sflag, size = 0x4, scoped, tag = 'scoped memory for tpu_custom_call.1']
    #allocation4 [shape = 's32[1]{0}', space=sflag, size = 0x4, scoped, tag = 'scoped memory for tpu_custom_call.1']
    #allocation5 [shape = 'u8[1572864]{0}', space=vmem, size = 0x180000, scoped, tag = 'input window, operand 1, single buffered']
    #allocation6 [shape = 's32[1]{0}', space=sflag, size = 0x4, scoped, tag = 'scoped memory for tpu_custom_call.1']
    #allocation7 [shape = 'u8[3072]{0}', space=vmem, size = 0xc00, scoped, tag = 'input window, operand 2, single buffered']
    #allocation8 [shape = 'u8[786432]{0}', space=vmem, size = 0xc0000, scoped, tag = 'input window, operand 3, single buffered']
    #allocation9 [shape = 's32[1]{0}', space=sflag, size = 0x4, scoped, tag = 'scoped memory for tpu_custom_call.1']
    #allocation10 [shape = 'u8[2048]{0}', space=vmem, size = 0x800, scoped, tag = 'input window, operand 4, single buffered']
    #allocation11 [shape = 'u8[262144]{0}', space=vmem, size = 0x40000, scoped, tag = 'input window, operand 5, single buffered']
    #allocation12 [shape = 's32[1]{0}', space=sflag, size = 0x4, scoped, tag = 'scoped memory for tpu_custom_call.1']
    #allocation13 [shape = 'u8[1024]{0}', space=vmem, size = 0x400, scoped, tag = 'input window, operand 6, single buffered']
    #allocation14 [shape = 'u8[65536]{0}', space=vmem, size = 0x10000, scoped, tag = 'input window, operand 7, single buffered']
    #allocation15 [shape = 's32[1]{0}', space=sflag, size = 0x4, scoped, tag = 'scoped memory for tpu_custom_call.1']
    #allocation16 [shape = 'u8[512]{0}', space=vmem, size = 0x400, scoped, tag = 'input window, operand 8, single buffered']
    #allocation17 [shape = 'u8[4096]{0}', space=vmem, size = 0x1000, scoped, tag = 'output window, operand 0, single buffered']
    %14 = vsyncpa [#allocation3], 0
    %15 = vsyncpa [#allocation6], 0
    %16 = vsyncpa [#allocation9], 0
    %17 = vsyncpa [#allocation12], 0
    %18 = vsyncpa [#allocation15], 0
    %19 = vsyncpa [#allocation4], 0
    // Predicated region
    $region2: #{tpu_custom_call.1} parent=1 // pred_check
      _
    $region3: #{tpu_custom_call.1} parent=1 // pred_check_branch
      %21 = sbr.rel (0) target = $region5
    $region4: #{tpu_custom_call.1} parent=1 // pred_region
      %s23 = ssub.s32 1024, 1024
      %24 = vsyncadd [#allocation3], %s23
      %s26 = sshll.u32 [#allocation2], 4
      %s27 = int_to_ptr.vmem [resolvable:$true] %s26
      %29 = dma.hbm_to_vmem [thread:$0]  %s0, 1024, %s27, [#allocation3]
    $region5: #{tpu_custom_call.1} parent=1 // pred_fallthru
      _
    // Predicated region
    $region6: #{tpu_custom_call.1} parent=1 // pred_check
      _
    $region7: #{tpu_custom_call.1} parent=1 // pred_check_branch
      %31 = sbr.rel (0) target = $region9
    $region8: #{tpu_custom_call.1} parent=1 // pred_region
      %s33 = ssub.s32 49152, 49152
      %34 = vsyncadd [#allocation6], %s33
      %s35 = sshll.u32 [#allocation5], 4
      %s36 = int_to_ptr.vmem [resolvable:$true] %s35
      %41 = dma.hbm_to_vmem [thread:$0]  %s1, 49152, %s36, [#allocation6], 384, 384, 24
    $region9: #{tpu_custom_call.1} parent=1 // pred_fallthru
      _
    // Predicated region
    $region10: #{tpu_custom_call.1} parent=1 // pred_check
      _
    $region11: #{tpu_custom_call.1} parent=1 // pred_check_branch
      %43 = sbr.rel (0) target = $region13
    $region12: #{tpu_custom_call.1} parent=1 // pred_region
      %s45 = ssub.s32 96, 96
      %46 = vsyncadd [#allocation6], %s45
      %s48 = sshll.u32 [#allocation7], 4
      %s49 = int_to_ptr.vmem [resolvable:$true] %s48
      %51 = dma.hbm_to_vmem [thread:$0]  %s2, 96, %s49, [#allocation6]
    $region13: #{tpu_custom_call.1} parent=1 // pred_fallthru
      _
    // Predicated region
    $region14: #{tpu_custom_call.1} parent=1 // pred_check
      _
    $region15: #{tpu_custom_call.1} parent=1 // pred_check_branch
      %53 = sbr.rel (0) target = $region17
    $region16: #{tpu_custom_call.1} parent=1 // pred_region
      %s55 = ssub.s32 24576, 24576
      %56 = vsyncadd [#allocation9], %s55
      %s57 = sshll.u32 [#allocation8], 4
      %s58 = int_to_ptr.vmem [resolvable:$true] %s57
      %63 = dma.hbm_to_vmem [thread:$0]  %s3, 24576, %s58, [#allocation9], 256, 256, 16
    $region17: #{tpu_custom_call.1} parent=1 // pred_fallthru
      _
    // Predicated region
    $region18: #{tpu_custom_call.1} parent=1 // pred_check
      _
    $region19: #{tpu_custom_call.1} parent=1 // pred_check_branch
      %65 = sbr.rel (0) target = $region21
    $region20: #{tpu_custom_call.1} parent=1 // pred_region
      %s67 = ssub.s32 64, 64
      %68 = vsyncadd [#allocation9], %s67
      %s70 = sshll.u32 [#allocation10], 4
      %s71 = int_to_ptr.vmem [resolvable:$true] %s70
      %73 = dma.hbm_to_vmem [thread:$0]  %s4, 64, %s71, [#allocation9]
    $region21: #{tpu_custom_call.1} parent=1 // pred_fallthru
      _
    // Predicated region
    $region22: #{tpu_custom_call.1} parent=1 // pred_check
      _
    $region23: #{tpu_custom_call.1} parent=1 // pred_check_branch
      %75 = sbr.rel (0) target = $region25
    $region24: #{tpu_custom_call.1} parent=1 // pred_region
      %s77 = ssub.s32 8192, 8192
      %78 = vsyncadd [#allocation12], %s77
      %s79 = sshll.u32 [#allocation11], 4
      %s80 = int_to_ptr.vmem [resolvable:$true] %s79
      %85 = dma.hbm_to_vmem [thread:$0]  %s5, 8192, %s80, [#allocation12], 128, 128, 8
    $region25: #{tpu_custom_call.1} parent=1 // pred_fallthru
      _
    // Predicated region
    $region26: #{tpu_custom_call.1} parent=1 // pred_check
      _
    $region27: #{tpu_custom_call.1} parent=1 // pred_check_branch
      %87 = sbr.rel (0) target = $region29
    $region28: #{tpu_custom_call.1} parent=1 // pred_region
      %s89 = ssub.s32 32, 32
      %90 = vsyncadd [#allocation12], %s89
      %s92 = sshll.u32 [#allocation13], 4
      %s93 = int_to_ptr.vmem [resolvable:$true] %s92
      %95 = dma.hbm_to_vmem [thread:$0]  %s6, 32, %s93, [#allocation12]
    $region29: #{tpu_custom_call.1} parent=1 // pred_fallthru
      _
    // Predicated region
    $region30: #{tpu_custom_call.1} parent=1 // pred_check
      _
    $region31: #{tpu_custom_call.1} parent=1 // pred_check_branch
      %97 = sbr.rel (0) target = $region33
    $region32: #{tpu_custom_call.1} parent=1 // pred_region
      %s99 = ssub.s32 2048, 2048
      %100 = vsyncadd [#allocation15], %s99
      %s101 = sshll.u32 [#allocation14], 4
      %s102 = int_to_ptr.vmem [resolvable:$true] %s101
      %107 = dma.hbm_to_vmem [thread:$0]  %s7, 2048, %s102, [#allocation15], 64, 64, 4
    $region33: #{tpu_custom_call.1} parent=1 // pred_fallthru
      _
    // Predicated region
    $region34: #{tpu_custom_call.1} parent=1 // pred_check
      _
    $region35: #{tpu_custom_call.1} parent=1 // pred_check_branch
      %109 = sbr.rel (0) target = $region37
    $region36: #{tpu_custom_call.1} parent=1 // pred_region
      %s111 = ssub.s32 16, 16
      %112 = vsyncadd [#allocation15], %s111
      %s114 = sshll.u32 [#allocation16], 4
      %s115 = int_to_ptr.vmem [resolvable:$true] %s114
      %117 = dma.hbm_to_vmem [thread:$0]  %s8, 16, %s115, [#allocation15]
    $region37: #{tpu_custom_call.1} parent=1 // pred_fallthru
      _
    // Predicated region
    $region38: #{tpu_custom_call.1} parent=1 // pred_check
      _
    $region39: #{tpu_custom_call.1} parent=1 // pred_check_branch
      %119 = sbr.rel (0) target = $region41
    $region40: #{tpu_custom_call.1} parent=1 // pred_region
      %120 = dma.done [#allocation3], 1024
    $region41: #{tpu_custom_call.1} parent=1 // pred_fallthru
      _
    // Predicated region
    $region42: #{tpu_custom_call.1} parent=1 // pred_check
      _
    $region43: #{tpu_custom_call.1} parent=1 // pred_check_branch
      %122 = sbr.rel (0) target = $region45
    $region44: #{tpu_custom_call.1} parent=1 // pred_region
      %123 = dma.done [#allocation6], 49152
    $region45: #{tpu_custom_call.1} parent=1 // pred_fallthru
      _
    // Predicated region
    $region46: #{tpu_custom_call.1} parent=1 // pred_check
      _
    $region47: #{tpu_custom_call.1} parent=1 // pred_check_branch
      %125 = sbr.rel (0) target = $region49
    $region48: #{tpu_custom_call.1} parent=1 // pred_region
      %126 = dma.done [#allocation6], 96
    $region49: #{tpu_custom_call.1} parent=1 // pred_fallthru
      _
    // Predicated region
    $region50: #{tpu_custom_call.1} parent=1 // pred_check
      _
    $region51: #{tpu_custom_call.1} parent=1 // pred_check_branch
      %128 = sbr.rel (0) target = $region53
    $region52: #{tpu_custom_call.1} parent=1 // pred_region
      %129 = dma.done [#allocation9], 24576
    $region53: #{tpu_custom_call.1} parent=1 // pred_fallthru
      _
    // Predicated region
    $region54: #{tpu_custom_call.1} parent=1 // pred_check
      _
    $region55: #{tpu_custom_call.1} parent=1 // pred_check_branch
      %131 = sbr.rel (0) target = $region57
    $region56: #{tpu_custom_call.1} parent=1 // pred_region
      %132 = dma.done [#allocation9], 64
    $region57: #{tpu_custom_call.1} parent=1 // pred_fallthru
      _
    // Predicated region
    $region58: #{tpu_custom_call.1} parent=1 // pred_check
      _
    $region59: #{tpu_custom_call.1} parent=1 // pred_check_branch
      %134 = sbr.rel (0) target = $region61
    $region60: #{tpu_custom_call.1} parent=1 // pred_region
      %135 = dma.done [#allocation12], 8192
    $region61: #{tpu_custom_call.1} parent=1 // pred_fallthru
      _
    // Predicated region
    $region62: #{tpu_custom_call.1} parent=1 // pred_check
      _
    $region63: #{tpu_custom_call.1} parent=1 // pred_check_branch
      %137 = sbr.rel (0) target = $region65
    $region64: #{tpu_custom_call.1} parent=1 // pred_region
      %138 = dma.done [#allocation12], 32
    $region65: #{tpu_custom_call.1} parent=1 // pred_fallthru
      _
    // Predicated region
    $region66: #{tpu_custom_call.1} parent=1 // pred_check
      _
    $region67: #{tpu_custom_call.1} parent=1 // pred_check_branch
      %140 = sbr.rel (0) target = $region69
    $region68: #{tpu_custom_call.1} parent=1 // pred_region
      %141 = dma.done [#allocation15], 2048
    $region69: #{tpu_custom_call.1} parent=1 // pred_fallthru
      _
    // Predicated region
    $region70: #{tpu_custom_call.1} parent=1 // pred_check
      _
    $region71: #{tpu_custom_call.1} parent=1 // pred_check_branch
      %143 = sbr.rel (0) target = $region73
    $region72: #{tpu_custom_call.1} parent=1 // pred_region
      %144 = dma.done [#allocation15], 16
    $region73: #{tpu_custom_call.1} parent=1 // pred_fallthru
      _
    %v146 = vld [vmem:[#allocation2] sm:$0xff]
    %v147 = vld [vmem:[#allocation2 + $0x8] sm:$0xff]
    %v148 = vld [vmem:[#allocation2 + $0x10] sm:$0xff]
    %v149 = vld [vmem:[#allocation2 + $0x18] sm:$0xff]
    %v150 = vld [vmem:[#allocation2 + $0x20] sm:$0xff]
    %v151 = vld [vmem:[#allocation2 + $0x28] sm:$0xff]
    %v152 = vld [vmem:[#allocation2 + $0x30] sm:$0xff]
    %v153 = vld [vmem:[#allocation2 + $0x38] sm:$0xff]
    %v154 = vpack.c.bf16 %v146, %v146
    %v155 = vpack.c.bf16 %v147, %v147
    %v156 = vpack.c.bf16 %v148, %v148
    %v157 = vpack.c.bf16 %v149, %v149
    %v158 = vpack.c.bf16 %v150, %v150
    %v159 = vpack.c.bf16 %v151, %v151
    %v160 = vpack.c.bf16 %v152, %v152
    %v161 = vpack.c.bf16 %v153, %v153
    %v162 = vld [vmem:[#allocation5] sm:$0xff]
    %v163 = vld [vmem:[#allocation5 + $0x8] sm:$0xff]
    %v164 = vld [vmem:[#allocation5 + $0x10] sm:$0xff]
    %v165 = vld [vmem:[#allocation5 + $0x18] sm:$0xff]
    %v166 = vld [vmem:[#allocation5 + $0x20] sm:$0xff]
    %v167 = vld [vmem:[#allocation5 + $0x28] sm:$0xff]
    %v168 = vld [vmem:[#allocation5 + $0x30] sm:$0xff]
    %v169 = vld [vmem:[#allocation5 + $0x38] sm:$0xff]
    %v170 = vld [vmem:[#allocation5 + $0x40] sm:$0xff]
    %v171 = vld [vmem:[#allocation5 + $0x48] sm:$0xff]
    %v172 = vld [vmem:[#allocation5 + $0x50] sm:$0xff]
    %v173 = vld [vmem:[#allocation5 + $0x58] sm:$0xff]
    %v174 = vld [vmem:[#allocation5 + $0x60] sm:$0xff]
    %v175 = vld [vmem:[#allocation5 + $0x68] sm:$0xff]
    %v176 = vld [vmem:[#allocation5 + $0x70] sm:$0xff]
    %v177 = vld [vmem:[#allocation5 + $0x78] sm:$0xff]
    %v178 = vld [vmem:[#allocation5 + $0x80] sm:$0xff]
    %v179 = vld [vmem:[#allocation5 + $0x88] sm:$0xff]
    %v180 = vld [vmem:[#allocation5 + $0x90] sm:$0xff]
    %v181 = vld [vmem:[#allocation5 + $0x98] sm:$0xff]
    %v182 = vld [vmem:[#allocation5 + $0xa0] sm:$0xff]
    %v183 = vld [vmem:[#allocation5 + $0xa8] sm:$0xff]
    %v184 = vld [vmem:[#allocation5 + $0xb0] sm:$0xff]
    %v185 = vld [vmem:[#allocation5 + $0xb8] sm:$0xff]
    %v186 = vld [vmem:[#allocation5 + $0xc0] sm:$0xff]
    %v187 = vld [vmem:[#allocation5 + $0xc8] sm:$0xff]
    %v188 = vld [vmem:[#allocation5 + $0xd0] sm:$0xff]
    %v189 = vld [vmem:[#allocation5 + $0xd8] sm:$0xff]
    %v190 = vld [vmem:[#allocation5 + $0xe0] sm:$0xff]
    %v191 = vld [vmem:[#allocation5 + $0xe8] sm:$0xff]
    %v192 = vld [vmem:[#allocation5 + $0xf0] sm:$0xff]
    %v193 = vld [vmem:[#allocation5 + $0xf8] sm:$0xff]
    %v194 = vld [vmem:[#allocation5 + $0x100] sm:$0xff]
    %v195 = vld [vmem:[#allocation5 + $0x108] sm:$0xff]
    %v196 = vld [vmem:[#allocation5 + $0x110] sm:$0xff]
    %v197 = vld [vmem:[#allocation5 + $0x118] sm:$0xff]
    %v198 = vld [vmem:[#allocation5 + $0x120] sm:$0xff]
    %v199 = vld [vmem:[#allocation5 + $0x128] sm:$0xff]
    %v200 = vld [vmem:[#allocation5 + $0x130] sm:$0xff]
    %v201 = vld [vmem:[#allocation5 + $0x138] sm:$0xff]
    %v202 = vld [vmem:[#allocation5 + $0x140] sm:$0xff]
    %v203 = vld [vmem:[#allocation5 + $0x148] sm:$0xff]
    %v204 = vld [vmem:[#allocation5 + $0x150] sm:$0xff]
    %v205 = vld [vmem:[#allocation5 + $0x158] sm:$0xff]
    %v206 = vld [vmem:[#allocation5 + $0x160] sm:$0xff]
    %v207 = vld [vmem:[#allocation5 + $0x168] sm:$0xff]
    %v208 = vld [vmem:[#allocation5 + $0x170] sm:$0xff]
    %v209 = vld [vmem:[#allocation5 + $0x178] sm:$0xff]
    %v210 = vld [vmem:[#allocation5 + $0x180] sm:$0xff]
    %v211 = vld [vmem:[#allocation5 + $0x188] sm:$0xff]
    %v212 = vld [vmem:[#allocation5 + $0x190] sm:$0xff]
    %v213 = vld [vmem:[#allocation5 + $0x198] sm:$0xff]
    %v214 = vld [vmem:[#allocation5 + $0x1a0] sm:$0xff]
    %v215 = vld [vmem:[#allocation5 + $0x1a8] sm:$0xff]
    %v216 = vld [vmem:[#allocation5 + $0x1b0] sm:$0xff]
    %v217 = vld [vmem:[#allocation5 + $0x1b8] sm:$0xff]
    %v218 = vld [vmem:[#allocation5 + $0x1c0] sm:$0xff]
    %v219 = vld [vmem:[#allocation5 + $0x1c8] sm:$0xff]
    %v220 = vld [vmem:[#allocation5 + $0x1d0] sm:$0xff]
    %v221 = vld [vmem:[#allocation5 + $0x1d8] sm:$0xff]
    %v222 = vld [vmem:[#allocation5 + $0x1e0] sm:$0xff]
    %v223 = vld [vmem:[#allocation5 + $0x1e8] sm:$0xff]
    %v224 = vld [vmem:[#allocation5 + $0x1f0] sm:$0xff]
    %v225 = vld [vmem:[#allocation5 + $0x1f8] sm:$0xff]
    %v226 = vld [vmem:[#allocation5 + $0x200] sm:$0xff]
    %v227 = vld [vmem:[#allocation5 + $0x208] sm:$0xff]
    %v228 = vld [vmem:[#allocation5 + $0x210] sm:$0xff]
    %v229 = vld [vmem:[#allocation5 + $0x218] sm:$0xff]
    %v230 = vld [vmem:[#allocation5 + $0x220] sm:$0xff]
    %v231 = vld [vmem:[#allocation5 + $0x228] sm:$0xff]
    %v232 = vld [vmem:[#allocation5 + $0x230] sm:$0xff]
    %v233 = vld [vmem:[#allocation5 + $0x238] sm:$0xff]
    %v234 = vld [vmem:[#allocation5 + $0x240] sm:$0xff]
    %v235 = vld [vmem:[#allocation5 + $0x248] sm:$0xff]
    %v236 = vld [vmem:[#allocation5 + $0x250] sm:$0xff]
    %v237 = vld [vmem:[#allocation5 + $0x258] sm:$0xff]
    %v238 = vld [vmem:[#allocation5 + $0x260] sm:$0xff]
    %v239 = vld [vmem:[#allocation5 + $0x268] sm:$0xff]
    %v240 = vld [vmem:[#allocation5 + $0x270] sm:$0xff]
    %v241 = vld [vmem:[#allocation5 + $0x278] sm:$0xff]
    %v242 = vld [vmem:[#allocation5 + $0x280] sm:$0xff]
    %v243 = vld [vmem:[#allocation5 + $0x288] sm:$0xff]
    %v244 = vld [vmem:[#allocation5 + $0x290] sm:$0xff]
    %v245 = vld [vmem:[#allocation5 + $0x298] sm:$0xff]
    %v246 = vld [vmem:[#allocation5 + $0x2a0] sm:$0xff]
    %v247 = vld [vmem:[#allocation5 + $0x2a8] sm:$0xff]
    %v248 = vld [vmem:[#allocation5 + $0x2b0] sm:$0xff]
    %v249 = vld [vmem:[#allocation5 + $0x2b8] sm:$0xff]
    %v250 = vld [vmem:[#allocation5 + $0x2c0] sm:$0xff]
    %v251 = vld [vmem:[#allocation5 + $0x2c8] sm:$0xff]
    %v252 = vld [vmem:[#allocation5 + $0x2d0] sm:$0xff]
    %v253 = vld [vmem:[#allocation5 + $0x2d8] sm:$0xff]
    %v254 = vld [vmem:[#allocation5 + $0x2e0] sm:$0xff]
    %v255 = vld [vmem:[#allocation5 + $0x2e8] sm:$0xff]
    %v256 = vld [vmem:[#allocation5 + $0x2f0] sm:$0xff]
    %v257 = vld [vmem:[#allocation5 + $0x2f8] sm:$0xff]
    %v258 = vld [vmem:[#allocation5 + $0x300] sm:$0xff]
    %v259 = vld [vmem:[#allocation5 + $0x308] sm:$0xff]
    %v260 = vld [vmem:[#allocation5 + $0x310] sm:$0xff]
    %v261 = vld [vmem:[#allocation5 + $0x318] sm:$0xff]
    %v262 = vld [vmem:[#allocation5 + $0x320] sm:$0xff]
    %v263 = vld [vmem:[#allocation5 + $0x328] sm:$0xff]
    %v264 = vld [vmem:[#allocation5 + $0x330] sm:$0xff]
    %v265 = vld [vmem:[#allocation5 + $0x338] sm:$0xff]
    %v266 = vld [vmem:[#allocation5 + $0x340] sm:$0xff]
    %v267 = vld [vmem:[#allocation5 + $0x348] sm:$0xff]
    %v268 = vld [vmem:[#allocation5 + $0x350] sm:$0xff]
    %v269 = vld [vmem:[#allocation5 + $0x358] sm:$0xff]
    %v270 = vld [vmem:[#allocation5 + $0x360] sm:$0xff]
    %v271 = vld [vmem:[#allocation5 + $0x368] sm:$0xff]
    %v272 = vld [vmem:[#allocation5 + $0x370] sm:$0xff]
    %v273 = vld [vmem:[#allocation5 + $0x378] sm:$0xff]
    %v274 = vld [vmem:[#allocation5 + $0x380] sm:$0xff]
    %v275 = vld [vmem:[#allocation5 + $0x388] sm:$0xff]
    %v276 = vld [vmem:[#allocation5 + $0x390] sm:$0xff]
    %v277 = vld [vmem:[#allocation5 + $0x398] sm:$0xff]
    %v278 = vld [vmem:[#allocation5 + $0x3a0] sm:$0xff]
    %v279 = vld [vmem:[#allocation5 + $0x3a8] sm:$0xff]
    %v280 = vld [vmem:[#allocation5 + $0x3b0] sm:$0xff]
    %v281 = vld [vmem:[#allocation5 + $0x3b8] sm:$0xff]
    %v282 = vld [vmem:[#allocation5 + $0x3c0] sm:$0xff]
    %v283 = vld [vmem:[#allocation5 + $0x3c8] sm:$0xff]
    %v284 = vld [vmem:[#allocation5 + $0x3d0] sm:$0xff]
    %v285 = vld [vmem:[#allocation5 + $0x3d8] sm:$0xff]
    %v286 = vld [vmem:[#allocation5 + $0x3e0] sm:$0xff]
    %v287 = vld [vmem:[#allocation5 + $0x3e8] sm:$0xff]
    %v288 = vld [vmem:[#allocation5 + $0x3f0] sm:$0xff]
    %v289 = vld [vmem:[#allocation5 + $0x3f8] sm:$0xff]
    %v290 = vld [vmem:[#allocation5 + $0x400] sm:$0xff]
    %v291 = vld [vmem:[#allocation5 + $0x408] sm:$0xff]
    %v292 = vld [vmem:[#allocation5 + $0x410] sm:$0xff]
    %v293 = vld [vmem:[#allocation5 + $0x418] sm:$0xff]
    %v294 = vld [vmem:[#allocation5 + $0x420] sm:$0xff]
    %v295 = vld [vmem:[#allocation5 + $0x428] sm:$0xff]
    %v296 = vld [vmem:[#allocation5 + $0x430] sm:$0xff]
    %v297 = vld [vmem:[#allocation5 + $0x438] sm:$0xff]
    %v298 = vld [vmem:[#allocation5 + $0x440] sm:$0xff]
    %v299 = vld [vmem:[#allocation5 + $0x448] sm:$0xff]
    %v300 = vld [vmem:[#allocation5 + $0x450] sm:$0xff]
    %v301 = vld [vmem:[#allocation5 + $0x458] sm:$0xff]
    %v302 = vld [vmem:[#allocation5 + $0x460] sm:$0xff]
    %v303 = vld [vmem:[#allocation5 + $0x468] sm:$0xff]
    %v304 = vld [vmem:[#allocation5 + $0x470] sm:$0xff]
    %v305 = vld [vmem:[#allocation5 + $0x478] sm:$0xff]
    %v306 = vld [vmem:[#allocation5 + $0x480] sm:$0xff]
    %v307 = vld [vmem:[#allocation5 + $0x488] sm:$0xff]
    %v308 = vld [vmem:[#allocation5 + $0x490] sm:$0xff]
    %v309 = vld [vmem:[#allocation5 + $0x498] sm:$0xff]
    %v310 = vld [vmem:[#allocation5 + $0x4a0] sm:$0xff]
    %v311 = vld [vmem:[#allocation5 + $0x4a8] sm:$0xff]
    %v312 = vld [vmem:[#allocation5 + $0x4b0] sm:$0xff]
    %v313 = vld [vmem:[#allocation5 + $0x4b8] sm:$0xff]
    %v314 = vld [vmem:[#allocation5 + $0x4c0] sm:$0xff]
    %v315 = vld [vmem:[#allocation5 + $0x4c8] sm:$0xff]
    %v316 = vld [vmem:[#allocation5 + $0x4d0] sm:$0xff]
    %v317 = vld [vmem:[#allocation5 + $0x4d8] sm:$0xff]
    %v318 = vld [vmem:[#allocation5 + $0x4e0] sm:$0xff]
    %v319 = vld [vmem:[#allocation5 + $0x4e8] sm:$0xff]
    %v320 = vld [vmem:[#allocation5 + $0x4f0] sm:$0xff]
    %v321 = vld [vmem:[#allocation5 + $0x4f8] sm:$0xff]
    %v322 = vld [vmem:[#allocation5 + $0x500] sm:$0xff]
    %v323 = vld [vmem:[#allocation5 + $0x508] sm:$0xff]
    %v324 = vld [vmem:[#allocation5 + $0x510] sm:$0xff]
    %v325 = vld [vmem:[#allocation5 + $0x518] sm:$0xff]
    %v326 = vld [vmem:[#allocation5 + $0x520] sm:$0xff]
    %v327 = vld [vmem:[#allocation5 + $0x528] sm:$0xff]
    %v328 = vld [vmem:[#allocation5 + $0x530] sm:$0xff]
    %v329 = vld [vmem:[#allocation5 + $0x538] sm:$0xff]
    %v330 = vld [vmem:[#allocation5 + $0x540] sm:$0xff]
    %v331 = vld [vmem:[#allocation5 + $0x548] sm:$0xff]
    %v332 = vld [vmem:[#allocation5 + $0x550] sm:$0xff]
    %v333 = vld [vmem:[#allocation5 + $0x558] sm:$0xff]
    %v334 = vld [vmem:[#allocation5 + $0x560] sm:$0xff]
    %v335 = vld [vmem:[#allocation5 + $0x568] sm:$0xff]
    %v336 = vld [vmem:[#allocation5 + $0x570] sm:$0xff]
    %v337 = vld [vmem:[#allocation5 + $0x578] sm:$0xff]
    %v338 = vld [vmem:[#allocation5 + $0x580] sm:$0xff]
    %v339 = vld [vmem:[#allocation5 + $0x588] sm:$0xff]
    %v340 = vld [vmem:[#allocation5 + $0x590] sm:$0xff]
    %v341 = vld [vmem:[#allocation5 + $0x598] sm:$0xff]
    %v342 = vld [vmem:[#allocation5 + $0x5a0] sm:$0xff]
    %v343 = vld [vmem:[#allocation5 + $0x5a8] sm:$0xff]
    %v344 = vld [vmem:[#allocation5 + $0x5b0] sm:$0xff]
    %v345 = vld [vmem:[#allocation5 + $0x5b8] sm:$0xff]
    %v346 = vld [vmem:[#allocation5 + $0x5c0] sm:$0xff]
    %v347 = vld [vmem:[#allocation5 + $0x5c8] sm:$0xff]
    %v348 = vld [vmem:[#allocation5 + $0x5d0] sm:$0xff]
    %v349 = vld [vmem:[#allocation5 + $0x5d8] sm:$0xff]
    %v350 = vld [vmem:[#allocation5 + $0x5e0] sm:$0xff]
    %v351 = vld [vmem:[#allocation5 + $0x5e8] sm:$0xff]
    %v352 = vld [vmem:[#allocation5 + $0x5f0] sm:$0xff]
    %v353 = vld [vmem:[#allocation5 + $0x5f8] sm:$0xff]
    %v354 = vld [vmem:[#allocation5 + $0x600] sm:$0xff]
    %v355 = vld [vmem:[#allocation5 + $0x608] sm:$0xff]
    %v356 = vld [vmem:[#allocation5 + $0x610] sm:$0xff]
    %v357 = vld [vmem:[#allocation5 + $0x618] sm:$0xff]
    %v358 = vld [vmem:[#allocation5 + $0x620] sm:$0xff]
    %v359 = vld [vmem:[#allocation5 + $0x628] sm:$0xff]
    %v360 = vld [vmem:[#allocation5 + $0x630] sm:$0xff]
    %v361 = vld [vmem:[#allocation5 + $0x638] sm:$0xff]
    %v362 = vld [vmem:[#allocation5 + $0x640] sm:$0xff]
    %v363 = vld [vmem:[#allocation5 + $0x648] sm:$0xff]
    %v364 = vld [vmem:[#allocation5 + $0x650] sm:$0xff]
    %v365 = vld [vmem:[#allocation5 + $0x658] sm:$0xff]
    %v366 = vld [vmem:[#allocation5 + $0x660] sm:$0xff]
    %v367 = vld [vmem:[#allocation5 + $0x668] sm:$0xff]
    %v368 = vld [vmem:[#allocation5 + $0x670] sm:$0xff]
    %v369 = vld [vmem:[#allocation5 + $0x678] sm:$0xff]
    %v370 = vld [vmem:[#allocation5 + $0x680] sm:$0xff]
    %v371 = vld [vmem:[#allocation5 + $0x688] sm:$0xff]
    %v372 = vld [vmem:[#allocation5 + $0x690] sm:$0xff]
    %v373 = vld [vmem:[#allocation5 + $0x698] sm:$0xff]
    %v374 = vld [vmem:[#allocation5 + $0x6a0] sm:$0xff]
    %v375 = vld [vmem:[#allocation5 + $0x6a8] sm:$0xff]
    %v376 = vld [vmem:[#allocation5 + $0x6b0] sm:$0xff]
    %v377 = vld [vmem:[#allocation5 + $0x6b8] sm:$0xff]
    %v378 = vld [vmem:[#allocation5 + $0x6c0] sm:$0xff]
    %v379 = vld [vmem:[#allocation5 + $0x6c8] sm:$0xff]
    %v380 = vld [vmem:[#allocation5 + $0x6d0] sm:$0xff]
    %v381 = vld [vmem:[#allocation5 + $0x6d8] sm:$0xff]
    %v382 = vld [vmem:[#allocation5 + $0x6e0] sm:$0xff]
    %v383 = vld [vmem:[#allocation5 + $0x6e8] sm:$0xff]
    %v384 = vld [vmem:[#allocation5 + $0x6f0] sm:$0xff]
    %v385 = vld [vmem:[#allocation5 + $0x6f8] sm:$0xff]
    %v386 = vld [vmem:[#allocation5 + $0x700] sm:$0xff]
    %v387 = vld [vmem:[#allocation5 + $0x708] sm:$0xff]
    %v388 = vld [vmem:[#allocation5 + $0x710] sm:$0xff]
    %v389 = vld [vmem:[#allocation5 + $0x718] sm:$0xff]
    %v390 = vld [vmem:[#allocation5 + $0x720] sm:$0xff]
    %v391 = vld [vmem:[#allocation5 + $0x728] sm:$0xff]
    %v392 = vld [vmem:[#allocation5 + $0x730] sm:$0xff]
    %v393 = vld [vmem:[#allocation5 + $0x738] sm:$0xff]
    %v394 = vld [vmem:[#allocation5 + $0x740] sm:$0xff]
    %v395 = vld [vmem:[#allocation5 + $0x748] sm:$0xff]
    %v396 = vld [vmem:[#allocation5 + $0x750] sm:$0xff]
    %v397 = vld [vmem:[#allocation5 + $0x758] sm:$0xff]
    %v398 = vld [vmem:[#allocation5 + $0x760] sm:$0xff]
    %v399 = vld [vmem:[#allocation5 + $0x768] sm:$0xff]
    %v400 = vld [vmem:[#allocation5 + $0x770] sm:$0xff]
    %v401 = vld [vmem:[#allocation5 + $0x778] sm:$0xff]
    %v402 = vld [vmem:[#allocation5 + $0x780] sm:$0xff]
    %v403 = vld [vmem:[#allocation5 + $0x788] sm:$0xff]
    %v404 = vld [vmem:[#allocation5 + $0x790] sm:$0xff]
    %v405 = vld [vmem:[#allocation5 + $0x798] sm:$0xff]
    %v406 = vld [vmem:[#allocation5 + $0x7a0] sm:$0xff]
    %v407 = vld [vmem:[#allocation5 + $0x7a8] sm:$0xff]
    %v408 = vld [vmem:[#allocation5 + $0x7b0] sm:$0xff]
    %v409 = vld [vmem:[#allocation5 + $0x7b8] sm:$0xff]
    %v410 = vld [vmem:[#allocation5 + $0x7c0] sm:$0xff]
    %v411 = vld [vmem:[#allocation5 + $0x7c8] sm:$0xff]
    %v412 = vld [vmem:[#allocation5 + $0x7d0] sm:$0xff]
    %v413 = vld [vmem:[#allocation5 + $0x7d8] sm:$0xff]
    %v414 = vld [vmem:[#allocation5 + $0x7e0] sm:$0xff]
    %v415 = vld [vmem:[#allocation5 + $0x7e8] sm:$0xff]
    %v416 = vld [vmem:[#allocation5 + $0x7f0] sm:$0xff]
    %v417 = vld [vmem:[#allocation5 + $0x7f8] sm:$0xff]
    %v418 = vld [vmem:[#allocation5 + $0x800] sm:$0xff]
    %v419 = vld [vmem:[#allocation5 + $0x808] sm:$0xff]
    %v420 = vld [vmem:[#allocation5 + $0x810] sm:$0xff]
    %v421 = vld [vmem:[#allocation5 + $0x818] sm:$0xff]
    %v422 = vld [vmem:[#allocation5 + $0x820] sm:$0xff]
    %v423 = vld [vmem:[#allocation5 + $0x828] sm:$0xff]
    %v424 = vld [vmem:[#allocation5 + $0x830] sm:$0xff]
    %v425 = vld [vmem:[#allocation5 + $0x838] sm:$0xff]
    %v426 = vld [vmem:[#allocation5 + $0x840] sm:$0xff]
    %v427 = vld [vmem:[#allocation5 + $0x848] sm:$0xff]
    %v428 = vld [vmem:[#allocation5 + $0x850] sm:$0xff]
    %v429 = vld [vmem:[#allocation5 + $0x858] sm:$0xff]
    %v430 = vld [vmem:[#allocation5 + $0x860] sm:$0xff]
    %v431 = vld [vmem:[#allocation5 + $0x868] sm:$0xff]
    %v432 = vld [vmem:[#allocation5 + $0x870] sm:$0xff]
    %v433 = vld [vmem:[#allocation5 + $0x878] sm:$0xff]
    %v434 = vld [vmem:[#allocation5 + $0x880] sm:$0xff]
    %v435 = vld [vmem:[#allocation5 + $0x888] sm:$0xff]
    %v436 = vld [vmem:[#allocation5 + $0x890] sm:$0xff]
    %v437 = vld [vmem:[#allocation5 + $0x898] sm:$0xff]
    %v438 = vld [vmem:[#allocation5 + $0x8a0] sm:$0xff]
    %v439 = vld [vmem:[#allocation5 + $0x8a8] sm:$0xff]
    %v440 = vld [vmem:[#allocation5 + $0x8b0] sm:$0xff]
    %v441 = vld [vmem:[#allocation5 + $0x8b8] sm:$0xff]
    %v442 = vld [vmem:[#allocation5 + $0x8c0] sm:$0xff]
    %v443 = vld [vmem:[#allocation5 + $0x8c8] sm:$0xff]
    %v444 = vld [vmem:[#allocation5 + $0x8d0] sm:$0xff]
    %v445 = vld [vmem:[#allocation5 + $0x8d8] sm:$0xff]
    %v446 = vld [vmem:[#allocation5 + $0x8e0] sm:$0xff]
    %v447 = vld [vmem:[#allocation5 + $0x8e8] sm:$0xff]
    %v448 = vld [vmem:[#allocation5 + $0x8f0] sm:$0xff]
    %v449 = vld [vmem:[#allocation5 + $0x8f8] sm:$0xff]
    %v450 = vld [vmem:[#allocation5 + $0x900] sm:$0xff]
    %v451 = vld [vmem:[#allocation5 + $0x908] sm:$0xff]
    %v452 = vld [vmem:[#allocation5 + $0x910] sm:$0xff]
    %v453 = vld [vmem:[#allocation5 + $0x918] sm:$0xff]
    %v454 = vld [vmem:[#allocation5 + $0x920] sm:$0xff]
    %v455 = vld [vmem:[#allocation5 + $0x928] sm:$0xff]
    %v456 = vld [vmem:[#allocation5 + $0x930] sm:$0xff]
    %v457 = vld [vmem:[#allocation5 + $0x938] sm:$0xff]
    %v458 = vld [vmem:[#allocation5 + $0x940] sm:$0xff]
    %v459 = vld [vmem:[#allocation5 + $0x948] sm:$0xff]
    %v460 = vld [vmem:[#allocation5 + $0x950] sm:$0xff]
    %v461 = vld [vmem:[#allocation5 + $0x958] sm:$0xff]
    %v462 = vld [vmem:[#allocation5 + $0x960] sm:$0xff]
    %v463 = vld [vmem:[#allocation5 + $0x968] sm:$0xff]
    %v464 = vld [vmem:[#allocation5 + $0x970] sm:$0xff]
    %v465 = vld [vmem:[#allocation5 + $0x978] sm:$0xff]
    %v466 = vld [vmem:[#allocation5 + $0x980] sm:$0xff]
    %v467 = vld [vmem:[#allocation5 + $0x988] sm:$0xff]
    %v468 = vld [vmem:[#allocation5 + $0x990] sm:$0xff]
    %v469 = vld [vmem:[#allocation5 + $0x998] sm:$0xff]
    %v470 = vld [vmem:[#allocation5 + $0x9a0] sm:$0xff]
    %v471 = vld [vmem:[#allocation5 + $0x9a8] sm:$0xff]
    %v472 = vld [vmem:[#allocation5 + $0x9b0] sm:$0xff]
    %v473 = vld [vmem:[#allocation5 + $0x9b8] sm:$0xff]
    %v474 = vld [vmem:[#allocation5 + $0x9c0] sm:$0xff]
    %v475 = vld [vmem:[#allocation5 + $0x9c8] sm:$0xff]
    %v476 = vld [vmem:[#allocation5 + $0x9d0] sm:$0xff]
    %v477 = vld [vmem:[#allocation5 + $0x9d8] sm:$0xff]
    %v478 = vld [vmem:[#allocation5 + $0x9e0] sm:$0xff]
    %v479 = vld [vmem:[#allocation5 + $0x9e8] sm:$0xff]
    %v480 = vld [vmem:[#allocation5 + $0x9f0] sm:$0xff]
    %v481 = vld [vmem:[#allocation5 + $0x9f8] sm:$0xff]
    %v482 = vld [vmem:[#allocation5 + $0xa00] sm:$0xff]
    %v483 = vld [vmem:[#allocation5 + $0xa08] sm:$0xff]
    %v484 = vld [vmem:[#allocation5 + $0xa10] sm:$0xff]
    %v485 = vld [vmem:[#allocation5 + $0xa18] sm:$0xff]
    %v486 = vld [vmem:[#allocation5 + $0xa20] sm:$0xff]
    %v487 = vld [vmem:[#allocation5 + $0xa28] sm:$0xff]
    %v488 = vld [vmem:[#allocation5 + $0xa30] sm:$0xff]
    %v489 = vld [vmem:[#allocation5 + $0xa38] sm:$0xff]
    %v490 = vld [vmem:[#allocation5 + $0xa40] sm:$0xff]
    %v491 = vld [vmem:[#allocation5 + $0xa48] sm:$0xff]
    %v492 = vld [vmem:[#allocation5 + $0xa50] sm:$0xff]
    %v493 = vld [vmem:[#allocation5 + $0xa58] sm:$0xff]
    %v494 = vld [vmem:[#allocation5 + $0xa60] sm:$0xff]
    %v495 = vld [vmem:[#allocation5 + $0xa68] sm:$0xff]
    %v496 = vld [vmem:[#allocation5 + $0xa70] sm:$0xff]
    %v497 = vld [vmem:[#allocation5 + $0xa78] sm:$0xff]
    %v498 = vld [vmem:[#allocation5 + $0xa80] sm:$0xff]
    %v499 = vld [vmem:[#allocation5 + $0xa88] sm:$0xff]
    %v500 = vld [vmem:[#allocation5 + $0xa90] sm:$0xff]
    %v501 = vld [vmem:[#allocation5 + $0xa98] sm:$0xff]
    %v502 = vld [vmem:[#allocation5 + $0xaa0] sm:$0xff]
    %v503 = vld [vmem:[#allocation5 + $0xaa8] sm:$0xff]
    %v504 = vld [vmem:[#allocation5 + $0xab0] sm:$0xff]
    %v505 = vld [vmem:[#allocation5 + $0xab8] sm:$0xff]
    %v506 = vld [vmem:[#allocation5 + $0xac0] sm:$0xff]
    %v507 = vld [vmem:[#allocation5 + $0xac8] sm:$0xff]
    %v508 = vld [vmem:[#allocation5 + $0xad0] sm:$0xff]
    %v509 = vld [vmem:[#allocation5 + $0xad8] sm:$0xff]
    %v510 = vld [vmem:[#allocation5 + $0xae0] sm:$0xff]
    %v511 = vld [vmem:[#allocation5 + $0xae8] sm:$0xff]
    %v512 = vld [vmem:[#allocation5 + $0xaf0] sm:$0xff]
    %v513 = vld [vmem:[#allocation5 + $0xaf8] sm:$0xff]
    %v514 = vld [vmem:[#allocation5 + $0xb00] sm:$0xff]
    %v515 = vld [vmem:[#allocation5 + $0xb08] sm:$0xff]
    %v516 = vld [vmem:[#allocation5 + $0xb10] sm:$0xff]
    %v517 = vld [vmem:[#allocation5 + $0xb18] sm:$0xff]
    %v518 = vld [vmem:[#allocation5 + $0xb20] sm:$0xff]
    %v519 = vld [vmem:[#allocation5 + $0xb28] sm:$0xff]
    %v520 = vld [vmem:[#allocation5 + $0xb30] sm:$0xff]
    %v521 = vld [vmem:[#allocation5 + $0xb38] sm:$0xff]
    %v522 = vld [vmem:[#allocation5 + $0xb40] sm:$0xff]
    %v523 = vld [vmem:[#allocation5 + $0xb48] sm:$0xff]
    %v524 = vld [vmem:[#allocation5 + $0xb50] sm:$0xff]
    %v525 = vld [vmem:[#allocation5 + $0xb58] sm:$0xff]
    %v526 = vld [vmem:[#allocation5 + $0xb60] sm:$0xff]
    %v527 = vld [vmem:[#allocation5 + $0xb68] sm:$0xff]
    %v528 = vld [vmem:[#allocation5 + $0xb70] sm:$0xff]
    %v529 = vld [vmem:[#allocation5 + $0xb78] sm:$0xff]
    %v530 = vld [vmem:[#allocation5 + $0xb80] sm:$0xff]
    %v531 = vld [vmem:[#allocation5 + $0xb88] sm:$0xff]
    %v532 = vld [vmem:[#allocation5 + $0xb90] sm:$0xff]
    %v533 = vld [vmem:[#allocation5 + $0xb98] sm:$0xff]
    %v534 = vld [vmem:[#allocation5 + $0xba0] sm:$0xff]
    %v535 = vld [vmem:[#allocation5 + $0xba8] sm:$0xff]
    %v536 = vld [vmem:[#allocation5 + $0xbb0] sm:$0xff]
    %v537 = vld [vmem:[#allocation5 + $0xbb8] sm:$0xff]
    %v538 = vld [vmem:[#allocation5 + $0xbc0] sm:$0xff]
    %v539 = vld [vmem:[#allocation5 + $0xbc8] sm:$0xff]
    %v540 = vld [vmem:[#allocation5 + $0xbd0] sm:$0xff]
    %v541 = vld [vmem:[#allocation5 + $0xbd8] sm:$0xff]
    %v542 = vld [vmem:[#allocation5 + $0xbe0] sm:$0xff]
    %v543 = vld [vmem:[#allocation5 + $0xbe8] sm:$0xff]
    %v544 = vld [vmem:[#allocation5 + $0xbf0] sm:$0xff]
    %v545 = vld [vmem:[#allocation5 + $0xbf8] sm:$0xff]
    %v546 = vld [vmem:[#allocation7] sm:$0x3f]
    %v548 = vlaneseq
    %v549 = vshrl.u32 %v548, 7
    %v550 = vsub.s32 0, %v549
    %v551 = vrot.slane %v546, %v550
    %v552 = vlaneseq
    %v553 = vshrl.u32 %v552, 7
    %v554 = vsub.s32 1, %v553
    %v555 = vrot.slane %v546, %v554
    %v556 = vlaneseq
    %v557 = vshrl.u32 %v556, 7
    %v558 = vsub.s32 2, %v557
    %v559 = vrot.slane %v546, %v558
    %v560 = vlaneseq
    %v561 = vshrl.u32 %v560, 7
    %v562 = vsub.s32 3, %v561
    %v563 = vrot.slane %v546, %v562
    %v564 = vlaneseq
    %v565 = vshrl.u32 %v564, 7
    %v566 = vsub.s32 4, %v565
    %v567 = vrot.slane %v546, %v566
    %v568 = vlaneseq
    %v569 = vshrl.u32 %v568, 7
    %v570 = vsub.s32 5, %v569
    %v571 = vrot.slane %v546, %v570
    %v962 = vunpack.c.l.b16 %v162
    %v963 = vunpack.c.h.b16 %v162
    %v964 = vunpack.c.l.b16 %v163
    %v965 = vunpack.c.h.b16 %v163
    %v966 = vunpack.c.l.b16 %v164
    %v967 = vunpack.c.h.b16 %v164
    %v968 = vunpack.c.l.b16 %v165
    %v969 = vunpack.c.h.b16 %v165
    %v970 = vunpack.c.l.b16 %v166
    %v971 = vunpack.c.h.b16 %v166
    %v972 = vunpack.c.l.b16 %v167
    %v973 = vunpack.c.h.b16 %v167
    %v974 = vunpack.c.l.b16 %v168
    %v975 = vunpack.c.h.b16 %v168
    %v976 = vunpack.c.l.b16 %v169
    %v977 = vunpack.c.h.b16 %v169
    %v978 = vunpack.c.l.b16 %v170
    %v979 = vunpack.c.h.b16 %v170
    %v980 = vunpack.c.l.b16 %v171
    %v981 = vunpack.c.h.b16 %v171
    %v982 = vunpack.c.l.b16 %v172
    %v983 = vunpack.c.h.b16 %v172
    %v984 = vunpack.c.l.b16 %v173
    %v985 = vunpack.c.h.b16 %v173
    %v986 = vunpack.c.l.b16 %v174
    %v987 = vunpack.c.h.b16 %v174
    %v988 = vunpack.c.l.b16 %v175
    %v989 = vunpack.c.h.b16 %v175
    %v990 = vunpack.c.l.b16 %v176
    %v991 = vunpack.c.h.b16 %v176
    %v992 = vunpack.c.l.b16 %v177
    %v993 = vunpack.c.h.b16 %v177
    %v994 = vunpack.c.l.b16 %v178
    %v995 = vunpack.c.h.b16 %v178
    %v996 = vunpack.c.l.b16 %v179
    %v997 = vunpack.c.h.b16 %v179
    %v998 = vunpack.c.l.b16 %v180
    %v999 = vunpack.c.h.b16 %v180
    %v1000 = vunpack.c.l.b16 %v181
    %v1001 = vunpack.c.h.b16 %v181
    %v1002 = vunpack.c.l.b16 %v182
    %v1003 = vunpack.c.h.b16 %v182
    %v1004 = vunpack.c.l.b16 %v183
    %v1005 = vunpack.c.h.b16 %v183
    %v1006 = vunpack.c.l.b16 %v184
    %v1007 = vunpack.c.h.b16 %v184
    %v1008 = vunpack.c.l.b16 %v185
    %v1009 = vunpack.c.h.b16 %v185
    %v1010 = vunpack.c.l.b16 %v186
    %v1011 = vunpack.c.h.b16 %v186
    %v1012 = vunpack.c.l.b16 %v187
    %v1013 = vunpack.c.h.b16 %v187
    %v1014 = vunpack.c.l.b16 %v188
    %v1015 = vunpack.c.h.b16 %v188
    %v1016 = vunpack.c.l.b16 %v189
    %v1017 = vunpack.c.h.b16 %v189
    %v1018 = vunpack.c.l.b16 %v190
    %v1019 = vunpack.c.h.b16 %v190
    %v1020 = vunpack.c.l.b16 %v191
    %v1021 = vunpack.c.h.b16 %v191
    %v1022 = vunpack.c.l.b16 %v192
    %v1023 = vunpack.c.h.b16 %v192
    %v1024 = vunpack.c.l.b16 %v193
    %v1025 = vunpack.c.h.b16 %v193
    %v1026 = vunpack.c.l.b16 %v194
    %v1027 = vunpack.c.h.b16 %v194
    %v1028 = vunpack.c.l.b16 %v195
    %v1029 = vunpack.c.h.b16 %v195
    %v1030 = vunpack.c.l.b16 %v196
    %v1031 = vunpack.c.h.b16 %v196
    %v1032 = vunpack.c.l.b16 %v197
    %v1033 = vunpack.c.h.b16 %v197
    %v1034 = vunpack.c.l.b16 %v198
    %v1035 = vunpack.c.h.b16 %v198
    %v1036 = vunpack.c.l.b16 %v199
    %v1037 = vunpack.c.h.b16 %v199
    %v1038 = vunpack.c.l.b16 %v200
    %v1039 = vunpack.c.h.b16 %v200
    %v1040 = vunpack.c.l.b16 %v201
    %v1041 = vunpack.c.h.b16 %v201
    %v1042 = vunpack.c.l.b16 %v202
    %v1043 = vunpack.c.h.b16 %v202
    %v1044 = vunpack.c.l.b16 %v203
    %v1045 = vunpack.c.h.b16 %v203
    %v1046 = vunpack.c.l.b16 %v204
    %v1047 = vunpack.c.h.b16 %v204
    %v1048 = vunpack.c.l.b16 %v205
    %v1049 = vunpack.c.h.b16 %v205
    %v1050 = vunpack.c.l.b16 %v206
    %v1051 = vunpack.c.h.b16 %v206
    %v1052 = vunpack.c.l.b16 %v207
    %v1053 = vunpack.c.h.b16 %v207
    %v1054 = vunpack.c.l.b16 %v208
    %v1055 = vunpack.c.h.b16 %v208
    %v1056 = vunpack.c.l.b16 %v209
    %v1057 = vunpack.c.h.b16 %v209
    %v1058 = vunpack.c.l.b16 %v210
    %v1059 = vunpack.c.h.b16 %v210
    %v1060 = vunpack.c.l.b16 %v211
    %v1061 = vunpack.c.h.b16 %v211
    %v1062 = vunpack.c.l.b16 %v212
    %v1063 = vunpack.c.h.b16 %v212
    %v1064 = vunpack.c.l.b16 %v213
    %v1065 = vunpack.c.h.b16 %v213
    %v1066 = vunpack.c.l.b16 %v214
    %v1067 = vunpack.c.h.b16 %v214
    %v1068 = vunpack.c.l.b16 %v215
    %v1069 = vunpack.c.h.b16 %v215
    %v1070 = vunpack.c.l.b16 %v216
    %v1071 = vunpack.c.h.b16 %v216
    %v1072 = vunpack.c.l.b16 %v217
    %v1073 = vunpack.c.h.b16 %v217
    %v1074 = vunpack.c.l.b16 %v218
    %v1075 = vunpack.c.h.b16 %v218
    %v1076 = vunpack.c.l.b16 %v219
    %v1077 = vunpack.c.h.b16 %v219
    %v1078 = vunpack.c.l.b16 %v220
    %v1079 = vunpack.c.h.b16 %v220
    %v1080 = vunpack.c.l.b16 %v221
    %v1081 = vunpack.c.h.b16 %v221
    %v1082 = vunpack.c.l.b16 %v222
    %v1083 = vunpack.c.h.b16 %v222
    %v1084 = vunpack.c.l.b16 %v223
    %v1085 = vunpack.c.h.b16 %v223
    %v1086 = vunpack.c.l.b16 %v224
    %v1087 = vunpack.c.h.b16 %v224
    %v1088 = vunpack.c.l.b16 %v225
    %v1089 = vunpack.c.h.b16 %v225
    %v1090 = vunpack.c.l.b16 %v226
    %v1091 = vunpack.c.h.b16 %v226
    %v1092 = vunpack.c.l.b16 %v227
    %v1093 = vunpack.c.h.b16 %v227
    %v1094 = vunpack.c.l.b16 %v228
    %v1095 = vunpack.c.h.b16 %v228
    %v1096 = vunpack.c.l.b16 %v229
    %v1097 = vunpack.c.h.b16 %v229
    %v1098 = vunpack.c.l.b16 %v230
    %v1099 = vunpack.c.h.b16 %v230
    %v1100 = vunpack.c.l.b16 %v231
    %v1101 = vunpack.c.h.b16 %v231
    %v1102 = vunpack.c.l.b16 %v232
    %v1103 = vunpack.c.h.b16 %v232
    %v1104 = vunpack.c.l.b16 %v233
    %v1105 = vunpack.c.h.b16 %v233
    %v1106 = vunpack.c.l.b16 %v234
    %v1107 = vunpack.c.h.b16 %v234
    %v1108 = vunpack.c.l.b16 %v235
    %v1109 = vunpack.c.h.b16 %v235
    %v1110 = vunpack.c.l.b16 %v236
    %v1111 = vunpack.c.h.b16 %v236
    %v1112 = vunpack.c.l.b16 %v237
    %v1113 = vunpack.c.h.b16 %v237
    %v1114 = vunpack.c.l.b16 %v238
    %v1115 = vunpack.c.h.b16 %v238
    %v1116 = vunpack.c.l.b16 %v239
    %v1117 = vunpack.c.h.b16 %v239
    %v1118 = vunpack.c.l.b16 %v240
    %v1119 = vunpack.c.h.b16 %v240
    %v1120 = vunpack.c.l.b16 %v241
    %v1121 = vunpack.c.h.b16 %v241
    %v1122 = vunpack.c.l.b16 %v242
    %v1123 = vunpack.c.h.b16 %v242
    %v1124 = vunpack.c.l.b16 %v243
    %v1125 = vunpack.c.h.b16 %v243
    %v1126 = vunpack.c.l.b16 %v244
    %v1127 = vunpack.c.h.b16 %v244
    %v1128 = vunpack.c.l.b16 %v245
    %v1129 = vunpack.c.h.b16 %v245
    %v1130 = vunpack.c.l.b16 %v246
    %v1131 = vunpack.c.h.b16 %v246
    %v1132 = vunpack.c.l.b16 %v247
    %v1133 = vunpack.c.h.b16 %v247
    %v1134 = vunpack.c.l.b16 %v248
    %v1135 = vunpack.c.h.b16 %v248
    %v1136 = vunpack.c.l.b16 %v249
    %v1137 = vunpack.c.h.b16 %v249
    %v1138 = vunpack.c.l.b16 %v250
    %v1139 = vunpack.c.h.b16 %v250
    %v1140 = vunpack.c.l.b16 %v251
    %v1141 = vunpack.c.h.b16 %v251
    %v1142 = vunpack.c.l.b16 %v252
    %v1143 = vunpack.c.h.b16 %v252
    %v1144 = vunpack.c.l.b16 %v253
    %v1145 = vunpack.c.h.b16 %v253
    %v1146 = vunpack.c.l.b16 %v254
    %v1147 = vunpack.c.h.b16 %v254
    %v1148 = vunpack.c.l.b16 %v255
    %v1149 = vunpack.c.h.b16 %v255
    %v1150 = vunpack.c.l.b16 %v256
    %v1151 = vunpack.c.h.b16 %v256
    %v1152 = vunpack.c.l.b16 %v257
    %v1153 = vunpack.c.h.b16 %v257
    %v1154 = vunpack.c.l.b16 %v258
    %v1155 = vunpack.c.h.b16 %v258
    %v1156 = vunpack.c.l.b16 %v259
    %v1157 = vunpack.c.h.b16 %v259
    %v1158 = vunpack.c.l.b16 %v260
    %v1159 = vunpack.c.h.b16 %v260
    %v1160 = vunpack.c.l.b16 %v261
    %v1161 = vunpack.c.h.b16 %v261
    %v1162 = vunpack.c.l.b16 %v262
    %v1163 = vunpack.c.h.b16 %v262
    %v1164 = vunpack.c.l.b16 %v263
    %v1165 = vunpack.c.h.b16 %v263
    %v1166 = vunpack.c.l.b16 %v264
    %v1167 = vunpack.c.h.b16 %v264
    %v1168 = vunpack.c.l.b16 %v265
    %v1169 = vunpack.c.h.b16 %v265
    %v1170 = vunpack.c.l.b16 %v266
    %v1171 = vunpack.c.h.b16 %v266
    %v1172 = vunpack.c.l.b16 %v267
    %v1173 = vunpack.c.h.b16 %v267
    %v1174 = vunpack.c.l.b16 %v268
    %v1175 = vunpack.c.h.b16 %v268
    %v1176 = vunpack.c.l.b16 %v269
    %v1177 = vunpack.c.h.b16 %v269
    %v1178 = vunpack.c.l.b16 %v270
    %v1179 = vunpack.c.h.b16 %v270
    %v1180 = vunpack.c.l.b16 %v271
    %v1181 = vunpack.c.h.b16 %v271
    %v1182 = vunpack.c.l.b16 %v272
    %v1183 = vunpack.c.h.b16 %v272
    %v1184 = vunpack.c.l.b16 %v273
    %v1185 = vunpack.c.h.b16 %v273
    %v1186 = vunpack.c.l.b16 %v274
    %v1187 = vunpack.c.h.b16 %v274
    %v1188 = vunpack.c.l.b16 %v275
    %v1189 = vunpack.c.h.b16 %v275
    %v1190 = vunpack.c.l.b16 %v276
    %v1191 = vunpack.c.h.b16 %v276
    %v1192 = vunpack.c.l.b16 %v277
    %v1193 = vunpack.c.h.b16 %v277
    %v1194 = vunpack.c.l.b16 %v278
    %v1195 = vunpack.c.h.b16 %v278
    %v1196 = vunpack.c.l.b16 %v279
    %v1197 = vunpack.c.h.b16 %v279
    %v1198 = vunpack.c.l.b16 %v280
    %v1199 = vunpack.c.h.b16 %v280
    %v1200 = vunpack.c.l.b16 %v281
    %v1201 = vunpack.c.h.b16 %v281
    %v1202 = vunpack.c.l.b16 %v282
    %v1203 = vunpack.c.h.b16 %v282
    %v1204 = vunpack.c.l.b16 %v283
    %v1205 = vunpack.c.h.b16 %v283
    %v1206 = vunpack.c.l.b16 %v284
    %v1207 = vunpack.c.h.b16 %v284
    %v1208 = vunpack.c.l.b16 %v285
    %v1209 = vunpack.c.h.b16 %v285
    %v1210 = vunpack.c.l.b16 %v286
    %v1211 = vunpack.c.h.b16 %v286
    %v1212 = vunpack.c.l.b16 %v287
    %v1213 = vunpack.c.h.b16 %v287
    %v1214 = vunpack.c.l.b16 %v288
    %v1215 = vunpack.c.h.b16 %v288
    %v1216 = vunpack.c.l.b16 %v289
    %v1217 = vunpack.c.h.b16 %v289
    %v1218 = vunpack.c.l.b16 %v290
    %v1219 = vunpack.c.h.b16 %v290
    %v1220 = vunpack.c.l.b16 %v291
    %v1221 = vunpack.c.h.b16 %v291
    %v1222 = vunpack.c.l.b16 %v292
    %v1223 = vunpack.c.h.b16 %v292
    %v1224 = vunpack.c.l.b16 %v293
    %v1225 = vunpack.c.h.b16 %v293
    %v1226 = vunpack.c.l.b16 %v294
    %v1227 = vunpack.c.h.b16 %v294
    %v1228 = vunpack.c.l.b16 %v295
    %v1229 = vunpack.c.h.b16 %v295
    %v1230 = vunpack.c.l.b16 %v296
    %v1231 = vunpack.c.h.b16 %v296
    %v1232 = vunpack.c.l.b16 %v297
    %v1233 = vunpack.c.h.b16 %v297
    %v1234 = vunpack.c.l.b16 %v298
    %v1235 = vunpack.c.h.b16 %v298
    %v1236 = vunpack.c.l.b16 %v299
    %v1237 = vunpack.c.h.b16 %v299
    %v1238 = vunpack.c.l.b16 %v300
    %v1239 = vunpack.c.h.b16 %v300
    %v1240 = vunpack.c.l.b16 %v301
    %v1241 = vunpack.c.h.b16 %v301
    %v1242 = vunpack.c.l.b16 %v302
    %v1243 = vunpack.c.h.b16 %v302
    %v1244 = vunpack.c.l.b16 %v303
    %v1245 = vunpack.c.h.b16 %v303
    %v1246 = vunpack.c.l.b16 %v304
    %v1247 = vunpack.c.h.b16 %v304
    %v1248 = vunpack.c.l.b16 %v305
    %v1249 = vunpack.c.h.b16 %v305
    %v1250 = vunpack.c.l.b16 %v306
    %v1251 = vunpack.c.h.b16 %v306
    %v1252 = vunpack.c.l.b16 %v307
    %v1253 = vunpack.c.h.b16 %v307
    %v1254 = vunpack.c.l.b16 %v308
    %v1255 = vunpack.c.h.b16 %v308
    %v1256 = vunpack.c.l.b16 %v309
    %v1257 = vunpack.c.h.b16 %v309
    %v1258 = vunpack.c.l.b16 %v310
    %v1259 = vunpack.c.h.b16 %v310
    %v1260 = vunpack.c.l.b16 %v311
    %v1261 = vunpack.c.h.b16 %v311
    %v1262 = vunpack.c.l.b16 %v312
    %v1263 = vunpack.c.h.b16 %v312
    %v1264 = vunpack.c.l.b16 %v313
    %v1265 = vunpack.c.h.b16 %v313
    %v1266 = vunpack.c.l.b16 %v314
    %v1267 = vunpack.c.h.b16 %v314
    %v1268 = vunpack.c.l.b16 %v315
    %v1269 = vunpack.c.h.b16 %v315
    %v1270 = vunpack.c.l.b16 %v316
    %v1271 = vunpack.c.h.b16 %v316
    %v1272 = vunpack.c.l.b16 %v317
    %v1273 = vunpack.c.h.b16 %v317
    %v1274 = vunpack.c.l.b16 %v318
    %v1275 = vunpack.c.h.b16 %v318
    %v1276 = vunpack.c.l.b16 %v319
    %v1277 = vunpack.c.h.b16 %v319
    %v1278 = vunpack.c.l.b16 %v320
    %v1279 = vunpack.c.h.b16 %v320
    %v1280 = vunpack.c.l.b16 %v321
    %v1281 = vunpack.c.h.b16 %v321
    %v1282 = vunpack.c.l.b16 %v322
    %v1283 = vunpack.c.h.b16 %v322
    %v1284 = vunpack.c.l.b16 %v323
    %v1285 = vunpack.c.h.b16 %v323
    %v1286 = vunpack.c.l.b16 %v324
    %v1287 = vunpack.c.h.b16 %v324
    %v1288 = vunpack.c.l.b16 %v325
    %v1289 = vunpack.c.h.b16 %v325
    %v1290 = vunpack.c.l.b16 %v326
    %v1291 = vunpack.c.h.b16 %v326
    %v1292 = vunpack.c.l.b16 %v327
    %v1293 = vunpack.c.h.b16 %v327
    %v1294 = vunpack.c.l.b16 %v328
    %v1295 = vunpack.c.h.b16 %v328
    %v1296 = vunpack.c.l.b16 %v329
    %v1297 = vunpack.c.h.b16 %v329
    %v1298 = vunpack.c.l.b16 %v330
    %v1299 = vunpack.c.h.b16 %v330
    %v1300 = vunpack.c.l.b16 %v331
    %v1301 = vunpack.c.h.b16 %v331
    %v1302 = vunpack.c.l.b16 %v332
    %v1303 = vunpack.c.h.b16 %v332
    %v1304 = vunpack.c.l.b16 %v333
    %v1305 = vunpack.c.h.b16 %v333
    %v1306 = vunpack.c.l.b16 %v334
    %v1307 = vunpack.c.h.b16 %v334
    %v1308 = vunpack.c.l.b16 %v335
    %v1309 = vunpack.c.h.b16 %v335
    %v1310 = vunpack.c.l.b16 %v336
    %v1311 = vunpack.c.h.b16 %v336
    %v1312 = vunpack.c.l.b16 %v337
    %v1313 = vunpack.c.h.b16 %v337
    %v1314 = vunpack.c.l.b16 %v338
    %v1315 = vunpack.c.h.b16 %v338
    %v1316 = vunpack.c.l.b16 %v339
    %v1317 = vunpack.c.h.b16 %v339
    %v1318 = vunpack.c.l.b16 %v340
    %v1319 = vunpack.c.h.b16 %v340
    %v1320 = vunpack.c.l.b16 %v341
    %v1321 = vunpack.c.h.b16 %v341
    %v1322 = vunpack.c.l.b16 %v342
    %v1323 = vunpack.c.h.b16 %v342
    %v1324 = vunpack.c.l.b16 %v343
    %v1325 = vunpack.c.h.b16 %v343
    %v1326 = vunpack.c.l.b16 %v344
    %v1327 = vunpack.c.h.b16 %v344
    %v1328 = vunpack.c.l.b16 %v345
    %v1329 = vunpack.c.h.b16 %v345
    %v1330 = vunpack.c.l.b16 %v346
    %v1331 = vunpack.c.h.b16 %v346
    %v1332 = vunpack.c.l.b16 %v347
    %v1333 = vunpack.c.h.b16 %v347
    %v1334 = vunpack.c.l.b16 %v348
    %v1335 = vunpack.c.h.b16 %v348
    %v1336 = vunpack.c.l.b16 %v349
    %v1337 = vunpack.c.h.b16 %v349
    %v1338 = vunpack.c.l.b16 %v350
    %v1339 = vunpack.c.h.b16 %v350
    %v1340 = vunpack.c.l.b16 %v351
    %v1341 = vunpack.c.h.b16 %v351
    %v1342 = vunpack.c.l.b16 %v352
    %v1343 = vunpack.c.h.b16 %v352
    %v1344 = vunpack.c.l.b16 %v353
    %v1345 = vunpack.c.h.b16 %v353
    %v1346 = vunpack.c.l.b16 %v354
    %v1347 = vunpack.c.h.b16 %v354
    %v1348 = vunpack.c.l.b16 %v355
    %v1349 = vunpack.c.h.b16 %v355
    %v1350 = vunpack.c.l.b16 %v356
    %v1351 = vunpack.c.h.b16 %v356
    %v1352 = vunpack.c.l.b16 %v357
    %v1353 = vunpack.c.h.b16 %v357
    %v1354 = vunpack.c.l.b16 %v358
    %v1355 = vunpack.c.h.b16 %v358
    %v1356 = vunpack.c.l.b16 %v359
    %v1357 = vunpack.c.h.b16 %v359
    %v1358 = vunpack.c.l.b16 %v360
    %v1359 = vunpack.c.h.b16 %v360
    %v1360 = vunpack.c.l.b16 %v361
    %v1361 = vunpack.c.h.b16 %v361
    %v1362 = vunpack.c.l.b16 %v362
    %v1363 = vunpack.c.h.b16 %v362
    %v1364 = vunpack.c.l.b16 %v363
    %v1365 = vunpack.c.h.b16 %v363
    %v1366 = vunpack.c.l.b16 %v364
    %v1367 = vunpack.c.h.b16 %v364
    %v1368 = vunpack.c.l.b16 %v365
    %v1369 = vunpack.c.h.b16 %v365
    %v1370 = vunpack.c.l.b16 %v366
    %v1371 = vunpack.c.h.b16 %v366
    %v1372 = vunpack.c.l.b16 %v367
    %v1373 = vunpack.c.h.b16 %v367
    %v1374 = vunpack.c.l.b16 %v368
    %v1375 = vunpack.c.h.b16 %v368
    %v1376 = vunpack.c.l.b16 %v369
    %v1377 = vunpack.c.h.b16 %v369
    %v1378 = vunpack.c.l.b16 %v370
    %v1379 = vunpack.c.h.b16 %v370
    %v1380 = vunpack.c.l.b16 %v371
    %v1381 = vunpack.c.h.b16 %v371
    %v1382 = vunpack.c.l.b16 %v372
    %v1383 = vunpack.c.h.b16 %v372
    %v1384 = vunpack.c.l.b16 %v373
    %v1385 = vunpack.c.h.b16 %v373
    %v1386 = vunpack.c.l.b16 %v374
    %v1387 = vunpack.c.h.b16 %v374
    %v1388 = vunpack.c.l.b16 %v375
    %v1389 = vunpack.c.h.b16 %v375
    %v1390 = vunpack.c.l.b16 %v376
    %v1391 = vunpack.c.h.b16 %v376
    %v1392 = vunpack.c.l.b16 %v377
    %v1393 = vunpack.c.h.b16 %v377
    %v1394 = vunpack.c.l.b16 %v378
    %v1395 = vunpack.c.h.b16 %v378
    %v1396 = vunpack.c.l.b16 %v379
    %v1397 = vunpack.c.h.b16 %v379
    %v1398 = vunpack.c.l.b16 %v380
    %v1399 = vunpack.c.h.b16 %v380
    %v1400 = vunpack.c.l.b16 %v381
    %v1401 = vunpack.c.h.b16 %v381
    %v1402 = vunpack.c.l.b16 %v382
    %v1403 = vunpack.c.h.b16 %v382
    %v1404 = vunpack.c.l.b16 %v383
    %v1405 = vunpack.c.h.b16 %v383
    %v1406 = vunpack.c.l.b16 %v384
    %v1407 = vunpack.c.h.b16 %v384
    %v1408 = vunpack.c.l.b16 %v385
    %v1409 = vunpack.c.h.b16 %v385
    %v1410 = vunpack.c.l.b16 %v386
    %v1411 = vunpack.c.h.b16 %v386
    %v1412 = vunpack.c.l.b16 %v387
    %v1413 = vunpack.c.h.b16 %v387
    %v1414 = vunpack.c.l.b16 %v388
    %v1415 = vunpack.c.h.b16 %v388
    %v1416 = vunpack.c.l.b16 %v389
    %v1417 = vunpack.c.h.b16 %v389
    %v1418 = vunpack.c.l.b16 %v390
    %v1419 = vunpack.c.h.b16 %v390
    %v1420 = vunpack.c.l.b16 %v391
    %v1421 = vunpack.c.h.b16 %v391
    %v1422 = vunpack.c.l.b16 %v392
    %v1423 = vunpack.c.h.b16 %v392
    %v1424 = vunpack.c.l.b16 %v393
    %v1425 = vunpack.c.h.b16 %v393
    %v1426 = vunpack.c.l.b16 %v394
    %v1427 = vunpack.c.h.b16 %v394
    %v1428 = vunpack.c.l.b16 %v395
    %v1429 = vunpack.c.h.b16 %v395
    %v1430 = vunpack.c.l.b16 %v396
    %v1431 = vunpack.c.h.b16 %v396
    %v1432 = vunpack.c.l.b16 %v397
    %v1433 = vunpack.c.h.b16 %v397
    %v1434 = vunpack.c.l.b16 %v398
    %v1435 = vunpack.c.h.b16 %v398
    %v1436 = vunpack.c.l.b16 %v399
    %v1437 = vunpack.c.h.b16 %v399
    %v1438 = vunpack.c.l.b16 %v400
    %v1439 = vunpack.c.h.b16 %v400
    %v1440 = vunpack.c.l.b16 %v401
    %v1441 = vunpack.c.h.b16 %v401
    %v1442 = vunpack.c.l.b16 %v402
    %v1443 = vunpack.c.h.b16 %v402
    %v1444 = vunpack.c.l.b16 %v403
    %v1445 = vunpack.c.h.b16 %v403
    %v1446 = vunpack.c.l.b16 %v404
    %v1447 = vunpack.c.h.b16 %v404
    %v1448 = vunpack.c.l.b16 %v405
    %v1449 = vunpack.c.h.b16 %v405
    %v1450 = vunpack.c.l.b16 %v406
    %v1451 = vunpack.c.h.b16 %v406
    %v1452 = vunpack.c.l.b16 %v407
    %v1453 = vunpack.c.h.b16 %v407
    %v1454 = vunpack.c.l.b16 %v408
    %v1455 = vunpack.c.h.b16 %v408
    %v1456 = vunpack.c.l.b16 %v409
    %v1457 = vunpack.c.h.b16 %v409
    %v1458 = vunpack.c.l.b16 %v410
    %v1459 = vunpack.c.h.b16 %v410
    %v1460 = vunpack.c.l.b16 %v411
    %v1461 = vunpack.c.h.b16 %v411
    %v1462 = vunpack.c.l.b16 %v412
    %v1463 = vunpack.c.h.b16 %v412
    %v1464 = vunpack.c.l.b16 %v413
    %v1465 = vunpack.c.h.b16 %v413
    %v1466 = vunpack.c.l.b16 %v414
    %v1467 = vunpack.c.h.b16 %v414
    %v1468 = vunpack.c.l.b16 %v415
    %v1469 = vunpack.c.h.b16 %v415
    %v1470 = vunpack.c.l.b16 %v416
    %v1471 = vunpack.c.h.b16 %v416
    %v1472 = vunpack.c.l.b16 %v417
    %v1473 = vunpack.c.h.b16 %v417
    %v1474 = vunpack.c.l.b16 %v418
    %v1475 = vunpack.c.h.b16 %v418
    %v1476 = vunpack.c.l.b16 %v419
    %v1477 = vunpack.c.h.b16 %v419
    %v1478 = vunpack.c.l.b16 %v420
    %v1479 = vunpack.c.h.b16 %v420
    %v1480 = vunpack.c.l.b16 %v421
    %v1481 = vunpack.c.h.b16 %v421
    %v1482 = vunpack.c.l.b16 %v422
    %v1483 = vunpack.c.h.b16 %v422
    %v1484 = vunpack.c.l.b16 %v423
    %v1485 = vunpack.c.h.b16 %v423
    %v1486 = vunpack.c.l.b16 %v424
    %v1487 = vunpack.c.h.b16 %v424
    %v1488 = vunpack.c.l.b16 %v425
    %v1489 = vunpack.c.h.b16 %v425
    %v1490 = vunpack.c.l.b16 %v426
    %v1491 = vunpack.c.h.b16 %v426
    %v1492 = vunpack.c.l.b16 %v427
    %v1493 = vunpack.c.h.b16 %v427
    %v1494 = vunpack.c.l.b16 %v428
    %v1495 = vunpack.c.h.b16 %v428
    %v1496 = vunpack.c.l.b16 %v429
    %v1497 = vunpack.c.h.b16 %v429
    %v1498 = vunpack.c.l.b16 %v430
    %v1499 = vunpack.c.h.b16 %v430
    %v1500 = vunpack.c.l.b16 %v431
    %v1501 = vunpack.c.h.b16 %v431
    %v1502 = vunpack.c.l.b16 %v432
    %v1503 = vunpack.c.h.b16 %v432
    %v1504 = vunpack.c.l.b16 %v433
    %v1505 = vunpack.c.h.b16 %v433
    %v1506 = vunpack.c.l.b16 %v434
    %v1507 = vunpack.c.h.b16 %v434
    %v1508 = vunpack.c.l.b16 %v435
    %v1509 = vunpack.c.h.b16 %v435
    %v1510 = vunpack.c.l.b16 %v436
    %v1511 = vunpack.c.h.b16 %v436
    %v1512 = vunpack.c.l.b16 %v437
    %v1513 = vunpack.c.h.b16 %v437
    %v1514 = vunpack.c.l.b16 %v438
    %v1515 = vunpack.c.h.b16 %v438
    %v1516 = vunpack.c.l.b16 %v439
    %v1517 = vunpack.c.h.b16 %v439
    %v1518 = vunpack.c.l.b16 %v440
    %v1519 = vunpack.c.h.b16 %v440
    %v1520 = vunpack.c.l.b16 %v441
    %v1521 = vunpack.c.h.b16 %v441
    %v1522 = vunpack.c.l.b16 %v442
    %v1523 = vunpack.c.h.b16 %v442
    %v1524 = vunpack.c.l.b16 %v443
    %v1525 = vunpack.c.h.b16 %v443
    %v1526 = vunpack.c.l.b16 %v444
    %v1527 = vunpack.c.h.b16 %v444
    %v1528 = vunpack.c.l.b16 %v445
    %v1529 = vunpack.c.h.b16 %v445
    %v1530 = vunpack.c.l.b16 %v446
    %v1531 = vunpack.c.h.b16 %v446
    %v1532 = vunpack.c.l.b16 %v447
    %v1533 = vunpack.c.h.b16 %v447
    %v1534 = vunpack.c.l.b16 %v448
    %v1535 = vunpack.c.h.b16 %v448
    %v1536 = vunpack.c.l.b16 %v449
    %v1537 = vunpack.c.h.b16 %v449
    %v1538 = vunpack.c.l.b16 %v450
    %v1539 = vunpack.c.h.b16 %v450
    %v1540 = vunpack.c.l.b16 %v451
    %v1541 = vunpack.c.h.b16 %v451
    %v1542 = vunpack.c.l.b16 %v452
    %v1543 = vunpack.c.h.b16 %v452
    %v1544 = vunpack.c.l.b16 %v453
    %v1545 = vunpack.c.h.b16 %v453
    %v1546 = vunpack.c.l.b16 %v454
    %v1547 = vunpack.c.h.b16 %v454
    %v1548 = vunpack.c.l.b16 %v455
    %v1549 = vunpack.c.h.b16 %v455
    %v1550 = vunpack.c.l.b16 %v456
    %v1551 = vunpack.c.h.b16 %v456
    %v1552 = vunpack.c.l.b16 %v457
    %v1553 = vunpack.c.h.b16 %v457
    %v1554 = vunpack.c.l.b16 %v458
    %v1555 = vunpack.c.h.b16 %v458
    %v1556 = vunpack.c.l.b16 %v459
    %v1557 = vunpack.c.h.b16 %v459
    %v1558 = vunpack.c.l.b16 %v460
    %v1559 = vunpack.c.h.b16 %v460
    %v1560 = vunpack.c.l.b16 %v461
    %v1561 = vunpack.c.h.b16 %v461
    %v1562 = vunpack.c.l.b16 %v462
    %v1563 = vunpack.c.h.b16 %v462
    %v1564 = vunpack.c.l.b16 %v463
    %v1565 = vunpack.c.h.b16 %v463
    %v1566 = vunpack.c.l.b16 %v464
    %v1567 = vunpack.c.h.b16 %v464
    %v1568 = vunpack.c.l.b16 %v465
    %v1569 = vunpack.c.h.b16 %v465
    %v1570 = vunpack.c.l.b16 %v466
    %v1571 = vunpack.c.h.b16 %v466
    %v1572 = vunpack.c.l.b16 %v467
    %v1573 = vunpack.c.h.b16 %v467
    %v1574 = vunpack.c.l.b16 %v468
    %v1575 = vunpack.c.h.b16 %v468
    %v1576 = vunpack.c.l.b16 %v469
    %v1577 = vunpack.c.h.b16 %v469
    %v1578 = vunpack.c.l.b16 %v470
    %v1579 = vunpack.c.h.b16 %v470
    %v1580 = vunpack.c.l.b16 %v471
    %v1581 = vunpack.c.h.b16 %v471
    %v1582 = vunpack.c.l.b16 %v472
    %v1583 = vunpack.c.h.b16 %v472
    %v1584 = vunpack.c.l.b16 %v473
    %v1585 = vunpack.c.h.b16 %v473
    %v1586 = vunpack.c.l.b16 %v474
    %v1587 = vunpack.c.h.b16 %v474
    %v1588 = vunpack.c.l.b16 %v475
    %v1589 = vunpack.c.h.b16 %v475
    %v1590 = vunpack.c.l.b16 %v476
    %v1591 = vunpack.c.h.b16 %v476
    %v1592 = vunpack.c.l.b16 %v477
    %v1593 = vunpack.c.h.b16 %v477
    %v1594 = vunpack.c.l.b16 %v478
    %v1595 = vunpack.c.h.b16 %v478
    %v1596 = vunpack.c.l.b16 %v479
    %v1597 = vunpack.c.h.b16 %v479
    %v1598 = vunpack.c.l.b16 %v480
    %v1599 = vunpack.c.h.b16 %v480
    %v1600 = vunpack.c.l.b16 %v481
    %v1601 = vunpack.c.h.b16 %v481
    %v1602 = vunpack.c.l.b16 %v482
    %v1603 = vunpack.c.h.b16 %v482
    %v1604 = vunpack.c.l.b16 %v483
    %v1605 = vunpack.c.h.b16 %v483
    %v1606 = vunpack.c.l.b16 %v484
    %v1607 = vunpack.c.h.b16 %v484
    %v1608 = vunpack.c.l.b16 %v485
    %v1609 = vunpack.c.h.b16 %v485
    %v1610 = vunpack.c.l.b16 %v486
    %v1611 = vunpack.c.h.b16 %v486
    %v1612 = vunpack.c.l.b16 %v487
    %v1613 = vunpack.c.h.b16 %v487
    %v1614 = vunpack.c.l.b16 %v488
    %v1615 = vunpack.c.h.b16 %v488
    %v1616 = vunpack.c.l.b16 %v489
    %v1617 = vunpack.c.h.b16 %v489
    %v1618 = vunpack.c.l.b16 %v490
    %v1619 = vunpack.c.h.b16 %v490
    %v1620 = vunpack.c.l.b16 %v491
    %v1621 = vunpack.c.h.b16 %v491
    %v1622 = vunpack.c.l.b16 %v492
    %v1623 = vunpack.c.h.b16 %v492
    %v1624 = vunpack.c.l.b16 %v493
    %v1625 = vunpack.c.h.b16 %v493
    %v1626 = vunpack.c.l.b16 %v494
    %v1627 = vunpack.c.h.b16 %v494
    %v1628 = vunpack.c.l.b16 %v495
    %v1629 = vunpack.c.h.b16 %v495
    %v1630 = vunpack.c.l.b16 %v496
    %v1631 = vunpack.c.h.b16 %v496
    %v1632 = vunpack.c.l.b16 %v497
    %v1633 = vunpack.c.h.b16 %v497
    %v1634 = vunpack.c.l.b16 %v498
    %v1635 = vunpack.c.h.b16 %v498
    %v1636 = vunpack.c.l.b16 %v499
    %v1637 = vunpack.c.h.b16 %v499
    %v1638 = vunpack.c.l.b16 %v500
    %v1639 = vunpack.c.h.b16 %v500
    %v1640 = vunpack.c.l.b16 %v501
    %v1641 = vunpack.c.h.b16 %v501
    %v1642 = vunpack.c.l.b16 %v502
    %v1643 = vunpack.c.h.b16 %v502
    %v1644 = vunpack.c.l.b16 %v503
    %v1645 = vunpack.c.h.b16 %v503
    %v1646 = vunpack.c.l.b16 %v504
    %v1647 = vunpack.c.h.b16 %v504
    %v1648 = vunpack.c.l.b16 %v505
    %v1649 = vunpack.c.h.b16 %v505
    %v1650 = vunpack.c.l.b16 %v506
    %v1651 = vunpack.c.h.b16 %v506
    %v1652 = vunpack.c.l.b16 %v507
    %v1653 = vunpack.c.h.b16 %v507
    %v1654 = vunpack.c.l.b16 %v508
    %v1655 = vunpack.c.h.b16 %v508
    %v1656 = vunpack.c.l.b16 %v509
    %v1657 = vunpack.c.h.b16 %v509
    %v1658 = vunpack.c.l.b16 %v510
    %v1659 = vunpack.c.h.b16 %v510
    %v1660 = vunpack.c.l.b16 %v511
    %v1661 = vunpack.c.h.b16 %v511
    %v1662 = vunpack.c.l.b16 %v512
    %v1663 = vunpack.c.h.b16 %v512
    %v1664 = vunpack.c.l.b16 %v513
    %v1665 = vunpack.c.h.b16 %v513
    %v1666 = vunpack.c.l.b16 %v514
    %v1667 = vunpack.c.h.b16 %v514
    %v1668 = vunpack.c.l.b16 %v515
    %v1669 = vunpack.c.h.b16 %v515
    %v1670 = vunpack.c.l.b16 %v516
    %v1671 = vunpack.c.h.b16 %v516
    %v1672 = vunpack.c.l.b16 %v517
    %v1673 = vunpack.c.h.b16 %v517
    %v1674 = vunpack.c.l.b16 %v518
    %v1675 = vunpack.c.h.b16 %v518
    %v1676 = vunpack.c.l.b16 %v519
    %v1677 = vunpack.c.h.b16 %v519
    %v1678 = vunpack.c.l.b16 %v520
    %v1679 = vunpack.c.h.b16 %v520
    %v1680 = vunpack.c.l.b16 %v521
    %v1681 = vunpack.c.h.b16 %v521
    %v1682 = vunpack.c.l.b16 %v522
    %v1683 = vunpack.c.h.b16 %v522
    %v1684 = vunpack.c.l.b16 %v523
    %v1685 = vunpack.c.h.b16 %v523
    %v1686 = vunpack.c.l.b16 %v524
    %v1687 = vunpack.c.h.b16 %v524
    %v1688 = vunpack.c.l.b16 %v525
    %v1689 = vunpack.c.h.b16 %v525
    %v1690 = vunpack.c.l.b16 %v526
    %v1691 = vunpack.c.h.b16 %v526
    %v1692 = vunpack.c.l.b16 %v527
    %v1693 = vunpack.c.h.b16 %v527
    %v1694 = vunpack.c.l.b16 %v528
    %v1695 = vunpack.c.h.b16 %v528
    %v1696 = vunpack.c.l.b16 %v529
    %v1697 = vunpack.c.h.b16 %v529
    %v1698 = vunpack.c.l.b16 %v530
    %v1699 = vunpack.c.h.b16 %v530
    %v1700 = vunpack.c.l.b16 %v531
    %v1701 = vunpack.c.h.b16 %v531
    %v1702 = vunpack.c.l.b16 %v532
    %v1703 = vunpack.c.h.b16 %v532
    %v1704 = vunpack.c.l.b16 %v533
    %v1705 = vunpack.c.h.b16 %v533
    %v1706 = vunpack.c.l.b16 %v534
    %v1707 = vunpack.c.h.b16 %v534
    %v1708 = vunpack.c.l.b16 %v535
    %v1709 = vunpack.c.h.b16 %v535
    %v1710 = vunpack.c.l.b16 %v536
    %v1711 = vunpack.c.h.b16 %v536
    %v1712 = vunpack.c.l.b16 %v537
    %v1713 = vunpack.c.h.b16 %v537
    %v1714 = vunpack.c.l.b16 %v538
    %v1715 = vunpack.c.h.b16 %v538
    %v1716 = vunpack.c.l.b16 %v539
    %v1717 = vunpack.c.h.b16 %v539
    %v1718 = vunpack.c.l.b16 %v540
    %v1719 = vunpack.c.h.b16 %v540
    %v1720 = vunpack.c.l.b16 %v541
    %v1721 = vunpack.c.h.b16 %v541
    %v1722 = vunpack.c.l.b16 %v542
    %v1723 = vunpack.c.h.b16 %v542
    %v1724 = vunpack.c.l.b16 %v543
    %v1725 = vunpack.c.h.b16 %v543
    %v1726 = vunpack.c.l.b16 %v544
    %v1727 = vunpack.c.h.b16 %v544
    %v1728 = vunpack.c.l.b16 %v545
    %v1729 = vunpack.c.h.b16 %v545
    %v1730 = vpack.c.b16 %v968, %v962
    %v1731 = vpack.c.b16 %v969, %v963
    %v1732 = vpack.c.b16 %v970, %v964
    %v1733 = vpack.c.b16 %v971, %v965
    %v1734 = vpack.c.b16 %v972, %v966
    %v1735 = vpack.c.b16 %v973, %v967
    %v1736 = vpack.c.b16 %v980, %v974
    %v1737 = vpack.c.b16 %v981, %v975
    %v1738 = vpack.c.b16 %v982, %v976
    %v1739 = vpack.c.b16 %v983, %v977
    %v1740 = vpack.c.b16 %v984, %v978
    %v1741 = vpack.c.b16 %v985, %v979
    %v1742 = vpack.c.b16 %v992, %v986
    %v1743 = vpack.c.b16 %v993, %v987
    %v1744 = vpack.c.b16 %v994, %v988
    %v1745 = vpack.c.b16 %v995, %v989
    %v1746 = vpack.c.b16 %v996, %v990
    %v1747 = vpack.c.b16 %v997, %v991
    %v1748 = vpack.c.b16 %v1004, %v998
    %v1749 = vpack.c.b16 %v1005, %v999
    %v1750 = vpack.c.b16 %v1006, %v1000
    %v1751 = vpack.c.b16 %v1007, %v1001
    %v1752 = vpack.c.b16 %v1008, %v1002
    %v1753 = vpack.c.b16 %v1009, %v1003
    %v1754 = vpack.c.b16 %v1016, %v1010
    %v1755 = vpack.c.b16 %v1017, %v1011
    %v1756 = vpack.c.b16 %v1018, %v1012
    %v1757 = vpack.c.b16 %v1019, %v1013
    %v1758 = vpack.c.b16 %v1020, %v1014
    %v1759 = vpack.c.b16 %v1021, %v1015
    %v1760 = vpack.c.b16 %v1028, %v1022
    %v1761 = vpack.c.b16 %v1029, %v1023
    %v1762 = vpack.c.b16 %v1030, %v1024
    %v1763 = vpack.c.b16 %v1031, %v1025
    %v1764 = vpack.c.b16 %v1032, %v1026
    %v1765 = vpack.c.b16 %v1033, %v1027
    %v1766 = vpack.c.b16 %v1040, %v1034
    %v1767 = vpack.c.b16 %v1041, %v1035
    %v1768 = vpack.c.b16 %v1042, %v1036
    %v1769 = vpack.c.b16 %v1043, %v1037
    %v1770 = vpack.c.b16 %v1044, %v1038
    %v1771 = vpack.c.b16 %v1045, %v1039
    %v1772 = vpack.c.b16 %v1052, %v1046
    %v1773 = vpack.c.b16 %v1053, %v1047
    %v1774 = vpack.c.b16 %v1054, %v1048
    %v1775 = vpack.c.b16 %v1055, %v1049
    %v1776 = vpack.c.b16 %v1056, %v1050
    %v1777 = vpack.c.b16 %v1057, %v1051
    %v1778 = vpack.c.b16 %v1064, %v1058
    %v1779 = vpack.c.b16 %v1065, %v1059
    %v1780 = vpack.c.b16 %v1066, %v1060
    %v1781 = vpack.c.b16 %v1067, %v1061
    %v1782 = vpack.c.b16 %v1068, %v1062
    %v1783 = vpack.c.b16 %v1069, %v1063
    %v1784 = vpack.c.b16 %v1076, %v1070
    %v1785 = vpack.c.b16 %v1077, %v1071
    %v1786 = vpack.c.b16 %v1078, %v1072
    %v1787 = vpack.c.b16 %v1079, %v1073
    %v1788 = vpack.c.b16 %v1080, %v1074
    %v1789 = vpack.c.b16 %v1081, %v1075
    %v1790 = vpack.c.b16 %v1088, %v1082
    %v1791 = vpack.c.b16 %v1089, %v1083
    %v1792 = vpack.c.b16 %v1090, %v1084
    %v1793 = vpack.c.b16 %v1091, %v1085
    %v1794 = vpack.c.b16 %v1092, %v1086
    %v1795 = vpack.c.b16 %v1093, %v1087
    %v1796 = vpack.c.b16 %v1100, %v1094
    %v1797 = vpack.c.b16 %v1101, %v1095
    %v1798 = vpack.c.b16 %v1102, %v1096
    %v1799 = vpack.c.b16 %v1103, %v1097
    %v1800 = vpack.c.b16 %v1104, %v1098
    %v1801 = vpack.c.b16 %v1105, %v1099
    %v1802 = vpack.c.b16 %v1112, %v1106
    %v1803 = vpack.c.b16 %v1113, %v1107
    %v1804 = vpack.c.b16 %v1114, %v1108
    %v1805 = vpack.c.b16 %v1115, %v1109
    %v1806 = vpack.c.b16 %v1116, %v1110
    %v1807 = vpack.c.b16 %v1117, %v1111
    %v1808 = vpack.c.b16 %v1124, %v1118
    %v1809 = vpack.c.b16 %v1125, %v1119
    %v1810 = vpack.c.b16 %v1126, %v1120
    %v1811 = vpack.c.b16 %v1127, %v1121
    %v1812 = vpack.c.b16 %v1128, %v1122
    %v1813 = vpack.c.b16 %v1129, %v1123
    %v1814 = vpack.c.b16 %v1136, %v1130
    %v1815 = vpack.c.b16 %v1137, %v1131
    %v1816 = vpack.c.b16 %v1138, %v1132
    %v1817 = vpack.c.b16 %v1139, %v1133
    %v1818 = vpack.c.b16 %v1140, %v1134
    %v1819 = vpack.c.b16 %v1141, %v1135
    %v1820 = vpack.c.b16 %v1148, %v1142
    %v1821 = vpack.c.b16 %v1149, %v1143
    %v1822 = vpack.c.b16 %v1150, %v1144
    %v1823 = vpack.c.b16 %v1151, %v1145
    %v1824 = vpack.c.b16 %v1152, %v1146
    %v1825 = vpack.c.b16 %v1153, %v1147
    %v1826 = vpack.c.b16 %v1160, %v1154
    %v1827 = vpack.c.b16 %v1161, %v1155
    %v1828 = vpack.c.b16 %v1162, %v1156
    %v1829 = vpack.c.b16 %v1163, %v1157
    %v1830 = vpack.c.b16 %v1164, %v1158
    %v1831 = vpack.c.b16 %v1165, %v1159
    %v1832 = vpack.c.b16 %v1172, %v1166
    %v1833 = vpack.c.b16 %v1173, %v1167
    %v1834 = vpack.c.b16 %v1174, %v1168
    %v1835 = vpack.c.b16 %v1175, %v1169
    %v1836 = vpack.c.b16 %v1176, %v1170
    %v1837 = vpack.c.b16 %v1177, %v1171
    %v1838 = vpack.c.b16 %v1184, %v1178
    %v1839 = vpack.c.b16 %v1185, %v1179
    %v1840 = vpack.c.b16 %v1186, %v1180
    %v1841 = vpack.c.b16 %v1187, %v1181
    %v1842 = vpack.c.b16 %v1188, %v1182
    %v1843 = vpack.c.b16 %v1189, %v1183
    %v1844 = vpack.c.b16 %v1196, %v1190
    %v1845 = vpack.c.b16 %v1197, %v1191
    %v1846 = vpack.c.b16 %v1198, %v1192
    %v1847 = vpack.c.b16 %v1199, %v1193
    %v1848 = vpack.c.b16 %v1200, %v1194
    %v1849 = vpack.c.b16 %v1201, %v1195
    %v1850 = vpack.c.b16 %v1208, %v1202
    %v1851 = vpack.c.b16 %v1209, %v1203
    %v1852 = vpack.c.b16 %v1210, %v1204
    %v1853 = vpack.c.b16 %v1211, %v1205
    %v1854 = vpack.c.b16 %v1212, %v1206
    %v1855 = vpack.c.b16 %v1213, %v1207
    %v1856 = vpack.c.b16 %v1220, %v1214
    %v1857 = vpack.c.b16 %v1221, %v1215
    %v1858 = vpack.c.b16 %v1222, %v1216
    %v1859 = vpack.c.b16 %v1223, %v1217
    %v1860 = vpack.c.b16 %v1224, %v1218
    %v1861 = vpack.c.b16 %v1225, %v1219
    %v1862 = vpack.c.b16 %v1232, %v1226
    %v1863 = vpack.c.b16 %v1233, %v1227
    %v1864 = vpack.c.b16 %v1234, %v1228
    %v1865 = vpack.c.b16 %v1235, %v1229
    %v1866 = vpack.c.b16 %v1236, %v1230
    %v1867 = vpack.c.b16 %v1237, %v1231
    %v1868 = vpack.c.b16 %v1244, %v1238
    %v1869 = vpack.c.b16 %v1245, %v1239
    %v1870 = vpack.c.b16 %v1246, %v1240
    %v1871 = vpack.c.b16 %v1247, %v1241
    %v1872 = vpack.c.b16 %v1248, %v1242
    %v1873 = vpack.c.b16 %v1249, %v1243
    %v1874 = vpack.c.b16 %v1256, %v1250
    %v1875 = vpack.c.b16 %v1257, %v1251
    %v1876 = vpack.c.b16 %v1258, %v1252
    %v1877 = vpack.c.b16 %v1259, %v1253
    %v1878 = vpack.c.b16 %v1260, %v1254
    %v1879 = vpack.c.b16 %v1261, %v1255
    %v1880 = vpack.c.b16 %v1268, %v1262
    %v1881 = vpack.c.b16 %v1269, %v1263
    %v1882 = vpack.c.b16 %v1270, %v1264
    %v1883 = vpack.c.b16 %v1271, %v1265
    %v1884 = vpack.c.b16 %v1272, %v1266
    %v1885 = vpack.c.b16 %v1273, %v1267
    %v1886 = vpack.c.b16 %v1280, %v1274
    %v1887 = vpack.c.b16 %v1281, %v1275
    %v1888 = vpack.c.b16 %v1282, %v1276
    %v1889 = vpack.c.b16 %v1283, %v1277
    %v1890 = vpack.c.b16 %v1284, %v1278
    %v1891 = vpack.c.b16 %v1285, %v1279
    %v1892 = vpack.c.b16 %v1292, %v1286
    %v1893 = vpack.c.b16 %v1293, %v1287
    %v1894 = vpack.c.b16 %v1294, %v1288
    %v1895 = vpack.c.b16 %v1295, %v1289
    %v1896 = vpack.c.b16 %v1296, %v1290
    %v1897 = vpack.c.b16 %v1297, %v1291
    %v1898 = vpack.c.b16 %v1304, %v1298
    %v1899 = vpack.c.b16 %v1305, %v1299
    %v1900 = vpack.c.b16 %v1306, %v1300
    %v1901 = vpack.c.b16 %v1307, %v1301
    %v1902 = vpack.c.b16 %v1308, %v1302
    %v1903 = vpack.c.b16 %v1309, %v1303
    %v1904 = vpack.c.b16 %v1316, %v1310
    %v1905 = vpack.c.b16 %v1317, %v1311
    %v1906 = vpack.c.b16 %v1318, %v1312
    %v1907 = vpack.c.b16 %v1319, %v1313
    %v1908 = vpack.c.b16 %v1320, %v1314
    %v1909 = vpack.c.b16 %v1321, %v1315
    %v1910 = vpack.c.b16 %v1328, %v1322
    %v1911 = vpack.c.b16 %v1329, %v1323
    %v1912 = vpack.c.b16 %v1330, %v1324
    %v1913 = vpack.c.b16 %v1331, %v1325
    %v1914 = vpack.c.b16 %v1332, %v1326
    %v1915 = vpack.c.b16 %v1333, %v1327
    %v1916 = vpack.c.b16 %v1340, %v1334
    %v1917 = vpack.c.b16 %v1341, %v1335
    %v1918 = vpack.c.b16 %v1342, %v1336
    %v1919 = vpack.c.b16 %v1343, %v1337
    %v1920 = vpack.c.b16 %v1344, %v1338
    %v1921 = vpack.c.b16 %v1345, %v1339
    %v1922 = vpack.c.b16 %v1352, %v1346
    %v1923 = vpack.c.b16 %v1353, %v1347
    %v1924 = vpack.c.b16 %v1354, %v1348
    %v1925 = vpack.c.b16 %v1355, %v1349
    %v1926 = vpack.c.b16 %v1356, %v1350
    %v1927 = vpack.c.b16 %v1357, %v1351
    %v1928 = vpack.c.b16 %v1364, %v1358
    %v1929 = vpack.c.b16 %v1365, %v1359
    %v1930 = vpack.c.b16 %v1366, %v1360
    %v1931 = vpack.c.b16 %v1367, %v1361
    %v1932 = vpack.c.b16 %v1368, %v1362
    %v1933 = vpack.c.b16 %v1369, %v1363
    %v1934 = vpack.c.b16 %v1376, %v1370
    %v1935 = vpack.c.b16 %v1377, %v1371
    %v1936 = vpack.c.b16 %v1378, %v1372
    %v1937 = vpack.c.b16 %v1379, %v1373
    %v1938 = vpack.c.b16 %v1380, %v1374
    %v1939 = vpack.c.b16 %v1381, %v1375
    %v1940 = vpack.c.b16 %v1388, %v1382
    %v1941 = vpack.c.b16 %v1389, %v1383
    %v1942 = vpack.c.b16 %v1390, %v1384
    %v1943 = vpack.c.b16 %v1391, %v1385
    %v1944 = vpack.c.b16 %v1392, %v1386
    %v1945 = vpack.c.b16 %v1393, %v1387
    %v1946 = vpack.c.b16 %v1400, %v1394
    %v1947 = vpack.c.b16 %v1401, %v1395
    %v1948 = vpack.c.b16 %v1402, %v1396
    %v1949 = vpack.c.b16 %v1403, %v1397
    %v1950 = vpack.c.b16 %v1404, %v1398
    %v1951 = vpack.c.b16 %v1405, %v1399
    %v1952 = vpack.c.b16 %v1412, %v1406
    %v1953 = vpack.c.b16 %v1413, %v1407
    %v1954 = vpack.c.b16 %v1414, %v1408
    %v1955 = vpack.c.b16 %v1415, %v1409
    %v1956 = vpack.c.b16 %v1416, %v1410
    %v1957 = vpack.c.b16 %v1417, %v1411
    %v1958 = vpack.c.b16 %v1424, %v1418
    %v1959 = vpack.c.b16 %v1425, %v1419
    %v1960 = vpack.c.b16 %v1426, %v1420
    %v1961 = vpack.c.b16 %v1427, %v1421
    %v1962 = vpack.c.b16 %v1428, %v1422
    %v1963 = vpack.c.b16 %v1429, %v1423
    %v1964 = vpack.c.b16 %v1436, %v1430
    %v1965 = vpack.c.b16 %v1437, %v1431
    %v1966 = vpack.c.b16 %v1438, %v1432
    %v1967 = vpack.c.b16 %v1439, %v1433
    %v1968 = vpack.c.b16 %v1440, %v1434
    %v1969 = vpack.c.b16 %v1441, %v1435
    %v1970 = vpack.c.b16 %v1448, %v1442
    %v1971 = vpack.c.b16 %v1449, %v1443
    %v1972 = vpack.c.b16 %v1450, %v1444
    %v1973 = vpack.c.b16 %v1451, %v1445
    %v1974 = vpack.c.b16 %v1452, %v1446
    %v1975 = vpack.c.b16 %v1453, %v1447
    %v1976 = vpack.c.b16 %v1460, %v1454
    %v1977 = vpack.c.b16 %v1461, %v1455
    %v1978 = vpack.c.b16 %v1462, %v1456
    %v1979 = vpack.c.b16 %v1463, %v1457
    %v1980 = vpack.c.b16 %v1464, %v1458
    %v1981 = vpack.c.b16 %v1465, %v1459
    %v1982 = vpack.c.b16 %v1472, %v1466
    %v1983 = vpack.c.b16 %v1473, %v1467
    %v1984 = vpack.c.b16 %v1474, %v1468
    %v1985 = vpack.c.b16 %v1475, %v1469
    %v1986 = vpack.c.b16 %v1476, %v1470
    %v1987 = vpack.c.b16 %v1477, %v1471
    %v1988 = vpack.c.b16 %v1484, %v1478
    %v1989 = vpack.c.b16 %v1485, %v1479
    %v1990 = vpack.c.b16 %v1486, %v1480
    %v1991 = vpack.c.b16 %v1487, %v1481
    %v1992 = vpack.c.b16 %v1488, %v1482
    %v1993 = vpack.c.b16 %v1489, %v1483
    %v1994 = vpack.c.b16 %v1496, %v1490
    %v1995 = vpack.c.b16 %v1497, %v1491
    %v1996 = vpack.c.b16 %v1498, %v1492
    %v1997 = vpack.c.b16 %v1499, %v1493
    %v1998 = vpack.c.b16 %v1500, %v1494
    %v1999 = vpack.c.b16 %v1501, %v1495
    %v2000 = vpack.c.b16 %v1508, %v1502
    %v2001 = vpack.c.b16 %v1509, %v1503
    %v2002 = vpack.c.b16 %v1510, %v1504
    %v2003 = vpack.c.b16 %v1511, %v1505
    %v2004 = vpack.c.b16 %v1512, %v1506
    %v2005 = vpack.c.b16 %v1513, %v1507
    %v2006 = vpack.c.b16 %v1520, %v1514
    %v2007 = vpack.c.b16 %v1521, %v1515
    %v2008 = vpack.c.b16 %v1522, %v1516
    %v2009 = vpack.c.b16 %v1523, %v1517
    %v2010 = vpack.c.b16 %v1524, %v1518
    %v2011 = vpack.c.b16 %v1525, %v1519
    %v2012 = vpack.c.b16 %v1532, %v1526
    %v2013 = vpack.c.b16 %v1533, %v1527
    %v2014 = vpack.c.b16 %v1534, %v1528
    %v2015 = vpack.c.b16 %v1535, %v1529
    %v2016 = vpack.c.b16 %v1536, %v1530
    %v2017 = vpack.c.b16 %v1537, %v1531
    %v2018 = vpack.c.b16 %v1544, %v1538
    %v2019 = vpack.c.b16 %v1545, %v1539
    %v2020 = vpack.c.b16 %v1546, %v1540
    %v2021 = vpack.c.b16 %v1547, %v1541
    %v2022 = vpack.c.b16 %v1548, %v1542
    %v2023 = vpack.c.b16 %v1549, %v1543
    %v2024 = vpack.c.b16 %v1556, %v1550
    %v2025 = vpack.c.b16 %v1557, %v1551
    %v2026 = vpack.c.b16 %v1558, %v1552
    %v2027 = vpack.c.b16 %v1559, %v1553
    %v2028 = vpack.c.b16 %v1560, %v1554
    %v2029 = vpack.c.b16 %v1561, %v1555
    %v2030 = vpack.c.b16 %v1568, %v1562
    %v2031 = vpack.c.b16 %v1569, %v1563
    %v2032 = vpack.c.b16 %v1570, %v1564
    %v2033 = vpack.c.b16 %v1571, %v1565
    %v2034 = vpack.c.b16 %v1572, %v1566
    %v2035 = vpack.c.b16 %v1573, %v1567
    %v2036 = vpack.c.b16 %v1580, %v1574
    %v2037 = vpack.c.b16 %v1581, %v1575
    %v2038 = vpack.c.b16 %v1582, %v1576
    %v2039 = vpack.c.b16 %v1583, %v1577
    %v2040 = vpack.c.b16 %v1584, %v1578
    %v2041 = vpack.c.b16 %v1585, %v1579
    %v2042 = vpack.c.b16 %v1592, %v1586
    %v2043 = vpack.c.b16 %v1593, %v1587
    %v2044 = vpack.c.b16 %v1594, %v1588
    %v2045 = vpack.c.b16 %v1595, %v1589
    %v2046 = vpack.c.b16 %v1596, %v1590
    %v2047 = vpack.c.b16 %v1597, %v1591
    %v2048 = vpack.c.b16 %v1604, %v1598
    %v2049 = vpack.c.b16 %v1605, %v1599
    %v2050 = vpack.c.b16 %v1606, %v1600
    %v2051 = vpack.c.b16 %v1607, %v1601
    %v2052 = vpack.c.b16 %v1608, %v1602
    %v2053 = vpack.c.b16 %v1609, %v1603
    %v2054 = vpack.c.b16 %v1616, %v1610
    %v2055 = vpack.c.b16 %v1617, %v1611
    %v2056 = vpack.c.b16 %v1618, %v1612
    %v2057 = vpack.c.b16 %v1619, %v1613
    %v2058 = vpack.c.b16 %v1620, %v1614
    %v2059 = vpack.c.b16 %v1621, %v1615
    %v2060 = vpack.c.b16 %v1628, %v1622
    %v2061 = vpack.c.b16 %v1629, %v1623
    %v2062 = vpack.c.b16 %v1630, %v1624
    %v2063 = vpack.c.b16 %v1631, %v1625
    %v2064 = vpack.c.b16 %v1632, %v1626
    %v2065 = vpack.c.b16 %v1633, %v1627
    %v2066 = vpack.c.b16 %v1640, %v1634
    %v2067 = vpack.c.b16 %v1641, %v1635
    %v2068 = vpack.c.b16 %v1642, %v1636
    %v2069 = vpack.c.b16 %v1643, %v1637
    %v2070 = vpack.c.b16 %v1644, %v1638
    %v2071 = vpack.c.b16 %v1645, %v1639
    %v2072 = vpack.c.b16 %v1652, %v1646
    %v2073 = vpack.c.b16 %v1653, %v1647
    %v2074 = vpack.c.b16 %v1654, %v1648
    %v2075 = vpack.c.b16 %v1655, %v1649
    %v2076 = vpack.c.b16 %v1656, %v1650
    %v2077 = vpack.c.b16 %v1657, %v1651
    %v2078 = vpack.c.b16 %v1664, %v1658
    %v2079 = vpack.c.b16 %v1665, %v1659
    %v2080 = vpack.c.b16 %v1666, %v1660
    %v2081 = vpack.c.b16 %v1667, %v1661
    %v2082 = vpack.c.b16 %v1668, %v1662
    %v2083 = vpack.c.b16 %v1669, %v1663
    %v2084 = vpack.c.b16 %v1676, %v1670
    %v2085 = vpack.c.b16 %v1677, %v1671
    %v2086 = vpack.c.b16 %v1678, %v1672
    %v2087 = vpack.c.b16 %v1679, %v1673
    %v2088 = vpack.c.b16 %v1680, %v1674
    %v2089 = vpack.c.b16 %v1681, %v1675
    %v2090 = vpack.c.b16 %v1688, %v1682
    %v2091 = vpack.c.b16 %v1689, %v1683
    %v2092 = vpack.c.b16 %v1690, %v1684
    %v2093 = vpack.c.b16 %v1691, %v1685
    %v2094 = vpack.c.b16 %v1692, %v1686
    %v2095 = vpack.c.b16 %v1693, %v1687
    %v2096 = vpack.c.b16 %v1700, %v1694
    %v2097 = vpack.c.b16 %v1701, %v1695
    %v2098 = vpack.c.b16 %v1702, %v1696
    %v2099 = vpack.c.b16 %v1703, %v1697
    %v2100 = vpack.c.b16 %v1704, %v1698
    %v2101 = vpack.c.b16 %v1705, %v1699
    %v2102 = vpack.c.b16 %v1712, %v1706
    %v2103 = vpack.c.b16 %v1713, %v1707
    %v2104 = vpack.c.b16 %v1714, %v1708
    %v2105 = vpack.c.b16 %v1715, %v1709
    %v2106 = vpack.c.b16 %v1716, %v1710
    %v2107 = vpack.c.b16 %v1717, %v1711
    %v2108 = vpack.c.b16 %v1724, %v1718
    %v2109 = vpack.c.b16 %v1725, %v1719
    %v2110 = vpack.c.b16 %v1726, %v1720
    %v2111 = vpack.c.b16 %v1727, %v1721
    %v2112 = vpack.c.b16 %v1728, %v1722
    %v2113 = vpack.c.b16 %v1729, %v1723
    %2498 = vmatprep.subr.bf16.mxu0 %v1773
    %2499 = vmatpush1.bf16.msra.mxu0 %v1772
    %2500 = vmatprep.subr.bf16.mxu0 %v1767
    %2501 = vmatpush1.bf16.msra.mxu0 %v1766
    %2502 = vmatprep.subr.bf16.mxu0 %v1761
    %2503 = vmatpush1.bf16.msra.mxu0 %v1760
    %2504 = vmatprep.subr.bf16.mxu0 %v1755
    %2505 = vmatpush1.bf16.msra.mxu0 %v1754
    %2506 = vmatprep.subr.bf16.mxu0 %v1749
    %2507 = vmatpush1.bf16.msra.mxu0 %v1748
    %2508 = vmatprep.subr.bf16.mxu0 %v1743
    %2509 = vmatpush1.bf16.msra.mxu0 %v1742
    %2510 = vmatprep.subr.bf16.mxu0 %v1737
    %2511 = vmatpush1.bf16.msra.mxu0 %v1736
    %2512 = vmatprep.subr.bf16.mxu0 %v1731
    %2513 = vmatpush1.bf16.msra.mxu0 %v1730
    %2514 = vmatprep.subr.bf16.mxu0 %v1821
    %2515 = vmatpush2.bf16.msra.mxu0 %v1820
    %2516 = vmatprep.subr.bf16.mxu0 %v1815
    %2517 = vmatpush2.bf16.msra.mxu0 %v1814
    %2518 = vmatprep.subr.bf16.mxu0 %v1809
    %2519 = vmatpush2.bf16.msra.mxu0 %v1808
    %2520 = vmatprep.subr.bf16.mxu0 %v1803
    %2521 = vmatpush2.bf16.msra.mxu0 %v1802
    %2522 = vmatprep.subr.bf16.mxu0 %v1797
    %2523 = vmatpush2.bf16.msra.mxu0 %v1796
    %2524 = vmatprep.subr.bf16.mxu0 %v1791
    %2525 = vmatpush2.bf16.msra.mxu0 %v1790
    %2526 = vmatprep.subr.bf16.mxu0 %v1785
    %2527 = vmatpush2.bf16.msra.mxu0 %v1784
    %2528 = vmatprep.subr.bf16.mxu0 %v1779
    %2529 = vmatpush2.bf16.msra.mxu0 %v1778
    %2530 = vmatprep.mubr.bf16.mxu0 %v155
    %2531 = vmatmul.mubr.bf16.gmra.mxu0 %v154
    %v2532 = vpop.f32.mrf.mxu0
    %v2533 = vadd.f32 %v551, %v2532
    %v2534 = vpop.f32.mrf.mxu0
    %v2535 = vadd.f32 %v555, %v2534
    %v2536 = vpop.f32.mrf.mxu0
    %v2537 = vpop.f32.mrf.mxu0
    %2538 = vdwg.mxu0
    %2539 = vmatprep.subr.bf16.mxu0 %v1869
    %2540 = vmatpush1.bf16.msra.mxu0 %v1868
    %2541 = vmatprep.subr.bf16.mxu0 %v1863
    %2542 = vmatpush1.bf16.msra.mxu0 %v1862
    %2543 = vmatprep.subr.bf16.mxu0 %v1857
    %2544 = vmatpush1.bf16.msra.mxu0 %v1856
    %2545 = vmatprep.subr.bf16.mxu0 %v1851
    %2546 = vmatpush1.bf16.msra.mxu0 %v1850
    %2547 = vmatprep.subr.bf16.mxu0 %v1845
    %2548 = vmatpush1.bf16.msra.mxu0 %v1844
    %2549 = vmatprep.subr.bf16.mxu0 %v1839
    %2550 = vmatpush1.bf16.msra.mxu0 %v1838
    %2551 = vmatprep.subr.bf16.mxu0 %v1833
    %2552 = vmatpush1.bf16.msra.mxu0 %v1832
    %2553 = vmatprep.subr.bf16.mxu0 %v1827
    %2554 = vmatpush1.bf16.msra.mxu0 %v1826
    %2555 = vmatprep.subr.bf16.mxu0 %v1917
    %2556 = vmatpush2.bf16.msra.mxu0 %v1916
    %2557 = vmatprep.subr.bf16.mxu0 %v1911
    %2558 = vmatpush2.bf16.msra.mxu0 %v1910
    %2559 = vmatprep.subr.bf16.mxu0 %v1905
    %2560 = vmatpush2.bf16.msra.mxu0 %v1904
    %2561 = vmatprep.subr.bf16.mxu0 %v1899
    %2562 = vmatpush2.bf16.msra.mxu0 %v1898
    %2563 = vmatprep.subr.bf16.mxu0 %v1893
    %2564 = vmatpush2.bf16.msra.mxu0 %v1892
    %2565 = vmatprep.subr.bf16.mxu0 %v1887
    %2566 = vmatpush2.bf16.msra.mxu0 %v1886
    %2567 = vmatprep.subr.bf16.mxu0 %v1881
    %2568 = vmatpush2.bf16.msra.mxu0 %v1880
    %2569 = vmatprep.subr.bf16.mxu0 %v1875
    %2570 = vmatpush2.bf16.msra.mxu0 %v1874
    %2571 = vmatprep.mubr.bf16.mxu0 %v157
    %2572 = vmatmul.mubr.bf16.gmra.mxu0 %v156
    %v2573 = vpop.f32.mrf.mxu0
    %v2574 = vadd.f32 %v2533, %v2573
    %v2575 = vpop.f32.mrf.mxu0
    %v2576 = vadd.f32 %v2535, %v2575
    %v2577 = vpop.f32.mrf.mxu0
    %v2578 = vpop.f32.mrf.mxu0
    %2579 = vdwg.mxu0
    %2580 = vmatprep.subr.bf16.mxu0 %v1965
    %2581 = vmatpush1.bf16.msra.mxu0 %v1964
    %2582 = vmatprep.subr.bf16.mxu0 %v1959
    %2583 = vmatpush1.bf16.msra.mxu0 %v1958
    %2584 = vmatprep.subr.bf16.mxu0 %v1953
    %2585 = vmatpush1.bf16.msra.mxu0 %v1952
    %2586 = vmatprep.subr.bf16.mxu0 %v1947
    %2587 = vmatpush1.bf16.msra.mxu0 %v1946
    %2588 = vmatprep.subr.bf16.mxu0 %v1941
    %2589 = vmatpush1.bf16.msra.mxu0 %v1940
    %2590 = vmatprep.subr.bf16.mxu0 %v1935
    %2591 = vmatpush1.bf16.msra.mxu0 %v1934
    %2592 = vmatprep.subr.bf16.mxu0 %v1929
    %2593 = vmatpush1.bf16.msra.mxu0 %v1928
    %2594 = vmatprep.subr.bf16.mxu0 %v1923
    %2595 = vmatpush1.bf16.msra.mxu0 %v1922
    %2596 = vmatprep.subr.bf16.mxu0 %v2013
    %2597 = vmatpush2.bf16.msra.mxu0 %v2012
    %2598 = vmatprep.subr.bf16.mxu0 %v2007
    %2599 = vmatpush2.bf16.msra.mxu0 %v2006
    %2600 = vmatprep.subr.bf16.mxu0 %v2001
    %2601 = vmatpush2.bf16.msra.mxu0 %v2000
    %2602 = vmatprep.subr.bf16.mxu0 %v1995
    %2603 = vmatpush2.bf16.msra.mxu0 %v1994
    %2604 = vmatprep.subr.bf16.mxu0 %v1989
    %2605 = vmatpush2.bf16.msra.mxu0 %v1988
    %2606 = vmatprep.subr.bf16.mxu0 %v1983
    %2607 = vmatpush2.bf16.msra.mxu0 %v1982
    %2608 = vmatprep.subr.bf16.mxu0 %v1977
    %2609 = vmatpush2.bf16.msra.mxu0 %v1976
    %2610 = vmatprep.subr.bf16.mxu0 %v1971
    %2611 = vmatpush2.bf16.msra.mxu0 %v1970
    %2612 = vmatprep.mubr.bf16.mxu0 %v159
    %2613 = vmatmul.mubr.bf16.gmra.mxu0 %v158
    %v2614 = vpop.f32.mrf.mxu0
    %v2615 = vadd.f32 %v2574, %v2614
    %v2616 = vpop.f32.mrf.mxu0
    %v2617 = vadd.f32 %v2576, %v2616
    %v2618 = vpop.f32.mrf.mxu0
    %v2619 = vpop.f32.mrf.mxu0
    %2620 = vdwg.mxu0
    %2621 = vmatprep.subr.bf16.mxu0 %v2061
    %2622 = vmatpush1.bf16.msra.mxu0 %v2060
    %2623 = vmatprep.subr.bf16.mxu0 %v2055
    %2624 = vmatpush1.bf16.msra.mxu0 %v2054
    %2625 = vmatprep.subr.bf16.mxu0 %v2049
    %2626 = vmatpush1.bf16.msra.mxu0 %v2048
    %2627 = vmatprep.subr.bf16.mxu0 %v2043
    %2628 = vmatpush1.bf16.msra.mxu0 %v2042
    %2629 = vmatprep.subr.bf16.mxu0 %v2037
    %2630 = vmatpush1.bf16.msra.mxu0 %v2036
    %2631 = vmatprep.subr.bf16.mxu0 %v2031
    %2632 = vmatpush1.bf16.msra.mxu0 %v2030
    %2633 = vmatprep.subr.bf16.mxu0 %v2025
    %2634 = vmatpush1.bf16.msra.mxu0 %v2024
    %2635 = vmatprep.subr.bf16.mxu0 %v2019
    %2636 = vmatpush1.bf16.msra.mxu0 %v2018
    %2637 = vmatprep.subr.bf16.mxu0 %v2109
    %2638 = vmatpush2.bf16.msra.mxu0 %v2108
    %2639 = vmatprep.subr.bf16.mxu0 %v2103
    %2640 = vmatpush2.bf16.msra.mxu0 %v2102
    %2641 = vmatprep.subr.bf16.mxu0 %v2097
    %2642 = vmatpush2.bf16.msra.mxu0 %v2096
    %2643 = vmatprep.subr.bf16.mxu0 %v2091
    %2644 = vmatpush2.bf16.msra.mxu0 %v2090
    %2645 = vmatprep.subr.bf16.mxu0 %v2085
    %2646 = vmatpush2.bf16.msra.mxu0 %v2084
    %2647 = vmatprep.subr.bf16.mxu0 %v2079
    %2648 = vmatpush2.bf16.msra.mxu0 %v2078
    %2649 = vmatprep.subr.bf16.mxu0 %v2073
    %2650 = vmatpush2.bf16.msra.mxu0 %v2072
    %2651 = vmatprep.subr.bf16.mxu0 %v2067
    %2652 = vmatpush2.bf16.msra.mxu0 %v2066
    %2653 = vmatprep.mubr.bf16.mxu0 %v161
    %2654 = vmatmul.mubr.bf16.gmra.mxu0 %v160
    %v2655 = vpop.f32.mrf.mxu0
    %v2656 = vadd.f32 %v2615, %v2655
    %v2657 = vpop.f32.mrf.mxu0
    %v2658 = vadd.f32 %v2617, %v2657
    %v2659 = vpop.f32.mrf.mxu0
    %v2660 = vpop.f32.mrf.mxu0
    %2661 = vdwg.mxu0
    %2662 = vmatprep.subr.bf16.mxu0 %v1775
    %2663 = vmatpush1.bf16.msra.mxu0 %v1774
    %2664 = vmatprep.subr.bf16.mxu0 %v1769
    %2665 = vmatpush1.bf16.msra.mxu0 %v1768
    %2666 = vmatprep.subr.bf16.mxu0 %v1763
    %2667 = vmatpush1.bf16.msra.mxu0 %v1762
    %2668 = vmatprep.subr.bf16.mxu0 %v1757
    %2669 = vmatpush1.bf16.msra.mxu0 %v1756
    %2670 = vmatprep.subr.bf16.mxu0 %v1751
    %2671 = vmatpush1.bf16.msra.mxu0 %v1750
    %2672 = vmatprep.subr.bf16.mxu0 %v1745
    %2673 = vmatpush1.bf16.msra.mxu0 %v1744
    %2674 = vmatprep.subr.bf16.mxu0 %v1739
    %2675 = vmatpush1.bf16.msra.mxu0 %v1738
    %2676 = vmatprep.subr.bf16.mxu0 %v1733
    %2677 = vmatpush1.bf16.msra.mxu0 %v1732
    %2678 = vmatprep.subr.bf16.mxu0 %v1823
    %2679 = vmatpush2.bf16.msra.mxu0 %v1822
    %2680 = vmatprep.subr.bf16.mxu0 %v1817
    %2681 = vmatpush2.bf16.msra.mxu0 %v1816
    %2682 = vmatprep.subr.bf16.mxu0 %v1811
    %2683 = vmatpush2.bf16.msra.mxu0 %v1810
    %2684 = vmatprep.subr.bf16.mxu0 %v1805
    %2685 = vmatpush2.bf16.msra.mxu0 %v1804
    %2686 = vmatprep.subr.bf16.mxu0 %v1799
    %2687 = vmatpush2.bf16.msra.mxu0 %v1798
    %2688 = vmatprep.subr.bf16.mxu0 %v1793
    %2689 = vmatpush2.bf16.msra.mxu0 %v1792
    %2690 = vmatprep.subr.bf16.mxu0 %v1787
    %2691 = vmatpush2.bf16.msra.mxu0 %v1786
    %2692 = vmatprep.subr.bf16.mxu0 %v1781
    %2693 = vmatpush2.bf16.msra.mxu0 %v1780
    %2694 = vmatprep.mubr.bf16.mxu0 %v155
    %2695 = vmatmul.mubr.bf16.gmra.mxu0 %v154
    %v2696 = vpop.f32.mrf.mxu0
    %v2697 = vadd.f32 %v559, %v2696
    %v2698 = vpop.f32.mrf.mxu0
    %v2699 = vadd.f32 %v563, %v2698
    %v2700 = vpop.f32.mrf.mxu0
    %v2701 = vpop.f32.mrf.mxu0
    %2702 = vdwg.mxu0
    %2703 = vmatprep.subr.bf16.mxu0 %v1871
    %2704 = vmatpush1.bf16.msra.mxu0 %v1870
    %2705 = vmatprep.subr.bf16.mxu0 %v1865
    %2706 = vmatpush1.bf16.msra.mxu0 %v1864
    %2707 = vmatprep.subr.bf16.mxu0 %v1859
    %2708 = vmatpush1.bf16.msra.mxu0 %v1858
    %2709 = vmatprep.subr.bf16.mxu0 %v1853
    %2710 = vmatpush1.bf16.msra.mxu0 %v1852
    %2711 = vmatprep.subr.bf16.mxu0 %v1847
    %2712 = vmatpush1.bf16.msra.mxu0 %v1846
    %2713 = vmatprep.subr.bf16.mxu0 %v1841
    %2714 = vmatpush1.bf16.msra.mxu0 %v1840
    %2715 = vmatprep.subr.bf16.mxu0 %v1835
    %2716 = vmatpush1.bf16.msra.mxu0 %v1834
    %2717 = vmatprep.subr.bf16.mxu0 %v1829
    %2718 = vmatpush1.bf16.msra.mxu0 %v1828
    %2719 = vmatprep.subr.bf16.mxu0 %v1919
    %2720 = vmatpush2.bf16.msra.mxu0 %v1918
    %2721 = vmatprep.subr.bf16.mxu0 %v1913
    %2722 = vmatpush2.bf16.msra.mxu0 %v1912
    %2723 = vmatprep.subr.bf16.mxu0 %v1907
    %2724 = vmatpush2.bf16.msra.mxu0 %v1906
    %2725 = vmatprep.subr.bf16.mxu0 %v1901
    %2726 = vmatpush2.bf16.msra.mxu0 %v1900
    %2727 = vmatprep.subr.bf16.mxu0 %v1895
    %2728 = vmatpush2.bf16.msra.mxu0 %v1894
    %2729 = vmatprep.subr.bf16.mxu0 %v1889
    %2730 = vmatpush2.bf16.msra.mxu0 %v1888
    %2731 = vmatprep.subr.bf16.mxu0 %v1883
    %2732 = vmatpush2.bf16.msra.mxu0 %v1882
    %2733 = vmatprep.subr.bf16.mxu0 %v1877
    %2734 = vmatpush2.bf16.msra.mxu0 %v1876
    %2735 = vmatprep.mubr.bf16.mxu0 %v157
    %2736 = vmatmul.mubr.bf16.gmra.mxu0 %v156
    %v2737 = vpop.f32.mrf.mxu0
    %v2738 = vadd.f32 %v2697, %v2737
    %v2739 = vpop.f32.mrf.mxu0
    %v2740 = vadd.f32 %v2699, %v2739
    %v2741 = vpop.f32.mrf.mxu0
    %v2742 = vpop.f32.mrf.mxu0
    %2743 = vdwg.mxu0
    %2744 = vmatprep.subr.bf16.mxu0 %v1967
    %2745 = vmatpush1.bf16.msra.mxu0 %v1966
    %2746 = vmatprep.subr.bf16.mxu0 %v1961
    %2747 = vmatpush1.bf16.msra.mxu0 %v1960
    %2748 = vmatprep.subr.bf16.mxu0 %v1955
    %2749 = vmatpush1.bf16.msra.mxu0 %v1954
    %2750 = vmatprep.subr.bf16.mxu0 %v1949
    %2751 = vmatpush1.bf16.msra.mxu0 %v1948
    %2752 = vmatprep.subr.bf16.mxu0 %v1943
    %2753 = vmatpush1.bf16.msra.mxu0 %v1942
    %2754 = vmatprep.subr.bf16.mxu0 %v1937
    %2755 = vmatpush1.bf16.msra.mxu0 %v1936
    %2756 = vmatprep.subr.bf16.mxu0 %v1931
    %2757 = vmatpush1.bf16.msra.mxu0 %v1930
    %2758 = vmatprep.subr.bf16.mxu0 %v1925
    %2759 = vmatpush1.bf16.msra.mxu0 %v1924
    %2760 = vmatprep.subr.bf16.mxu0 %v2015
    %2761 = vmatpush2.bf16.msra.mxu0 %v2014
    %2762 = vmatprep.subr.bf16.mxu0 %v2009
    %2763 = vmatpush2.bf16.msra.mxu0 %v2008
    %2764 = vmatprep.subr.bf16.mxu0 %v2003
    %2765 = vmatpush2.bf16.msra.mxu0 %v2002
    %2766 = vmatprep.subr.bf16.mxu0 %v1997
    %2767 = vmatpush2.bf16.msra.mxu0 %v1996
    %2768 = vmatprep.subr.bf16.mxu0 %v1991
    %2769 = vmatpush2.bf16.msra.mxu0 %v1990
    %2770 = vmatprep.subr.bf16.mxu0 %v1985
    %2771 = vmatpush2.bf16.msra.mxu0 %v1984
    %2772 = vmatprep.subr.bf16.mxu0 %v1979
    %2773 = vmatpush2.bf16.msra.mxu0 %v1978
    %2774 = vmatprep.subr.bf16.mxu0 %v1973
    %2775 = vmatpush2.bf16.msra.mxu0 %v1972
    %2776 = vmatprep.mubr.bf16.mxu0 %v159
    %2777 = vmatmul.mubr.bf16.gmra.mxu0 %v158
    %v2778 = vpop.f32.mrf.mxu0
    %v2779 = vadd.f32 %v2738, %v2778
    %v2780 = vpop.f32.mrf.mxu0
    %v2781 = vadd.f32 %v2740, %v2780
    %v2782 = vpop.f32.mrf.mxu0
    %v2783 = vpop.f32.mrf.mxu0
    %2784 = vdwg.mxu0
    %2785 = vmatprep.subr.bf16.mxu0 %v2063
    %2786 = vmatpush1.bf16.msra.mxu0 %v2062
    %2787 = vmatprep.subr.bf16.mxu0 %v2057
    %2788 = vmatpush1.bf16.msra.mxu0 %v2056
    %2789 = vmatprep.subr.bf16.mxu0 %v2051
    %2790 = vmatpush1.bf16.msra.mxu0 %v2050
    %2791 = vmatprep.subr.bf16.mxu0 %v2045
    %2792 = vmatpush1.bf16.msra.mxu0 %v2044
    %2793 = vmatprep.subr.bf16.mxu0 %v2039
    %2794 = vmatpush1.bf16.msra.mxu0 %v2038
    %2795 = vmatprep.subr.bf16.mxu0 %v2033
    %2796 = vmatpush1.bf16.msra.mxu0 %v2032
    %2797 = vmatprep.subr.bf16.mxu0 %v2027
    %2798 = vmatpush1.bf16.msra.mxu0 %v2026
    %2799 = vmatprep.subr.bf16.mxu0 %v2021
    %2800 = vmatpush1.bf16.msra.mxu0 %v2020
    %2801 = vmatprep.subr.bf16.mxu0 %v2111
    %2802 = vmatpush2.bf16.msra.mxu0 %v2110
    %2803 = vmatprep.subr.bf16.mxu0 %v2105
    %2804 = vmatpush2.bf16.msra.mxu0 %v2104
    %2805 = vmatprep.subr.bf16.mxu0 %v2099
    %2806 = vmatpush2.bf16.msra.mxu0 %v2098
    %2807 = vmatprep.subr.bf16.mxu0 %v2093
    %2808 = vmatpush2.bf16.msra.mxu0 %v2092
    %2809 = vmatprep.subr.bf16.mxu0 %v2087
    %2810 = vmatpush2.bf16.msra.mxu0 %v2086
    %2811 = vmatprep.subr.bf16.mxu0 %v2081
    %2812 = vmatpush2.bf16.msra.mxu0 %v2080
    %2813 = vmatprep.subr.bf16.mxu0 %v2075
    %2814 = vmatpush2.bf16.msra.mxu0 %v2074
    %2815 = vmatprep.subr.bf16.mxu0 %v2069
    %2816 = vmatpush2.bf16.msra.mxu0 %v2068
    %2817 = vmatprep.mubr.bf16.mxu0 %v161
    %2818 = vmatmul.mubr.bf16.gmra.mxu0 %v160
    %v2819 = vpop.f32.mrf.mxu0
    %v2820 = vadd.f32 %v2779, %v2819
    %v2821 = vpop.f32.mrf.mxu0
    %v2822 = vadd.f32 %v2781, %v2821
    %v2823 = vpop.f32.mrf.mxu0
    %v2824 = vpop.f32.mrf.mxu0
    %2825 = vdwg.mxu0
    %2826 = vmatprep.subr.bf16.mxu0 %v1777
    %2827 = vmatpush1.bf16.msra.mxu0 %v1776
    %2828 = vmatprep.subr.bf16.mxu0 %v1771
    %2829 = vmatpush1.bf16.msra.mxu0 %v1770
    %2830 = vmatprep.subr.bf16.mxu0 %v1765
    %2831 = vmatpush1.bf16.msra.mxu0 %v1764
    %2832 = vmatprep.subr.bf16.mxu0 %v1759
    %2833 = vmatpush1.bf16.msra.mxu0 %v1758
    %2834 = vmatprep.subr.bf16.mxu0 %v1753
    %2835 = vmatpush1.bf16.msra.mxu0 %v1752
    %2836 = vmatprep.subr.bf16.mxu0 %v1747
    %2837 = vmatpush1.bf16.msra.mxu0 %v1746
    %2838 = vmatprep.subr.bf16.mxu0 %v1741
    %2839 = vmatpush1.bf16.msra.mxu0 %v1740
    %2840 = vmatprep.subr.bf16.mxu0 %v1735
    %2841 = vmatpush1.bf16.msra.mxu0 %v1734
    %2842 = vmatprep.subr.bf16.mxu0 %v1825
    %2843 = vmatpush2.bf16.msra.mxu0 %v1824
    %2844 = vmatprep.subr.bf16.mxu0 %v1819
    %2845 = vmatpush2.bf16.msra.mxu0 %v1818
    %2846 = vmatprep.subr.bf16.mxu0 %v1813
    %2847 = vmatpush2.bf16.msra.mxu0 %v1812
    %2848 = vmatprep.subr.bf16.mxu0 %v1807
    %2849 = vmatpush2.bf16.msra.mxu0 %v1806
    %2850 = vmatprep.subr.bf16.mxu0 %v1801
    %2851 = vmatpush2.bf16.msra.mxu0 %v1800
    %2852 = vmatprep.subr.bf16.mxu0 %v1795
    %2853 = vmatpush2.bf16.msra.mxu0 %v1794
    %2854 = vmatprep.subr.bf16.mxu0 %v1789
    %2855 = vmatpush2.bf16.msra.mxu0 %v1788
    %2856 = vmatprep.subr.bf16.mxu0 %v1783
    %2857 = vmatpush2.bf16.msra.mxu0 %v1782
    %2858 = vmatprep.mubr.bf16.mxu0 %v155
    %2859 = vmatmul.mubr.bf16.gmra.mxu0 %v154
    %v2860 = vpop.f32.mrf.mxu0
    %v2861 = vadd.f32 %v567, %v2860
    %v2862 = vpop.f32.mrf.mxu0
    %v2863 = vadd.f32 %v571, %v2862
    %v2864 = vpop.f32.mrf.mxu0
    %v2865 = vpop.f32.mrf.mxu0
    %2866 = vdwg.mxu0
    %2867 = vmatprep.subr.bf16.mxu0 %v1873
    %2868 = vmatpush1.bf16.msra.mxu0 %v1872
    %2869 = vmatprep.subr.bf16.mxu0 %v1867
    %2870 = vmatpush1.bf16.msra.mxu0 %v1866
    %2871 = vmatprep.subr.bf16.mxu0 %v1861
    %2872 = vmatpush1.bf16.msra.mxu0 %v1860
    %2873 = vmatprep.subr.bf16.mxu0 %v1855
    %2874 = vmatpush1.bf16.msra.mxu0 %v1854
    %2875 = vmatprep.subr.bf16.mxu0 %v1849
    %2876 = vmatpush1.bf16.msra.mxu0 %v1848
    %2877 = vmatprep.subr.bf16.mxu0 %v1843
    %2878 = vmatpush1.bf16.msra.mxu0 %v1842
    %2879 = vmatprep.subr.bf16.mxu0 %v1837
    %2880 = vmatpush1.bf16.msra.mxu0 %v1836
    %2881 = vmatprep.subr.bf16.mxu0 %v1831
    %2882 = vmatpush1.bf16.msra.mxu0 %v1830
    %2883 = vmatprep.subr.bf16.mxu0 %v1921
    %2884 = vmatpush2.bf16.msra.mxu0 %v1920
    %2885 = vmatprep.subr.bf16.mxu0 %v1915
    %2886 = vmatpush2.bf16.msra.mxu0 %v1914
    %2887 = vmatprep.subr.bf16.mxu0 %v1909
    %2888 = vmatpush2.bf16.msra.mxu0 %v1908
    %2889 = vmatprep.subr.bf16.mxu0 %v1903
    %2890 = vmatpush2.bf16.msra.mxu0 %v1902
    %2891 = vmatprep.subr.bf16.mxu0 %v1897
    %2892 = vmatpush2.bf16.msra.mxu0 %v1896
    %2893 = vmatprep.subr.bf16.mxu0 %v1891
    %2894 = vmatpush2.bf16.msra.mxu0 %v1890
    %2895 = vmatprep.subr.bf16.mxu0 %v1885
    %2896 = vmatpush2.bf16.msra.mxu0 %v1884
    %2897 = vmatprep.subr.bf16.mxu0 %v1879
    %2898 = vmatpush2.bf16.msra.mxu0 %v1878
    %2899 = vmatprep.mubr.bf16.mxu0 %v157
    %2900 = vmatmul.mubr.bf16.gmra.mxu0 %v156
    %v2901 = vpop.f32.mrf.mxu0
    %v2902 = vadd.f32 %v2861, %v2901
    %v2903 = vpop.f32.mrf.mxu0
    %v2904 = vadd.f32 %v2863, %v2903
    %v2905 = vpop.f32.mrf.mxu0
    %v2906 = vpop.f32.mrf.mxu0
    %2907 = vdwg.mxu0
    %2908 = vmatprep.subr.bf16.mxu0 %v1969
    %2909 = vmatpush1.bf16.msra.mxu0 %v1968
    %2910 = vmatprep.subr.bf16.mxu0 %v1963
    %2911 = vmatpush1.bf16.msra.mxu0 %v1962
    %2912 = vmatprep.subr.bf16.mxu0 %v1957
    %2913 = vmatpush1.bf16.msra.mxu0 %v1956
    %2914 = vmatprep.subr.bf16.mxu0 %v1951
    %2915 = vmatpush1.bf16.msra.mxu0 %v1950
    %2916 = vmatprep.subr.bf16.mxu0 %v1945
    %2917 = vmatpush1.bf16.msra.mxu0 %v1944
    %2918 = vmatprep.subr.bf16.mxu0 %v1939
    %2919 = vmatpush1.bf16.msra.mxu0 %v1938
    %2920 = vmatprep.subr.bf16.mxu0 %v1933
    %2921 = vmatpush1.bf16.msra.mxu0 %v1932
    %2922 = vmatprep.subr.bf16.mxu0 %v1927
    %2923 = vmatpush1.bf16.msra.mxu0 %v1926
    %2924 = vmatprep.subr.bf16.mxu0 %v2017
    %2925 = vmatpush2.bf16.msra.mxu0 %v2016
    %2926 = vmatprep.subr.bf16.mxu0 %v2011
    %2927 = vmatpush2.bf16.msra.mxu0 %v2010
    %2928 = vmatprep.subr.bf16.mxu0 %v2005
    %2929 = vmatpush2.bf16.msra.mxu0 %v2004
    %2930 = vmatprep.subr.bf16.mxu0 %v1999
    %2931 = vmatpush2.bf16.msra.mxu0 %v1998
    %2932 = vmatprep.subr.bf16.mxu0 %v1993
    %2933 = vmatpush2.bf16.msra.mxu0 %v1992
    %2934 = vmatprep.subr.bf16.mxu0 %v1987
    %2935 = vmatpush2.bf16.msra.mxu0 %v1986
    %2936 = vmatprep.subr.bf16.mxu0 %v1981
    %2937 = vmatpush2.bf16.msra.mxu0 %v1980
    %2938 = vmatprep.subr.bf16.mxu0 %v1975
    %2939 = vmatpush2.bf16.msra.mxu0 %v1974
    %2940 = vmatprep.mubr.bf16.mxu0 %v159
    %2941 = vmatmul.mubr.bf16.gmra.mxu0 %v158
    %v2942 = vpop.f32.mrf.mxu0
    %v2943 = vadd.f32 %v2902, %v2942
    %v2944 = vpop.f32.mrf.mxu0
    %v2945 = vadd.f32 %v2904, %v2944
    %v2946 = vpop.f32.mrf.mxu0
    %v2947 = vpop.f32.mrf.mxu0
    %2948 = vdwg.mxu0
    %2949 = vmatprep.subr.bf16.mxu0 %v2065
    %2950 = vmatpush1.bf16.msra.mxu0 %v2064
    %2951 = vmatprep.subr.bf16.mxu0 %v2059
    %2952 = vmatpush1.bf16.msra.mxu0 %v2058
    %2953 = vmatprep.subr.bf16.mxu0 %v2053
    %2954 = vmatpush1.bf16.msra.mxu0 %v2052
    %2955 = vmatprep.subr.bf16.mxu0 %v2047
    %2956 = vmatpush1.bf16.msra.mxu0 %v2046
    %2957 = vmatprep.subr.bf16.mxu0 %v2041
    %2958 = vmatpush1.bf16.msra.mxu0 %v2040
    %2959 = vmatprep.subr.bf16.mxu0 %v2035
    %2960 = vmatpush1.bf16.msra.mxu0 %v2034
    %2961 = vmatprep.subr.bf16.mxu0 %v2029
    %2962 = vmatpush1.bf16.msra.mxu0 %v2028
    %2963 = vmatprep.subr.bf16.mxu0 %v2023
    %2964 = vmatpush1.bf16.msra.mxu0 %v2022
    %2965 = vmatprep.subr.bf16.mxu0 %v2113
    %2966 = vmatpush2.bf16.msra.mxu0 %v2112
    %2967 = vmatprep.subr.bf16.mxu0 %v2107
    %2968 = vmatpush2.bf16.msra.mxu0 %v2106
    %2969 = vmatprep.subr.bf16.mxu0 %v2101
    %2970 = vmatpush2.bf16.msra.mxu0 %v2100
    %2971 = vmatprep.subr.bf16.mxu0 %v2095
    %2972 = vmatpush2.bf16.msra.mxu0 %v2094
    %2973 = vmatprep.subr.bf16.mxu0 %v2089
    %2974 = vmatpush2.bf16.msra.mxu0 %v2088
    %2975 = vmatprep.subr.bf16.mxu0 %v2083
    %2976 = vmatpush2.bf16.msra.mxu0 %v2082
    %2977 = vmatprep.subr.bf16.mxu0 %v2077
    %2978 = vmatpush2.bf16.msra.mxu0 %v2076
    %2979 = vmatprep.subr.bf16.mxu0 %v2071
    %2980 = vmatpush2.bf16.msra.mxu0 %v2070
    %2981 = vmatprep.mubr.bf16.mxu0 %v161
    %2982 = vmatmul.mubr.bf16.gmra.mxu0 %v160
    %v2983 = vpop.f32.mrf.mxu0
    %v2984 = vadd.f32 %v2943, %v2983
    %v2985 = vpop.f32.mrf.mxu0
    %v2986 = vadd.f32 %v2945, %v2985
    %v2987 = vpop.f32.mrf.mxu0
    %v2988 = vpop.f32.mrf.mxu0
    %2989 = vdwg.mxu0
    %v2990 = vmax.f32 %v2656, 0.0
    %v2991 = vmax.f32 %v2658, 0.0
    %v2992 = vmax.f32 %v2820, 0.0
    %v2993 = vmax.f32 %v2822, 0.0
    %v2994 = vmax.f32 %v2984, 0.0
    %v2995 = vmax.f32 %v2986, 0.0
    %v2996 = vpack.c.bf16 %v2990, %v2990
    %v2997 = vpack.c.bf16 %v2991, %v2991
    %v2998 = vpack.c.bf16 %v2992, %v2992
    %v2999 = vpack.c.bf16 %v2993, %v2993
    %v3000 = vpack.c.bf16 %v2994, %v2994
    %v3001 = vpack.c.bf16 %v2995, %v2995
    %v3002 = vld [vmem:[#allocation8] sm:$0xff]
    %v3003 = vld [vmem:[#allocation8 + $0x8] sm:$0xff]
    %v3004 = vld [vmem:[#allocation8 + $0x10] sm:$0xff]
    %v3005 = vld [vmem:[#allocation8 + $0x18] sm:$0xff]
    %v3006 = vld [vmem:[#allocation8 + $0x20] sm:$0xff]
    %v3007 = vld [vmem:[#allocation8 + $0x28] sm:$0xff]
    %v3008 = vld [vmem:[#allocation8 + $0x30] sm:$0xff]
    %v3009 = vld [vmem:[#allocation8 + $0x38] sm:$0xff]
    %v3010 = vld [vmem:[#allocation8 + $0x40] sm:$0xff]
    %v3011 = vld [vmem:[#allocation8 + $0x48] sm:$0xff]
    %v3012 = vld [vmem:[#allocation8 + $0x50] sm:$0xff]
    %v3013 = vld [vmem:[#allocation8 + $0x58] sm:$0xff]
    %v3014 = vld [vmem:[#allocation8 + $0x60] sm:$0xff]
    %v3015 = vld [vmem:[#allocation8 + $0x68] sm:$0xff]
    %v3016 = vld [vmem:[#allocation8 + $0x70] sm:$0xff]
    %v3017 = vld [vmem:[#allocation8 + $0x78] sm:$0xff]
    %v3018 = vld [vmem:[#allocation8 + $0x80] sm:$0xff]
    %v3019 = vld [vmem:[#allocation8 + $0x88] sm:$0xff]
    %v3020 = vld [vmem:[#allocation8 + $0x90] sm:$0xff]
    %v3021 = vld [vmem:[#allocation8 + $0x98] sm:$0xff]
    %v3022 = vld [vmem:[#allocation8 + $0xa0] sm:$0xff]
    %v3023 = vld [vmem:[#allocation8 + $0xa8] sm:$0xff]
    %v3024 = vld [vmem:[#allocation8 + $0xb0] sm:$0xff]
    %v3025 = vld [vmem:[#allocation8 + $0xb8] sm:$0xff]
    %v3026 = vld [vmem:[#allocation8 + $0xc0] sm:$0xff]
    %v3027 = vld [vmem:[#allocation8 + $0xc8] sm:$0xff]
    %v3028 = vld [vmem:[#allocation8 + $0xd0] sm:$0xff]
    %v3029 = vld [vmem:[#allocation8 + $0xd8] sm:$0xff]
    %v3030 = vld [vmem:[#allocation8 + $0xe0] sm:$0xff]
    %v3031 = vld [vmem:[#allocation8 + $0xe8] sm:$0xff]
    %v3032 = vld [vmem:[#allocation8 + $0xf0] sm:$0xff]
    %v3033 = vld [vmem:[#allocation8 + $0xf8] sm:$0xff]
    %v3034 = vld [vmem:[#allocation8 + $0x100] sm:$0xff]
    %v3035 = vld [vmem:[#allocation8 + $0x108] sm:$0xff]
    %v3036 = vld [vmem:[#allocation8 + $0x110] sm:$0xff]
    %v3037 = vld [vmem:[#allocation8 + $0x118] sm:$0xff]
    %v3038 = vld [vmem:[#allocation8 + $0x120] sm:$0xff]
    %v3039 = vld [vmem:[#allocation8 + $0x128] sm:$0xff]
    %v3040 = vld [vmem:[#allocation8 + $0x130] sm:$0xff]
    %v3041 = vld [vmem:[#allocation8 + $0x138] sm:$0xff]
    %v3042 = vld [vmem:[#allocation8 + $0x140] sm:$0xff]
    %v3043 = vld [vmem:[#allocation8 + $0x148] sm:$0xff]
    %v3044 = vld [vmem:[#allocation8 + $0x150] sm:$0xff]
    %v3045 = vld [vmem:[#allocation8 + $0x158] sm:$0xff]
    %v3046 = vld [vmem:[#allocation8 + $0x160] sm:$0xff]
    %v3047 = vld [vmem:[#allocation8 + $0x168] sm:$0xff]
    %v3048 = vld [vmem:[#allocation8 + $0x170] sm:$0xff]
    %v3049 = vld [vmem:[#allocation8 + $0x178] sm:$0xff]
    %v3050 = vld [vmem:[#allocation8 + $0x180] sm:$0xff]
    %v3051 = vld [vmem:[#allocation8 + $0x188] sm:$0xff]
    %v3052 = vld [vmem:[#allocation8 + $0x190] sm:$0xff]
    %v3053 = vld [vmem:[#allocation8 + $0x198] sm:$0xff]
    %v3054 = vld [vmem:[#allocation8 + $0x1a0] sm:$0xff]
    %v3055 = vld [vmem:[#allocation8 + $0x1a8] sm:$0xff]
    %v3056 = vld [vmem:[#allocation8 + $0x1b0] sm:$0xff]
    %v3057 = vld [vmem:[#allocation8 + $0x1b8] sm:$0xff]
    %v3058 = vld [vmem:[#allocation8 + $0x1c0] sm:$0xff]
    %v3059 = vld [vmem:[#allocation8 + $0x1c8] sm:$0xff]
    %v3060 = vld [vmem:[#allocation8 + $0x1d0] sm:$0xff]
    %v3061 = vld [vmem:[#allocation8 + $0x1d8] sm:$0xff]
    %v3062 = vld [vmem:[#allocation8 + $0x1e0] sm:$0xff]
    %v3063 = vld [vmem:[#allocation8 + $0x1e8] sm:$0xff]
    %v3064 = vld [vmem:[#allocation8 + $0x1f0] sm:$0xff]
    %v3065 = vld [vmem:[#allocation8 + $0x1f8] sm:$0xff]
    %v3066 = vld [vmem:[#allocation8 + $0x200] sm:$0xff]
    %v3067 = vld [vmem:[#allocation8 + $0x208] sm:$0xff]
    %v3068 = vld [vmem:[#allocation8 + $0x210] sm:$0xff]
    %v3069 = vld [vmem:[#allocation8 + $0x218] sm:$0xff]
    %v3070 = vld [vmem:[#allocation8 + $0x220] sm:$0xff]
    %v3071 = vld [vmem:[#allocation8 + $0x228] sm:$0xff]
    %v3072 = vld [vmem:[#allocation8 + $0x230] sm:$0xff]
    %v3073 = vld [vmem:[#allocation8 + $0x238] sm:$0xff]
    %v3074 = vld [vmem:[#allocation8 + $0x240] sm:$0xff]
    %v3075 = vld [vmem:[#allocation8 + $0x248] sm:$0xff]
    %v3076 = vld [vmem:[#allocation8 + $0x250] sm:$0xff]
    %v3077 = vld [vmem:[#allocation8 + $0x258] sm:$0xff]
    %v3078 = vld [vmem:[#allocation8 + $0x260] sm:$0xff]
    %v3079 = vld [vmem:[#allocation8 + $0x268] sm:$0xff]
    %v3080 = vld [vmem:[#allocation8 + $0x270] sm:$0xff]
    %v3081 = vld [vmem:[#allocation8 + $0x278] sm:$0xff]
    %v3082 = vld [vmem:[#allocation8 + $0x280] sm:$0xff]
    %v3083 = vld [vmem:[#allocation8 + $0x288] sm:$0xff]
    %v3084 = vld [vmem:[#allocation8 + $0x290] sm:$0xff]
    %v3085 = vld [vmem:[#allocation8 + $0x298] sm:$0xff]
    %v3086 = vld [vmem:[#allocation8 + $0x2a0] sm:$0xff]
    %v3087 = vld [vmem:[#allocation8 + $0x2a8] sm:$0xff]
    %v3088 = vld [vmem:[#allocation8 + $0x2b0] sm:$0xff]
    %v3089 = vld [vmem:[#allocation8 + $0x2b8] sm:$0xff]
    %v3090 = vld [vmem:[#allocation8 + $0x2c0] sm:$0xff]
    %v3091 = vld [vmem:[#allocation8 + $0x2c8] sm:$0xff]
    %v3092 = vld [vmem:[#allocation8 + $0x2d0] sm:$0xff]
    %v3093 = vld [vmem:[#allocation8 + $0x2d8] sm:$0xff]
    %v3094 = vld [vmem:[#allocation8 + $0x2e0] sm:$0xff]
    %v3095 = vld [vmem:[#allocation8 + $0x2e8] sm:$0xff]
    %v3096 = vld [vmem:[#allocation8 + $0x2f0] sm:$0xff]
    %v3097 = vld [vmem:[#allocation8 + $0x2f8] sm:$0xff]
    %v3098 = vld [vmem:[#allocation8 + $0x300] sm:$0xff]
    %v3099 = vld [vmem:[#allocation8 + $0x308] sm:$0xff]
    %v3100 = vld [vmem:[#allocation8 + $0x310] sm:$0xff]
    %v3101 = vld [vmem:[#allocation8 + $0x318] sm:$0xff]
    %v3102 = vld [vmem:[#allocation8 + $0x320] sm:$0xff]
    %v3103 = vld [vmem:[#allocation8 + $0x328] sm:$0xff]
    %v3104 = vld [vmem:[#allocation8 + $0x330] sm:$0xff]
    %v3105 = vld [vmem:[#allocation8 + $0x338] sm:$0xff]
    %v3106 = vld [vmem:[#allocation8 + $0x340] sm:$0xff]
    %v3107 = vld [vmem:[#allocation8 + $0x348] sm:$0xff]
    %v3108 = vld [vmem:[#allocation8 + $0x350] sm:$0xff]
    %v3109 = vld [vmem:[#allocation8 + $0x358] sm:$0xff]
    %v3110 = vld [vmem:[#allocation8 + $0x360] sm:$0xff]
    %v3111 = vld [vmem:[#allocation8 + $0x368] sm:$0xff]
    %v3112 = vld [vmem:[#allocation8 + $0x370] sm:$0xff]
    %v3113 = vld [vmem:[#allocation8 + $0x378] sm:$0xff]
    %v3114 = vld [vmem:[#allocation8 + $0x380] sm:$0xff]
    %v3115 = vld [vmem:[#allocation8 + $0x388] sm:$0xff]
    %v3116 = vld [vmem:[#allocation8 + $0x390] sm:$0xff]
    %v3117 = vld [vmem:[#allocation8 + $0x398] sm:$0xff]
    %v3118 = vld [vmem:[#allocation8 + $0x3a0] sm:$0xff]
    %v3119 = vld [vmem:[#allocation8 + $0x3a8] sm:$0xff]
    %v3120 = vld [vmem:[#allocation8 + $0x3b0] sm:$0xff]
    %v3121 = vld [vmem:[#allocation8 + $0x3b8] sm:$0xff]
    %v3122 = vld [vmem:[#allocation8 + $0x3c0] sm:$0xff]
    %v3123 = vld [vmem:[#allocation8 + $0x3c8] sm:$0xff]
    %v3124 = vld [vmem:[#allocation8 + $0x3d0] sm:$0xff]
    %v3125 = vld [vmem:[#allocation8 + $0x3d8] sm:$0xff]
    %v3126 = vld [vmem:[#allocation8 + $0x3e0] sm:$0xff]
    %v3127 = vld [vmem:[#allocation8 + $0x3e8] sm:$0xff]
    %v3128 = vld [vmem:[#allocation8 + $0x3f0] sm:$0xff]
    %v3129 = vld [vmem:[#allocation8 + $0x3f8] sm:$0xff]
    %v3130 = vld [vmem:[#allocation8 + $0x400] sm:$0xff]
    %v3131 = vld [vmem:[#allocation8 + $0x408] sm:$0xff]
    %v3132 = vld [vmem:[#allocation8 + $0x410] sm:$0xff]
    %v3133 = vld [vmem:[#allocation8 + $0x418] sm:$0xff]
    %v3134 = vld [vmem:[#allocation8 + $0x420] sm:$0xff]
    %v3135 = vld [vmem:[#allocation8 + $0x428] sm:$0xff]
    %v3136 = vld [vmem:[#allocation8 + $0x430] sm:$0xff]
    %v3137 = vld [vmem:[#allocation8 + $0x438] sm:$0xff]
    %v3138 = vld [vmem:[#allocation8 + $0x440] sm:$0xff]
    %v3139 = vld [vmem:[#allocation8 + $0x448] sm:$0xff]
    %v3140 = vld [vmem:[#allocation8 + $0x450] sm:$0xff]
    %v3141 = vld [vmem:[#allocation8 + $0x458] sm:$0xff]
    %v3142 = vld [vmem:[#allocation8 + $0x460] sm:$0xff]
    %v3143 = vld [vmem:[#allocation8 + $0x468] sm:$0xff]
    %v3144 = vld [vmem:[#allocation8 + $0x470] sm:$0xff]
    %v3145 = vld [vmem:[#allocation8 + $0x478] sm:$0xff]
    %v3146 = vld [vmem:[#allocation8 + $0x480] sm:$0xff]
    %v3147 = vld [vmem:[#allocation8 + $0x488] sm:$0xff]
    %v3148 = vld [vmem:[#allocation8 + $0x490] sm:$0xff]
    %v3149 = vld [vmem:[#allocation8 + $0x498] sm:$0xff]
    %v3150 = vld [vmem:[#allocation8 + $0x4a0] sm:$0xff]
    %v3151 = vld [vmem:[#allocation8 + $0x4a8] sm:$0xff]
    %v3152 = vld [vmem:[#allocation8 + $0x4b0] sm:$0xff]
    %v3153 = vld [vmem:[#allocation8 + $0x4b8] sm:$0xff]
    %v3154 = vld [vmem:[#allocation8 + $0x4c0] sm:$0xff]
    %v3155 = vld [vmem:[#allocation8 + $0x4c8] sm:$0xff]
    %v3156 = vld [vmem:[#allocation8 + $0x4d0] sm:$0xff]
    %v3157 = vld [vmem:[#allocation8 + $0x4d8] sm:$0xff]
    %v3158 = vld [vmem:[#allocation8 + $0x4e0] sm:$0xff]
    %v3159 = vld [vmem:[#allocation8 + $0x4e8] sm:$0xff]
    %v3160 = vld [vmem:[#allocation8 + $0x4f0] sm:$0xff]
    %v3161 = vld [vmem:[#allocation8 + $0x4f8] sm:$0xff]
    %v3162 = vld [vmem:[#allocation8 + $0x500] sm:$0xff]
    %v3163 = vld [vmem:[#allocation8 + $0x508] sm:$0xff]
    %v3164 = vld [vmem:[#allocation8 + $0x510] sm:$0xff]
    %v3165 = vld [vmem:[#allocation8 + $0x518] sm:$0xff]
    %v3166 = vld [vmem:[#allocation8 + $0x520] sm:$0xff]
    %v3167 = vld [vmem:[#allocation8 + $0x528] sm:$0xff]
    %v3168 = vld [vmem:[#allocation8 + $0x530] sm:$0xff]
    %v3169 = vld [vmem:[#allocation8 + $0x538] sm:$0xff]
    %v3170 = vld [vmem:[#allocation8 + $0x540] sm:$0xff]
    %v3171 = vld [vmem:[#allocation8 + $0x548] sm:$0xff]
    %v3172 = vld [vmem:[#allocation8 + $0x550] sm:$0xff]
    %v3173 = vld [vmem:[#allocation8 + $0x558] sm:$0xff]
    %v3174 = vld [vmem:[#allocation8 + $0x560] sm:$0xff]
    %v3175 = vld [vmem:[#allocation8 + $0x568] sm:$0xff]
    %v3176 = vld [vmem:[#allocation8 + $0x570] sm:$0xff]
    %v3177 = vld [vmem:[#allocation8 + $0x578] sm:$0xff]
    %v3178 = vld [vmem:[#allocation8 + $0x580] sm:$0xff]
    %v3179 = vld [vmem:[#allocation8 + $0x588] sm:$0xff]
    %v3180 = vld [vmem:[#allocation8 + $0x590] sm:$0xff]
    %v3181 = vld [vmem:[#allocation8 + $0x598] sm:$0xff]
    %v3182 = vld [vmem:[#allocation8 + $0x5a0] sm:$0xff]
    %v3183 = vld [vmem:[#allocation8 + $0x5a8] sm:$0xff]
    %v3184 = vld [vmem:[#allocation8 + $0x5b0] sm:$0xff]
    %v3185 = vld [vmem:[#allocation8 + $0x5b8] sm:$0xff]
    %v3186 = vld [vmem:[#allocation8 + $0x5c0] sm:$0xff]
    %v3187 = vld [vmem:[#allocation8 + $0x5c8] sm:$0xff]
    %v3188 = vld [vmem:[#allocation8 + $0x5d0] sm:$0xff]
    %v3189 = vld [vmem:[#allocation8 + $0x5d8] sm:$0xff]
    %v3190 = vld [vmem:[#allocation8 + $0x5e0] sm:$0xff]
    %v3191 = vld [vmem:[#allocation8 + $0x5e8] sm:$0xff]
    %v3192 = vld [vmem:[#allocation8 + $0x5f0] sm:$0xff]
    %v3193 = vld [vmem:[#allocation8 + $0x5f8] sm:$0xff]
    %v3194 = vld [vmem:[#allocation10] sm:$0xf]
    %v3196 = vlaneseq
    %v3197 = vshrl.u32 %v3196, 7
    %v3198 = vsub.s32 0, %v3197
    %v3199 = vrot.slane %v3194, %v3198
    %v3200 = vlaneseq
    %v3201 = vshrl.u32 %v3200, 7
    %v3202 = vsub.s32 1, %v3201
    %v3203 = vrot.slane %v3194, %v3202
    %v3204 = vlaneseq
    %v3205 = vshrl.u32 %v3204, 7
    %v3206 = vsub.s32 2, %v3205
    %v3207 = vrot.slane %v3194, %v3206
    %v3208 = vlaneseq
    %v3209 = vshrl.u32 %v3208, 7
    %v3210 = vsub.s32 3, %v3209
    %v3211 = vrot.slane %v3194, %v3210
    %v3408 = vunpack.c.l.b16 %v3002
    %v3409 = vunpack.c.h.b16 %v3002
    %v3410 = vunpack.c.l.b16 %v3003
    %v3411 = vunpack.c.h.b16 %v3003
    %v3412 = vunpack.c.l.b16 %v3004
    %v3413 = vunpack.c.h.b16 %v3004
    %v3414 = vunpack.c.l.b16 %v3005
    %v3415 = vunpack.c.h.b16 %v3005
    %v3416 = vunpack.c.l.b16 %v3006
    %v3417 = vunpack.c.h.b16 %v3006
    %v3418 = vunpack.c.l.b16 %v3007
    %v3419 = vunpack.c.h.b16 %v3007
    %v3420 = vunpack.c.l.b16 %v3008
    %v3421 = vunpack.c.h.b16 %v3008
    %v3422 = vunpack.c.l.b16 %v3009
    %v3423 = vunpack.c.h.b16 %v3009
    %v3424 = vunpack.c.l.b16 %v3010
    %v3425 = vunpack.c.h.b16 %v3010
    %v3426 = vunpack.c.l.b16 %v3011
    %v3427 = vunpack.c.h.b16 %v3011
    %v3428 = vunpack.c.l.b16 %v3012
    %v3429 = vunpack.c.h.b16 %v3012
    %v3430 = vunpack.c.l.b16 %v3013
    %v3431 = vunpack.c.h.b16 %v3013
    %v3432 = vunpack.c.l.b16 %v3014
    %v3433 = vunpack.c.h.b16 %v3014
    %v3434 = vunpack.c.l.b16 %v3015
    %v3435 = vunpack.c.h.b16 %v3015
    %v3436 = vunpack.c.l.b16 %v3016
    %v3437 = vunpack.c.h.b16 %v3016
    %v3438 = vunpack.c.l.b16 %v3017
    %v3439 = vunpack.c.h.b16 %v3017
    %v3440 = vunpack.c.l.b16 %v3018
    %v3441 = vunpack.c.h.b16 %v3018
    %v3442 = vunpack.c.l.b16 %v3019
    %v3443 = vunpack.c.h.b16 %v3019
    %v3444 = vunpack.c.l.b16 %v3020
    %v3445 = vunpack.c.h.b16 %v3020
    %v3446 = vunpack.c.l.b16 %v3021
    %v3447 = vunpack.c.h.b16 %v3021
    %v3448 = vunpack.c.l.b16 %v3022
    %v3449 = vunpack.c.h.b16 %v3022
    %v3450 = vunpack.c.l.b16 %v3023
    %v3451 = vunpack.c.h.b16 %v3023
    %v3452 = vunpack.c.l.b16 %v3024
    %v3453 = vunpack.c.h.b16 %v3024
    %v3454 = vunpack.c.l.b16 %v3025
    %v3455 = vunpack.c.h.b16 %v3025
    %v3456 = vunpack.c.l.b16 %v3026
    %v3457 = vunpack.c.h.b16 %v3026
    %v3458 = vunpack.c.l.b16 %v3027
    %v3459 = vunpack.c.h.b16 %v3027
    %v3460 = vunpack.c.l.b16 %v3028
    %v3461 = vunpack.c.h.b16 %v3028
    %v3462 = vunpack.c.l.b16 %v3029
    %v3463 = vunpack.c.h.b16 %v3029
    %v3464 = vunpack.c.l.b16 %v3030
    %v3465 = vunpack.c.h.b16 %v3030
    %v3466 = vunpack.c.l.b16 %v3031
    %v3467 = vunpack.c.h.b16 %v3031
    %v3468 = vunpack.c.l.b16 %v3032
    %v3469 = vunpack.c.h.b16 %v3032
    %v3470 = vunpack.c.l.b16 %v3033
    %v3471 = vunpack.c.h.b16 %v3033
    %v3472 = vunpack.c.l.b16 %v3034
    %v3473 = vunpack.c.h.b16 %v3034
    %v3474 = vunpack.c.l.b16 %v3035
    %v3475 = vunpack.c.h.b16 %v3035
    %v3476 = vunpack.c.l.b16 %v3036
    %v3477 = vunpack.c.h.b16 %v3036
    %v3478 = vunpack.c.l.b16 %v3037
    %v3479 = vunpack.c.h.b16 %v3037
    %v3480 = vunpack.c.l.b16 %v3038
    %v3481 = vunpack.c.h.b16 %v3038
    %v3482 = vunpack.c.l.b16 %v3039
    %v3483 = vunpack.c.h.b16 %v3039
    %v3484 = vunpack.c.l.b16 %v3040
    %v3485 = vunpack.c.h.b16 %v3040
    %v3486 = vunpack.c.l.b16 %v3041
    %v3487 = vunpack.c.h.b16 %v3041
    %v3488 = vunpack.c.l.b16 %v3042
    %v3489 = vunpack.c.h.b16 %v3042
    %v3490 = vunpack.c.l.b16 %v3043
    %v3491 = vunpack.c.h.b16 %v3043
    %v3492 = vunpack.c.l.b16 %v3044
    %v3493 = vunpack.c.h.b16 %v3044
    %v3494 = vunpack.c.l.b16 %v3045
    %v3495 = vunpack.c.h.b16 %v3045
    %v3496 = vunpack.c.l.b16 %v3046
    %v3497 = vunpack.c.h.b16 %v3046
    %v3498 = vunpack.c.l.b16 %v3047
    %v3499 = vunpack.c.h.b16 %v3047
    %v3500 = vunpack.c.l.b16 %v3048
    %v3501 = vunpack.c.h.b16 %v3048
    %v3502 = vunpack.c.l.b16 %v3049
    %v3503 = vunpack.c.h.b16 %v3049
    %v3504 = vunpack.c.l.b16 %v3050
    %v3505 = vunpack.c.h.b16 %v3050
    %v3506 = vunpack.c.l.b16 %v3051
    %v3507 = vunpack.c.h.b16 %v3051
    %v3508 = vunpack.c.l.b16 %v3052
    %v3509 = vunpack.c.h.b16 %v3052
    %v3510 = vunpack.c.l.b16 %v3053
    %v3511 = vunpack.c.h.b16 %v3053
    %v3512 = vunpack.c.l.b16 %v3054
    %v3513 = vunpack.c.h.b16 %v3054
    %v3514 = vunpack.c.l.b16 %v3055
    %v3515 = vunpack.c.h.b16 %v3055
    %v3516 = vunpack.c.l.b16 %v3056
    %v3517 = vunpack.c.h.b16 %v3056
    %v3518 = vunpack.c.l.b16 %v3057
    %v3519 = vunpack.c.h.b16 %v3057
    %v3520 = vunpack.c.l.b16 %v3058
    %v3521 = vunpack.c.h.b16 %v3058
    %v3522 = vunpack.c.l.b16 %v3059
    %v3523 = vunpack.c.h.b16 %v3059
    %v3524 = vunpack.c.l.b16 %v3060
    %v3525 = vunpack.c.h.b16 %v3060
    %v3526 = vunpack.c.l.b16 %v3061
    %v3527 = vunpack.c.h.b16 %v3061
    %v3528 = vunpack.c.l.b16 %v3062
    %v3529 = vunpack.c.h.b16 %v3062
    %v3530 = vunpack.c.l.b16 %v3063
    %v3531 = vunpack.c.h.b16 %v3063
    %v3532 = vunpack.c.l.b16 %v3064
    %v3533 = vunpack.c.h.b16 %v3064
    %v3534 = vunpack.c.l.b16 %v3065
    %v3535 = vunpack.c.h.b16 %v3065
    %v3536 = vunpack.c.l.b16 %v3066
    %v3537 = vunpack.c.h.b16 %v3066
    %v3538 = vunpack.c.l.b16 %v3067
    %v3539 = vunpack.c.h.b16 %v3067
    %v3540 = vunpack.c.l.b16 %v3068
    %v3541 = vunpack.c.h.b16 %v3068
    %v3542 = vunpack.c.l.b16 %v3069
    %v3543 = vunpack.c.h.b16 %v3069
    %v3544 = vunpack.c.l.b16 %v3070
    %v3545 = vunpack.c.h.b16 %v3070
    %v3546 = vunpack.c.l.b16 %v3071
    %v3547 = vunpack.c.h.b16 %v3071
    %v3548 = vunpack.c.l.b16 %v3072
    %v3549 = vunpack.c.h.b16 %v3072
    %v3550 = vunpack.c.l.b16 %v3073
    %v3551 = vunpack.c.h.b16 %v3073
    %v3552 = vunpack.c.l.b16 %v3074
    %v3553 = vunpack.c.h.b16 %v3074
    %v3554 = vunpack.c.l.b16 %v3075
    %v3555 = vunpack.c.h.b16 %v3075
    %v3556 = vunpack.c.l.b16 %v3076
    %v3557 = vunpack.c.h.b16 %v3076
    %v3558 = vunpack.c.l.b16 %v3077
    %v3559 = vunpack.c.h.b16 %v3077
    %v3560 = vunpack.c.l.b16 %v3078
    %v3561 = vunpack.c.h.b16 %v3078
    %v3562 = vunpack.c.l.b16 %v3079
    %v3563 = vunpack.c.h.b16 %v3079
    %v3564 = vunpack.c.l.b16 %v3080
    %v3565 = vunpack.c.h.b16 %v3080
    %v3566 = vunpack.c.l.b16 %v3081
    %v3567 = vunpack.c.h.b16 %v3081
    %v3568 = vunpack.c.l.b16 %v3082
    %v3569 = vunpack.c.h.b16 %v3082
    %v3570 = vunpack.c.l.b16 %v3083
    %v3571 = vunpack.c.h.b16 %v3083
    %v3572 = vunpack.c.l.b16 %v3084
    %v3573 = vunpack.c.h.b16 %v3084
    %v3574 = vunpack.c.l.b16 %v3085
    %v3575 = vunpack.c.h.b16 %v3085
    %v3576 = vunpack.c.l.b16 %v3086
    %v3577 = vunpack.c.h.b16 %v3086
    %v3578 = vunpack.c.l.b16 %v3087
    %v3579 = vunpack.c.h.b16 %v3087
    %v3580 = vunpack.c.l.b16 %v3088
    %v3581 = vunpack.c.h.b16 %v3088
    %v3582 = vunpack.c.l.b16 %v3089
    %v3583 = vunpack.c.h.b16 %v3089
    %v3584 = vunpack.c.l.b16 %v3090
    %v3585 = vunpack.c.h.b16 %v3090
    %v3586 = vunpack.c.l.b16 %v3091
    %v3587 = vunpack.c.h.b16 %v3091
    %v3588 = vunpack.c.l.b16 %v3092
    %v3589 = vunpack.c.h.b16 %v3092
    %v3590 = vunpack.c.l.b16 %v3093
    %v3591 = vunpack.c.h.b16 %v3093
    %v3592 = vunpack.c.l.b16 %v3094
    %v3593 = vunpack.c.h.b16 %v3094
    %v3594 = vunpack.c.l.b16 %v3095
    %v3595 = vunpack.c.h.b16 %v3095
    %v3596 = vunpack.c.l.b16 %v3096
    %v3597 = vunpack.c.h.b16 %v3096
    %v3598 = vunpack.c.l.b16 %v3097
    %v3599 = vunpack.c.h.b16 %v3097
    %v3600 = vunpack.c.l.b16 %v3098
    %v3601 = vunpack.c.h.b16 %v3098
    %v3602 = vunpack.c.l.b16 %v3099
    %v3603 = vunpack.c.h.b16 %v3099
    %v3604 = vunpack.c.l.b16 %v3100
    %v3605 = vunpack.c.h.b16 %v3100
    %v3606 = vunpack.c.l.b16 %v3101
    %v3607 = vunpack.c.h.b16 %v3101
    %v3608 = vunpack.c.l.b16 %v3102
    %v3609 = vunpack.c.h.b16 %v3102
    %v3610 = vunpack.c.l.b16 %v3103
    %v3611 = vunpack.c.h.b16 %v3103
    %v3612 = vunpack.c.l.b16 %v3104
    %v3613 = vunpack.c.h.b16 %v3104
    %v3614 = vunpack.c.l.b16 %v3105
    %v3615 = vunpack.c.h.b16 %v3105
    %v3616 = vunpack.c.l.b16 %v3106
    %v3617 = vunpack.c.h.b16 %v3106
    %v3618 = vunpack.c.l.b16 %v3107
    %v3619 = vunpack.c.h.b16 %v3107
    %v3620 = vunpack.c.l.b16 %v3108
    %v3621 = vunpack.c.h.b16 %v3108
    %v3622 = vunpack.c.l.b16 %v3109
    %v3623 = vunpack.c.h.b16 %v3109
    %v3624 = vunpack.c.l.b16 %v3110
    %v3625 = vunpack.c.h.b16 %v3110
    %v3626 = vunpack.c.l.b16 %v3111
    %v3627 = vunpack.c.h.b16 %v3111
    %v3628 = vunpack.c.l.b16 %v3112
    %v3629 = vunpack.c.h.b16 %v3112
    %v3630 = vunpack.c.l.b16 %v3113
    %v3631 = vunpack.c.h.b16 %v3113
    %v3632 = vunpack.c.l.b16 %v3114
    %v3633 = vunpack.c.h.b16 %v3114
    %v3634 = vunpack.c.l.b16 %v3115
    %v3635 = vunpack.c.h.b16 %v3115
    %v3636 = vunpack.c.l.b16 %v3116
    %v3637 = vunpack.c.h.b16 %v3116
    %v3638 = vunpack.c.l.b16 %v3117
    %v3639 = vunpack.c.h.b16 %v3117
    %v3640 = vunpack.c.l.b16 %v3118
    %v3641 = vunpack.c.h.b16 %v3118
    %v3642 = vunpack.c.l.b16 %v3119
    %v3643 = vunpack.c.h.b16 %v3119
    %v3644 = vunpack.c.l.b16 %v3120
    %v3645 = vunpack.c.h.b16 %v3120
    %v3646 = vunpack.c.l.b16 %v3121
    %v3647 = vunpack.c.h.b16 %v3121
    %v3648 = vunpack.c.l.b16 %v3122
    %v3649 = vunpack.c.h.b16 %v3122
    %v3650 = vunpack.c.l.b16 %v3123
    %v3651 = vunpack.c.h.b16 %v3123
    %v3652 = vunpack.c.l.b16 %v3124
    %v3653 = vunpack.c.h.b16 %v3124
    %v3654 = vunpack.c.l.b16 %v3125
    %v3655 = vunpack.c.h.b16 %v3125
    %v3656 = vunpack.c.l.b16 %v3126
    %v3657 = vunpack.c.h.b16 %v3126
    %v3658 = vunpack.c.l.b16 %v3127
    %v3659 = vunpack.c.h.b16 %v3127
    %v3660 = vunpack.c.l.b16 %v3128
    %v3661 = vunpack.c.h.b16 %v3128
    %v3662 = vunpack.c.l.b16 %v3129
    %v3663 = vunpack.c.h.b16 %v3129
    %v3664 = vunpack.c.l.b16 %v3130
    %v3665 = vunpack.c.h.b16 %v3130
    %v3666 = vunpack.c.l.b16 %v3131
    %v3667 = vunpack.c.h.b16 %v3131
    %v3668 = vunpack.c.l.b16 %v3132
    %v3669 = vunpack.c.h.b16 %v3132
    %v3670 = vunpack.c.l.b16 %v3133
    %v3671 = vunpack.c.h.b16 %v3133
    %v3672 = vunpack.c.l.b16 %v3134
    %v3673 = vunpack.c.h.b16 %v3134
    %v3674 = vunpack.c.l.b16 %v3135
    %v3675 = vunpack.c.h.b16 %v3135
    %v3676 = vunpack.c.l.b16 %v3136
    %v3677 = vunpack.c.h.b16 %v3136
    %v3678 = vunpack.c.l.b16 %v3137
    %v3679 = vunpack.c.h.b16 %v3137
    %v3680 = vunpack.c.l.b16 %v3138
    %v3681 = vunpack.c.h.b16 %v3138
    %v3682 = vunpack.c.l.b16 %v3139
    %v3683 = vunpack.c.h.b16 %v3139
    %v3684 = vunpack.c.l.b16 %v3140
    %v3685 = vunpack.c.h.b16 %v3140
    %v3686 = vunpack.c.l.b16 %v3141
    %v3687 = vunpack.c.h.b16 %v3141
    %v3688 = vunpack.c.l.b16 %v3142
    %v3689 = vunpack.c.h.b16 %v3142
    %v3690 = vunpack.c.l.b16 %v3143
    %v3691 = vunpack.c.h.b16 %v3143
    %v3692 = vunpack.c.l.b16 %v3144
    %v3693 = vunpack.c.h.b16 %v3144
    %v3694 = vunpack.c.l.b16 %v3145
    %v3695 = vunpack.c.h.b16 %v3145
    %v3696 = vunpack.c.l.b16 %v3146
    %v3697 = vunpack.c.h.b16 %v3146
    %v3698 = vunpack.c.l.b16 %v3147
    %v3699 = vunpack.c.h.b16 %v3147
    %v3700 = vunpack.c.l.b16 %v3148
    %v3701 = vunpack.c.h.b16 %v3148
    %v3702 = vunpack.c.l.b16 %v3149
    %v3703 = vunpack.c.h.b16 %v3149
    %v3704 = vunpack.c.l.b16 %v3150
    %v3705 = vunpack.c.h.b16 %v3150
    %v3706 = vunpack.c.l.b16 %v3151
    %v3707 = vunpack.c.h.b16 %v3151
    %v3708 = vunpack.c.l.b16 %v3152
    %v3709 = vunpack.c.h.b16 %v3152
    %v3710 = vunpack.c.l.b16 %v3153
    %v3711 = vunpack.c.h.b16 %v3153
    %v3712 = vunpack.c.l.b16 %v3154
    %v3713 = vunpack.c.h.b16 %v3154
    %v3714 = vunpack.c.l.b16 %v3155
    %v3715 = vunpack.c.h.b16 %v3155
    %v3716 = vunpack.c.l.b16 %v3156
    %v3717 = vunpack.c.h.b16 %v3156
    %v3718 = vunpack.c.l.b16 %v3157
    %v3719 = vunpack.c.h.b16 %v3157
    %v3720 = vunpack.c.l.b16 %v3158
    %v3721 = vunpack.c.h.b16 %v3158
    %v3722 = vunpack.c.l.b16 %v3159
    %v3723 = vunpack.c.h.b16 %v3159
    %v3724 = vunpack.c.l.b16 %v3160
    %v3725 = vunpack.c.h.b16 %v3160
    %v3726 = vunpack.c.l.b16 %v3161
    %v3727 = vunpack.c.h.b16 %v3161
    %v3728 = vunpack.c.l.b16 %v3162
    %v3729 = vunpack.c.h.b16 %v3162
    %v3730 = vunpack.c.l.b16 %v3163
    %v3731 = vunpack.c.h.b16 %v3163
    %v3732 = vunpack.c.l.b16 %v3164
    %v3733 = vunpack.c.h.b16 %v3164
    %v3734 = vunpack.c.l.b16 %v3165
    %v3735 = vunpack.c.h.b16 %v3165
    %v3736 = vunpack.c.l.b16 %v3166
    %v3737 = vunpack.c.h.b16 %v3166
    %v3738 = vunpack.c.l.b16 %v3167
    %v3739 = vunpack.c.h.b16 %v3167
    %v3740 = vunpack.c.l.b16 %v3168
    %v3741 = vunpack.c.h.b16 %v3168
    %v3742 = vunpack.c.l.b16 %v3169
    %v3743 = vunpack.c.h.b16 %v3169
    %v3744 = vunpack.c.l.b16 %v3170
    %v3745 = vunpack.c.h.b16 %v3170
    %v3746 = vunpack.c.l.b16 %v3171
    %v3747 = vunpack.c.h.b16 %v3171
    %v3748 = vunpack.c.l.b16 %v3172
    %v3749 = vunpack.c.h.b16 %v3172
    %v3750 = vunpack.c.l.b16 %v3173
    %v3751 = vunpack.c.h.b16 %v3173
    %v3752 = vunpack.c.l.b16 %v3174
    %v3753 = vunpack.c.h.b16 %v3174
    %v3754 = vunpack.c.l.b16 %v3175
    %v3755 = vunpack.c.h.b16 %v3175
    %v3756 = vunpack.c.l.b16 %v3176
    %v3757 = vunpack.c.h.b16 %v3176
    %v3758 = vunpack.c.l.b16 %v3177
    %v3759 = vunpack.c.h.b16 %v3177
    %v3760 = vunpack.c.l.b16 %v3178
    %v3761 = vunpack.c.h.b16 %v3178
    %v3762 = vunpack.c.l.b16 %v3179
    %v3763 = vunpack.c.h.b16 %v3179
    %v3764 = vunpack.c.l.b16 %v3180
    %v3765 = vunpack.c.h.b16 %v3180
    %v3766 = vunpack.c.l.b16 %v3181
    %v3767 = vunpack.c.h.b16 %v3181
    %v3768 = vunpack.c.l.b16 %v3182
    %v3769 = vunpack.c.h.b16 %v3182
    %v3770 = vunpack.c.l.b16 %v3183
    %v3771 = vunpack.c.h.b16 %v3183
    %v3772 = vunpack.c.l.b16 %v3184
    %v3773 = vunpack.c.h.b16 %v3184
    %v3774 = vunpack.c.l.b16 %v3185
    %v3775 = vunpack.c.h.b16 %v3185
    %v3776 = vunpack.c.l.b16 %v3186
    %v3777 = vunpack.c.h.b16 %v3186
    %v3778 = vunpack.c.l.b16 %v3187
    %v3779 = vunpack.c.h.b16 %v3187
    %v3780 = vunpack.c.l.b16 %v3188
    %v3781 = vunpack.c.h.b16 %v3188
    %v3782 = vunpack.c.l.b16 %v3189
    %v3783 = vunpack.c.h.b16 %v3189
    %v3784 = vunpack.c.l.b16 %v3190
    %v3785 = vunpack.c.h.b16 %v3190
    %v3786 = vunpack.c.l.b16 %v3191
    %v3787 = vunpack.c.h.b16 %v3191
    %v3788 = vunpack.c.l.b16 %v3192
    %v3789 = vunpack.c.h.b16 %v3192
    %v3790 = vunpack.c.l.b16 %v3193
    %v3791 = vunpack.c.h.b16 %v3193
    %v3792 = vpack.c.b16 %v3412, %v3408
    %v3793 = vpack.c.b16 %v3413, %v3409
    %v3794 = vpack.c.b16 %v3414, %v3410
    %v3795 = vpack.c.b16 %v3415, %v3411
    %v3796 = vpack.c.b16 %v3420, %v3416
    %v3797 = vpack.c.b16 %v3421, %v3417
    %v3798 = vpack.c.b16 %v3422, %v3418
    %v3799 = vpack.c.b16 %v3423, %v3419
    %v3800 = vpack.c.b16 %v3428, %v3424
    %v3801 = vpack.c.b16 %v3429, %v3425
    %v3802 = vpack.c.b16 %v3430, %v3426
    %v3803 = vpack.c.b16 %v3431, %v3427
    %v3804 = vpack.c.b16 %v3436, %v3432
    %v3805 = vpack.c.b16 %v3437, %v3433
    %v3806 = vpack.c.b16 %v3438, %v3434
    %v3807 = vpack.c.b16 %v3439, %v3435
    %v3808 = vpack.c.b16 %v3444, %v3440
    %v3809 = vpack.c.b16 %v3445, %v3441
    %v3810 = vpack.c.b16 %v3446, %v3442
    %v3811 = vpack.c.b16 %v3447, %v3443
    %v3812 = vpack.c.b16 %v3452, %v3448
    %v3813 = vpack.c.b16 %v3453, %v3449
    %v3814 = vpack.c.b16 %v3454, %v3450
    %v3815 = vpack.c.b16 %v3455, %v3451
    %v3816 = vpack.c.b16 %v3460, %v3456
    %v3817 = vpack.c.b16 %v3461, %v3457
    %v3818 = vpack.c.b16 %v3462, %v3458
    %v3819 = vpack.c.b16 %v3463, %v3459
    %v3820 = vpack.c.b16 %v3468, %v3464
    %v3821 = vpack.c.b16 %v3469, %v3465
    %v3822 = vpack.c.b16 %v3470, %v3466
    %v3823 = vpack.c.b16 %v3471, %v3467
    %v3824 = vpack.c.b16 %v3476, %v3472
    %v3825 = vpack.c.b16 %v3477, %v3473
    %v3826 = vpack.c.b16 %v3478, %v3474
    %v3827 = vpack.c.b16 %v3479, %v3475
    %v3828 = vpack.c.b16 %v3484, %v3480
    %v3829 = vpack.c.b16 %v3485, %v3481
    %v3830 = vpack.c.b16 %v3486, %v3482
    %v3831 = vpack.c.b16 %v3487, %v3483
    %v3832 = vpack.c.b16 %v3492, %v3488
    %v3833 = vpack.c.b16 %v3493, %v3489
    %v3834 = vpack.c.b16 %v3494, %v3490
    %v3835 = vpack.c.b16 %v3495, %v3491
    %v3836 = vpack.c.b16 %v3500, %v3496
    %v3837 = vpack.c.b16 %v3501, %v3497
    %v3838 = vpack.c.b16 %v3502, %v3498
    %v3839 = vpack.c.b16 %v3503, %v3499
    %v3840 = vpack.c.b16 %v3508, %v3504
    %v3841 = vpack.c.b16 %v3509, %v3505
    %v3842 = vpack.c.b16 %v3510, %v3506
    %v3843 = vpack.c.b16 %v3511, %v3507
    %v3844 = vpack.c.b16 %v3516, %v3512
    %v3845 = vpack.c.b16 %v3517, %v3513
    %v3846 = vpack.c.b16 %v3518, %v3514
    %v3847 = vpack.c.b16 %v3519, %v3515
    %v3848 = vpack.c.b16 %v3524, %v3520
    %v3849 = vpack.c.b16 %v3525, %v3521
    %v3850 = vpack.c.b16 %v3526, %v3522
    %v3851 = vpack.c.b16 %v3527, %v3523
    %v3852 = vpack.c.b16 %v3532, %v3528
    %v3853 = vpack.c.b16 %v3533, %v3529
    %v3854 = vpack.c.b16 %v3534, %v3530
    %v3855 = vpack.c.b16 %v3535, %v3531
    %v3856 = vpack.c.b16 %v3540, %v3536
    %v3857 = vpack.c.b16 %v3541, %v3537
    %v3858 = vpack.c.b16 %v3542, %v3538
    %v3859 = vpack.c.b16 %v3543, %v3539
    %v3860 = vpack.c.b16 %v3548, %v3544
    %v3861 = vpack.c.b16 %v3549, %v3545
    %v3862 = vpack.c.b16 %v3550, %v3546
    %v3863 = vpack.c.b16 %v3551, %v3547
    %v3864 = vpack.c.b16 %v3556, %v3552
    %v3865 = vpack.c.b16 %v3557, %v3553
    %v3866 = vpack.c.b16 %v3558, %v3554
    %v3867 = vpack.c.b16 %v3559, %v3555
    %v3868 = vpack.c.b16 %v3564, %v3560
    %v3869 = vpack.c.b16 %v3565, %v3561
    %v3870 = vpack.c.b16 %v3566, %v3562
    %v3871 = vpack.c.b16 %v3567, %v3563
    %v3872 = vpack.c.b16 %v3572, %v3568
    %v3873 = vpack.c.b16 %v3573, %v3569
    %v3874 = vpack.c.b16 %v3574, %v3570
    %v3875 = vpack.c.b16 %v3575, %v3571
    %v3876 = vpack.c.b16 %v3580, %v3576
    %v3877 = vpack.c.b16 %v3581, %v3577
    %v3878 = vpack.c.b16 %v3582, %v3578
    %v3879 = vpack.c.b16 %v3583, %v3579
    %v3880 = vpack.c.b16 %v3588, %v3584
    %v3881 = vpack.c.b16 %v3589, %v3585
    %v3882 = vpack.c.b16 %v3590, %v3586
    %v3883 = vpack.c.b16 %v3591, %v3587
    %v3884 = vpack.c.b16 %v3596, %v3592
    %v3885 = vpack.c.b16 %v3597, %v3593
    %v3886 = vpack.c.b16 %v3598, %v3594
    %v3887 = vpack.c.b16 %v3599, %v3595
    %v3888 = vpack.c.b16 %v3604, %v3600
    %v3889 = vpack.c.b16 %v3605, %v3601
    %v3890 = vpack.c.b16 %v3606, %v3602
    %v3891 = vpack.c.b16 %v3607, %v3603
    %v3892 = vpack.c.b16 %v3612, %v3608
    %v3893 = vpack.c.b16 %v3613, %v3609
    %v3894 = vpack.c.b16 %v3614, %v3610
    %v3895 = vpack.c.b16 %v3615, %v3611
    %v3896 = vpack.c.b16 %v3620, %v3616
    %v3897 = vpack.c.b16 %v3621, %v3617
    %v3898 = vpack.c.b16 %v3622, %v3618
    %v3899 = vpack.c.b16 %v3623, %v3619
    %v3900 = vpack.c.b16 %v3628, %v3624
    %v3901 = vpack.c.b16 %v3629, %v3625
    %v3902 = vpack.c.b16 %v3630, %v3626
    %v3903 = vpack.c.b16 %v3631, %v3627
    %v3904 = vpack.c.b16 %v3636, %v3632
    %v3905 = vpack.c.b16 %v3637, %v3633
    %v3906 = vpack.c.b16 %v3638, %v3634
    %v3907 = vpack.c.b16 %v3639, %v3635
    %v3908 = vpack.c.b16 %v3644, %v3640
    %v3909 = vpack.c.b16 %v3645, %v3641
    %v3910 = vpack.c.b16 %v3646, %v3642
    %v3911 = vpack.c.b16 %v3647, %v3643
    %v3912 = vpack.c.b16 %v3652, %v3648
    %v3913 = vpack.c.b16 %v3653, %v3649
    %v3914 = vpack.c.b16 %v3654, %v3650
    %v3915 = vpack.c.b16 %v3655, %v3651
    %v3916 = vpack.c.b16 %v3660, %v3656
    %v3917 = vpack.c.b16 %v3661, %v3657
    %v3918 = vpack.c.b16 %v3662, %v3658
    %v3919 = vpack.c.b16 %v3663, %v3659
    %v3920 = vpack.c.b16 %v3668, %v3664
    %v3921 = vpack.c.b16 %v3669, %v3665
    %v3922 = vpack.c.b16 %v3670, %v3666
    %v3923 = vpack.c.b16 %v3671, %v3667
    %v3924 = vpack.c.b16 %v3676, %v3672
    %v3925 = vpack.c.b16 %v3677, %v3673
    %v3926 = vpack.c.b16 %v3678, %v3674
    %v3927 = vpack.c.b16 %v3679, %v3675
    %v3928 = vpack.c.b16 %v3684, %v3680
    %v3929 = vpack.c.b16 %v3685, %v3681
    %v3930 = vpack.c.b16 %v3686, %v3682
    %v3931 = vpack.c.b16 %v3687, %v3683
    %v3932 = vpack.c.b16 %v3692, %v3688
    %v3933 = vpack.c.b16 %v3693, %v3689
    %v3934 = vpack.c.b16 %v3694, %v3690
    %v3935 = vpack.c.b16 %v3695, %v3691
    %v3936 = vpack.c.b16 %v3700, %v3696
    %v3937 = vpack.c.b16 %v3701, %v3697
    %v3938 = vpack.c.b16 %v3702, %v3698
    %v3939 = vpack.c.b16 %v3703, %v3699
    %v3940 = vpack.c.b16 %v3708, %v3704
    %v3941 = vpack.c.b16 %v3709, %v3705
    %v3942 = vpack.c.b16 %v3710, %v3706
    %v3943 = vpack.c.b16 %v3711, %v3707
    %v3944 = vpack.c.b16 %v3716, %v3712
    %v3945 = vpack.c.b16 %v3717, %v3713
    %v3946 = vpack.c.b16 %v3718, %v3714
    %v3947 = vpack.c.b16 %v3719, %v3715
    %v3948 = vpack.c.b16 %v3724, %v3720
    %v3949 = vpack.c.b16 %v3725, %v3721
    %v3950 = vpack.c.b16 %v3726, %v3722
    %v3951 = vpack.c.b16 %v3727, %v3723
    %v3952 = vpack.c.b16 %v3732, %v3728
    %v3953 = vpack.c.b16 %v3733, %v3729
    %v3954 = vpack.c.b16 %v3734, %v3730
    %v3955 = vpack.c.b16 %v3735, %v3731
    %v3956 = vpack.c.b16 %v3740, %v3736
    %v3957 = vpack.c.b16 %v3741, %v3737
    %v3958 = vpack.c.b16 %v3742, %v3738
    %v3959 = vpack.c.b16 %v3743, %v3739
    %v3960 = vpack.c.b16 %v3748, %v3744
    %v3961 = vpack.c.b16 %v3749, %v3745
    %v3962 = vpack.c.b16 %v3750, %v3746
    %v3963 = vpack.c.b16 %v3751, %v3747
    %v3964 = vpack.c.b16 %v3756, %v3752
    %v3965 = vpack.c.b16 %v3757, %v3753
    %v3966 = vpack.c.b16 %v3758, %v3754
    %v3967 = vpack.c.b16 %v3759, %v3755
    %v3968 = vpack.c.b16 %v3764, %v3760
    %v3969 = vpack.c.b16 %v3765, %v3761
    %v3970 = vpack.c.b16 %v3766, %v3762
    %v3971 = vpack.c.b16 %v3767, %v3763
    %v3972 = vpack.c.b16 %v3772, %v3768
    %v3973 = vpack.c.b16 %v3773, %v3769
    %v3974 = vpack.c.b16 %v3774, %v3770
    %v3975 = vpack.c.b16 %v3775, %v3771
    %v3976 = vpack.c.b16 %v3780, %v3776
    %v3977 = vpack.c.b16 %v3781, %v3777
    %v3978 = vpack.c.b16 %v3782, %v3778
    %v3979 = vpack.c.b16 %v3783, %v3779
    %v3980 = vpack.c.b16 %v3788, %v3784
    %v3981 = vpack.c.b16 %v3789, %v3785
    %v3982 = vpack.c.b16 %v3790, %v3786
    %v3983 = vpack.c.b16 %v3791, %v3787
    %4176 = vmatprep.subr.bf16.mxu0 %v3821
    %4177 = vmatpush1.bf16.msra.mxu0 %v3820
    %4178 = vmatprep.subr.bf16.mxu0 %v3817
    %4179 = vmatpush1.bf16.msra.mxu0 %v3816
    %4180 = vmatprep.subr.bf16.mxu0 %v3813
    %4181 = vmatpush1.bf16.msra.mxu0 %v3812
    %4182 = vmatprep.subr.bf16.mxu0 %v3809
    %4183 = vmatpush1.bf16.msra.mxu0 %v3808
    %4184 = vmatprep.subr.bf16.mxu0 %v3805
    %4185 = vmatpush1.bf16.msra.mxu0 %v3804
    %4186 = vmatprep.subr.bf16.mxu0 %v3801
    %4187 = vmatpush1.bf16.msra.mxu0 %v3800
    %4188 = vmatprep.subr.bf16.mxu0 %v3797
    %4189 = vmatpush1.bf16.msra.mxu0 %v3796
    %4190 = vmatprep.subr.bf16.mxu0 %v3793
    %4191 = vmatpush1.bf16.msra.mxu0 %v3792
    %4192 = vmatprep.subr.bf16.mxu0 %v3853
    %4193 = vmatpush2.bf16.msra.mxu0 %v3852
    %4194 = vmatprep.subr.bf16.mxu0 %v3849
    %4195 = vmatpush2.bf16.msra.mxu0 %v3848
    %4196 = vmatprep.subr.bf16.mxu0 %v3845
    %4197 = vmatpush2.bf16.msra.mxu0 %v3844
    %4198 = vmatprep.subr.bf16.mxu0 %v3841
    %4199 = vmatpush2.bf16.msra.mxu0 %v3840
    %4200 = vmatprep.subr.bf16.mxu0 %v3837
    %4201 = vmatpush2.bf16.msra.mxu0 %v3836
    %4202 = vmatprep.subr.bf16.mxu0 %v3833
    %4203 = vmatpush2.bf16.msra.mxu0 %v3832
    %4204 = vmatprep.subr.bf16.mxu0 %v3829
    %4205 = vmatpush2.bf16.msra.mxu0 %v3828
    %4206 = vmatprep.subr.bf16.mxu0 %v3825
    %4207 = vmatpush2.bf16.msra.mxu0 %v3824
    %4208 = vmatprep.mubr.bf16.mxu0 %v2997
    %4209 = vmatmul.mubr.bf16.gmra.mxu0 %v2996
    %v4210 = vpop.f32.mrf.mxu0
    %v4211 = vadd.f32 %v3199, %v4210
    %v4212 = vpop.f32.mrf.mxu0
    %v4213 = vadd.f32 %v3203, %v4212
    %v4214 = vpop.f32.mrf.mxu0
    %v4215 = vpop.f32.mrf.mxu0
    %4216 = vdwg.mxu0
    %4217 = vmatprep.subr.bf16.mxu0 %v3885
    %4218 = vmatpush1.bf16.msra.mxu0 %v3884
    %4219 = vmatprep.subr.bf16.mxu0 %v3881
    %4220 = vmatpush1.bf16.msra.mxu0 %v3880
    %4221 = vmatprep.subr.bf16.mxu0 %v3877
    %4222 = vmatpush1.bf16.msra.mxu0 %v3876
    %4223 = vmatprep.subr.bf16.mxu0 %v3873
    %4224 = vmatpush1.bf16.msra.mxu0 %v3872
    %4225 = vmatprep.subr.bf16.mxu0 %v3869
    %4226 = vmatpush1.bf16.msra.mxu0 %v3868
    %4227 = vmatprep.subr.bf16.mxu0 %v3865
    %4228 = vmatpush1.bf16.msra.mxu0 %v3864
    %4229 = vmatprep.subr.bf16.mxu0 %v3861
    %4230 = vmatpush1.bf16.msra.mxu0 %v3860
    %4231 = vmatprep.subr.bf16.mxu0 %v3857
    %4232 = vmatpush1.bf16.msra.mxu0 %v3856
    %4233 = vmatprep.subr.bf16.mxu0 %v3917
    %4234 = vmatpush2.bf16.msra.mxu0 %v3916
    %4235 = vmatprep.subr.bf16.mxu0 %v3913
    %4236 = vmatpush2.bf16.msra.mxu0 %v3912
    %4237 = vmatprep.subr.bf16.mxu0 %v3909
    %4238 = vmatpush2.bf16.msra.mxu0 %v3908
    %4239 = vmatprep.subr.bf16.mxu0 %v3905
    %4240 = vmatpush2.bf16.msra.mxu0 %v3904
    %4241 = vmatprep.subr.bf16.mxu0 %v3901
    %4242 = vmatpush2.bf16.msra.mxu0 %v3900
    %4243 = vmatprep.subr.bf16.mxu0 %v3897
    %4244 = vmatpush2.bf16.msra.mxu0 %v3896
    %4245 = vmatprep.subr.bf16.mxu0 %v3893
    %4246 = vmatpush2.bf16.msra.mxu0 %v3892
    %4247 = vmatprep.subr.bf16.mxu0 %v3889
    %4248 = vmatpush2.bf16.msra.mxu0 %v3888
    %4249 = vmatprep.mubr.bf16.mxu0 %v2999
    %4250 = vmatmul.mubr.bf16.gmra.mxu0 %v2998
    %v4251 = vpop.f32.mrf.mxu0
    %v4252 = vadd.f32 %v4211, %v4251
    %v4253 = vpop.f32.mrf.mxu0
    %v4254 = vadd.f32 %v4213, %v4253
    %v4255 = vpop.f32.mrf.mxu0
    %v4256 = vpop.f32.mrf.mxu0
    %4257 = vdwg.mxu0
    %4258 = vmatprep.subr.bf16.mxu0 %v3949
    %4259 = vmatpush1.bf16.msra.mxu0 %v3948
    %4260 = vmatprep.subr.bf16.mxu0 %v3945
    %4261 = vmatpush1.bf16.msra.mxu0 %v3944
    %4262 = vmatprep.subr.bf16.mxu0 %v3941
    %4263 = vmatpush1.bf16.msra.mxu0 %v3940
    %4264 = vmatprep.subr.bf16.mxu0 %v3937
    %4265 = vmatpush1.bf16.msra.mxu0 %v3936
    %4266 = vmatprep.subr.bf16.mxu0 %v3933
    %4267 = vmatpush1.bf16.msra.mxu0 %v3932
    %4268 = vmatprep.subr.bf16.mxu0 %v3929
    %4269 = vmatpush1.bf16.msra.mxu0 %v3928
    %4270 = vmatprep.subr.bf16.mxu0 %v3925
    %4271 = vmatpush1.bf16.msra.mxu0 %v3924
    %4272 = vmatprep.subr.bf16.mxu0 %v3921
    %4273 = vmatpush1.bf16.msra.mxu0 %v3920
    %4274 = vmatprep.subr.bf16.mxu0 %v3981
    %4275 = vmatpush2.bf16.msra.mxu0 %v3980
    %4276 = vmatprep.subr.bf16.mxu0 %v3977
    %4277 = vmatpush2.bf16.msra.mxu0 %v3976
    %4278 = vmatprep.subr.bf16.mxu0 %v3973
    %4279 = vmatpush2.bf16.msra.mxu0 %v3972
    %4280 = vmatprep.subr.bf16.mxu0 %v3969
    %4281 = vmatpush2.bf16.msra.mxu0 %v3968
    %4282 = vmatprep.subr.bf16.mxu0 %v3965
    %4283 = vmatpush2.bf16.msra.mxu0 %v3964
    %4284 = vmatprep.subr.bf16.mxu0 %v3961
    %4285 = vmatpush2.bf16.msra.mxu0 %v3960
    %4286 = vmatprep.subr.bf16.mxu0 %v3957
    %4287 = vmatpush2.bf16.msra.mxu0 %v3956
    %4288 = vmatprep.subr.bf16.mxu0 %v3953
    %4289 = vmatpush2.bf16.msra.mxu0 %v3952
    %4290 = vmatprep.mubr.bf16.mxu0 %v3001
    %4291 = vmatmul.mubr.bf16.gmra.mxu0 %v3000
    %v4292 = vpop.f32.mrf.mxu0
    %v4293 = vadd.f32 %v4252, %v4292
    %v4294 = vpop.f32.mrf.mxu0
    %v4295 = vadd.f32 %v4254, %v4294
    %v4296 = vpop.f32.mrf.mxu0
    %v4297 = vpop.f32.mrf.mxu0
    %4298 = vdwg.mxu0
    %4299 = vmatprep.subr.bf16.mxu0 %v3823
    %4300 = vmatpush1.bf16.msra.mxu0 %v3822
    %4301 = vmatprep.subr.bf16.mxu0 %v3819
    %4302 = vmatpush1.bf16.msra.mxu0 %v3818
    %4303 = vmatprep.subr.bf16.mxu0 %v3815
    %4304 = vmatpush1.bf16.msra.mxu0 %v3814
    %4305 = vmatprep.subr.bf16.mxu0 %v3811
    %4306 = vmatpush1.bf16.msra.mxu0 %v3810
    %4307 = vmatprep.subr.bf16.mxu0 %v3807
    %4308 = vmatpush1.bf16.msra.mxu0 %v3806
    %4309 = vmatprep.subr.bf16.mxu0 %v3803
    %4310 = vmatpush1.bf16.msra.mxu0 %v3802
    %4311 = vmatprep.subr.bf16.mxu0 %v3799
    %4312 = vmatpush1.bf16.msra.mxu0 %v3798
    %4313 = vmatprep.subr.bf16.mxu0 %v3795
    %4314 = vmatpush1.bf16.msra.mxu0 %v3794
    %4315 = vmatprep.subr.bf16.mxu0 %v3855
    %4316 = vmatpush2.bf16.msra.mxu0 %v3854
    %4317 = vmatprep.subr.bf16.mxu0 %v3851
    %4318 = vmatpush2.bf16.msra.mxu0 %v3850
    %4319 = vmatprep.subr.bf16.mxu0 %v3847
    %4320 = vmatpush2.bf16.msra.mxu0 %v3846
    %4321 = vmatprep.subr.bf16.mxu0 %v3843
    %4322 = vmatpush2.bf16.msra.mxu0 %v3842
    %4323 = vmatprep.subr.bf16.mxu0 %v3839
    %4324 = vmatpush2.bf16.msra.mxu0 %v3838
    %4325 = vmatprep.subr.bf16.mxu0 %v3835
    %4326 = vmatpush2.bf16.msra.mxu0 %v3834
    %4327 = vmatprep.subr.bf16.mxu0 %v3831
    %4328 = vmatpush2.bf16.msra.mxu0 %v3830
    %4329 = vmatprep.subr.bf16.mxu0 %v3827
    %4330 = vmatpush2.bf16.msra.mxu0 %v3826
    %4331 = vmatprep.mubr.bf16.mxu0 %v2997
    %4332 = vmatmul.mubr.bf16.gmra.mxu0 %v2996
    %v4333 = vpop.f32.mrf.mxu0
    %v4334 = vadd.f32 %v3207, %v4333
    %v4335 = vpop.f32.mrf.mxu0
    %v4336 = vadd.f32 %v3211, %v4335
    %v4337 = vpop.f32.mrf.mxu0
    %v4338 = vpop.f32.mrf.mxu0
    %4339 = vdwg.mxu0
    %4340 = vmatprep.subr.bf16.mxu0 %v3887
    %4341 = vmatpush1.bf16.msra.mxu0 %v3886
    %4342 = vmatprep.subr.bf16.mxu0 %v3883
    %4343 = vmatpush1.bf16.msra.mxu0 %v3882
    %4344 = vmatprep.subr.bf16.mxu0 %v3879
    %4345 = vmatpush1.bf16.msra.mxu0 %v3878
    %4346 = vmatprep.subr.bf16.mxu0 %v3875
    %4347 = vmatpush1.bf16.msra.mxu0 %v3874
    %4348 = vmatprep.subr.bf16.mxu0 %v3871
    %4349 = vmatpush1.bf16.msra.mxu0 %v3870
    %4350 = vmatprep.subr.bf16.mxu0 %v3867
    %4351 = vmatpush1.bf16.msra.mxu0 %v3866
    %4352 = vmatprep.subr.bf16.mxu0 %v3863
    %4353 = vmatpush1.bf16.msra.mxu0 %v3862
    %4354 = vmatprep.subr.bf16.mxu0 %v3859
    %4355 = vmatpush1.bf16.msra.mxu0 %v3858
    %4356 = vmatprep.subr.bf16.mxu0 %v3919
    %4357 = vmatpush2.bf16.msra.mxu0 %v3918
    %4358 = vmatprep.subr.bf16.mxu0 %v3915
    %4359 = vmatpush2.bf16.msra.mxu0 %v3914
    %4360 = vmatprep.subr.bf16.mxu0 %v3911
    %4361 = vmatpush2.bf16.msra.mxu0 %v3910
    %4362 = vmatprep.subr.bf16.mxu0 %v3907
    %4363 = vmatpush2.bf16.msra.mxu0 %v3906
    %4364 = vmatprep.subr.bf16.mxu0 %v3903
    %4365 = vmatpush2.bf16.msra.mxu0 %v3902
    %4366 = vmatprep.subr.bf16.mxu0 %v3899
    %4367 = vmatpush2.bf16.msra.mxu0 %v3898
    %4368 = vmatprep.subr.bf16.mxu0 %v3895
    %4369 = vmatpush2.bf16.msra.mxu0 %v3894
    %4370 = vmatprep.subr.bf16.mxu0 %v3891
    %4371 = vmatpush2.bf16.msra.mxu0 %v3890
    %4372 = vmatprep.mubr.bf16.mxu0 %v2999
    %4373 = vmatmul.mubr.bf16.gmra.mxu0 %v2998
    %v4374 = vpop.f32.mrf.mxu0
    %v4375 = vadd.f32 %v4334, %v4374
    %v4376 = vpop.f32.mrf.mxu0
    %v4377 = vadd.f32 %v4336, %v4376
    %v4378 = vpop.f32.mrf.mxu0
    %v4379 = vpop.f32.mrf.mxu0
    %4380 = vdwg.mxu0
    %4381 = vmatprep.subr.bf16.mxu0 %v3951
    %4382 = vmatpush1.bf16.msra.mxu0 %v3950
    %4383 = vmatprep.subr.bf16.mxu0 %v3947
    %4384 = vmatpush1.bf16.msra.mxu0 %v3946
    %4385 = vmatprep.subr.bf16.mxu0 %v3943
    %4386 = vmatpush1.bf16.msra.mxu0 %v3942
    %4387 = vmatprep.subr.bf16.mxu0 %v3939
    %4388 = vmatpush1.bf16.msra.mxu0 %v3938
    %4389 = vmatprep.subr.bf16.mxu0 %v3935
    %4390 = vmatpush1.bf16.msra.mxu0 %v3934
    %4391 = vmatprep.subr.bf16.mxu0 %v3931
    %4392 = vmatpush1.bf16.msra.mxu0 %v3930
    %4393 = vmatprep.subr.bf16.mxu0 %v3927
    %4394 = vmatpush1.bf16.msra.mxu0 %v3926
    %4395 = vmatprep.subr.bf16.mxu0 %v3923
    %4396 = vmatpush1.bf16.msra.mxu0 %v3922
    %4397 = vmatprep.subr.bf16.mxu0 %v3983
    %4398 = vmatpush2.bf16.msra.mxu0 %v3982
    %4399 = vmatprep.subr.bf16.mxu0 %v3979
    %4400 = vmatpush2.bf16.msra.mxu0 %v3978
    %4401 = vmatprep.subr.bf16.mxu0 %v3975
    %4402 = vmatpush2.bf16.msra.mxu0 %v3974
    %4403 = vmatprep.subr.bf16.mxu0 %v3971
    %4404 = vmatpush2.bf16.msra.mxu0 %v3970
    %4405 = vmatprep.subr.bf16.mxu0 %v3967
    %4406 = vmatpush2.bf16.msra.mxu0 %v3966
    %4407 = vmatprep.subr.bf16.mxu0 %v3963
    %4408 = vmatpush2.bf16.msra.mxu0 %v3962
    %4409 = vmatprep.subr.bf16.mxu0 %v3959
    %4410 = vmatpush2.bf16.msra.mxu0 %v3958
    %4411 = vmatprep.subr.bf16.mxu0 %v3955
    %4412 = vmatpush2.bf16.msra.mxu0 %v3954
    %4413 = vmatprep.mubr.bf16.mxu0 %v3001
    %4414 = vmatmul.mubr.bf16.gmra.mxu0 %v3000
    %v4415 = vpop.f32.mrf.mxu0
    %v4416 = vadd.f32 %v4375, %v4415
    %v4417 = vpop.f32.mrf.mxu0
    %v4418 = vadd.f32 %v4377, %v4417
    %v4419 = vpop.f32.mrf.mxu0
    %v4420 = vpop.f32.mrf.mxu0
    %4421 = vdwg.mxu0
    %v4422 = vmax.f32 %v4293, 0.0
    %v4423 = vmax.f32 %v4295, 0.0
    %v4424 = vmax.f32 %v4416, 0.0
    %v4425 = vmax.f32 %v4418, 0.0
    %v4426 = vpack.c.bf16 %v4422, %v4422
    %v4427 = vpack.c.bf16 %v4423, %v4423
    %v4428 = vpack.c.bf16 %v4424, %v4424
    %v4429 = vpack.c.bf16 %v4425, %v4425
    %v4430 = vld [vmem:[#allocation11] sm:$0xff]
    %v4431 = vld [vmem:[#allocation11 + $0x8] sm:$0xff]
    %v4432 = vld [vmem:[#allocation11 + $0x10] sm:$0xff]
    %v4433 = vld [vmem:[#allocation11 + $0x18] sm:$0xff]
    %v4434 = vld [vmem:[#allocation11 + $0x20] sm:$0xff]
    %v4435 = vld [vmem:[#allocation11 + $0x28] sm:$0xff]
    %v4436 = vld [vmem:[#allocation11 + $0x30] sm:$0xff]
    %v4437 = vld [vmem:[#allocation11 + $0x38] sm:$0xff]
    %v4438 = vld [vmem:[#allocation11 + $0x40] sm:$0xff]
    %v4439 = vld [vmem:[#allocation11 + $0x48] sm:$0xff]
    %v4440 = vld [vmem:[#allocation11 + $0x50] sm:$0xff]
    %v4441 = vld [vmem:[#allocation11 + $0x58] sm:$0xff]
    %v4442 = vld [vmem:[#allocation11 + $0x60] sm:$0xff]
    %v4443 = vld [vmem:[#allocation11 + $0x68] sm:$0xff]
    %v4444 = vld [vmem:[#allocation11 + $0x70] sm:$0xff]
    %v4445 = vld [vmem:[#allocation11 + $0x78] sm:$0xff]
    %v4446 = vld [vmem:[#allocation11 + $0x80] sm:$0xff]
    %v4447 = vld [vmem:[#allocation11 + $0x88] sm:$0xff]
    %v4448 = vld [vmem:[#allocation11 + $0x90] sm:$0xff]
    %v4449 = vld [vmem:[#allocation11 + $0x98] sm:$0xff]
    %v4450 = vld [vmem:[#allocation11 + $0xa0] sm:$0xff]
    %v4451 = vld [vmem:[#allocation11 + $0xa8] sm:$0xff]
    %v4452 = vld [vmem:[#allocation11 + $0xb0] sm:$0xff]
    %v4453 = vld [vmem:[#allocation11 + $0xb8] sm:$0xff]
    %v4454 = vld [vmem:[#allocation11 + $0xc0] sm:$0xff]
    %v4455 = vld [vmem:[#allocation11 + $0xc8] sm:$0xff]
    %v4456 = vld [vmem:[#allocation11 + $0xd0] sm:$0xff]
    %v4457 = vld [vmem:[#allocation11 + $0xd8] sm:$0xff]
    %v4458 = vld [vmem:[#allocation11 + $0xe0] sm:$0xff]
    %v4459 = vld [vmem:[#allocation11 + $0xe8] sm:$0xff]
    %v4460 = vld [vmem:[#allocation11 + $0xf0] sm:$0xff]
    %v4461 = vld [vmem:[#allocation11 + $0xf8] sm:$0xff]
    %v4462 = vld [vmem:[#allocation11 + $0x100] sm:$0xff]
    %v4463 = vld [vmem:[#allocation11 + $0x108] sm:$0xff]
    %v4464 = vld [vmem:[#allocation11 + $0x110] sm:$0xff]
    %v4465 = vld [vmem:[#allocation11 + $0x118] sm:$0xff]
    %v4466 = vld [vmem:[#allocation11 + $0x120] sm:$0xff]
    %v4467 = vld [vmem:[#allocation11 + $0x128] sm:$0xff]
    %v4468 = vld [vmem:[#allocation11 + $0x130] sm:$0xff]
    %v4469 = vld [vmem:[#allocation11 + $0x138] sm:$0xff]
    %v4470 = vld [vmem:[#allocation11 + $0x140] sm:$0xff]
    %v4471 = vld [vmem:[#allocation11 + $0x148] sm:$0xff]
    %v4472 = vld [vmem:[#allocation11 + $0x150] sm:$0xff]
    %v4473 = vld [vmem:[#allocation11 + $0x158] sm:$0xff]
    %v4474 = vld [vmem:[#allocation11 + $0x160] sm:$0xff]
    %v4475 = vld [vmem:[#allocation11 + $0x168] sm:$0xff]
    %v4476 = vld [vmem:[#allocation11 + $0x170] sm:$0xff]
    %v4477 = vld [vmem:[#allocation11 + $0x178] sm:$0xff]
    %v4478 = vld [vmem:[#allocation11 + $0x180] sm:$0xff]
    %v4479 = vld [vmem:[#allocation11 + $0x188] sm:$0xff]
    %v4480 = vld [vmem:[#allocation11 + $0x190] sm:$0xff]
    %v4481 = vld [vmem:[#allocation11 + $0x198] sm:$0xff]
    %v4482 = vld [vmem:[#allocation11 + $0x1a0] sm:$0xff]
    %v4483 = vld [vmem:[#allocation11 + $0x1a8] sm:$0xff]
    %v4484 = vld [vmem:[#allocation11 + $0x1b0] sm:$0xff]
    %v4485 = vld [vmem:[#allocation11 + $0x1b8] sm:$0xff]
    %v4486 = vld [vmem:[#allocation11 + $0x1c0] sm:$0xff]
    %v4487 = vld [vmem:[#allocation11 + $0x1c8] sm:$0xff]
    %v4488 = vld [vmem:[#allocation11 + $0x1d0] sm:$0xff]
    %v4489 = vld [vmem:[#allocation11 + $0x1d8] sm:$0xff]
    %v4490 = vld [vmem:[#allocation11 + $0x1e0] sm:$0xff]
    %v4491 = vld [vmem:[#allocation11 + $0x1e8] sm:$0xff]
    %v4492 = vld [vmem:[#allocation11 + $0x1f0] sm:$0xff]
    %v4493 = vld [vmem:[#allocation11 + $0x1f8] sm:$0xff]
    %v4494 = vld [vmem:[#allocation13] sm:$0x3]
    %v4496 = vlaneseq
    %v4497 = vshrl.u32 %v4496, 7
    %v4498 = vsub.s32 0, %v4497
    %v4499 = vrot.slane %v4494, %v4498
    %v4500 = vlaneseq
    %v4501 = vshrl.u32 %v4500, 7
    %v4502 = vsub.s32 1, %v4501
    %v4503 = vrot.slane %v4494, %v4502
    %v4570 = vunpack.c.l.b16 %v4430
    %v4571 = vunpack.c.h.b16 %v4430
    %v4572 = vunpack.c.l.b16 %v4431
    %v4573 = vunpack.c.h.b16 %v4431
    %v4574 = vunpack.c.l.b16 %v4432
    %v4575 = vunpack.c.h.b16 %v4432
    %v4576 = vunpack.c.l.b16 %v4433
    %v4577 = vunpack.c.h.b16 %v4433
    %v4578 = vunpack.c.l.b16 %v4434
    %v4579 = vunpack.c.h.b16 %v4434
    %v4580 = vunpack.c.l.b16 %v4435
    %v4581 = vunpack.c.h.b16 %v4435
    %v4582 = vunpack.c.l.b16 %v4436
    %v4583 = vunpack.c.h.b16 %v4436
    %v4584 = vunpack.c.l.b16 %v4437
    %v4585 = vunpack.c.h.b16 %v4437
    %v4586 = vunpack.c.l.b16 %v4438
    %v4587 = vunpack.c.h.b16 %v4438
    %v4588 = vunpack.c.l.b16 %v4439
    %v4589 = vunpack.c.h.b16 %v4439
    %v4590 = vunpack.c.l.b16 %v4440
    %v4591 = vunpack.c.h.b16 %v4440
    %v4592 = vunpack.c.l.b16 %v4441
    %v4593 = vunpack.c.h.b16 %v4441
    %v4594 = vunpack.c.l.b16 %v4442
    %v4595 = vunpack.c.h.b16 %v4442
    %v4596 = vunpack.c.l.b16 %v4443
    %v4597 = vunpack.c.h.b16 %v4443
    %v4598 = vunpack.c.l.b16 %v4444
    %v4599 = vunpack.c.h.b16 %v4444
    %v4600 = vunpack.c.l.b16 %v4445
    %v4601 = vunpack.c.h.b16 %v4445
    %v4602 = vunpack.c.l.b16 %v4446
    %v4603 = vunpack.c.h.b16 %v4446
    %v4604 = vunpack.c.l.b16 %v4447
    %v4605 = vunpack.c.h.b16 %v4447
    %v4606 = vunpack.c.l.b16 %v4448
    %v4607 = vunpack.c.h.b16 %v4448
    %v4608 = vunpack.c.l.b16 %v4449
    %v4609 = vunpack.c.h.b16 %v4449
    %v4610 = vunpack.c.l.b16 %v4450
    %v4611 = vunpack.c.h.b16 %v4450
    %v4612 = vunpack.c.l.b16 %v4451
    %v4613 = vunpack.c.h.b16 %v4451
    %v4614 = vunpack.c.l.b16 %v4452
    %v4615 = vunpack.c.h.b16 %v4452
    %v4616 = vunpack.c.l.b16 %v4453
    %v4617 = vunpack.c.h.b16 %v4453
    %v4618 = vunpack.c.l.b16 %v4454
    %v4619 = vunpack.c.h.b16 %v4454
    %v4620 = vunpack.c.l.b16 %v4455
    %v4621 = vunpack.c.h.b16 %v4455
    %v4622 = vunpack.c.l.b16 %v4456
    %v4623 = vunpack.c.h.b16 %v4456
    %v4624 = vunpack.c.l.b16 %v4457
    %v4625 = vunpack.c.h.b16 %v4457
    %v4626 = vunpack.c.l.b16 %v4458
    %v4627 = vunpack.c.h.b16 %v4458
    %v4628 = vunpack.c.l.b16 %v4459
    %v4629 = vunpack.c.h.b16 %v4459
    %v4630 = vunpack.c.l.b16 %v4460
    %v4631 = vunpack.c.h.b16 %v4460
    %v4632 = vunpack.c.l.b16 %v4461
    %v4633 = vunpack.c.h.b16 %v4461
    %v4634 = vunpack.c.l.b16 %v4462
    %v4635 = vunpack.c.h.b16 %v4462
    %v4636 = vunpack.c.l.b16 %v4463
    %v4637 = vunpack.c.h.b16 %v4463
    %v4638 = vunpack.c.l.b16 %v4464
    %v4639 = vunpack.c.h.b16 %v4464
    %v4640 = vunpack.c.l.b16 %v4465
    %v4641 = vunpack.c.h.b16 %v4465
    %v4642 = vunpack.c.l.b16 %v4466
    %v4643 = vunpack.c.h.b16 %v4466
    %v4644 = vunpack.c.l.b16 %v4467
    %v4645 = vunpack.c.h.b16 %v4467
    %v4646 = vunpack.c.l.b16 %v4468
    %v4647 = vunpack.c.h.b16 %v4468
    %v4648 = vunpack.c.l.b16 %v4469
    %v4649 = vunpack.c.h.b16 %v4469
    %v4650 = vunpack.c.l.b16 %v4470
    %v4651 = vunpack.c.h.b16 %v4470
    %v4652 = vunpack.c.l.b16 %v4471
    %v4653 = vunpack.c.h.b16 %v4471
    %v4654 = vunpack.c.l.b16 %v4472
    %v4655 = vunpack.c.h.b16 %v4472
    %v4656 = vunpack.c.l.b16 %v4473
    %v4657 = vunpack.c.h.b16 %v4473
    %v4658 = vunpack.c.l.b16 %v4474
    %v4659 = vunpack.c.h.b16 %v4474
    %v4660 = vunpack.c.l.b16 %v4475
    %v4661 = vunpack.c.h.b16 %v4475
    %v4662 = vunpack.c.l.b16 %v4476
    %v4663 = vunpack.c.h.b16 %v4476
    %v4664 = vunpack.c.l.b16 %v4477
    %v4665 = vunpack.c.h.b16 %v4477
    %v4666 = vunpack.c.l.b16 %v4478
    %v4667 = vunpack.c.h.b16 %v4478
    %v4668 = vunpack.c.l.b16 %v4479
    %v4669 = vunpack.c.h.b16 %v4479
    %v4670 = vunpack.c.l.b16 %v4480
    %v4671 = vunpack.c.h.b16 %v4480
    %v4672 = vunpack.c.l.b16 %v4481
    %v4673 = vunpack.c.h.b16 %v4481
    %v4674 = vunpack.c.l.b16 %v4482
    %v4675 = vunpack.c.h.b16 %v4482
    %v4676 = vunpack.c.l.b16 %v4483
    %v4677 = vunpack.c.h.b16 %v4483
    %v4678 = vunpack.c.l.b16 %v4484
    %v4679 = vunpack.c.h.b16 %v4484
    %v4680 = vunpack.c.l.b16 %v4485
    %v4681 = vunpack.c.h.b16 %v4485
    %v4682 = vunpack.c.l.b16 %v4486
    %v4683 = vunpack.c.h.b16 %v4486
    %v4684 = vunpack.c.l.b16 %v4487
    %v4685 = vunpack.c.h.b16 %v4487
    %v4686 = vunpack.c.l.b16 %v4488
    %v4687 = vunpack.c.h.b16 %v4488
    %v4688 = vunpack.c.l.b16 %v4489
    %v4689 = vunpack.c.h.b16 %v4489
    %v4690 = vunpack.c.l.b16 %v4490
    %v4691 = vunpack.c.h.b16 %v4490
    %v4692 = vunpack.c.l.b16 %v4491
    %v4693 = vunpack.c.h.b16 %v4491
    %v4694 = vunpack.c.l.b16 %v4492
    %v4695 = vunpack.c.h.b16 %v4492
    %v4696 = vunpack.c.l.b16 %v4493
    %v4697 = vunpack.c.h.b16 %v4493
    %v4698 = vpack.c.b16 %v4572, %v4570
    %v4699 = vpack.c.b16 %v4573, %v4571
    %v4700 = vpack.c.b16 %v4576, %v4574
    %v4701 = vpack.c.b16 %v4577, %v4575
    %v4702 = vpack.c.b16 %v4580, %v4578
    %v4703 = vpack.c.b16 %v4581, %v4579
    %v4704 = vpack.c.b16 %v4584, %v4582
    %v4705 = vpack.c.b16 %v4585, %v4583
    %v4706 = vpack.c.b16 %v4588, %v4586
    %v4707 = vpack.c.b16 %v4589, %v4587
    %v4708 = vpack.c.b16 %v4592, %v4590
    %v4709 = vpack.c.b16 %v4593, %v4591
    %v4710 = vpack.c.b16 %v4596, %v4594
    %v4711 = vpack.c.b16 %v4597, %v4595
    %v4712 = vpack.c.b16 %v4600, %v4598
    %v4713 = vpack.c.b16 %v4601, %v4599
    %v4714 = vpack.c.b16 %v4604, %v4602
    %v4715 = vpack.c.b16 %v4605, %v4603
    %v4716 = vpack.c.b16 %v4608, %v4606
    %v4717 = vpack.c.b16 %v4609, %v4607
    %v4718 = vpack.c.b16 %v4612, %v4610
    %v4719 = vpack.c.b16 %v4613, %v4611
    %v4720 = vpack.c.b16 %v4616, %v4614
    %v4721 = vpack.c.b16 %v4617, %v4615
    %v4722 = vpack.c.b16 %v4620, %v4618
    %v4723 = vpack.c.b16 %v4621, %v4619
    %v4724 = vpack.c.b16 %v4624, %v4622
    %v4725 = vpack.c.b16 %v4625, %v4623
    %v4726 = vpack.c.b16 %v4628, %v4626
    %v4727 = vpack.c.b16 %v4629, %v4627
    %v4728 = vpack.c.b16 %v4632, %v4630
    %v4729 = vpack.c.b16 %v4633, %v4631
    %v4730 = vpack.c.b16 %v4636, %v4634
    %v4731 = vpack.c.b16 %v4637, %v4635
    %v4732 = vpack.c.b16 %v4640, %v4638
    %v4733 = vpack.c.b16 %v4641, %v4639
    %v4734 = vpack.c.b16 %v4644, %v4642
    %v4735 = vpack.c.b16 %v4645, %v4643
    %v4736 = vpack.c.b16 %v4648, %v4646
    %v4737 = vpack.c.b16 %v4649, %v4647
    %v4738 = vpack.c.b16 %v4652, %v4650
    %v4739 = vpack.c.b16 %v4653, %v4651
    %v4740 = vpack.c.b16 %v4656, %v4654
    %v4741 = vpack.c.b16 %v4657, %v4655
    %v4742 = vpack.c.b16 %v4660, %v4658
    %v4743 = vpack.c.b16 %v4661, %v4659
    %v4744 = vpack.c.b16 %v4664, %v4662
    %v4745 = vpack.c.b16 %v4665, %v4663
    %v4746 = vpack.c.b16 %v4668, %v4666
    %v4747 = vpack.c.b16 %v4669, %v4667
    %v4748 = vpack.c.b16 %v4672, %v4670
    %v4749 = vpack.c.b16 %v4673, %v4671
    %v4750 = vpack.c.b16 %v4676, %v4674
    %v4751 = vpack.c.b16 %v4677, %v4675
    %v4752 = vpack.c.b16 %v4680, %v4678
    %v4753 = vpack.c.b16 %v4681, %v4679
    %v4754 = vpack.c.b16 %v4684, %v4682
    %v4755 = vpack.c.b16 %v4685, %v4683
    %v4756 = vpack.c.b16 %v4688, %v4686
    %v4757 = vpack.c.b16 %v4689, %v4687
    %v4758 = vpack.c.b16 %v4692, %v4690
    %v4759 = vpack.c.b16 %v4693, %v4691
    %v4760 = vpack.c.b16 %v4696, %v4694
    %v4761 = vpack.c.b16 %v4697, %v4695
    %4826 = vmatprep.subr.bf16.mxu0 %v4713
    %4827 = vmatpush1.bf16.msra.mxu0 %v4712
    %4828 = vmatprep.subr.bf16.mxu0 %v4711
    %4829 = vmatpush1.bf16.msra.mxu0 %v4710
    %4830 = vmatprep.subr.bf16.mxu0 %v4709
    %4831 = vmatpush1.bf16.msra.mxu0 %v4708
    %4832 = vmatprep.subr.bf16.mxu0 %v4707
    %4833 = vmatpush1.bf16.msra.mxu0 %v4706
    %4834 = vmatprep.subr.bf16.mxu0 %v4705
    %4835 = vmatpush1.bf16.msra.mxu0 %v4704
    %4836 = vmatprep.subr.bf16.mxu0 %v4703
    %4837 = vmatpush1.bf16.msra.mxu0 %v4702
    %4838 = vmatprep.subr.bf16.mxu0 %v4701
    %4839 = vmatpush1.bf16.msra.mxu0 %v4700
    %4840 = vmatprep.subr.bf16.mxu0 %v4699
    %4841 = vmatpush1.bf16.msra.mxu0 %v4698
    %4842 = vmatprep.subr.bf16.mxu0 %v4729
    %4843 = vmatpush2.bf16.msra.mxu0 %v4728
    %4844 = vmatprep.subr.bf16.mxu0 %v4727
    %4845 = vmatpush2.bf16.msra.mxu0 %v4726
    %4846 = vmatprep.subr.bf16.mxu0 %v4725
    %4847 = vmatpush2.bf16.msra.mxu0 %v4724
    %4848 = vmatprep.subr.bf16.mxu0 %v4723
    %4849 = vmatpush2.bf16.msra.mxu0 %v4722
    %4850 = vmatprep.subr.bf16.mxu0 %v4721
    %4851 = vmatpush2.bf16.msra.mxu0 %v4720
    %4852 = vmatprep.subr.bf16.mxu0 %v4719
    %4853 = vmatpush2.bf16.msra.mxu0 %v4718
    %4854 = vmatprep.subr.bf16.mxu0 %v4717
    %4855 = vmatpush2.bf16.msra.mxu0 %v4716
    %4856 = vmatprep.subr.bf16.mxu0 %v4715
    %4857 = vmatpush2.bf16.msra.mxu0 %v4714
    %4858 = vmatprep.mubr.bf16.mxu0 %v4427
    %4859 = vmatmul.mubr.bf16.gmra.mxu0 %v4426
    %v4860 = vpop.f32.mrf.mxu0
    %v4861 = vadd.f32 %v4499, %v4860
    %v4862 = vpop.f32.mrf.mxu0
    %v4863 = vadd.f32 %v4503, %v4862
    %v4864 = vpop.f32.mrf.mxu0
    %v4865 = vpop.f32.mrf.mxu0
    %4866 = vdwg.mxu0
    %4867 = vmatprep.subr.bf16.mxu0 %v4745
    %4868 = vmatpush1.bf16.msra.mxu0 %v4744
    %4869 = vmatprep.subr.bf16.mxu0 %v4743
    %4870 = vmatpush1.bf16.msra.mxu0 %v4742
    %4871 = vmatprep.subr.bf16.mxu0 %v4741
    %4872 = vmatpush1.bf16.msra.mxu0 %v4740
    %4873 = vmatprep.subr.bf16.mxu0 %v4739
    %4874 = vmatpush1.bf16.msra.mxu0 %v4738
    %4875 = vmatprep.subr.bf16.mxu0 %v4737
    %4876 = vmatpush1.bf16.msra.mxu0 %v4736
    %4877 = vmatprep.subr.bf16.mxu0 %v4735
    %4878 = vmatpush1.bf16.msra.mxu0 %v4734
    %4879 = vmatprep.subr.bf16.mxu0 %v4733
    %4880 = vmatpush1.bf16.msra.mxu0 %v4732
    %4881 = vmatprep.subr.bf16.mxu0 %v4731
    %4882 = vmatpush1.bf16.msra.mxu0 %v4730
    %4883 = vmatprep.subr.bf16.mxu0 %v4761
    %4884 = vmatpush2.bf16.msra.mxu0 %v4760
    %4885 = vmatprep.subr.bf16.mxu0 %v4759
    %4886 = vmatpush2.bf16.msra.mxu0 %v4758
    %4887 = vmatprep.subr.bf16.mxu0 %v4757
    %4888 = vmatpush2.bf16.msra.mxu0 %v4756
    %4889 = vmatprep.subr.bf16.mxu0 %v4755
    %4890 = vmatpush2.bf16.msra.mxu0 %v4754
    %4891 = vmatprep.subr.bf16.mxu0 %v4753
    %4892 = vmatpush2.bf16.msra.mxu0 %v4752
    %4893 = vmatprep.subr.bf16.mxu0 %v4751
    %4894 = vmatpush2.bf16.msra.mxu0 %v4750
    %4895 = vmatprep.subr.bf16.mxu0 %v4749
    %4896 = vmatpush2.bf16.msra.mxu0 %v4748
    %4897 = vmatprep.subr.bf16.mxu0 %v4747
    %4898 = vmatpush2.bf16.msra.mxu0 %v4746
    %4899 = vmatprep.mubr.bf16.mxu0 %v4429
    %4900 = vmatmul.mubr.bf16.gmra.mxu0 %v4428
    %v4901 = vpop.f32.mrf.mxu0
    %v4902 = vadd.f32 %v4861, %v4901
    %v4903 = vpop.f32.mrf.mxu0
    %v4904 = vadd.f32 %v4863, %v4903
    %v4905 = vpop.f32.mrf.mxu0
    %v4906 = vpop.f32.mrf.mxu0
    %4907 = vdwg.mxu0
    %v4908 = vmax.f32 %v4902, 0.0
    %v4909 = vmax.f32 %v4904, 0.0
    %v4910 = vpack.c.bf16 %v4908, %v4908
    %v4911 = vpack.c.bf16 %v4909, %v4909
    %v4912 = vld [vmem:[#allocation14] sm:$0xf]
    %v4913 = vld [vmem:[#allocation14 + $0x4] sm:$0xf]
    %v4914 = vld [vmem:[#allocation14 + $0x8] sm:$0xf]
    %v4915 = vld [vmem:[#allocation14 + $0xc] sm:$0xf]
    %v4916 = vld [vmem:[#allocation14 + $0x10] sm:$0xf]
    %v4917 = vld [vmem:[#allocation14 + $0x14] sm:$0xf]
    %v4918 = vld [vmem:[#allocation14 + $0x18] sm:$0xf]
    %v4919 = vld [vmem:[#allocation14 + $0x1c] sm:$0xf]
    %v4920 = vld [vmem:[#allocation14 + $0x20] sm:$0xf]
    %v4921 = vld [vmem:[#allocation14 + $0x24] sm:$0xf]
    %v4922 = vld [vmem:[#allocation14 + $0x28] sm:$0xf]
    %v4923 = vld [vmem:[#allocation14 + $0x2c] sm:$0xf]
    %v4924 = vld [vmem:[#allocation14 + $0x30] sm:$0xf]
    %v4925 = vld [vmem:[#allocation14 + $0x34] sm:$0xf]
    %v4926 = vld [vmem:[#allocation14 + $0x38] sm:$0xf]
    %v4927 = vld [vmem:[#allocation14 + $0x3c] sm:$0xf]
    %v4928 = vld [vmem:[#allocation14 + $0x40] sm:$0xf]
    %v4929 = vld [vmem:[#allocation14 + $0x44] sm:$0xf]
    %v4930 = vld [vmem:[#allocation14 + $0x48] sm:$0xf]
    %v4931 = vld [vmem:[#allocation14 + $0x4c] sm:$0xf]
    %v4932 = vld [vmem:[#allocation14 + $0x50] sm:$0xf]
    %v4933 = vld [vmem:[#allocation14 + $0x54] sm:$0xf]
    %v4934 = vld [vmem:[#allocation14 + $0x58] sm:$0xf]
    %v4935 = vld [vmem:[#allocation14 + $0x5c] sm:$0xf]
    %v4936 = vld [vmem:[#allocation14 + $0x60] sm:$0xf]
    %v4937 = vld [vmem:[#allocation14 + $0x64] sm:$0xf]
    %v4938 = vld [vmem:[#allocation14 + $0x68] sm:$0xf]
    %v4939 = vld [vmem:[#allocation14 + $0x6c] sm:$0xf]
    %v4940 = vld [vmem:[#allocation14 + $0x70] sm:$0xf]
    %v4941 = vld [vmem:[#allocation14 + $0x74] sm:$0xf]
    %v4942 = vld [vmem:[#allocation14 + $0x78] sm:$0xf]
    %v4943 = vld [vmem:[#allocation14 + $0x7c] sm:$0xf]
    %v4944 = vld [vmem:[#allocation16] sm:$0x1]
    %v4946 = vlaneseq
    %v4947 = vshrl.u32 %v4946, 7
    %v4948 = vsub.s32 0, %v4947
    %v4949 = vrot.slane %v4944, %v4948
    %v4983 = vunpack.c.l.b16 %v4912
    %v4984 = vunpack.c.l.b16 %v4913
    %v4985 = vunpack.c.l.b16 %v4914
    %v4986 = vunpack.c.l.b16 %v4915
    %v4987 = vunpack.c.l.b16 %v4916
    %v4988 = vunpack.c.l.b16 %v4917
    %v4989 = vunpack.c.l.b16 %v4918
    %v4990 = vunpack.c.l.b16 %v4919
    %v4991 = vunpack.c.l.b16 %v4920
    %v4992 = vunpack.c.l.b16 %v4921
    %v4993 = vunpack.c.l.b16 %v4922
    %v4994 = vunpack.c.l.b16 %v4923
    %v4995 = vunpack.c.l.b16 %v4924
    %v4996 = vunpack.c.l.b16 %v4925
    %v4997 = vunpack.c.l.b16 %v4926
    %v4998 = vunpack.c.l.b16 %v4927
    %v4999 = vunpack.c.l.b16 %v4928
    %v5000 = vunpack.c.l.b16 %v4929
    %v5001 = vunpack.c.l.b16 %v4930
    %v5002 = vunpack.c.l.b16 %v4931
    %v5003 = vunpack.c.l.b16 %v4932
    %v5004 = vunpack.c.l.b16 %v4933
    %v5005 = vunpack.c.l.b16 %v4934
    %v5006 = vunpack.c.l.b16 %v4935
    %v5007 = vunpack.c.l.b16 %v4936
    %v5008 = vunpack.c.l.b16 %v4937
    %v5009 = vunpack.c.l.b16 %v4938
    %v5010 = vunpack.c.l.b16 %v4939
    %v5011 = vunpack.c.l.b16 %v4940
    %v5012 = vunpack.c.l.b16 %v4941
    %v5013 = vunpack.c.l.b16 %v4942
    %v5014 = vunpack.c.l.b16 %v4943
    %v5015 = vpack.c.b16 %v4984, %v4983
    %v5016 = vpack.c.b16 %v4986, %v4985
    %v5017 = vpack.c.b16 %v4988, %v4987
    %v5018 = vpack.c.b16 %v4990, %v4989
    %v5019 = vpack.c.b16 %v4992, %v4991
    %v5020 = vpack.c.b16 %v4994, %v4993
    %v5021 = vpack.c.b16 %v4996, %v4995
    %v5022 = vpack.c.b16 %v4998, %v4997
    %v5023 = vpack.c.b16 %v5000, %v4999
    %v5024 = vpack.c.b16 %v5002, %v5001
    %v5025 = vpack.c.b16 %v5004, %v5003
    %v5026 = vpack.c.b16 %v5006, %v5005
    %v5027 = vpack.c.b16 %v5008, %v5007
    %v5028 = vpack.c.b16 %v5010, %v5009
    %v5029 = vpack.c.b16 %v5012, %v5011
    %v5030 = vpack.c.b16 %v5014, %v5013
    %5047 = vmatprep.subr.bf16.mxu0 0
    %5048 = vmatpush1.bf16.msra.mxu0 %v5022
    %5049 = vmatprep.subr.bf16.mxu0 0
    %5050 = vmatpush1.bf16.msra.mxu0 %v5021
    %5051 = vmatprep.subr.bf16.mxu0 0
    %5052 = vmatpush1.bf16.msra.mxu0 %v5020
    %5053 = vmatprep.subr.bf16.mxu0 0
    %5054 = vmatpush1.bf16.msra.mxu0 %v5019
    %5055 = vmatprep.subr.bf16.mxu0 0
    %5056 = vmatpush1.bf16.msra.mxu0 %v5018
    %5057 = vmatprep.subr.bf16.mxu0 0
    %5058 = vmatpush1.bf16.msra.mxu0 %v5017
    %5059 = vmatprep.subr.bf16.mxu0 0
    %5060 = vmatpush1.bf16.msra.mxu0 %v5016
    %5061 = vmatprep.subr.bf16.mxu0 0
    %5062 = vmatpush1.bf16.msra.mxu0 %v5015
    %5063 = vmatprep.subr.bf16.mxu0 0
    %5064 = vmatpush2.bf16.msra.mxu0 %v5030
    %5065 = vmatprep.subr.bf16.mxu0 0
    %5066 = vmatpush2.bf16.msra.mxu0 %v5029
    %5067 = vmatprep.subr.bf16.mxu0 0
    %5068 = vmatpush2.bf16.msra.mxu0 %v5028
    %5069 = vmatprep.subr.bf16.mxu0 0
    %5070 = vmatpush2.bf16.msra.mxu0 %v5027
    %5071 = vmatprep.subr.bf16.mxu0 0
    %5072 = vmatpush2.bf16.msra.mxu0 %v5026
    %5073 = vmatprep.subr.bf16.mxu0 0
    %5074 = vmatpush2.bf16.msra.mxu0 %v5025
    %5075 = vmatprep.subr.bf16.mxu0 0
    %5076 = vmatpush2.bf16.msra.mxu0 %v5024
    %5077 = vmatprep.subr.bf16.mxu0 0
    %5078 = vmatpush2.bf16.msra.mxu0 %v5023
    %5079 = vmatprep.mubr.bf16.mxu0 %v4911
    %5080 = vmatmul.mubr.bf16.gmra.mxu0 %v4910
    %v5081 = vpop.f32.mrf.mxu0
    %v5082 = vadd.f32 %v4949, %v5081
    %v5083 = vpop.f32.mrf.mxu0
    %v5084 = vpop.f32.mrf.mxu0
    %v5085 = vpop.f32.mrf.mxu0
    %5086 = vdwg.mxu0
    %5087 = vst [vmem:[#allocation17] sm:$0xff] %v5082
    // Predicated region
    $region74: #{tpu_custom_call.1} parent=1 // pred_check
      _
    $region75: #{tpu_custom_call.1} parent=1 // pred_check_branch
      %5089 = sbr.rel (0) target = $region77
    $region76: #{tpu_custom_call.1} parent=1 // pred_region
      %s5091 = ssub.s32 128, 128
      %5092 = vsyncadd [#allocation4], %s5091
      %s5094 = sshll.u32 [#allocation17], 4
      %s5095 = int_to_ptr.vmem [resolvable:$true] %s5094
      %5097 = dma.vmem_to_hbm [thread:$0]  %s5095, 128, %s9, [#allocation4]
    $region77: #{tpu_custom_call.1} parent=1 // pred_fallthru
      _
    // Predicated region
    $region78: #{tpu_custom_call.1} parent=1 // pred_check
      _
    $region79: #{tpu_custom_call.1} parent=1 // pred_check_branch
      %5099 = sbr.rel (0) target = $region81
    $region80: #{tpu_custom_call.1} parent=1 // pred_region
      %5100 = dma.done [#allocation4], 128
    $region81: #{tpu_custom_call.1} parent=1 // pred_fallthru
      _
    %5101 = vsyncpa [#allocation3], 1
    %5102 = vsyncpa [#allocation6], 1
    %5103 = vsyncpa [#allocation9], 1
    %5104 = vsyncpa [#allocation12], 1
    %5105 = vsyncpa [#allocation15], 1
    %5106 = vsyncpa [#allocation4], 1

</llo_original>
